<compile_context>
chip_gen: v7x
topology: tpu7x:2x2x1
jax: 0.10.0
libtpu: 0.0.40
codegen_flags: <defaults>
</compile_context>

<pallas_src>
import math

import jax
import jax.numpy as jnp
from jax.experimental import pallas as pl
from jax.experimental.pallas import tpu as pltpu

# ----------------------------- model config ---------------------------------
B = 2              # batch
C_IN = 3           # image channels
IMG = 32           # image size
PATCH = 8          # patch size
NP = (IMG // PATCH) ** 2          # 16 patches
SEQ_V = NP + 1                    # +cls = 17 vision tokens
D_V = 64                          # vision width
V_LAYERS = 2
V_HEADS = 4
V_MLP = 256

D_T = 32                          # text hidden size
T_LAYERS = 2
T_HEADS = 4
T_FF = 64
NQ = 8                            # num_query_token
LT = 8                            # max_text_length
VOCAB = 100

S_T = NQ + LT                     # 16 text-stream tokens


# --------------------- small helpers (traced in kernels) ---------------------
def _ln(x, g, b, eps):
    """Row-wise LayerNorm in f32.  g/b are (1, D)."""
    x = x.astype(jnp.float32)
    mu = jnp.mean(x, axis=-1, keepdims=True)
    var = jnp.mean(jnp.square(x - mu), axis=-1, keepdims=True)
    return (x - mu) * jax.lax.rsqrt(var + eps) * g + b


def _gelu(x):
    # TODO(synk): tanh approximation (exact erf GELU left out for safe lowering).
    return jax.nn.gelu(x, approximate=True)


def _mha(q, k, v, wo, bo, heads, bias=None):
    """All-heads attention fused with the output projection.

    q:(S,D) k,v:(T,D) f32; wo:(D,D) bf16; bo:(1,D) f32; bias:(1,T) additive.
    bf16 casts are hoisted (done once per operand); per-head contexts are
    concatenated along lanes and projected with ONE (S,D)@(D,D) GEMM.
    """
    S, D = q.shape
    dh = D // heads
    scale = 1.0 / math.sqrt(dh)
    qb = (q * scale).astype(jnp.bfloat16)
    kb = k.astype(jnp.bfloat16)
    vb = v.astype(jnp.bfloat16)
    ctxs = []
    for h in range(heads):
        sl = slice(h * dh, (h + 1) * dh)
        s = jnp.einsum("qd,kd->qk", qb[:, sl], kb[:, sl],
                       preferred_element_type=jnp.float32)
        if bias is not None:
            s = s + bias
        s = s - jnp.max(s, axis=-1, keepdims=True)
        p = jnp.exp(s)
        p = p * pl.reciprocal(jnp.sum(p, axis=-1, keepdims=True), approx=True)
        ctxs.append(jnp.dot(p.astype(jnp.bfloat16), vb[:, sl],
                            preferred_element_type=jnp.float32))
    ctx = jnp.concatenate(ctxs, axis=-1).astype(jnp.bfloat16)          # (S, D)
    return jnp.dot(ctx, wo, preferred_element_type=jnp.float32) + bo


# ----------------------------- Pallas kernels --------------------------------
def _vision_stage_kernel(patches_ref, patch_w, cls_pos, pos_pat, lnp_g, lnp_b,
                         ln1g, ln1b, wqkv, bqkv, wo, bo,
                         ln2g, ln2b, w1, b1, w2, b2,
                         lnv_g, lnv_b, o_ref):
    """Full CLIP-ViT stack + ln_vision for one batch element, fused.

    Per-layer weights are stacked along a leading (L, ...) axis; the layer loop
    is unrolled inside the kernel so weights stay resident in VMEM.
    """
    pe = jnp.dot(patches_ref[0].astype(jnp.bfloat16), patch_w[...],
                 preferred_element_type=jnp.float32) + pos_pat[...]    # (NP, D_V)
    x = jnp.concatenate([cls_pos[...], pe], axis=0)                    # (SEQ_V, D_V)
    x = _ln(x, lnp_g[...], lnp_b[...], 1e-5)

    for l in range(V_LAYERS):
        # --- self attention (pre-LN) ---
        h = _ln(x, ln1g[l], ln1b[l], 1e-5)
        qkv = jnp.dot(h.astype(jnp.bfloat16), wqkv[l],
                      preferred_element_type=jnp.float32) + bqkv[l]
        q, k, v = qkv[:, :D_V], qkv[:, D_V:2 * D_V], qkv[:, 2 * D_V:]
        x = x + _mha(q, k, v, wo[l], bo[l], V_HEADS)
        # --- MLP ---
        h = _ln(x, ln2g[l], ln2b[l], 1e-5)
        h = _gelu(jnp.dot(h.astype(jnp.bfloat16), w1[l],
                          preferred_element_type=jnp.float32) + b1[l])
        x = x + jnp.dot(h.astype(jnp.bfloat16), w2[l],
                        preferred_element_type=jnp.float32) + b2[l]

    # ln_vision fused in; single full-tile store of the stage output.
    o_ref[0] = _ln(x, lnv_g[...], lnv_b[...], 1e-5).astype(o_ref.dtype)


def _text_stage_kernel(h_ref, img_ref, bias_ref, eg, eb,
                       wqkv, bqkv, wo, bo, ag, ab,
                       cwq, cbq, cwkv, cbkv, cwo, cbo, cg, cb,
                       wiq, biq, woq, boq, qg, qb,
                       wit, bit, wot, bot, tg, tb,
                       o_ref):
    """Full Q-Former stack (emb-LN + post-LN BERT blocks with cross-attention)
    for one batch element, fused. Layer loop unrolled in-kernel."""
    hid = _ln(h_ref[0], eg[...], eb[...], 1e-12)        # (S_T, D_T)
    img_b16 = img_ref[0].astype(jnp.bfloat16)            # (SEQ_V, D_V), cast once
    bias = bias_ref[0]                                    # (1, S_T) additive key mask

    for l in range(T_LAYERS):
        # --- self attention over [query ; text] ---
        qkv = jnp.dot(hid.astype(jnp.bfloat16), wqkv[l],
                      preferred_element_type=jnp.float32) + bqkv[l]
        q, k, v = qkv[:, :D_T], qkv[:, D_T:2 * D_T], qkv[:, 2 * D_T:]
        a = _mha(q, k, v, wo[l], bo[l], T_HEADS, bias=bias)
        hid = _ln(hid + a, ag[l], ab[l], 1e-12)

        # --- cross attention: query tokens attend to image embeds ---
        qh = hid[:NQ, :]
        cq = jnp.dot(qh.astype(jnp.bfloat16), cwq[l],
                     preferred_element_type=jnp.float32) + cbq[l]
        ckv = jnp.dot(img_b16, cwkv[l],
                      preferred_element_type=jnp.float32) + cbkv[l]
        ca = _mha(cq, ckv[:, :D_T], ckv[:, D_T:], cwo[l], cbo[l], T_HEADS)
        qh = _ln(qh + ca, cg[l], cb[l], 1e-12)

        # --- feed-forward: query branch ---
        fq = _gelu(jnp.dot(qh.astype(jnp.bfloat16), wiq[l],
                           preferred_element_type=jnp.float32) + biq[l])
        fq = jnp.dot(fq.astype(jnp.bfloat16), woq[l],
                     preferred_element_type=jnp.float32) + boq[l]
        qh = _ln(qh + fq, qg[l], qb[l], 1e-12)

        # --- feed-forward: text branch (text tokens skip cross attention) ---
        th = hid[NQ:, :]
        ft = _gelu(jnp.dot(th.astype(jnp.bfloat16), wit[l],
                           preferred_element_type=jnp.float32) + bit[l])
        ft = jnp.dot(ft.astype(jnp.bfloat16), wot[l],
                     preferred_element_type=jnp.float32) + bot[l]
        th = _ln(th + ft, tg[l], tb[l], 1e-12)

        hid = jnp.concatenate([qh, th], axis=0)           # (S_T, D_T)

    # Module output = query hidden states only; single full-tile store.
    o_ref[0] = hid[:NQ, :].astype(o_ref.dtype)


# ----------------------------- pallas_call wrappers ---------------------------
_PARALLEL = pltpu.CompilerParams(dimension_semantics=("parallel",))


def _rep_spec(shape):
    """Weight replicated across the batch grid axis (block == full array,
    constant index_map => no re-DMA across grid steps)."""
    z = (0,) * len(shape)
    return pl.BlockSpec(tuple(shape), lambda b, _z=z: _z)


def _bat_spec(shape):
    """Per-batch block along the leading axis."""
    blk = (1,) + tuple(shape[1:])
    z = (0,) * (len(shape) - 1)
    return pl.BlockSpec(blk, lambda b, _z=z: (b,) + _z)


_VIS_W_KEYS = ("ln1_g", "ln1_b", "wqkv", "bqkv", "wo", "bo",
               "ln2_g", "ln2_b", "w1", "b1", "w2", "b2")

_TEXT_W_KEYS = ("wqkv", "bqkv", "wo", "bo", "attn_ln_g", "attn_ln_b",
                "cwq", "cbq", "cwkv", "cbkv", "cwo", "cbo", "cross_ln_g", "cross_ln_b",
                "wi_q", "bi_q", "wo_q", "bo_q", "ffn_ln_q_g", "ffn_ln_q_b",
                "wi_t", "bi_t", "wo_t", "bo_t", "ffn_ln_t_g", "ffn_ln_t_b")


def vision_stage(image_nchw, vp, lnv):
    """image (B,C,H,W) -> ln_vision(ViT(image)) : (B, SEQ_V, D_V), one pallas_call."""
    Bn = image_nchw.shape[0]
    p = PATCH
    # im2col for non-overlapping patches: conv(stride=patch) == matmul (JAX glue).
    x = image_nchw.reshape(Bn, C_IN, IMG // p, p, IMG // p, p)
    patches = x.transpose(0, 2, 4, 1, 3, 5).reshape(Bn, NP, C_IN * p * p)
    cls_pos = vp["cls"] + vp["pos"][:1]          # (1, D_V)
    pos_pat = vp["pos"][1:]                      # (NP, D_V)
    rest = (vp["patch_w"], cls_pos, pos_pat, vp["ln_pre_g"], vp["ln_pre_b"],
            *[vp["stack"][k] for k in _VIS_W_KEYS], lnv["g"], lnv["b"])
    out_shape = jax.ShapeDtypeStruct((Bn, SEQ_V, D_V), jnp.float32)
    return pl.pallas_call(
        _vision_stage_kernel,
        grid=(Bn,),
        out_shape=out_shape,
        in_specs=[_bat_spec(patches.shape)] + [_rep_spec(a.shape) for a in rest],
        out_specs=_bat_spec(out_shape.shape),
        compiler_params=_PARALLEL,
    )(patches, *rest)


def text_stage(text_ids, text_atts, image_embeds, tp):
    """(ids, atts, image_embeds) -> query hidden states (B, NQ, D_T), one pallas_call."""
    Bn, lt = text_ids.shape
    # Embedding gather / position add / query-token concat are one-time JAX glue.
    word = jnp.take(tp["word_emb"], text_ids, axis=0) + tp["pos_emb"][None, :lt, :]
    query = jnp.broadcast_to(tp["query_tokens"], (Bn, NQ, D_T))
    hidden0 = jnp.concatenate([query, word], axis=1)             # (B, S_T, D_T) pre-LN
    attn_mask = jnp.concatenate(
        [jnp.ones((Bn, NQ), jnp.float32), text_atts.astype(jnp.float32)], axis=1)
    self_bias = ((1.0 - attn_mask) * -1e4).reshape(Bn, 1, NQ + lt)

    rest = (tp["emb_ln_g"], tp["emb_ln_b"], *[tp["stack"][k] for k in _TEXT_W_KEYS])
    out_shape = jax.ShapeDtypeStruct((Bn, NQ, D_T), jnp.float32)
    return pl.pallas_call(
        _text_stage_kernel,
        grid=(Bn,),
        out_shape=out_shape,
        in_specs=[_bat_spec(hidden0.shape), _bat_spec(image_embeds.shape),
                  _bat_spec(self_bias.shape)] + [_rep_spec(a.shape) for a in rest],
        out_specs=_bat_spec(out_shape.shape),
        compiler_params=_PARALLEL,
    )(hidden0, image_embeds, self_bias, *rest)


# ----------------------------- parameters ------------------------------------
def init_params(key):
    keys = iter(jax.random.split(key, 256))

    def nrm(shape, std=0.02):
        return jax.random.normal(next(keys), shape, jnp.float32) * std

    def wmat(shape):
        # MXU-operand weights stored in bf16 (accumulation stays f32).
        return nrm(shape).astype(jnp.bfloat16)

    def ones(shape):
        return jnp.ones(shape, jnp.float32)

    def zeros(shape):
        return jnp.zeros(shape, jnp.float32)

    def vis_layer():
        return dict(
            ln1_g=ones((1, D_V)), ln1_b=zeros((1, D_V)),
            wqkv=wmat((D_V, 3 * D_V)), bqkv=zeros((1, 3 * D_V)),   # fused Q|K|V
            wo=wmat((D_V, D_V)), bo=zeros((1, D_V)),
            ln2_g=ones((1, D_V)), ln2_b=zeros((1, D_V)),
            w1=wmat((D_V, V_MLP)), b1=zeros((1, V_MLP)),
            w2=wmat((V_MLP, D_V)), b2=zeros((1, D_V)),
        )

    def text_layer():
        return dict(
            # self attention (fused Q|K|V)
            wqkv=wmat((D_T, 3 * D_T)), bqkv=zeros((1, 3 * D_T)),
            wo=wmat((D_T, D_T)), bo=zeros((1, D_T)),
            attn_ln_g=ones((1, D_T)), attn_ln_b=zeros((1, D_T)),
            # cross attention (query tokens -> image embeds), encoder_width = D_V
            cwq=wmat((D_T, D_T)), cbq=zeros((1, D_T)),
            cwkv=wmat((D_V, 2 * D_T)), cbkv=zeros((1, 2 * D_T)),   # fused K|V
            cwo=wmat((D_T, D_T)), cbo=zeros((1, D_T)),
            cross_ln_g=ones((1, D_T)), cross_ln_b=zeros((1, D_T)),
            # feed-forward (separate branches for query vs. text, Q-Former style)
            wi_q=wmat((D_T, T_FF)), bi_q=zeros((1, T_FF)),
            wo_q=wmat((T_FF, D_T)), bo_q=zeros((1, D_T)),
            ffn_ln_q_g=ones((1, D_T)), ffn_ln_q_b=zeros((1, D_T)),
            wi_t=wmat((D_T, T_FF)), bi_t=zeros((1, T_FF)),
            wo_t=wmat((T_FF, D_T)), bo_t=zeros((1, D_T)),
            ffn_ln_t_g=ones((1, D_T)), ffn_ln_t_b=zeros((1, D_T)),
        )

    vis_layers = [vis_layer() for _ in range(V_LAYERS)]
    vision = dict(
        patch_w=wmat((C_IN * PATCH * PATCH, D_V)),          # conv as matmul, no bias
        cls=nrm((1, D_V)),
        pos=nrm((SEQ_V, D_V)),
        ln_pre_g=ones((1, D_V)), ln_pre_b=zeros((1, D_V)),
        # per-layer weights stacked on a leading (L, ...) axis -> one ref per key
        stack={k: jnp.stack([lp[k] for lp in vis_layers]) for k in _VIS_W_KEYS},
    )

    txt_layers = [text_layer() for _ in range(T_LAYERS)]
    text = dict(
        word_emb=nrm((VOCAB, D_T)),
        pos_emb=nrm((LT, D_T)),
        emb_ln_g=ones((1, D_T)), emb_ln_b=zeros((1, D_T)),
        query_tokens=nrm((1, NQ, D_T)),                          # initializer_range=0.02
        stack={k: jnp.stack([lp[k] for lp in txt_layers]) for k in _TEXT_W_KEYS},
    )

    ln_vision = dict(g=ones((1, D_V)), b=zeros((1, D_V)))
    return dict(vision=vision, text=text, ln_vision=ln_vision)


# ----------------------------- forward pass -----------------------------------
def blip_forward(image, text_ids, text_atts, params):
    image_embeds = vision_stage(image, params["vision"], params["ln_vision"])
    vl_embeddings = text_stage(text_ids, text_atts, image_embeds, params["text"])
    return vl_embeddings                                         # (B, NQ, D_T)


# ----------------------------- main -------------------------------------------
if __name__ == "__main__":
    key = jax.random.PRNGKey(0)
    kp, ki, kt = jax.random.split(key, 3)

    params = init_params(kp)
    image = jax.random.normal(ki, (B, C_IN, IMG, IMG), jnp.float32)   # NCHW
    # TODO(synk): deterministic stand-in for BertTokenizer output.
    text_ids = jax.random.randint(kt, (B, LT), 0, VOCAB)
    text_atts = jnp.ones((B, LT), jnp.int32).at[1, 6:].set(0)          # some padding

    forward = jax.jit(blip_forward)
    vl = forward(image, text_ids, text_atts, params)
    vl = jax.block_until_ready(vl)
    assert vl.shape == (B, NQ, D_T), vl.shape
    assert bool(jnp.all(jnp.isfinite(vl)))
    print("KERNEL_OK")
</pallas_src>

<mosaic_0001>
module attributes {stable_mosaic.version = 11 : i64} {
  func.func @_vision_stage_kernel(%arg0: i32, %arg1: memref<1x16x192xf32, #tpu.memory_space<vmem>>, %arg2: memref<192x64xbf16, #tpu.memory_space<vmem>>, %arg3: memref<1x64xf32, #tpu.memory_space<vmem>>, %arg4: memref<16x64xf32, #tpu.memory_space<vmem>>, %arg5: memref<1x64xf32, #tpu.memory_space<vmem>>, %arg6: memref<1x64xf32, #tpu.memory_space<vmem>>, %arg7: memref<2x1x64xf32, #tpu.memory_space<vmem>>, %arg8: memref<2x1x64xf32, #tpu.memory_space<vmem>>, %arg9: memref<2x64x192xbf16, #tpu.memory_space<vmem>>, %arg10: memref<2x1x192xf32, #tpu.memory_space<vmem>>, %arg11: memref<2x64x64xbf16, #tpu.memory_space<vmem>>, %arg12: memref<2x1x64xf32, #tpu.memory_space<vmem>>, %arg13: memref<2x1x64xf32, #tpu.memory_space<vmem>>, %arg14: memref<2x1x64xf32, #tpu.memory_space<vmem>>, %arg15: memref<2x64x256xbf16, #tpu.memory_space<vmem>>, %arg16: memref<2x1x256xf32, #tpu.memory_space<vmem>>, %arg17: memref<2x256x64xbf16, #tpu.memory_space<vmem>>, %arg18: memref<2x1x64xf32, #tpu.memory_space<vmem>>, %arg19: memref<1x64xf32, #tpu.memory_space<vmem>>, %arg20: memref<1x64xf32, #tpu.memory_space<vmem>>, %arg21: memref<1x17x64xf32, #tpu.memory_space<vmem>>) attributes {dimension_semantics = [#tpu.dimension_semantics<parallel>], iteration_bounds = array<i64: 2>, scalar_prefetch = 0 : i64, scratch_operands = 0 : i64, tpu.core_type = #tpu.core_type<tc>, window_params = [{transform_indices = @transform_0, window_bounds = array<i64: 1, 16, 192>}, {pipeline_mode = #tpu.pipeline_mode<synchronous>, transform_indices = @transform_1, window_bounds = array<i64: 192, 64>}, {pipeline_mode = #tpu.pipeline_mode<synchronous>, transform_indices = @transform_2, window_bounds = array<i64: 1, 64>}, {pipeline_mode = #tpu.pipeline_mode<synchronous>, transform_indices = @transform_3, window_bounds = array<i64: 16, 64>}, {pipeline_mode = #tpu.pipeline_mode<synchronous>, transform_indices = @transform_4, window_bounds = array<i64: 1, 64>}, {pipeline_mode = #tpu.pipeline_mode<synchronous>, transform_indices = @transform_5, window_bounds = array<i64: 1, 64>}, {pipeline_mode = #tpu.pipeline_mode<synchronous>, transform_indices = @transform_6, window_bounds = array<i64: 2, 1, 64>}, {pipeline_mode = #tpu.pipeline_mode<synchronous>, transform_indices = @transform_7, window_bounds = array<i64: 2, 1, 64>}, {pipeline_mode = #tpu.pipeline_mode<synchronous>, transform_indices = @transform_8, window_bounds = array<i64: 2, 64, 192>}, {pipeline_mode = #tpu.pipeline_mode<synchronous>, transform_indices = @transform_9, window_bounds = array<i64: 2, 1, 192>}, {pipeline_mode = #tpu.pipeline_mode<synchronous>, transform_indices = @transform_10, window_bounds = array<i64: 2, 64, 64>}, {pipeline_mode = #tpu.pipeline_mode<synchronous>, transform_indices = @transform_11, window_bounds = array<i64: 2, 1, 64>}, {pipeline_mode = #tpu.pipeline_mode<synchronous>, transform_indices = @transform_12, window_bounds = array<i64: 2, 1, 64>}, {pipeline_mode = #tpu.pipeline_mode<synchronous>, transform_indices = @transform_13, window_bounds = array<i64: 2, 1, 64>}, {pipeline_mode = #tpu.pipeline_mode<synchronous>, transform_indices = @transform_14, window_bounds = array<i64: 2, 64, 256>}, {pipeline_mode = #tpu.pipeline_mode<synchronous>, transform_indices = @transform_15, window_bounds = array<i64: 2, 1, 256>}, {pipeline_mode = #tpu.pipeline_mode<synchronous>, transform_indices = @transform_16, window_bounds = array<i64: 2, 256, 64>}, {pipeline_mode = #tpu.pipeline_mode<synchronous>, transform_indices = @transform_17, window_bounds = array<i64: 2, 1, 64>}, {pipeline_mode = #tpu.pipeline_mode<synchronous>, transform_indices = @transform_18, window_bounds = array<i64: 1, 64>}, {pipeline_mode = #tpu.pipeline_mode<synchronous>, transform_indices = @transform_19, window_bounds = array<i64: 1, 64>}, {transform_indices = @transform_20, window_bounds = array<i64: 1, 17, 64>}]} {
    %c0 = arith.constant 0 : index
    %c0_0 = arith.constant 0 : index
    %c0_1 = arith.constant 0 : index
    %0 = vector.load %arg1[%c0, %c0_0, %c0_1] : memref<1x16x192xf32, #tpu.memory_space<vmem>>, vector<1x16x192xf32>
    %1 = vector.shape_cast %0 : vector<1x16x192xf32> to vector<16x192xf32>
    %2 = arith.truncf %1 : vector<16x192xf32> to vector<16x192xbf16>
    %c0_2 = arith.constant 0 : index
    %c0_3 = arith.constant 0 : index
    %3 = vector.load %arg2[%c0_2, %c0_3] : memref<192x64xbf16, #tpu.memory_space<vmem>>, vector<192x64xbf16>
    %cst = arith.constant dense<0.000000e+00> : vector<16x64xf32>
    %4 = tpu.matmul %2, %3, %cst {dimension_numbers = #tpu.dot_dimension_numbers<[1], [0], [0], [1], [0, 0, 1, 1], [], []>} : vector<16x192xbf16>, vector<192x64xbf16>, vector<16x64xf32> -> vector<16x64xf32>
    %c0_4 = arith.constant 0 : index
    %c0_5 = arith.constant 0 : index
    %5 = vector.load %arg4[%c0_4, %c0_5] : memref<16x64xf32, #tpu.memory_space<vmem>>, vector<16x64xf32>
    %6 = arith.addf %4, %5 : vector<16x64xf32>
    %c0_6 = arith.constant 0 : index
    %c0_7 = arith.constant 0 : index
    %7 = vector.load %arg3[%c0_6, %c0_7] : memref<1x64xf32, #tpu.memory_space<vmem>>, vector<1x64xf32>
    %8 = tpu.concatenate %7, %6 in 0 : vector<1x64xf32>, vector<16x64xf32> -> vector<17x64xf32>
    %c0_8 = arith.constant 0 : index
    %c0_9 = arith.constant 0 : index
    %9 = vector.load %arg5[%c0_8, %c0_9] : memref<1x64xf32, #tpu.memory_space<vmem>>, vector<1x64xf32>
    %c0_10 = arith.constant 0 : index
    %c0_11 = arith.constant 0 : index
    %10 = vector.load %arg6[%c0_10, %c0_11] : memref<1x64xf32, #tpu.memory_space<vmem>>, vector<1x64xf32>
    %cst_12 = arith.constant dense<0.000000e+00> : vector<17xf32>
    %11 = vector.multi_reduction <add>, %8, %cst_12 [1] : vector<17x64xf32> to vector<17xf32>
    %12 = vector.shape_cast %11 : vector<17xf32> to vector<17x1xf32>
    %cst_13 = arith.constant 6.400000e+01 : f32
    %13 = vector.broadcast %cst_13 : f32 to vector<17x1xf32>
    %14 = arith.divf %12, %13 : vector<17x1xf32>
    %15 = vector.broadcast %14 : vector<17x1xf32> to vector<17x64xf32>
    %16 = arith.subf %8, %15 : vector<17x64xf32>
    %17 = arith.mulf %16, %16 : vector<17x64xf32>
    %cst_14 = arith.constant dense<0.000000e+00> : vector<17xf32>
    %18 = vector.multi_reduction <add>, %17, %cst_14 [1] : vector<17x64xf32> to vector<17xf32>
    %19 = vector.shape_cast %18 : vector<17xf32> to vector<17x1xf32>
    %cst_15 = arith.constant 6.400000e+01 : f32
    %20 = vector.broadcast %cst_15 : f32 to vector<17x1xf32>
    %21 = arith.divf %19, %20 : vector<17x1xf32>
    %22 = vector.broadcast %14 : vector<17x1xf32> to vector<17x64xf32>
    %23 = arith.subf %8, %22 : vector<17x64xf32>
    %cst_16 = arith.constant 9.99999974E-6 : f32
    %24 = vector.broadcast %cst_16 : f32 to vector<17x1xf32>
    %25 = arith.addf %21, %24 : vector<17x1xf32>
    %26 = math.rsqrt %25 : vector<17x1xf32>
    %27 = vector.broadcast %26 : vector<17x1xf32> to vector<17x64xf32>
    %28 = arith.mulf %23, %27 : vector<17x64xf32>
    %29 = vector.broadcast %9 : vector<1x64xf32> to vector<17x64xf32>
    %30 = arith.mulf %28, %29 : vector<17x64xf32>
    %31 = vector.broadcast %10 : vector<1x64xf32> to vector<17x64xf32>
    %32 = arith.addf %30, %31 : vector<17x64xf32>
    %c0_17 = arith.constant 0 : index
    %c0_18 = arith.constant 0 : index
    %c0_19 = arith.constant 0 : index
    %33 = vector.load %arg7[%c0_17, %c0_18, %c0_19] : memref<2x1x64xf32, #tpu.memory_space<vmem>>, vector<1x1x64xf32>
    %34 = vector.shape_cast %33 : vector<1x1x64xf32> to vector<1x64xf32>
    %c0_20 = arith.constant 0 : index
    %c0_21 = arith.constant 0 : index
    %c0_22 = arith.constant 0 : index
    %35 = vector.load %arg8[%c0_20, %c0_21, %c0_22] : memref<2x1x64xf32, #tpu.memory_space<vmem>>, vector<1x1x64xf32>
    %36 = vector.shape_cast %35 : vector<1x1x64xf32> to vector<1x64xf32>
    %cst_23 = arith.constant dense<0.000000e+00> : vector<17xf32>
    %37 = vector.multi_reduction <add>, %32, %cst_23 [1] : vector<17x64xf32> to vector<17xf32>
    %38 = vector.shape_cast %37 : vector<17xf32> to vector<17x1xf32>
    %cst_24 = arith.constant 6.400000e+01 : f32
    %39 = vector.broadcast %cst_24 : f32 to vector<17x1xf32>
    %40 = arith.divf %38, %39 : vector<17x1xf32>
    %41 = vector.broadcast %40 : vector<17x1xf32> to vector<17x64xf32>
    %42 = arith.subf %32, %41 : vector<17x64xf32>
    %43 = arith.mulf %42, %42 : vector<17x64xf32>
    %cst_25 = arith.constant dense<0.000000e+00> : vector<17xf32>
    %44 = vector.multi_reduction <add>, %43, %cst_25 [1] : vector<17x64xf32> to vector<17xf32>
    %45 = vector.shape_cast %44 : vector<17xf32> to vector<17x1xf32>
    %cst_26 = arith.constant 6.400000e+01 : f32
    %46 = vector.broadcast %cst_26 : f32 to vector<17x1xf32>
    %47 = arith.divf %45, %46 : vector<17x1xf32>
    %48 = vector.broadcast %40 : vector<17x1xf32> to vector<17x64xf32>
    %49 = arith.subf %32, %48 : vector<17x64xf32>
    %cst_27 = arith.constant 9.99999974E-6 : f32
    %50 = vector.broadcast %cst_27 : f32 to vector<17x1xf32>
    %51 = arith.addf %47, %50 : vector<17x1xf32>
    %52 = math.rsqrt %51 : vector<17x1xf32>
    %53 = vector.broadcast %52 : vector<17x1xf32> to vector<17x64xf32>
    %54 = arith.mulf %49, %53 : vector<17x64xf32>
    %55 = vector.broadcast %34 : vector<1x64xf32> to vector<17x64xf32>
    %56 = arith.mulf %54, %55 : vector<17x64xf32>
    %57 = vector.broadcast %36 : vector<1x64xf32> to vector<17x64xf32>
    %58 = arith.addf %56, %57 : vector<17x64xf32>
    %59 = arith.truncf %58 : vector<17x64xf32> to vector<17x64xbf16>
    %c0_28 = arith.constant 0 : index
    %c0_29 = arith.constant 0 : index
    %c0_30 = arith.constant 0 : index
    %60 = vector.load %arg9[%c0_28, %c0_29, %c0_30] : memref<2x64x192xbf16, #tpu.memory_space<vmem>>, vector<1x64x192xbf16>
    %61 = vector.shape_cast %60 : vector<1x64x192xbf16> to vector<64x192xbf16>
    %cst_31 = arith.constant dense<0.000000e+00> : vector<17x192xf32>
    %62 = tpu.matmul %59, %61, %cst_31 {dimension_numbers = #tpu.dot_dimension_numbers<[1], [0], [0], [1], [0, 0, 1, 1], [], []>} : vector<17x64xbf16>, vector<64x192xbf16>, vector<17x192xf32> -> vector<17x192xf32>
    %c0_32 = arith.constant 0 : index
    %c0_33 = arith.constant 0 : index
    %c0_34 = arith.constant 0 : index
    %63 = vector.load %arg10[%c0_32, %c0_33, %c0_34] : memref<2x1x192xf32, #tpu.memory_space<vmem>>, vector<1x1x192xf32>
    %64 = vector.shape_cast %63 : vector<1x1x192xf32> to vector<1x192xf32>
    %65 = vector.broadcast %64 : vector<1x192xf32> to vector<17x192xf32>
    %66 = arith.addf %62, %65 : vector<17x192xf32>
    %67 = vector.extract_strided_slice %66 {offsets = [0, 0], sizes = [17, 64], strides = [1, 1]} : vector<17x192xf32> to vector<17x64xf32>
    %68 = vector.extract_strided_slice %66 {offsets = [0, 64], sizes = [17, 64], strides = [1, 1]} : vector<17x192xf32> to vector<17x64xf32>
    %69 = vector.extract_strided_slice %66 {offsets = [0, 128], sizes = [17, 64], strides = [1, 1]} : vector<17x192xf32> to vector<17x64xf32>
    %c0_35 = arith.constant 0 : index
    %c0_36 = arith.constant 0 : index
    %c0_37 = arith.constant 0 : index
    %70 = vector.load %arg11[%c0_35, %c0_36, %c0_37] : memref<2x64x64xbf16, #tpu.memory_space<vmem>>, vector<1x64x64xbf16>
    %71 = vector.shape_cast %70 : vector<1x64x64xbf16> to vector<64x64xbf16>
    %c0_38 = arith.constant 0 : index
    %c0_39 = arith.constant 0 : index
    %c0_40 = arith.constant 0 : index
    %72 = vector.load %arg12[%c0_38, %c0_39, %c0_40] : memref<2x1x64xf32, #tpu.memory_space<vmem>>, vector<1x1x64xf32>
    %73 = vector.shape_cast %72 : vector<1x1x64xf32> to vector<1x64xf32>
    %cst_41 = arith.constant 2.500000e-01 : f32
    %74 = vector.broadcast %cst_41 : f32 to vector<17x64xf32>
    %75 = arith.mulf %67, %74 : vector<17x64xf32>
    %76 = arith.truncf %75 : vector<17x64xf32> to vector<17x64xbf16>
    %77 = arith.truncf %68 : vector<17x64xf32> to vector<17x64xbf16>
    %78 = arith.truncf %69 : vector<17x64xf32> to vector<17x64xbf16>
    %79 = vector.extract_strided_slice %76 {offsets = [0, 0], sizes = [17, 16], strides = [1, 1]} : vector<17x64xbf16> to vector<17x16xbf16>
    %80 = vector.extract_strided_slice %77 {offsets = [0, 0], sizes = [17, 16], strides = [1, 1]} : vector<17x64xbf16> to vector<17x16xbf16>
    "tpu.trace_start"() <{level = 10 : i32, message = "qd,kd->qk"}> : () -> ()
    %cst_42 = arith.constant dense<0.000000e+00> : vector<17x17xf32>
    %81 = tpu.matmul %79, %80, %cst_42 {dimension_numbers = #tpu.dot_dimension_numbers<[1], [1], [0], [0], [0, 0, 1, 0], [], []>} : vector<17x16xbf16>, vector<17x16xbf16>, vector<17x17xf32> -> vector<17x17xf32>
    "tpu.trace_stop"() : () -> ()
    %cst_43 = arith.constant dense<0xFF800000> : vector<17xf32>
    %82 = vector.multi_reduction <maximumf>, %81, %cst_43 [1] : vector<17x17xf32> to vector<17xf32>
    %83 = vector.shape_cast %82 : vector<17xf32> to vector<17x1xf32>
    %84 = vector.broadcast %83 : vector<17x1xf32> to vector<17x17xf32>
    %85 = arith.subf %81, %84 : vector<17x17xf32>
    %86 = math.exp %85 : vector<17x17xf32>
    %cst_44 = arith.constant dense<0.000000e+00> : vector<17xf32>
    %87 = vector.multi_reduction <add>, %86, %cst_44 [1] : vector<17x17xf32> to vector<17xf32>
    %88 = vector.shape_cast %87 : vector<17xf32> to vector<17x1xf32>
    %89 = tpu.reciprocal %88 {approx = true} : vector<17x1xf32> -> vector<17x1xf32>
    %90 = vector.broadcast %89 : vector<17x1xf32> to vector<17x17xf32>
    %91 = arith.mulf %86, %90 : vector<17x17xf32>
    %92 = arith.truncf %91 : vector<17x17xf32> to vector<17x17xbf16>
    %93 = vector.extract_strided_slice %78 {offsets = [0, 0], sizes = [17, 16], strides = [1, 1]} : vector<17x64xbf16> to vector<17x16xbf16>
    %cst_45 = arith.constant dense<0.000000e+00> : vector<17x16xf32>
    %94 = tpu.matmul %92, %93, %cst_45 {dimension_numbers = #tpu.dot_dimension_numbers<[1], [0], [0], [1], [0, 0, 1, 1], [], []>} : vector<17x17xbf16>, vector<17x16xbf16>, vector<17x16xf32> -> vector<17x16xf32>
    %95 = vector.extract_strided_slice %76 {offsets = [0, 16], sizes = [17, 16], strides = [1, 1]} : vector<17x64xbf16> to vector<17x16xbf16>
    %96 = vector.extract_strided_slice %77 {offsets = [0, 16], sizes = [17, 16], strides = [1, 1]} : vector<17x64xbf16> to vector<17x16xbf16>
    "tpu.trace_start"() <{level = 10 : i32, message = "qd,kd->qk"}> : () -> ()
    %cst_46 = arith.constant dense<0.000000e+00> : vector<17x17xf32>
    %97 = tpu.matmul %95, %96, %cst_46 {dimension_numbers = #tpu.dot_dimension_numbers<[1], [1], [0], [0], [0, 0, 1, 0], [], []>} : vector<17x16xbf16>, vector<17x16xbf16>, vector<17x17xf32> -> vector<17x17xf32>
    "tpu.trace_stop"() : () -> ()
    %cst_47 = arith.constant dense<0xFF800000> : vector<17xf32>
    %98 = vector.multi_reduction <maximumf>, %97, %cst_47 [1] : vector<17x17xf32> to vector<17xf32>
    %99 = vector.shape_cast %98 : vector<17xf32> to vector<17x1xf32>
    %100 = vector.broadcast %99 : vector<17x1xf32> to vector<17x17xf32>
    %101 = arith.subf %97, %100 : vector<17x17xf32>
    %102 = math.exp %101 : vector<17x17xf32>
    %cst_48 = arith.constant dense<0.000000e+00> : vector<17xf32>
    %103 = vector.multi_reduction <add>, %102, %cst_48 [1] : vector<17x17xf32> to vector<17xf32>
    %104 = vector.shape_cast %103 : vector<17xf32> to vector<17x1xf32>
    %105 = tpu.reciprocal %104 {approx = true} : vector<17x1xf32> -> vector<17x1xf32>
    %106 = vector.broadcast %105 : vector<17x1xf32> to vector<17x17xf32>
    %107 = arith.mulf %102, %106 : vector<17x17xf32>
    %108 = arith.truncf %107 : vector<17x17xf32> to vector<17x17xbf16>
    %109 = vector.extract_strided_slice %78 {offsets = [0, 16], sizes = [17, 16], strides = [1, 1]} : vector<17x64xbf16> to vector<17x16xbf16>
    %cst_49 = arith.constant dense<0.000000e+00> : vector<17x16xf32>
    %110 = tpu.matmul %108, %109, %cst_49 {dimension_numbers = #tpu.dot_dimension_numbers<[1], [0], [0], [1], [0, 0, 1, 1], [], []>} : vector<17x17xbf16>, vector<17x16xbf16>, vector<17x16xf32> -> vector<17x16xf32>
    %111 = vector.extract_strided_slice %76 {offsets = [0, 32], sizes = [17, 16], strides = [1, 1]} : vector<17x64xbf16> to vector<17x16xbf16>
    %112 = vector.extract_strided_slice %77 {offsets = [0, 32], sizes = [17, 16], strides = [1, 1]} : vector<17x64xbf16> to vector<17x16xbf16>
    "tpu.trace_start"() <{level = 10 : i32, message = "qd,kd->qk"}> : () -> ()
    %cst_50 = arith.constant dense<0.000000e+00> : vector<17x17xf32>
    %113 = tpu.matmul %111, %112, %cst_50 {dimension_numbers = #tpu.dot_dimension_numbers<[1], [1], [0], [0], [0, 0, 1, 0], [], []>} : vector<17x16xbf16>, vector<17x16xbf16>, vector<17x17xf32> -> vector<17x17xf32>
    "tpu.trace_stop"() : () -> ()
    %cst_51 = arith.constant dense<0xFF800000> : vector<17xf32>
    %114 = vector.multi_reduction <maximumf>, %113, %cst_51 [1] : vector<17x17xf32> to vector<17xf32>
    %115 = vector.shape_cast %114 : vector<17xf32> to vector<17x1xf32>
    %116 = vector.broadcast %115 : vector<17x1xf32> to vector<17x17xf32>
    %117 = arith.subf %113, %116 : vector<17x17xf32>
    %118 = math.exp %117 : vector<17x17xf32>
    %cst_52 = arith.constant dense<0.000000e+00> : vector<17xf32>
    %119 = vector.multi_reduction <add>, %118, %cst_52 [1] : vector<17x17xf32> to vector<17xf32>
    %120 = vector.shape_cast %119 : vector<17xf32> to vector<17x1xf32>
    %121 = tpu.reciprocal %120 {approx = true} : vector<17x1xf32> -> vector<17x1xf32>
    %122 = vector.broadcast %121 : vector<17x1xf32> to vector<17x17xf32>
    %123 = arith.mulf %118, %122 : vector<17x17xf32>
    %124 = arith.truncf %123 : vector<17x17xf32> to vector<17x17xbf16>
    %125 = vector.extract_strided_slice %78 {offsets = [0, 32], sizes = [17, 16], strides = [1, 1]} : vector<17x64xbf16> to vector<17x16xbf16>
    %cst_53 = arith.constant dense<0.000000e+00> : vector<17x16xf32>
    %126 = tpu.matmul %124, %125, %cst_53 {dimension_numbers = #tpu.dot_dimension_numbers<[1], [0], [0], [1], [0, 0, 1, 1], [], []>} : vector<17x17xbf16>, vector<17x16xbf16>, vector<17x16xf32> -> vector<17x16xf32>
    %127 = vector.extract_strided_slice %76 {offsets = [0, 48], sizes = [17, 16], strides = [1, 1]} : vector<17x64xbf16> to vector<17x16xbf16>
    %128 = vector.extract_strided_slice %77 {offsets = [0, 48], sizes = [17, 16], strides = [1, 1]} : vector<17x64xbf16> to vector<17x16xbf16>
    "tpu.trace_start"() <{level = 10 : i32, message = "qd,kd->qk"}> : () -> ()
    %cst_54 = arith.constant dense<0.000000e+00> : vector<17x17xf32>
    %129 = tpu.matmul %127, %128, %cst_54 {dimension_numbers = #tpu.dot_dimension_numbers<[1], [1], [0], [0], [0, 0, 1, 0], [], []>} : vector<17x16xbf16>, vector<17x16xbf16>, vector<17x17xf32> -> vector<17x17xf32>
    "tpu.trace_stop"() : () -> ()
    %cst_55 = arith.constant dense<0xFF800000> : vector<17xf32>
    %130 = vector.multi_reduction <maximumf>, %129, %cst_55 [1] : vector<17x17xf32> to vector<17xf32>
    %131 = vector.shape_cast %130 : vector<17xf32> to vector<17x1xf32>
    %132 = vector.broadcast %131 : vector<17x1xf32> to vector<17x17xf32>
    %133 = arith.subf %129, %132 : vector<17x17xf32>
    %134 = math.exp %133 : vector<17x17xf32>
    %cst_56 = arith.constant dense<0.000000e+00> : vector<17xf32>
    %135 = vector.multi_reduction <add>, %134, %cst_56 [1] : vector<17x17xf32> to vector<17xf32>
    %136 = vector.shape_cast %135 : vector<17xf32> to vector<17x1xf32>
    %137 = tpu.reciprocal %136 {approx = true} : vector<17x1xf32> -> vector<17x1xf32>
    %138 = vector.broadcast %137 : vector<17x1xf32> to vector<17x17xf32>
    %139 = arith.mulf %134, %138 : vector<17x17xf32>
    %140 = arith.truncf %139 : vector<17x17xf32> to vector<17x17xbf16>
    %141 = vector.extract_strided_slice %78 {offsets = [0, 48], sizes = [17, 16], strides = [1, 1]} : vector<17x64xbf16> to vector<17x16xbf16>
    %cst_57 = arith.constant dense<0.000000e+00> : vector<17x16xf32>
    %142 = tpu.matmul %140, %141, %cst_57 {dimension_numbers = #tpu.dot_dimension_numbers<[1], [0], [0], [1], [0, 0, 1, 1], [], []>} : vector<17x17xbf16>, vector<17x16xbf16>, vector<17x16xf32> -> vector<17x16xf32>
    %143 = tpu.concatenate %94, %110, %126, %142 in 1 : vector<17x16xf32>, vector<17x16xf32>, vector<17x16xf32>, vector<17x16xf32> -> vector<17x64xf32>
    %144 = arith.truncf %143 : vector<17x64xf32> to vector<17x64xbf16>
    %cst_58 = arith.constant dense<0.000000e+00> : vector<17x64xf32>
    %145 = tpu.matmul %144, %71, %cst_58 {dimension_numbers = #tpu.dot_dimension_numbers<[1], [0], [0], [1], [0, 0, 1, 1], [], []>} : vector<17x64xbf16>, vector<64x64xbf16>, vector<17x64xf32> -> vector<17x64xf32>
    %146 = vector.broadcast %73 : vector<1x64xf32> to vector<17x64xf32>
    %147 = arith.addf %145, %146 : vector<17x64xf32>
    %148 = arith.addf %32, %147 : vector<17x64xf32>
    %c0_59 = arith.constant 0 : index
    %c0_60 = arith.constant 0 : index
    %c0_61 = arith.constant 0 : index
    %149 = vector.load %arg13[%c0_59, %c0_60, %c0_61] : memref<2x1x64xf32, #tpu.memory_space<vmem>>, vector<1x1x64xf32>
    %150 = vector.shape_cast %149 : vector<1x1x64xf32> to vector<1x64xf32>
    %c0_62 = arith.constant 0 : index
    %c0_63 = arith.constant 0 : index
    %c0_64 = arith.constant 0 : index
    %151 = vector.load %arg14[%c0_62, %c0_63, %c0_64] : memref<2x1x64xf32, #tpu.memory_space<vmem>>, vector<1x1x64xf32>
    %152 = vector.shape_cast %151 : vector<1x1x64xf32> to vector<1x64xf32>
    %cst_65 = arith.constant dense<0.000000e+00> : vector<17xf32>
    %153 = vector.multi_reduction <add>, %148, %cst_65 [1] : vector<17x64xf32> to vector<17xf32>
    %154 = vector.shape_cast %153 : vector<17xf32> to vector<17x1xf32>
    %cst_66 = arith.constant 6.400000e+01 : f32
    %155 = vector.broadcast %cst_66 : f32 to vector<17x1xf32>
    %156 = arith.divf %154, %155 : vector<17x1xf32>
    %157 = vector.broadcast %156 : vector<17x1xf32> to vector<17x64xf32>
    %158 = arith.subf %148, %157 : vector<17x64xf32>
    %159 = arith.mulf %158, %158 : vector<17x64xf32>
    %cst_67 = arith.constant dense<0.000000e+00> : vector<17xf32>
    %160 = vector.multi_reduction <add>, %159, %cst_67 [1] : vector<17x64xf32> to vector<17xf32>
    %161 = vector.shape_cast %160 : vector<17xf32> to vector<17x1xf32>
    %cst_68 = arith.constant 6.400000e+01 : f32
    %162 = vector.broadcast %cst_68 : f32 to vector<17x1xf32>
    %163 = arith.divf %161, %162 : vector<17x1xf32>
    %164 = vector.broadcast %156 : vector<17x1xf32> to vector<17x64xf32>
    %165 = arith.subf %148, %164 : vector<17x64xf32>
    %cst_69 = arith.constant 9.99999974E-6 : f32
    %166 = vector.broadcast %cst_69 : f32 to vector<17x1xf32>
    %167 = arith.addf %163, %166 : vector<17x1xf32>
    %168 = math.rsqrt %167 : vector<17x1xf32>
    %169 = vector.broadcast %168 : vector<17x1xf32> to vector<17x64xf32>
    %170 = arith.mulf %165, %169 : vector<17x64xf32>
    %171 = vector.broadcast %150 : vector<1x64xf32> to vector<17x64xf32>
    %172 = arith.mulf %170, %171 : vector<17x64xf32>
    %173 = vector.broadcast %152 : vector<1x64xf32> to vector<17x64xf32>
    %174 = arith.addf %172, %173 : vector<17x64xf32>
    %175 = arith.truncf %174 : vector<17x64xf32> to vector<17x64xbf16>
    %c0_70 = arith.constant 0 : index
    %c0_71 = arith.constant 0 : index
    %c0_72 = arith.constant 0 : index
    %176 = vector.load %arg15[%c0_70, %c0_71, %c0_72] : memref<2x64x256xbf16, #tpu.memory_space<vmem>>, vector<1x64x256xbf16>
    %177 = vector.shape_cast %176 : vector<1x64x256xbf16> to vector<64x256xbf16>
    %cst_73 = arith.constant dense<0.000000e+00> : vector<17x256xf32>
    %178 = tpu.matmul %175, %177, %cst_73 {dimension_numbers = #tpu.dot_dimension_numbers<[1], [0], [0], [1], [0, 0, 1, 1], [], []>} : vector<17x64xbf16>, vector<64x256xbf16>, vector<17x256xf32> -> vector<17x256xf32>
    %c0_74 = arith.constant 0 : index
    %c0_75 = arith.constant 0 : index
    %c0_76 = arith.constant 0 : index
    %179 = vector.load %arg16[%c0_74, %c0_75, %c0_76] : memref<2x1x256xf32, #tpu.memory_space<vmem>>, vector<1x1x256xf32>
    %180 = vector.shape_cast %179 : vector<1x1x256xf32> to vector<1x256xf32>
    %181 = vector.broadcast %180 : vector<1x256xf32> to vector<17x256xf32>
    %182 = arith.addf %178, %181 : vector<17x256xf32>
    %183 = arith.mulf %182, %182 : vector<17x256xf32>
    %184 = arith.mulf %182, %183 : vector<17x256xf32>
    %cst_77 = arith.constant 4.471500e-02 : f32
    %185 = vector.broadcast %cst_77 : f32 to vector<17x256xf32>
    %186 = arith.mulf %185, %184 : vector<17x256xf32>
    %187 = arith.addf %182, %186 : vector<17x256xf32>
    %cst_78 = arith.constant 0.797884583 : f32
    %188 = vector.broadcast %cst_78 : f32 to vector<17x256xf32>
    %189 = arith.mulf %188, %187 : vector<17x256xf32>
    %190 = math.tanh %189 : vector<17x256xf32>
    %cst_79 = arith.constant 1.000000e+00 : f32
    %191 = vector.broadcast %cst_79 : f32 to vector<17x256xf32>
    %192 = arith.addf %191, %190 : vector<17x256xf32>
    %cst_80 = arith.constant 5.000000e-01 : f32
    %193 = vector.broadcast %cst_80 : f32 to vector<17x256xf32>
    %194 = arith.mulf %193, %192 : vector<17x256xf32>
    %195 = arith.mulf %182, %194 : vector<17x256xf32>
    %196 = arith.truncf %195 : vector<17x256xf32> to vector<17x256xbf16>
    %c0_81 = arith.constant 0 : index
    %c0_82 = arith.constant 0 : index
    %c0_83 = arith.constant 0 : index
    %197 = vector.load %arg17[%c0_81, %c0_82, %c0_83] : memref<2x256x64xbf16, #tpu.memory_space<vmem>>, vector<1x256x64xbf16>
    %198 = vector.shape_cast %197 : vector<1x256x64xbf16> to vector<256x64xbf16>
    %cst_84 = arith.constant dense<0.000000e+00> : vector<17x64xf32>
    %199 = tpu.matmul %196, %198, %cst_84 {dimension_numbers = #tpu.dot_dimension_numbers<[1], [0], [0], [1], [0, 0, 1, 1], [], []>} : vector<17x256xbf16>, vector<256x64xbf16>, vector<17x64xf32> -> vector<17x64xf32>
    %200 = arith.addf %148, %199 : vector<17x64xf32>
    %c0_85 = arith.constant 0 : index
    %c0_86 = arith.constant 0 : index
    %c0_87 = arith.constant 0 : index
    %201 = vector.load %arg18[%c0_85, %c0_86, %c0_87] : memref<2x1x64xf32, #tpu.memory_space<vmem>>, vector<1x1x64xf32>
    %202 = vector.shape_cast %201 : vector<1x1x64xf32> to vector<1x64xf32>
    %203 = vector.broadcast %202 : vector<1x64xf32> to vector<17x64xf32>
    %204 = arith.addf %200, %203 : vector<17x64xf32>
    %c1 = arith.constant 1 : index
    %c0_88 = arith.constant 0 : index
    %c0_89 = arith.constant 0 : index
    %205 = vector.load %arg7[%c1, %c0_88, %c0_89] : memref<2x1x64xf32, #tpu.memory_space<vmem>>, vector<1x1x64xf32>
    %206 = vector.shape_cast %205 : vector<1x1x64xf32> to vector<1x64xf32>
    %c1_90 = arith.constant 1 : index
    %c0_91 = arith.constant 0 : index
    %c0_92 = arith.constant 0 : index
    %207 = vector.load %arg8[%c1_90, %c0_91, %c0_92] : memref<2x1x64xf32, #tpu.memory_space<vmem>>, vector<1x1x64xf32>
    %208 = vector.shape_cast %207 : vector<1x1x64xf32> to vector<1x64xf32>
    %cst_93 = arith.constant dense<0.000000e+00> : vector<17xf32>
    %209 = vector.multi_reduction <add>, %204, %cst_93 [1] : vector<17x64xf32> to vector<17xf32>
    %210 = vector.shape_cast %209 : vector<17xf32> to vector<17x1xf32>
    %cst_94 = arith.constant 6.400000e+01 : f32
    %211 = vector.broadcast %cst_94 : f32 to vector<17x1xf32>
    %212 = arith.divf %210, %211 : vector<17x1xf32>
    %213 = vector.broadcast %212 : vector<17x1xf32> to vector<17x64xf32>
    %214 = arith.subf %204, %213 : vector<17x64xf32>
    %215 = arith.mulf %214, %214 : vector<17x64xf32>
    %cst_95 = arith.constant dense<0.000000e+00> : vector<17xf32>
    %216 = vector.multi_reduction <add>, %215, %cst_95 [1] : vector<17x64xf32> to vector<17xf32>
    %217 = vector.shape_cast %216 : vector<17xf32> to vector<17x1xf32>
    %cst_96 = arith.constant 6.400000e+01 : f32
    %218 = vector.broadcast %cst_96 : f32 to vector<17x1xf32>
    %219 = arith.divf %217, %218 : vector<17x1xf32>
    %220 = vector.broadcast %212 : vector<17x1xf32> to vector<17x64xf32>
    %221 = arith.subf %204, %220 : vector<17x64xf32>
    %cst_97 = arith.constant 9.99999974E-6 : f32
    %222 = vector.broadcast %cst_97 : f32 to vector<17x1xf32>
    %223 = arith.addf %219, %222 : vector<17x1xf32>
    %224 = math.rsqrt %223 : vector<17x1xf32>
    %225 = vector.broadcast %224 : vector<17x1xf32> to vector<17x64xf32>
    %226 = arith.mulf %221, %225 : vector<17x64xf32>
    %227 = vector.broadcast %206 : vector<1x64xf32> to vector<17x64xf32>
    %228 = arith.mulf %226, %227 : vector<17x64xf32>
    %229 = vector.broadcast %208 : vector<1x64xf32> to vector<17x64xf32>
    %230 = arith.addf %228, %229 : vector<17x64xf32>
    %231 = arith.truncf %230 : vector<17x64xf32> to vector<17x64xbf16>
    %c1_98 = arith.constant 1 : index
    %c0_99 = arith.constant 0 : index
    %c0_100 = arith.constant 0 : index
    %232 = vector.load %arg9[%c1_98, %c0_99, %c0_100] : memref<2x64x192xbf16, #tpu.memory_space<vmem>>, vector<1x64x192xbf16>
    %233 = vector.shape_cast %232 : vector<1x64x192xbf16> to vector<64x192xbf16>
    %cst_101 = arith.constant dense<0.000000e+00> : vector<17x192xf32>
    %234 = tpu.matmul %231, %233, %cst_101 {dimension_numbers = #tpu.dot_dimension_numbers<[1], [0], [0], [1], [0, 0, 1, 1], [], []>} : vector<17x64xbf16>, vector<64x192xbf16>, vector<17x192xf32> -> vector<17x192xf32>
    %c1_102 = arith.constant 1 : index
    %c0_103 = arith.constant 0 : index
    %c0_104 = arith.constant 0 : index
    %235 = vector.load %arg10[%c1_102, %c0_103, %c0_104] : memref<2x1x192xf32, #tpu.memory_space<vmem>>, vector<1x1x192xf32>
    %236 = vector.shape_cast %235 : vector<1x1x192xf32> to vector<1x192xf32>
    %237 = vector.broadcast %236 : vector<1x192xf32> to vector<17x192xf32>
    %238 = arith.addf %234, %237 : vector<17x192xf32>
    %239 = vector.extract_strided_slice %238 {offsets = [0, 0], sizes = [17, 64], strides = [1, 1]} : vector<17x192xf32> to vector<17x64xf32>
    %240 = vector.extract_strided_slice %238 {offsets = [0, 64], sizes = [17, 64], strides = [1, 1]} : vector<17x192xf32> to vector<17x64xf32>
    %241 = vector.extract_strided_slice %238 {offsets = [0, 128], sizes = [17, 64], strides = [1, 1]} : vector<17x192xf32> to vector<17x64xf32>
    %c1_105 = arith.constant 1 : index
    %c0_106 = arith.constant 0 : index
    %c0_107 = arith.constant 0 : index
    %242 = vector.load %arg11[%c1_105, %c0_106, %c0_107] : memref<2x64x64xbf16, #tpu.memory_space<vmem>>, vector<1x64x64xbf16>
    %243 = vector.shape_cast %242 : vector<1x64x64xbf16> to vector<64x64xbf16>
    %c1_108 = arith.constant 1 : index
    %c0_109 = arith.constant 0 : index
    %c0_110 = arith.constant 0 : index
    %244 = vector.load %arg12[%c1_108, %c0_109, %c0_110] : memref<2x1x64xf32, #tpu.memory_space<vmem>>, vector<1x1x64xf32>
    %245 = vector.shape_cast %244 : vector<1x1x64xf32> to vector<1x64xf32>
    %cst_111 = arith.constant 2.500000e-01 : f32
    %246 = vector.broadcast %cst_111 : f32 to vector<17x64xf32>
    %247 = arith.mulf %239, %246 : vector<17x64xf32>
    %248 = arith.truncf %247 : vector<17x64xf32> to vector<17x64xbf16>
    %249 = arith.truncf %240 : vector<17x64xf32> to vector<17x64xbf16>
    %250 = arith.truncf %241 : vector<17x64xf32> to vector<17x64xbf16>
    %251 = vector.extract_strided_slice %248 {offsets = [0, 0], sizes = [17, 16], strides = [1, 1]} : vector<17x64xbf16> to vector<17x16xbf16>
    %252 = vector.extract_strided_slice %249 {offsets = [0, 0], sizes = [17, 16], strides = [1, 1]} : vector<17x64xbf16> to vector<17x16xbf16>
    "tpu.trace_start"() <{level = 10 : i32, message = "qd,kd->qk"}> : () -> ()
    %cst_112 = arith.constant dense<0.000000e+00> : vector<17x17xf32>
    %253 = tpu.matmul %251, %252, %cst_112 {dimension_numbers = #tpu.dot_dimension_numbers<[1], [1], [0], [0], [0, 0, 1, 0], [], []>} : vector<17x16xbf16>, vector<17x16xbf16>, vector<17x17xf32> -> vector<17x17xf32>
    "tpu.trace_stop"() : () -> ()
    %cst_113 = arith.constant dense<0xFF800000> : vector<17xf32>
    %254 = vector.multi_reduction <maximumf>, %253, %cst_113 [1] : vector<17x17xf32> to vector<17xf32>
    %255 = vector.shape_cast %254 : vector<17xf32> to vector<17x1xf32>
    %256 = vector.broadcast %255 : vector<17x1xf32> to vector<17x17xf32>
    %257 = arith.subf %253, %256 : vector<17x17xf32>
    %258 = math.exp %257 : vector<17x17xf32>
    %cst_114 = arith.constant dense<0.000000e+00> : vector<17xf32>
    %259 = vector.multi_reduction <add>, %258, %cst_114 [1] : vector<17x17xf32> to vector<17xf32>
    %260 = vector.shape_cast %259 : vector<17xf32> to vector<17x1xf32>
    %261 = tpu.reciprocal %260 {approx = true} : vector<17x1xf32> -> vector<17x1xf32>
    %262 = vector.broadcast %261 : vector<17x1xf32> to vector<17x17xf32>
    %263 = arith.mulf %258, %262 : vector<17x17xf32>
    %264 = arith.truncf %263 : vector<17x17xf32> to vector<17x17xbf16>
    %265 = vector.extract_strided_slice %250 {offsets = [0, 0], sizes = [17, 16], strides = [1, 1]} : vector<17x64xbf16> to vector<17x16xbf16>
    %cst_115 = arith.constant dense<0.000000e+00> : vector<17x16xf32>
    %266 = tpu.matmul %264, %265, %cst_115 {dimension_numbers = #tpu.dot_dimension_numbers<[1], [0], [0], [1], [0, 0, 1, 1], [], []>} : vector<17x17xbf16>, vector<17x16xbf16>, vector<17x16xf32> -> vector<17x16xf32>
    %267 = vector.extract_strided_slice %248 {offsets = [0, 16], sizes = [17, 16], strides = [1, 1]} : vector<17x64xbf16> to vector<17x16xbf16>
    %268 = vector.extract_strided_slice %249 {offsets = [0, 16], sizes = [17, 16], strides = [1, 1]} : vector<17x64xbf16> to vector<17x16xbf16>
    "tpu.trace_start"() <{level = 10 : i32, message = "qd,kd->qk"}> : () -> ()
    %cst_116 = arith.constant dense<0.000000e+00> : vector<17x17xf32>
    %269 = tpu.matmul %267, %268, %cst_116 {dimension_numbers = #tpu.dot_dimension_numbers<[1], [1], [0], [0], [0, 0, 1, 0], [], []>} : vector<17x16xbf16>, vector<17x16xbf16>, vector<17x17xf32> -> vector<17x17xf32>
    "tpu.trace_stop"() : () -> ()
    %cst_117 = arith.constant dense<0xFF800000> : vector<17xf32>
    %270 = vector.multi_reduction <maximumf>, %269, %cst_117 [1] : vector<17x17xf32> to vector<17xf32>
    %271 = vector.shape_cast %270 : vector<17xf32> to vector<17x1xf32>
    %272 = vector.broadcast %271 : vector<17x1xf32> to vector<17x17xf32>
    %273 = arith.subf %269, %272 : vector<17x17xf32>
    %274 = math.exp %273 : vector<17x17xf32>
    %cst_118 = arith.constant dense<0.000000e+00> : vector<17xf32>
    %275 = vector.multi_reduction <add>, %274, %cst_118 [1] : vector<17x17xf32> to vector<17xf32>
    %276 = vector.shape_cast %275 : vector<17xf32> to vector<17x1xf32>
    %277 = tpu.reciprocal %276 {approx = true} : vector<17x1xf32> -> vector<17x1xf32>
    %278 = vector.broadcast %277 : vector<17x1xf32> to vector<17x17xf32>
    %279 = arith.mulf %274, %278 : vector<17x17xf32>
    %280 = arith.truncf %279 : vector<17x17xf32> to vector<17x17xbf16>
    %281 = vector.extract_strided_slice %250 {offsets = [0, 16], sizes = [17, 16], strides = [1, 1]} : vector<17x64xbf16> to vector<17x16xbf16>
    %cst_119 = arith.constant dense<0.000000e+00> : vector<17x16xf32>
    %282 = tpu.matmul %280, %281, %cst_119 {dimension_numbers = #tpu.dot_dimension_numbers<[1], [0], [0], [1], [0, 0, 1, 1], [], []>} : vector<17x17xbf16>, vector<17x16xbf16>, vector<17x16xf32> -> vector<17x16xf32>
    %283 = vector.extract_strided_slice %248 {offsets = [0, 32], sizes = [17, 16], strides = [1, 1]} : vector<17x64xbf16> to vector<17x16xbf16>
    %284 = vector.extract_strided_slice %249 {offsets = [0, 32], sizes = [17, 16], strides = [1, 1]} : vector<17x64xbf16> to vector<17x16xbf16>
    "tpu.trace_start"() <{level = 10 : i32, message = "qd,kd->qk"}> : () -> ()
    %cst_120 = arith.constant dense<0.000000e+00> : vector<17x17xf32>
    %285 = tpu.matmul %283, %284, %cst_120 {dimension_numbers = #tpu.dot_dimension_numbers<[1], [1], [0], [0], [0, 0, 1, 0], [], []>} : vector<17x16xbf16>, vector<17x16xbf16>, vector<17x17xf32> -> vector<17x17xf32>
    "tpu.trace_stop"() : () -> ()
    %cst_121 = arith.constant dense<0xFF800000> : vector<17xf32>
    %286 = vector.multi_reduction <maximumf>, %285, %cst_121 [1] : vector<17x17xf32> to vector<17xf32>
    %287 = vector.shape_cast %286 : vector<17xf32> to vector<17x1xf32>
    %288 = vector.broadcast %287 : vector<17x1xf32> to vector<17x17xf32>
    %289 = arith.subf %285, %288 : vector<17x17xf32>
    %290 = math.exp %289 : vector<17x17xf32>
    %cst_122 = arith.constant dense<0.000000e+00> : vector<17xf32>
    %291 = vector.multi_reduction <add>, %290, %cst_122 [1] : vector<17x17xf32> to vector<17xf32>
    %292 = vector.shape_cast %291 : vector<17xf32> to vector<17x1xf32>
    %293 = tpu.reciprocal %292 {approx = true} : vector<17x1xf32> -> vector<17x1xf32>
    %294 = vector.broadcast %293 : vector<17x1xf32> to vector<17x17xf32>
    %295 = arith.mulf %290, %294 : vector<17x17xf32>
    %296 = arith.truncf %295 : vector<17x17xf32> to vector<17x17xbf16>
    %297 = vector.extract_strided_slice %250 {offsets = [0, 32], sizes = [17, 16], strides = [1, 1]} : vector<17x64xbf16> to vector<17x16xbf16>
    %cst_123 = arith.constant dense<0.000000e+00> : vector<17x16xf32>
    %298 = tpu.matmul %296, %297, %cst_123 {dimension_numbers = #tpu.dot_dimension_numbers<[1], [0], [0], [1], [0, 0, 1, 1], [], []>} : vector<17x17xbf16>, vector<17x16xbf16>, vector<17x16xf32> -> vector<17x16xf32>
    %299 = vector.extract_strided_slice %248 {offsets = [0, 48], sizes = [17, 16], strides = [1, 1]} : vector<17x64xbf16> to vector<17x16xbf16>
    %300 = vector.extract_strided_slice %249 {offsets = [0, 48], sizes = [17, 16], strides = [1, 1]} : vector<17x64xbf16> to vector<17x16xbf16>
    "tpu.trace_start"() <{level = 10 : i32, message = "qd,kd->qk"}> : () -> ()
    %cst_124 = arith.constant dense<0.000000e+00> : vector<17x17xf32>
    %301 = tpu.matmul %299, %300, %cst_124 {dimension_numbers = #tpu.dot_dimension_numbers<[1], [1], [0], [0], [0, 0, 1, 0], [], []>} : vector<17x16xbf16>, vector<17x16xbf16>, vector<17x17xf32> -> vector<17x17xf32>
    "tpu.trace_stop"() : () -> ()
    %cst_125 = arith.constant dense<0xFF800000> : vector<17xf32>
    %302 = vector.multi_reduction <maximumf>, %301, %cst_125 [1] : vector<17x17xf32> to vector<17xf32>
    %303 = vector.shape_cast %302 : vector<17xf32> to vector<17x1xf32>
    %304 = vector.broadcast %303 : vector<17x1xf32> to vector<17x17xf32>
    %305 = arith.subf %301, %304 : vector<17x17xf32>
    %306 = math.exp %305 : vector<17x17xf32>
    %cst_126 = arith.constant dense<0.000000e+00> : vector<17xf32>
    %307 = vector.multi_reduction <add>, %306, %cst_126 [1] : vector<17x17xf32> to vector<17xf32>
    %308 = vector.shape_cast %307 : vector<17xf32> to vector<17x1xf32>
    %309 = tpu.reciprocal %308 {approx = true} : vector<17x1xf32> -> vector<17x1xf32>
    %310 = vector.broadcast %309 : vector<17x1xf32> to vector<17x17xf32>
    %311 = arith.mulf %306, %310 : vector<17x17xf32>
    %312 = arith.truncf %311 : vector<17x17xf32> to vector<17x17xbf16>
    %313 = vector.extract_strided_slice %250 {offsets = [0, 48], sizes = [17, 16], strides = [1, 1]} : vector<17x64xbf16> to vector<17x16xbf16>
    %cst_127 = arith.constant dense<0.000000e+00> : vector<17x16xf32>
    %314 = tpu.matmul %312, %313, %cst_127 {dimension_numbers = #tpu.dot_dimension_numbers<[1], [0], [0], [1], [0, 0, 1, 1], [], []>} : vector<17x17xbf16>, vector<17x16xbf16>, vector<17x16xf32> -> vector<17x16xf32>
    %315 = tpu.concatenate %266, %282, %298, %314 in 1 : vector<17x16xf32>, vector<17x16xf32>, vector<17x16xf32>, vector<17x16xf32> -> vector<17x64xf32>
    %316 = arith.truncf %315 : vector<17x64xf32> to vector<17x64xbf16>
    %cst_128 = arith.constant dense<0.000000e+00> : vector<17x64xf32>
    %317 = tpu.matmul %316, %243, %cst_128 {dimension_numbers = #tpu.dot_dimension_numbers<[1], [0], [0], [1], [0, 0, 1, 1], [], []>} : vector<17x64xbf16>, vector<64x64xbf16>, vector<17x64xf32> -> vector<17x64xf32>
    %318 = vector.broadcast %245 : vector<1x64xf32> to vector<17x64xf32>
    %319 = arith.addf %317, %318 : vector<17x64xf32>
    %320 = arith.addf %204, %319 : vector<17x64xf32>
    %c1_129 = arith.constant 1 : index
    %c0_130 = arith.constant 0 : index
    %c0_131 = arith.constant 0 : index
    %321 = vector.load %arg13[%c1_129, %c0_130, %c0_131] : memref<2x1x64xf32, #tpu.memory_space<vmem>>, vector<1x1x64xf32>
    %322 = vector.shape_cast %321 : vector<1x1x64xf32> to vector<1x64xf32>
    %c1_132 = arith.constant 1 : index
    %c0_133 = arith.constant 0 : index
    %c0_134 = arith.constant 0 : index
    %323 = vector.load %arg14[%c1_132, %c0_133, %c0_134] : memref<2x1x64xf32, #tpu.memory_space<vmem>>, vector<1x1x64xf32>
    %324 = vector.shape_cast %323 : vector<1x1x64xf32> to vector<1x64xf32>
    %cst_135 = arith.constant dense<0.000000e+00> : vector<17xf32>
    %325 = vector.multi_reduction <add>, %320, %cst_135 [1] : vector<17x64xf32> to vector<17xf32>
    %326 = vector.shape_cast %325 : vector<17xf32> to vector<17x1xf32>
    %cst_136 = arith.constant 6.400000e+01 : f32
    %327 = vector.broadcast %cst_136 : f32 to vector<17x1xf32>
    %328 = arith.divf %326, %327 : vector<17x1xf32>
    %329 = vector.broadcast %328 : vector<17x1xf32> to vector<17x64xf32>
    %330 = arith.subf %320, %329 : vector<17x64xf32>
    %331 = arith.mulf %330, %330 : vector<17x64xf32>
    %cst_137 = arith.constant dense<0.000000e+00> : vector<17xf32>
    %332 = vector.multi_reduction <add>, %331, %cst_137 [1] : vector<17x64xf32> to vector<17xf32>
    %333 = vector.shape_cast %332 : vector<17xf32> to vector<17x1xf32>
    %cst_138 = arith.constant 6.400000e+01 : f32
    %334 = vector.broadcast %cst_138 : f32 to vector<17x1xf32>
    %335 = arith.divf %333, %334 : vector<17x1xf32>
    %336 = vector.broadcast %328 : vector<17x1xf32> to vector<17x64xf32>
    %337 = arith.subf %320, %336 : vector<17x64xf32>
    %cst_139 = arith.constant 9.99999974E-6 : f32
    %338 = vector.broadcast %cst_139 : f32 to vector<17x1xf32>
    %339 = arith.addf %335, %338 : vector<17x1xf32>
    %340 = math.rsqrt %339 : vector<17x1xf32>
    %341 = vector.broadcast %340 : vector<17x1xf32> to vector<17x64xf32>
    %342 = arith.mulf %337, %341 : vector<17x64xf32>
    %343 = vector.broadcast %322 : vector<1x64xf32> to vector<17x64xf32>
    %344 = arith.mulf %342, %343 : vector<17x64xf32>
    %345 = vector.broadcast %324 : vector<1x64xf32> to vector<17x64xf32>
    %346 = arith.addf %344, %345 : vector<17x64xf32>
    %347 = arith.truncf %346 : vector<17x64xf32> to vector<17x64xbf16>
    %c1_140 = arith.constant 1 : index
    %c0_141 = arith.constant 0 : index
    %c0_142 = arith.constant 0 : index
    %348 = vector.load %arg15[%c1_140, %c0_141, %c0_142] : memref<2x64x256xbf16, #tpu.memory_space<vmem>>, vector<1x64x256xbf16>
    %349 = vector.shape_cast %348 : vector<1x64x256xbf16> to vector<64x256xbf16>
    %cst_143 = arith.constant dense<0.000000e+00> : vector<17x256xf32>
    %350 = tpu.matmul %347, %349, %cst_143 {dimension_numbers = #tpu.dot_dimension_numbers<[1], [0], [0], [1], [0, 0, 1, 1], [], []>} : vector<17x64xbf16>, vector<64x256xbf16>, vector<17x256xf32> -> vector<17x256xf32>
    %c1_144 = arith.constant 1 : index
    %c0_145 = arith.constant 0 : index
    %c0_146 = arith.constant 0 : index
    %351 = vector.load %arg16[%c1_144, %c0_145, %c0_146] : memref<2x1x256xf32, #tpu.memory_space<vmem>>, vector<1x1x256xf32>
    %352 = vector.shape_cast %351 : vector<1x1x256xf32> to vector<1x256xf32>
    %353 = vector.broadcast %352 : vector<1x256xf32> to vector<17x256xf32>
    %354 = arith.addf %350, %353 : vector<17x256xf32>
    %355 = arith.mulf %354, %354 : vector<17x256xf32>
    %356 = arith.mulf %354, %355 : vector<17x256xf32>
    %cst_147 = arith.constant 4.471500e-02 : f32
    %357 = vector.broadcast %cst_147 : f32 to vector<17x256xf32>
    %358 = arith.mulf %357, %356 : vector<17x256xf32>
    %359 = arith.addf %354, %358 : vector<17x256xf32>
    %cst_148 = arith.constant 0.797884583 : f32
    %360 = vector.broadcast %cst_148 : f32 to vector<17x256xf32>
    %361 = arith.mulf %360, %359 : vector<17x256xf32>
    %362 = math.tanh %361 : vector<17x256xf32>
    %cst_149 = arith.constant 1.000000e+00 : f32
    %363 = vector.broadcast %cst_149 : f32 to vector<17x256xf32>
    %364 = arith.addf %363, %362 : vector<17x256xf32>
    %cst_150 = arith.constant 5.000000e-01 : f32
    %365 = vector.broadcast %cst_150 : f32 to vector<17x256xf32>
    %366 = arith.mulf %365, %364 : vector<17x256xf32>
    %367 = arith.mulf %354, %366 : vector<17x256xf32>
    %368 = arith.truncf %367 : vector<17x256xf32> to vector<17x256xbf16>
    %c1_151 = arith.constant 1 : index
    %c0_152 = arith.constant 0 : index
    %c0_153 = arith.constant 0 : index
    %369 = vector.load %arg17[%c1_151, %c0_152, %c0_153] : memref<2x256x64xbf16, #tpu.memory_space<vmem>>, vector<1x256x64xbf16>
    %370 = vector.shape_cast %369 : vector<1x256x64xbf16> to vector<256x64xbf16>
    %cst_154 = arith.constant dense<0.000000e+00> : vector<17x64xf32>
    %371 = tpu.matmul %368, %370, %cst_154 {dimension_numbers = #tpu.dot_dimension_numbers<[1], [0], [0], [1], [0, 0, 1, 1], [], []>} : vector<17x256xbf16>, vector<256x64xbf16>, vector<17x64xf32> -> vector<17x64xf32>
    %372 = arith.addf %320, %371 : vector<17x64xf32>
    %c1_155 = arith.constant 1 : index
    %c0_156 = arith.constant 0 : index
    %c0_157 = arith.constant 0 : index
    %373 = vector.load %arg18[%c1_155, %c0_156, %c0_157] : memref<2x1x64xf32, #tpu.memory_space<vmem>>, vector<1x1x64xf32>
    %374 = vector.shape_cast %373 : vector<1x1x64xf32> to vector<1x64xf32>
    %375 = vector.broadcast %374 : vector<1x64xf32> to vector<17x64xf32>
    %376 = arith.addf %372, %375 : vector<17x64xf32>
    %c0_158 = arith.constant 0 : index
    %c0_159 = arith.constant 0 : index
    %377 = vector.load %arg19[%c0_158, %c0_159] : memref<1x64xf32, #tpu.memory_space<vmem>>, vector<1x64xf32>
    %c0_160 = arith.constant 0 : index
    %c0_161 = arith.constant 0 : index
    %378 = vector.load %arg20[%c0_160, %c0_161] : memref<1x64xf32, #tpu.memory_space<vmem>>, vector<1x64xf32>
    %cst_162 = arith.constant dense<0.000000e+00> : vector<17xf32>
    %379 = vector.multi_reduction <add>, %376, %cst_162 [1] : vector<17x64xf32> to vector<17xf32>
    %380 = vector.shape_cast %379 : vector<17xf32> to vector<17x1xf32>
    %cst_163 = arith.constant 6.400000e+01 : f32
    %381 = vector.broadcast %cst_163 : f32 to vector<17x1xf32>
    %382 = arith.divf %380, %381 : vector<17x1xf32>
    %383 = vector.broadcast %382 : vector<17x1xf32> to vector<17x64xf32>
    %384 = arith.subf %376, %383 : vector<17x64xf32>
    %385 = arith.mulf %384, %384 : vector<17x64xf32>
    %cst_164 = arith.constant dense<0.000000e+00> : vector<17xf32>
    %386 = vector.multi_reduction <add>, %385, %cst_164 [1] : vector<17x64xf32> to vector<17xf32>
    %387 = vector.shape_cast %386 : vector<17xf32> to vector<17x1xf32>
    %cst_165 = arith.constant 6.400000e+01 : f32
    %388 = vector.broadcast %cst_165 : f32 to vector<17x1xf32>
    %389 = arith.divf %387, %388 : vector<17x1xf32>
    %390 = vector.broadcast %382 : vector<17x1xf32> to vector<17x64xf32>
    %391 = arith.subf %376, %390 : vector<17x64xf32>
    %cst_166 = arith.constant 9.99999974E-6 : f32
    %392 = vector.broadcast %cst_166 : f32 to vector<17x1xf32>
    %393 = arith.addf %389, %392 : vector<17x1xf32>
    %394 = math.rsqrt %393 : vector<17x1xf32>
    %395 = vector.broadcast %394 : vector<17x1xf32> to vector<17x64xf32>
    %396 = arith.mulf %391, %395 : vector<17x64xf32>
    %397 = vector.broadcast %377 : vector<1x64xf32> to vector<17x64xf32>
    %398 = arith.mulf %396, %397 : vector<17x64xf32>
    %399 = vector.broadcast %378 : vector<1x64xf32> to vector<17x64xf32>
    %400 = arith.addf %398, %399 : vector<17x64xf32>
    %c0_167 = arith.constant 0 : index
    %c0_168 = arith.constant 0 : index
    %c0_169 = arith.constant 0 : index
    %401 = vector.load %arg21[%c0_167, %c0_168, %c0_169] : memref<1x17x64xf32, #tpu.memory_space<vmem>>, vector<1x17x64xf32>
    %402 = vector.shape_cast %401 : vector<1x17x64xf32> to vector<17x64xf32>
    %403 = vector.shape_cast %400 : vector<17x64xf32> to vector<1x17x64xf32>
    tpu.vector_store %arg21[%c0_167, %c0_168, %c0_169], %403 {strides = array<i32>} : memref<1x17x64xf32, #tpu.memory_space<vmem>>, vector<1x17x64xf32>,
    return
  }
  func.func @transform_0(%arg0: i32) -> (i32, i32, i32) {
    %c0_i32 = arith.constant 0 : i32
    %c0_i32_0 = arith.constant 0 : i32
    %c0_i32_1 = arith.constant 0 : i32
    return %arg0, %c0_i32, %c0_i32_0 : i32, i32, i32
  }
  func.func @transform_1(%arg0: i32) -> (i32, i32) {
    %c0_i32 = arith.constant 0 : i32
    %c0_i32_0 = arith.constant 0 : i32
    %c0_i32_1 = arith.constant 0 : i32
    return %c0_i32, %c0_i32_0 : i32, i32
  }
  func.func @transform_2(%arg0: i32) -> (i32, i32) {
    %c0_i32 = arith.constant 0 : i32
    %c0_i32_0 = arith.constant 0 : i32
    %c0_i32_1 = arith.constant 0 : i32
    return %c0_i32, %c0_i32_0 : i32, i32
  }
  func.func @transform_3(%arg0: i32) -> (i32, i32) {
    %c0_i32 = arith.constant 0 : i32
    %c0_i32_0 = arith.constant 0 : i32
    %c0_i32_1 = arith.constant 0 : i32
    return %c0_i32, %c0_i32_0 : i32, i32
  }
  func.func @transform_4(%arg0: i32) -> (i32, i32) {
    %c0_i32 = arith.constant 0 : i32
    %c0_i32_0 = arith.constant 0 : i32
    %c0_i32_1 = arith.constant 0 : i32
    return %c0_i32, %c0_i32_0 : i32, i32
  }
  func.func @transform_5(%arg0: i32) -> (i32, i32) {
    %c0_i32 = arith.constant 0 : i32
    %c0_i32_0 = arith.constant 0 : i32
    %c0_i32_1 = arith.constant 0 : i32
    return %c0_i32, %c0_i32_0 : i32, i32
  }
  func.func @transform_6(%arg0: i32) -> (i32, i32, i32) {
    %c0_i32 = arith.constant 0 : i32
    %c0_i32_0 = arith.constant 0 : i32
    %c0_i32_1 = arith.constant 0 : i32
    %c0_i32_2 = arith.constant 0 : i32
    return %c0_i32, %c0_i32_0, %c0_i32_1 : i32, i32, i32
  }
  func.func @transform_7(%arg0: i32) -> (i32, i32, i32) {
    %c0_i32 = arith.constant 0 : i32
    %c0_i32_0 = arith.constant 0 : i32
    %c0_i32_1 = arith.constant 0 : i32
    %c0_i32_2 = arith.constant 0 : i32
    return %c0_i32, %c0_i32_0, %c0_i32_1 : i32, i32, i32
  }
  func.func @transform_8(%arg0: i32) -> (i32, i32, i32) {
    %c0_i32 = arith.constant 0 : i32
    %c0_i32_0 = arith.constant 0 : i32
    %c0_i32_1 = arith.constant 0 : i32
    %c0_i32_2 = arith.constant 0 : i32
    return %c0_i32, %c0_i32_0, %c0_i32_1 : i32, i32, i32
  }
  func.func @transform_9(%arg0: i32) -> (i32, i32, i32) {
    %c0_i32 = arith.constant 0 : i32
    %c0_i32_0 = arith.constant 0 : i32
    %c0_i32_1 = arith.constant 0 : i32
    %c0_i32_2 = arith.constant 0 : i32
    return %c0_i32, %c0_i32_0, %c0_i32_1 : i32, i32, i32
  }
  func.func @transform_10(%arg0: i32) -> (i32, i32, i32) {
    %c0_i32 = arith.constant 0 : i32
    %c0_i32_0 = arith.constant 0 : i32
    %c0_i32_1 = arith.constant 0 : i32
    %c0_i32_2 = arith.constant 0 : i32
    return %c0_i32, %c0_i32_0, %c0_i32_1 : i32, i32, i32
  }
  func.func @transform_11(%arg0: i32) -> (i32, i32, i32) {
    %c0_i32 = arith.constant 0 : i32
    %c0_i32_0 = arith.constant 0 : i32
    %c0_i32_1 = arith.constant 0 : i32
    %c0_i32_2 = arith.constant 0 : i32
    return %c0_i32, %c0_i32_0, %c0_i32_1 : i32, i32, i32
  }
  func.func @transform_12(%arg0: i32) -> (i32, i32, i32) {
    %c0_i32 = arith.constant 0 : i32
    %c0_i32_0 = arith.constant 0 : i32
    %c0_i32_1 = arith.constant 0 : i32
    %c0_i32_2 = arith.constant 0 : i32
    return %c0_i32, %c0_i32_0, %c0_i32_1 : i32, i32, i32
  }
  func.func @transform_13(%arg0: i32) -> (i32, i32, i32) {
    %c0_i32 = arith.constant 0 : i32
    %c0_i32_0 = arith.constant 0 : i32
    %c0_i32_1 = arith.constant 0 : i32
    %c0_i32_2 = arith.constant 0 : i32
    return %c0_i32, %c0_i32_0, %c0_i32_1 : i32, i32, i32
  }
  func.func @transform_14(%arg0: i32) -> (i32, i32, i32) {
    %c0_i32 = arith.constant 0 : i32
    %c0_i32_0 = arith.constant 0 : i32
    %c0_i32_1 = arith.constant 0 : i32
    %c0_i32_2 = arith.constant 0 : i32
    return %c0_i32, %c0_i32_0, %c0_i32_1 : i32, i32, i32
  }
  func.func @transform_15(%arg0: i32) -> (i32, i32, i32) {
    %c0_i32 = arith.constant 0 : i32
    %c0_i32_0 = arith.constant 0 : i32
    %c0_i32_1 = arith.constant 0 : i32
    %c0_i32_2 = arith.constant 0 : i32
    return %c0_i32, %c0_i32_0, %c0_i32_1 : i32, i32, i32
  }
  func.func @transform_16(%arg0: i32) -> (i32, i32, i32) {
    %c0_i32 = arith.constant 0 : i32
    %c0_i32_0 = arith.constant 0 : i32
    %c0_i32_1 = arith.constant 0 : i32
    %c0_i32_2 = arith.constant 0 : i32
    return %c0_i32, %c0_i32_0, %c0_i32_1 : i32, i32, i32
  }
  func.func @transform_17(%arg0: i32) -> (i32, i32, i32) {
    %c0_i32 = arith.constant 0 : i32
    %c0_i32_0 = arith.constant 0 : i32
    %c0_i32_1 = arith.constant 0 : i32
    %c0_i32_2 = arith.constant 0 : i32
    return %c0_i32, %c0_i32_0, %c0_i32_1 : i32, i32, i32
  }
  func.func @transform_18(%arg0: i32) -> (i32, i32) {
    %c0_i32 = arith.constant 0 : i32
    %c0_i32_0 = arith.constant 0 : i32
    %c0_i32_1 = arith.constant 0 : i32
    return %c0_i32, %c0_i32_0 : i32, i32
  }
  func.func @transform_19(%arg0: i32) -> (i32, i32) {
    %c0_i32 = arith.constant 0 : i32
    %c0_i32_0 = arith.constant 0 : i32
    %c0_i32_1 = arith.constant 0 : i32
    return %c0_i32, %c0_i32_0 : i32, i32
  }
  func.func @transform_20(%arg0: i32) -> (i32, i32, i32) {
    %c0_i32 = arith.constant 0 : i32
    %c0_i32_0 = arith.constant 0 : i32
    %c0_i32_1 = arith.constant 0 : i32
    return %arg0, %c0_i32, %c0_i32_0 : i32, i32, i32
  }
}

module attributes {stable_mosaic.version = 11 : i64} {
  func.func @_text_stage_kernel(%arg0: i32, %arg1: memref<1x16x32xf32, #tpu.memory_space<vmem>>, %arg2: memref<1x17x64xf32, #tpu.memory_space<vmem>>, %arg3: memref<1x1x16xf32, #tpu.memory_space<vmem>>, %arg4: memref<1x32xf32, #tpu.memory_space<vmem>>, %arg5: memref<1x32xf32, #tpu.memory_space<vmem>>, %arg6: memref<2x32x96xbf16, #tpu.memory_space<vmem>>, %arg7: memref<2x1x96xf32, #tpu.memory_space<vmem>>, %arg8: memref<2x32x32xbf16, #tpu.memory_space<vmem>>, %arg9: memref<2x1x32xf32, #tpu.memory_space<vmem>>, %arg10: memref<2x1x32xf32, #tpu.memory_space<vmem>>, %arg11: memref<2x1x32xf32, #tpu.memory_space<vmem>>, %arg12: memref<2x32x32xbf16, #tpu.memory_space<vmem>>, %arg13: memref<2x1x32xf32, #tpu.memory_space<vmem>>, %arg14: memref<2x64x64xbf16, #tpu.memory_space<vmem>>, %arg15: memref<2x1x64xf32, #tpu.memory_space<vmem>>, %arg16: memref<2x32x32xbf16, #tpu.memory_space<vmem>>, %arg17: memref<2x1x32xf32, #tpu.memory_space<vmem>>, %arg18: memref<2x1x32xf32, #tpu.memory_space<vmem>>, %arg19: memref<2x1x32xf32, #tpu.memory_space<vmem>>, %arg20: memref<2x32x64xbf16, #tpu.memory_space<vmem>>, %arg21: memref<2x1x64xf32, #tpu.memory_space<vmem>>, %arg22: memref<2x64x32xbf16, #tpu.memory_space<vmem>>, %arg23: memref<2x1x32xf32, #tpu.memory_space<vmem>>, %arg24: memref<2x1x32xf32, #tpu.memory_space<vmem>>, %arg25: memref<2x1x32xf32, #tpu.memory_space<vmem>>, %arg26: memref<2x32x64xbf16, #tpu.memory_space<vmem>>, %arg27: memref<2x1x64xf32, #tpu.memory_space<vmem>>, %arg28: memref<2x64x32xbf16, #tpu.memory_space<vmem>>, %arg29: memref<2x1x32xf32, #tpu.memory_space<vmem>>, %arg30: memref<2x1x32xf32, #tpu.memory_space<vmem>>, %arg31: memref<2x1x32xf32, #tpu.memory_space<vmem>>, %arg32: memref<1x8x32xf32, #tpu.memory_space<vmem>>) attributes {dimension_semantics = [#tpu.dimension_semantics<parallel>], iteration_bounds = array<i64: 2>, scalar_prefetch = 0 : i64, scratch_operands = 0 : i64, tpu.core_type = #tpu.core_type<tc>, window_params = [{transform_indices = @transform_0, window_bounds = array<i64: 1, 16, 32>}, {transform_indices = @transform_1, window_bounds = array<i64: 1, 17, 64>}, {transform_indices = @transform_2, window_bounds = array<i64: 1, 1, 16>}, {pipeline_mode = #tpu.pipeline_mode<synchronous>, transform_indices = @transform_3, window_bounds = array<i64: 1, 32>}, {pipeline_mode = #tpu.pipeline_mode<synchronous>, transform_indices = @transform_4, window_bounds = array<i64: 1, 32>}, {pipeline_mode = #tpu.pipeline_mode<synchronous>, transform_indices = @transform_5, window_bounds = array<i64: 2, 32, 96>}, {pipeline_mode = #tpu.pipeline_mode<synchronous>, transform_indices = @transform_6, window_bounds = array<i64: 2, 1, 96>}, {pipeline_mode = #tpu.pipeline_mode<synchronous>, transform_indices = @transform_7, window_bounds = array<i64: 2, 32, 32>}, {pipeline_mode = #tpu.pipeline_mode<synchronous>, transform_indices = @transform_8, window_bounds = array<i64: 2, 1, 32>}, {pipeline_mode = #tpu.pipeline_mode<synchronous>, transform_indices = @transform_9, window_bounds = array<i64: 2, 1, 32>}, {pipeline_mode = #tpu.pipeline_mode<synchronous>, transform_indices = @transform_10, window_bounds = array<i64: 2, 1, 32>}, {pipeline_mode = #tpu.pipeline_mode<synchronous>, transform_indices = @transform_11, window_bounds = array<i64: 2, 32, 32>}, {pipeline_mode = #tpu.pipeline_mode<synchronous>, transform_indices = @transform_12, window_bounds = array<i64: 2, 1, 32>}, {pipeline_mode = #tpu.pipeline_mode<synchronous>, transform_indices = @transform_13, window_bounds = array<i64: 2, 64, 64>}, {pipeline_mode = #tpu.pipeline_mode<synchronous>, transform_indices = @transform_14, window_bounds = array<i64: 2, 1, 64>}, {pipeline_mode = #tpu.pipeline_mode<synchronous>, transform_indices = @transform_15, window_bounds = array<i64: 2, 32, 32>}, {pipeline_mode = #tpu.pipeline_mode<synchronous>, transform_indices = @transform_16, window_bounds = array<i64: 2, 1, 32>}, {pipeline_mode = #tpu.pipeline_mode<synchronous>, transform_indices = @transform_17, window_bounds = array<i64: 2, 1, 32>}, {pipeline_mode = #tpu.pipeline_mode<synchronous>, transform_indices = @transform_18, window_bounds = array<i64: 2, 1, 32>}, {pipeline_mode = #tpu.pipeline_mode<synchronous>, transform_indices = @transform_19, window_bounds = array<i64: 2, 32, 64>}, {pipeline_mode = #tpu.pipeline_mode<synchronous>, transform_indices = @transform_20, window_bounds = array<i64: 2, 1, 64>}, {pipeline_mode = #tpu.pipeline_mode<synchronous>, transform_indices = @transform_21, window_bounds = array<i64: 2, 64, 32>}, {pipeline_mode = #tpu.pipeline_mode<synchronous>, transform_indices = @transform_22, window_bounds = array<i64: 2, 1, 32>}, {pipeline_mode = #tpu.pipeline_mode<synchronous>, transform_indices = @transform_23, window_bounds = array<i64: 2, 1, 32>}, {pipeline_mode = #tpu.pipeline_mode<synchronous>, transform_indices = @transform_24, window_bounds = array<i64: 2, 1, 32>}, {pipeline_mode = #tpu.pipeline_mode<synchronous>, transform_indices = @transform_25, window_bounds = array<i64: 2, 32, 64>}, {pipeline_mode = #tpu.pipeline_mode<synchronous>, transform_indices = @transform_26, window_bounds = array<i64: 2, 1, 64>}, {pipeline_mode = #tpu.pipeline_mode<synchronous>, transform_indices = @transform_27, window_bounds = array<i64: 2, 64, 32>}, {pipeline_mode = #tpu.pipeline_mode<synchronous>, transform_indices = @transform_28, window_bounds = array<i64: 2, 1, 32>}, {pipeline_mode = #tpu.pipeline_mode<synchronous>, transform_indices = @transform_29, window_bounds = array<i64: 2, 1, 32>}, {pipeline_mode = #tpu.pipeline_mode<synchronous>, transform_indices = @transform_30, window_bounds = array<i64: 2, 1, 32>}, {transform_indices = @transform_31, window_bounds = array<i64: 1, 8, 32>}]} {
    %c0 = arith.constant 0 : index
    %c0_0 = arith.constant 0 : index
    %c0_1 = arith.constant 0 : index
    %0 = vector.load %arg1[%c0, %c0_0, %c0_1] : memref<1x16x32xf32, #tpu.memory_space<vmem>>, vector<1x16x32xf32>
    %1 = vector.shape_cast %0 : vector<1x16x32xf32> to vector<16x32xf32>
    %c0_2 = arith.constant 0 : index
    %c0_3 = arith.constant 0 : index
    %2 = vector.load %arg4[%c0_2, %c0_3] : memref<1x32xf32, #tpu.memory_space<vmem>>, vector<1x32xf32>
    %c0_4 = arith.constant 0 : index
    %c0_5 = arith.constant 0 : index
    %3 = vector.load %arg5[%c0_4, %c0_5] : memref<1x32xf32, #tpu.memory_space<vmem>>, vector<1x32xf32>
    %cst = arith.constant dense<0.000000e+00> : vector<16xf32>
    %4 = vector.multi_reduction <add>, %1, %cst [1] : vector<16x32xf32> to vector<16xf32>
    %5 = vector.shape_cast %4 : vector<16xf32> to vector<16x1xf32>
    %cst_6 = arith.constant 3.200000e+01 : f32
    %6 = vector.broadcast %cst_6 : f32 to vector<16x1xf32>
    %7 = arith.divf %5, %6 : vector<16x1xf32>
    %8 = vector.broadcast %7 : vector<16x1xf32> to vector<16x32xf32>
    %9 = arith.subf %1, %8 : vector<16x32xf32>
    %10 = arith.mulf %9, %9 : vector<16x32xf32>
    %cst_7 = arith.constant dense<0.000000e+00> : vector<16xf32>
    %11 = vector.multi_reduction <add>, %10, %cst_7 [1] : vector<16x32xf32> to vector<16xf32>
    %12 = vector.shape_cast %11 : vector<16xf32> to vector<16x1xf32>
    %cst_8 = arith.constant 3.200000e+01 : f32
    %13 = vector.broadcast %cst_8 : f32 to vector<16x1xf32>
    %14 = arith.divf %12, %13 : vector<16x1xf32>
    %15 = vector.broadcast %7 : vector<16x1xf32> to vector<16x32xf32>
    %16 = arith.subf %1, %15 : vector<16x32xf32>
    %cst_9 = arith.constant 9.99999996E-13 : f32
    %17 = vector.broadcast %cst_9 : f32 to vector<16x1xf32>
    %18 = arith.addf %14, %17 : vector<16x1xf32>
    %19 = math.rsqrt %18 : vector<16x1xf32>
    %20 = vector.broadcast %19 : vector<16x1xf32> to vector<16x32xf32>
    %21 = arith.mulf %16, %20 : vector<16x32xf32>
    %22 = vector.broadcast %2 : vector<1x32xf32> to vector<16x32xf32>
    %23 = arith.mulf %21, %22 : vector<16x32xf32>
    %24 = vector.broadcast %3 : vector<1x32xf32> to vector<16x32xf32>
    %25 = arith.addf %23, %24 : vector<16x32xf32>
    %c0_10 = arith.constant 0 : index
    %c0_11 = arith.constant 0 : index
    %c0_12 = arith.constant 0 : index
    %26 = vector.load %arg2[%c0_10, %c0_11, %c0_12] : memref<1x17x64xf32, #tpu.memory_space<vmem>>, vector<1x17x64xf32>
    %27 = vector.shape_cast %26 : vector<1x17x64xf32> to vector<17x64xf32>
    %28 = arith.truncf %27 : vector<17x64xf32> to vector<17x64xbf16>
    %c0_13 = arith.constant 0 : index
    %c0_14 = arith.constant 0 : index
    %c0_15 = arith.constant 0 : index
    %29 = vector.load %arg3[%c0_13, %c0_14, %c0_15] : memref<1x1x16xf32, #tpu.memory_space<vmem>>, vector<1x1x16xf32>
    %30 = vector.shape_cast %29 : vector<1x1x16xf32> to vector<1x16xf32>
    %31 = arith.truncf %25 : vector<16x32xf32> to vector<16x32xbf16>
    %c0_16 = arith.constant 0 : index
    %c0_17 = arith.constant 0 : index
    %c0_18 = arith.constant 0 : index
    %32 = vector.load %arg6[%c0_16, %c0_17, %c0_18] : memref<2x32x96xbf16, #tpu.memory_space<vmem>>, vector<1x32x96xbf16>
    %33 = vector.shape_cast %32 : vector<1x32x96xbf16> to vector<32x96xbf16>
    %cst_19 = arith.constant dense<0.000000e+00> : vector<16x96xf32>
    %34 = tpu.matmul %31, %33, %cst_19 {dimension_numbers = #tpu.dot_dimension_numbers<[1], [0], [0], [1], [0, 0, 1, 1], [], []>} : vector<16x32xbf16>, vector<32x96xbf16>, vector<16x96xf32> -> vector<16x96xf32>
    %c0_20 = arith.constant 0 : index
    %c0_21 = arith.constant 0 : index
    %c0_22 = arith.constant 0 : index
    %35 = vector.load %arg7[%c0_20, %c0_21, %c0_22] : memref<2x1x96xf32, #tpu.memory_space<vmem>>, vector<1x1x96xf32>
    %36 = vector.shape_cast %35 : vector<1x1x96xf32> to vector<1x96xf32>
    %37 = vector.broadcast %36 : vector<1x96xf32> to vector<16x96xf32>
    %38 = arith.addf %34, %37 : vector<16x96xf32>
    %39 = vector.extract_strided_slice %38 {offsets = [0, 0], sizes = [16, 32], strides = [1, 1]} : vector<16x96xf32> to vector<16x32xf32>
    %40 = vector.extract_strided_slice %38 {offsets = [0, 32], sizes = [16, 32], strides = [1, 1]} : vector<16x96xf32> to vector<16x32xf32>
    %41 = vector.extract_strided_slice %38 {offsets = [0, 64], sizes = [16, 32], strides = [1, 1]} : vector<16x96xf32> to vector<16x32xf32>
    %c0_23 = arith.constant 0 : index
    %c0_24 = arith.constant 0 : index
    %c0_25 = arith.constant 0 : index
    %42 = vector.load %arg8[%c0_23, %c0_24, %c0_25] : memref<2x32x32xbf16, #tpu.memory_space<vmem>>, vector<1x32x32xbf16>
    %43 = vector.shape_cast %42 : vector<1x32x32xbf16> to vector<32x32xbf16>
    %c0_26 = arith.constant 0 : index
    %c0_27 = arith.constant 0 : index
    %c0_28 = arith.constant 0 : index
    %44 = vector.load %arg9[%c0_26, %c0_27, %c0_28] : memref<2x1x32xf32, #tpu.memory_space<vmem>>, vector<1x1x32xf32>
    %45 = vector.shape_cast %44 : vector<1x1x32xf32> to vector<1x32xf32>
    %cst_29 = arith.constant 0.353553385 : f32
    %46 = vector.broadcast %cst_29 : f32 to vector<16x32xf32>
    %47 = arith.mulf %39, %46 : vector<16x32xf32>
    %48 = arith.truncf %47 : vector<16x32xf32> to vector<16x32xbf16>
    %49 = arith.truncf %40 : vector<16x32xf32> to vector<16x32xbf16>
    %50 = arith.truncf %41 : vector<16x32xf32> to vector<16x32xbf16>
    %51 = vector.extract_strided_slice %48 {offsets = [0, 0], sizes = [16, 8], strides = [1, 1]} : vector<16x32xbf16> to vector<16x8xbf16>
    %52 = vector.extract_strided_slice %49 {offsets = [0, 0], sizes = [16, 8], strides = [1, 1]} : vector<16x32xbf16> to vector<16x8xbf16>
    "tpu.trace_start"() <{level = 10 : i32, message = "qd,kd->qk"}> : () -> ()
    %cst_30 = arith.constant dense<0.000000e+00> : vector<16x16xf32>
    %53 = tpu.matmul %51, %52, %cst_30 {dimension_numbers = #tpu.dot_dimension_numbers<[1], [1], [0], [0], [0, 0, 1, 0], [], []>} : vector<16x8xbf16>, vector<16x8xbf16>, vector<16x16xf32> -> vector<16x16xf32>
    "tpu.trace_stop"() : () -> ()
    %54 = vector.broadcast %30 : vector<1x16xf32> to vector<16x16xf32>
    %55 = arith.addf %53, %54 : vector<16x16xf32>
    %cst_31 = arith.constant dense<0xFF800000> : vector<16xf32>
    %56 = vector.multi_reduction <maximumf>, %55, %cst_31 [1] : vector<16x16xf32> to vector<16xf32>
    %57 = vector.shape_cast %56 : vector<16xf32> to vector<16x1xf32>
    %58 = vector.broadcast %57 : vector<16x1xf32> to vector<16x16xf32>
    %59 = arith.subf %55, %58 : vector<16x16xf32>
    %60 = math.exp %59 : vector<16x16xf32>
    %cst_32 = arith.constant dense<0.000000e+00> : vector<16xf32>
    %61 = vector.multi_reduction <add>, %60, %cst_32 [1] : vector<16x16xf32> to vector<16xf32>
    %62 = vector.shape_cast %61 : vector<16xf32> to vector<16x1xf32>
    %63 = tpu.reciprocal %62 {approx = true} : vector<16x1xf32> -> vector<16x1xf32>
    %64 = vector.broadcast %63 : vector<16x1xf32> to vector<16x16xf32>
    %65 = arith.mulf %60, %64 : vector<16x16xf32>
    %66 = arith.truncf %65 : vector<16x16xf32> to vector<16x16xbf16>
    %67 = vector.extract_strided_slice %50 {offsets = [0, 0], sizes = [16, 8], strides = [1, 1]} : vector<16x32xbf16> to vector<16x8xbf16>
    %cst_33 = arith.constant dense<0.000000e+00> : vector<16x8xf32>
    %68 = tpu.matmul %66, %67, %cst_33 {dimension_numbers = #tpu.dot_dimension_numbers<[1], [0], [0], [1], [0, 0, 1, 1], [], []>} : vector<16x16xbf16>, vector<16x8xbf16>, vector<16x8xf32> -> vector<16x8xf32>
    %69 = vector.extract_strided_slice %48 {offsets = [0, 8], sizes = [16, 8], strides = [1, 1]} : vector<16x32xbf16> to vector<16x8xbf16>
    %70 = vector.extract_strided_slice %49 {offsets = [0, 8], sizes = [16, 8], strides = [1, 1]} : vector<16x32xbf16> to vector<16x8xbf16>
    "tpu.trace_start"() <{level = 10 : i32, message = "qd,kd->qk"}> : () -> ()
    %cst_34 = arith.constant dense<0.000000e+00> : vector<16x16xf32>
    %71 = tpu.matmul %69, %70, %cst_34 {dimension_numbers = #tpu.dot_dimension_numbers<[1], [1], [0], [0], [0, 0, 1, 0], [], []>} : vector<16x8xbf16>, vector<16x8xbf16>, vector<16x16xf32> -> vector<16x16xf32>
    "tpu.trace_stop"() : () -> ()
    %72 = vector.broadcast %30 : vector<1x16xf32> to vector<16x16xf32>
    %73 = arith.addf %71, %72 : vector<16x16xf32>
    %cst_35 = arith.constant dense<0xFF800000> : vector<16xf32>
    %74 = vector.multi_reduction <maximumf>, %73, %cst_35 [1] : vector<16x16xf32> to vector<16xf32>
    %75 = vector.shape_cast %74 : vector<16xf32> to vector<16x1xf32>
    %76 = vector.broadcast %75 : vector<16x1xf32> to vector<16x16xf32>
    %77 = arith.subf %73, %76 : vector<16x16xf32>
    %78 = math.exp %77 : vector<16x16xf32>
    %cst_36 = arith.constant dense<0.000000e+00> : vector<16xf32>
    %79 = vector.multi_reduction <add>, %78, %cst_36 [1] : vector<16x16xf32> to vector<16xf32>
    %80 = vector.shape_cast %79 : vector<16xf32> to vector<16x1xf32>
    %81 = tpu.reciprocal %80 {approx = true} : vector<16x1xf32> -> vector<16x1xf32>
    %82 = vector.broadcast %81 : vector<16x1xf32> to vector<16x16xf32>
    %83 = arith.mulf %78, %82 : vector<16x16xf32>
    %84 = arith.truncf %83 : vector<16x16xf32> to vector<16x16xbf16>
    %85 = vector.extract_strided_slice %50 {offsets = [0, 8], sizes = [16, 8], strides = [1, 1]} : vector<16x32xbf16> to vector<16x8xbf16>
    %cst_37 = arith.constant dense<0.000000e+00> : vector<16x8xf32>
    %86 = tpu.matmul %84, %85, %cst_37 {dimension_numbers = #tpu.dot_dimension_numbers<[1], [0], [0], [1], [0, 0, 1, 1], [], []>} : vector<16x16xbf16>, vector<16x8xbf16>, vector<16x8xf32> -> vector<16x8xf32>
    %87 = vector.extract_strided_slice %48 {offsets = [0, 16], sizes = [16, 8], strides = [1, 1]} : vector<16x32xbf16> to vector<16x8xbf16>
    %88 = vector.extract_strided_slice %49 {offsets = [0, 16], sizes = [16, 8], strides = [1, 1]} : vector<16x32xbf16> to vector<16x8xbf16>
    "tpu.trace_start"() <{level = 10 : i32, message = "qd,kd->qk"}> : () -> ()
    %cst_38 = arith.constant dense<0.000000e+00> : vector<16x16xf32>
    %89 = tpu.matmul %87, %88, %cst_38 {dimension_numbers = #tpu.dot_dimension_numbers<[1], [1], [0], [0], [0, 0, 1, 0], [], []>} : vector<16x8xbf16>, vector<16x8xbf16>, vector<16x16xf32> -> vector<16x16xf32>
    "tpu.trace_stop"() : () -> ()
    %90 = vector.broadcast %30 : vector<1x16xf32> to vector<16x16xf32>
    %91 = arith.addf %89, %90 : vector<16x16xf32>
    %cst_39 = arith.constant dense<0xFF800000> : vector<16xf32>
    %92 = vector.multi_reduction <maximumf>, %91, %cst_39 [1] : vector<16x16xf32> to vector<16xf32>
    %93 = vector.shape_cast %92 : vector<16xf32> to vector<16x1xf32>
    %94 = vector.broadcast %93 : vector<16x1xf32> to vector<16x16xf32>
    %95 = arith.subf %91, %94 : vector<16x16xf32>
    %96 = math.exp %95 : vector<16x16xf32>
    %cst_40 = arith.constant dense<0.000000e+00> : vector<16xf32>
    %97 = vector.multi_reduction <add>, %96, %cst_40 [1] : vector<16x16xf32> to vector<16xf32>
    %98 = vector.shape_cast %97 : vector<16xf32> to vector<16x1xf32>
    %99 = tpu.reciprocal %98 {approx = true} : vector<16x1xf32> -> vector<16x1xf32>
    %100 = vector.broadcast %99 : vector<16x1xf32> to vector<16x16xf32>
    %101 = arith.mulf %96, %100 : vector<16x16xf32>
    %102 = arith.truncf %101 : vector<16x16xf32> to vector<16x16xbf16>
    %103 = vector.extract_strided_slice %50 {offsets = [0, 16], sizes = [16, 8], strides = [1, 1]} : vector<16x32xbf16> to vector<16x8xbf16>
    %cst_41 = arith.constant dense<0.000000e+00> : vector<16x8xf32>
    %104 = tpu.matmul %102, %103, %cst_41 {dimension_numbers = #tpu.dot_dimension_numbers<[1], [0], [0], [1], [0, 0, 1, 1], [], []>} : vector<16x16xbf16>, vector<16x8xbf16>, vector<16x8xf32> -> vector<16x8xf32>
    %105 = vector.extract_strided_slice %48 {offsets = [0, 24], sizes = [16, 8], strides = [1, 1]} : vector<16x32xbf16> to vector<16x8xbf16>
    %106 = vector.extract_strided_slice %49 {offsets = [0, 24], sizes = [16, 8], strides = [1, 1]} : vector<16x32xbf16> to vector<16x8xbf16>
    "tpu.trace_start"() <{level = 10 : i32, message = "qd,kd->qk"}> : () -> ()
    %cst_42 = arith.constant dense<0.000000e+00> : vector<16x16xf32>
    %107 = tpu.matmul %105, %106, %cst_42 {dimension_numbers = #tpu.dot_dimension_numbers<[1], [1], [0], [0], [0, 0, 1, 0], [], []>} : vector<16x8xbf16>, vector<16x8xbf16>, vector<16x16xf32> -> vector<16x16xf32>
    "tpu.trace_stop"() : () -> ()
    %108 = vector.broadcast %30 : vector<1x16xf32> to vector<16x16xf32>
    %109 = arith.addf %107, %108 : vector<16x16xf32>
    %cst_43 = arith.constant dense<0xFF800000> : vector<16xf32>
    %110 = vector.multi_reduction <maximumf>, %109, %cst_43 [1] : vector<16x16xf32> to vector<16xf32>
    %111 = vector.shape_cast %110 : vector<16xf32> to vector<16x1xf32>
    %112 = vector.broadcast %111 : vector<16x1xf32> to vector<16x16xf32>
    %113 = arith.subf %109, %112 : vector<16x16xf32>
    %114 = math.exp %113 : vector<16x16xf32>
    %cst_44 = arith.constant dense<0.000000e+00> : vector<16xf32>
    %115 = vector.multi_reduction <add>, %114, %cst_44 [1] : vector<16x16xf32> to vector<16xf32>
    %116 = vector.shape_cast %115 : vector<16xf32> to vector<16x1xf32>
    %117 = tpu.reciprocal %116 {approx = true} : vector<16x1xf32> -> vector<16x1xf32>
    %118 = vector.broadcast %117 : vector<16x1xf32> to vector<16x16xf32>
    %119 = arith.mulf %114, %118 : vector<16x16xf32>
    %120 = arith.truncf %119 : vector<16x16xf32> to vector<16x16xbf16>
    %121 = vector.extract_strided_slice %50 {offsets = [0, 24], sizes = [16, 8], strides = [1, 1]} : vector<16x32xbf16> to vector<16x8xbf16>
    %cst_45 = arith.constant dense<0.000000e+00> : vector<16x8xf32>
    %122 = tpu.matmul %120, %121, %cst_45 {dimension_numbers = #tpu.dot_dimension_numbers<[1], [0], [0], [1], [0, 0, 1, 1], [], []>} : vector<16x16xbf16>, vector<16x8xbf16>, vector<16x8xf32> -> vector<16x8xf32>
    %123 = tpu.concatenate %68, %86, %104, %122 in 1 : vector<16x8xf32>, vector<16x8xf32>, vector<16x8xf32>, vector<16x8xf32> -> vector<16x32xf32>
    %124 = arith.truncf %123 : vector<16x32xf32> to vector<16x32xbf16>
    %cst_46 = arith.constant dense<0.000000e+00> : vector<16x32xf32>
    %125 = tpu.matmul %124, %43, %cst_46 {dimension_numbers = #tpu.dot_dimension_numbers<[1], [0], [0], [1], [0, 0, 1, 1], [], []>} : vector<16x32xbf16>, vector<32x32xbf16>, vector<16x32xf32> -> vector<16x32xf32>
    %126 = vector.broadcast %45 : vector<1x32xf32> to vector<16x32xf32>
    %127 = arith.addf %125, %126 : vector<16x32xf32>
    %128 = arith.addf %25, %127 : vector<16x32xf32>
    %c0_47 = arith.constant 0 : index
    %c0_48 = arith.constant 0 : index
    %c0_49 = arith.constant 0 : index
    %129 = vector.load %arg10[%c0_47, %c0_48, %c0_49] : memref<2x1x32xf32, #tpu.memory_space<vmem>>, vector<1x1x32xf32>
    %130 = vector.shape_cast %129 : vector<1x1x32xf32> to vector<1x32xf32>
    %c0_50 = arith.constant 0 : index
    %c0_51 = arith.constant 0 : index
    %c0_52 = arith.constant 0 : index
    %131 = vector.load %arg11[%c0_50, %c0_51, %c0_52] : memref<2x1x32xf32, #tpu.memory_space<vmem>>, vector<1x1x32xf32>
    %132 = vector.shape_cast %131 : vector<1x1x32xf32> to vector<1x32xf32>
    %cst_53 = arith.constant dense<0.000000e+00> : vector<16xf32>
    %133 = vector.multi_reduction <add>, %128, %cst_53 [1] : vector<16x32xf32> to vector<16xf32>
    %134 = vector.shape_cast %133 : vector<16xf32> to vector<16x1xf32>
    %cst_54 = arith.constant 3.200000e+01 : f32
    %135 = vector.broadcast %cst_54 : f32 to vector<16x1xf32>
    %136 = arith.divf %134, %135 : vector<16x1xf32>
    %137 = vector.broadcast %136 : vector<16x1xf32> to vector<16x32xf32>
    %138 = arith.subf %128, %137 : vector<16x32xf32>
    %139 = arith.mulf %138, %138 : vector<16x32xf32>
    %cst_55 = arith.constant dense<0.000000e+00> : vector<16xf32>
    %140 = vector.multi_reduction <add>, %139, %cst_55 [1] : vector<16x32xf32> to vector<16xf32>
    %141 = vector.shape_cast %140 : vector<16xf32> to vector<16x1xf32>
    %cst_56 = arith.constant 3.200000e+01 : f32
    %142 = vector.broadcast %cst_56 : f32 to vector<16x1xf32>
    %143 = arith.divf %141, %142 : vector<16x1xf32>
    %144 = vector.broadcast %136 : vector<16x1xf32> to vector<16x32xf32>
    %145 = arith.subf %128, %144 : vector<16x32xf32>
    %cst_57 = arith.constant 9.99999996E-13 : f32
    %146 = vector.broadcast %cst_57 : f32 to vector<16x1xf32>
    %147 = arith.addf %143, %146 : vector<16x1xf32>
    %148 = math.rsqrt %147 : vector<16x1xf32>
    %149 = vector.broadcast %148 : vector<16x1xf32> to vector<16x32xf32>
    %150 = arith.mulf %145, %149 : vector<16x32xf32>
    %151 = vector.broadcast %130 : vector<1x32xf32> to vector<16x32xf32>
    %152 = arith.mulf %150, %151 : vector<16x32xf32>
    %153 = vector.broadcast %132 : vector<1x32xf32> to vector<16x32xf32>
    %154 = arith.addf %152, %153 : vector<16x32xf32>
    %155 = vector.extract_strided_slice %154 {offsets = [0, 0], sizes = [8, 32], strides = [1, 1]} : vector<16x32xf32> to vector<8x32xf32>
    %156 = arith.truncf %155 : vector<8x32xf32> to vector<8x32xbf16>
    %c0_58 = arith.constant 0 : index
    %c0_59 = arith.constant 0 : index
    %c0_60 = arith.constant 0 : index
    %157 = vector.load %arg12[%c0_58, %c0_59, %c0_60] : memref<2x32x32xbf16, #tpu.memory_space<vmem>>, vector<1x32x32xbf16>
    %158 = vector.shape_cast %157 : vector<1x32x32xbf16> to vector<32x32xbf16>
    %cst_61 = arith.constant dense<0.000000e+00> : vector<8x32xf32>
    %159 = tpu.matmul %156, %158, %cst_61 {dimension_numbers = #tpu.dot_dimension_numbers<[1], [0], [0], [1], [0, 0, 1, 1], [], []>} : vector<8x32xbf16>, vector<32x32xbf16>, vector<8x32xf32> -> vector<8x32xf32>
    %c0_62 = arith.constant 0 : index
    %c0_63 = arith.constant 0 : index
    %c0_64 = arith.constant 0 : index
    %160 = vector.load %arg13[%c0_62, %c0_63, %c0_64] : memref<2x1x32xf32, #tpu.memory_space<vmem>>, vector<1x1x32xf32>
    %161 = vector.shape_cast %160 : vector<1x1x32xf32> to vector<1x32xf32>
    %162 = vector.broadcast %161 : vector<1x32xf32> to vector<8x32xf32>
    %163 = arith.addf %159, %162 : vector<8x32xf32>
    %c0_65 = arith.constant 0 : index
    %c0_66 = arith.constant 0 : index
    %c0_67 = arith.constant 0 : index
    %164 = vector.load %arg14[%c0_65, %c0_66, %c0_67] : memref<2x64x64xbf16, #tpu.memory_space<vmem>>, vector<1x64x64xbf16>
    %165 = vector.shape_cast %164 : vector<1x64x64xbf16> to vector<64x64xbf16>
    %cst_68 = arith.constant dense<0.000000e+00> : vector<17x64xf32>
    %166 = tpu.matmul %28, %165, %cst_68 {dimension_numbers = #tpu.dot_dimension_numbers<[1], [0], [0], [1], [0, 0, 1, 1], [], []>} : vector<17x64xbf16>, vector<64x64xbf16>, vector<17x64xf32> -> vector<17x64xf32>
    %c0_69 = arith.constant 0 : index
    %c0_70 = arith.constant 0 : index
    %c0_71 = arith.constant 0 : index
    %167 = vector.load %arg15[%c0_69, %c0_70, %c0_71] : memref<2x1x64xf32, #tpu.memory_space<vmem>>, vector<1x1x64xf32>
    %168 = vector.shape_cast %167 : vector<1x1x64xf32> to vector<1x64xf32>
    %169 = vector.broadcast %168 : vector<1x64xf32> to vector<17x64xf32>
    %170 = arith.addf %166, %169 : vector<17x64xf32>
    %171 = vector.extract_strided_slice %170 {offsets = [0, 0], sizes = [17, 32], strides = [1, 1]} : vector<17x64xf32> to vector<17x32xf32>
    %172 = vector.extract_strided_slice %170 {offsets = [0, 32], sizes = [17, 32], strides = [1, 1]} : vector<17x64xf32> to vector<17x32xf32>
    %c0_72 = arith.constant 0 : index
    %c0_73 = arith.constant 0 : index
    %c0_74 = arith.constant 0 : index
    %173 = vector.load %arg16[%c0_72, %c0_73, %c0_74] : memref<2x32x32xbf16, #tpu.memory_space<vmem>>, vector<1x32x32xbf16>
    %174 = vector.shape_cast %173 : vector<1x32x32xbf16> to vector<32x32xbf16>
    %c0_75 = arith.constant 0 : index
    %c0_76 = arith.constant 0 : index
    %c0_77 = arith.constant 0 : index
    %175 = vector.load %arg17[%c0_75, %c0_76, %c0_77] : memref<2x1x32xf32, #tpu.memory_space<vmem>>, vector<1x1x32xf32>
    %176 = vector.shape_cast %175 : vector<1x1x32xf32> to vector<1x32xf32>
    %cst_78 = arith.constant 0.353553385 : f32
    %177 = vector.broadcast %cst_78 : f32 to vector<8x32xf32>
    %178 = arith.mulf %163, %177 : vector<8x32xf32>
    %179 = arith.truncf %178 : vector<8x32xf32> to vector<8x32xbf16>
    %180 = arith.truncf %171 : vector<17x32xf32> to vector<17x32xbf16>
    %181 = arith.truncf %172 : vector<17x32xf32> to vector<17x32xbf16>
    %182 = vector.extract_strided_slice %179 {offsets = [0, 0], sizes = [8, 8], strides = [1, 1]} : vector<8x32xbf16> to vector<8x8xbf16>
    %183 = vector.extract_strided_slice %180 {offsets = [0, 0], sizes = [17, 8], strides = [1, 1]} : vector<17x32xbf16> to vector<17x8xbf16>
    "tpu.trace_start"() <{level = 10 : i32, message = "qd,kd->qk"}> : () -> ()
    %cst_79 = arith.constant dense<0.000000e+00> : vector<8x17xf32>
    %184 = tpu.matmul %182, %183, %cst_79 {dimension_numbers = #tpu.dot_dimension_numbers<[1], [1], [0], [0], [0, 0, 1, 0], [], []>} : vector<8x8xbf16>, vector<17x8xbf16>, vector<8x17xf32> -> vector<8x17xf32>
    "tpu.trace_stop"() : () -> ()
    %cst_80 = arith.constant dense<0xFF800000> : vector<8xf32>
    %185 = vector.multi_reduction <maximumf>, %184, %cst_80 [1] : vector<8x17xf32> to vector<8xf32>
    %186 = vector.shape_cast %185 : vector<8xf32> to vector<8x1xf32>
    %187 = vector.broadcast %186 : vector<8x1xf32> to vector<8x17xf32>
    %188 = arith.subf %184, %187 : vector<8x17xf32>
    %189 = math.exp %188 : vector<8x17xf32>
    %cst_81 = arith.constant dense<0.000000e+00> : vector<8xf32>
    %190 = vector.multi_reduction <add>, %189, %cst_81 [1] : vector<8x17xf32> to vector<8xf32>
    %191 = vector.shape_cast %190 : vector<8xf32> to vector<8x1xf32>
    %192 = tpu.reciprocal %191 {approx = true} : vector<8x1xf32> -> vector<8x1xf32>
    %193 = vector.broadcast %192 : vector<8x1xf32> to vector<8x17xf32>
    %194 = arith.mulf %189, %193 : vector<8x17xf32>
    %195 = arith.truncf %194 : vector<8x17xf32> to vector<8x17xbf16>
    %196 = vector.extract_strided_slice %181 {offsets = [0, 0], sizes = [17, 8], strides = [1, 1]} : vector<17x32xbf16> to vector<17x8xbf16>
    %cst_82 = arith.constant dense<0.000000e+00> : vector<8x8xf32>
    %197 = tpu.matmul %195, %196, %cst_82 {dimension_numbers = #tpu.dot_dimension_numbers<[1], [0], [0], [1], [0, 0, 1, 1], [], []>} : vector<8x17xbf16>, vector<17x8xbf16>, vector<8x8xf32> -> vector<8x8xf32>
    %198 = vector.extract_strided_slice %179 {offsets = [0, 8], sizes = [8, 8], strides = [1, 1]} : vector<8x32xbf16> to vector<8x8xbf16>
    %199 = vector.extract_strided_slice %180 {offsets = [0, 8], sizes = [17, 8], strides = [1, 1]} : vector<17x32xbf16> to vector<17x8xbf16>
    "tpu.trace_start"() <{level = 10 : i32, message = "qd,kd->qk"}> : () -> ()
    %cst_83 = arith.constant dense<0.000000e+00> : vector<8x17xf32>
    %200 = tpu.matmul %198, %199, %cst_83 {dimension_numbers = #tpu.dot_dimension_numbers<[1], [1], [0], [0], [0, 0, 1, 0], [], []>} : vector<8x8xbf16>, vector<17x8xbf16>, vector<8x17xf32> -> vector<8x17xf32>
    "tpu.trace_stop"() : () -> ()
    %cst_84 = arith.constant dense<0xFF800000> : vector<8xf32>
    %201 = vector.multi_reduction <maximumf>, %200, %cst_84 [1] : vector<8x17xf32> to vector<8xf32>
    %202 = vector.shape_cast %201 : vector<8xf32> to vector<8x1xf32>
    %203 = vector.broadcast %202 : vector<8x1xf32> to vector<8x17xf32>
    %204 = arith.subf %200, %203 : vector<8x17xf32>
    %205 = math.exp %204 : vector<8x17xf32>
    %cst_85 = arith.constant dense<0.000000e+00> : vector<8xf32>
    %206 = vector.multi_reduction <add>, %205, %cst_85 [1] : vector<8x17xf32> to vector<8xf32>
    %207 = vector.shape_cast %206 : vector<8xf32> to vector<8x1xf32>
    %208 = tpu.reciprocal %207 {approx = true} : vector<8x1xf32> -> vector<8x1xf32>
    %209 = vector.broadcast %208 : vector<8x1xf32> to vector<8x17xf32>
    %210 = arith.mulf %205, %209 : vector<8x17xf32>
    %211 = arith.truncf %210 : vector<8x17xf32> to vector<8x17xbf16>
    %212 = vector.extract_strided_slice %181 {offsets = [0, 8], sizes = [17, 8], strides = [1, 1]} : vector<17x32xbf16> to vector<17x8xbf16>
    %cst_86 = arith.constant dense<0.000000e+00> : vector<8x8xf32>
    %213 = tpu.matmul %211, %212, %cst_86 {dimension_numbers = #tpu.dot_dimension_numbers<[1], [0], [0], [1], [0, 0, 1, 1], [], []>} : vector<8x17xbf16>, vector<17x8xbf16>, vector<8x8xf32> -> vector<8x8xf32>
    %214 = vector.extract_strided_slice %179 {offsets = [0, 16], sizes = [8, 8], strides = [1, 1]} : vector<8x32xbf16> to vector<8x8xbf16>
    %215 = vector.extract_strided_slice %180 {offsets = [0, 16], sizes = [17, 8], strides = [1, 1]} : vector<17x32xbf16> to vector<17x8xbf16>
    "tpu.trace_start"() <{level = 10 : i32, message = "qd,kd->qk"}> : () -> ()
    %cst_87 = arith.constant dense<0.000000e+00> : vector<8x17xf32>
    %216 = tpu.matmul %214, %215, %cst_87 {dimension_numbers = #tpu.dot_dimension_numbers<[1], [1], [0], [0], [0, 0, 1, 0], [], []>} : vector<8x8xbf16>, vector<17x8xbf16>, vector<8x17xf32> -> vector<8x17xf32>
    "tpu.trace_stop"() : () -> ()
    %cst_88 = arith.constant dense<0xFF800000> : vector<8xf32>
    %217 = vector.multi_reduction <maximumf>, %216, %cst_88 [1] : vector<8x17xf32> to vector<8xf32>
    %218 = vector.shape_cast %217 : vector<8xf32> to vector<8x1xf32>
    %219 = vector.broadcast %218 : vector<8x1xf32> to vector<8x17xf32>
    %220 = arith.subf %216, %219 : vector<8x17xf32>
    %221 = math.exp %220 : vector<8x17xf32>
    %cst_89 = arith.constant dense<0.000000e+00> : vector<8xf32>
    %222 = vector.multi_reduction <add>, %221, %cst_89 [1] : vector<8x17xf32> to vector<8xf32>
    %223 = vector.shape_cast %222 : vector<8xf32> to vector<8x1xf32>
    %224 = tpu.reciprocal %223 {approx = true} : vector<8x1xf32> -> vector<8x1xf32>
    %225 = vector.broadcast %224 : vector<8x1xf32> to vector<8x17xf32>
    %226 = arith.mulf %221, %225 : vector<8x17xf32>
    %227 = arith.truncf %226 : vector<8x17xf32> to vector<8x17xbf16>
    %228 = vector.extract_strided_slice %181 {offsets = [0, 16], sizes = [17, 8], strides = [1, 1]} : vector<17x32xbf16> to vector<17x8xbf16>
    %cst_90 = arith.constant dense<0.000000e+00> : vector<8x8xf32>
    %229 = tpu.matmul %227, %228, %cst_90 {dimension_numbers = #tpu.dot_dimension_numbers<[1], [0], [0], [1], [0, 0, 1, 1], [], []>} : vector<8x17xbf16>, vector<17x8xbf16>, vector<8x8xf32> -> vector<8x8xf32>
    %230 = vector.extract_strided_slice %179 {offsets = [0, 24], sizes = [8, 8], strides = [1, 1]} : vector<8x32xbf16> to vector<8x8xbf16>
    %231 = vector.extract_strided_slice %180 {offsets = [0, 24], sizes = [17, 8], strides = [1, 1]} : vector<17x32xbf16> to vector<17x8xbf16>
    "tpu.trace_start"() <{level = 10 : i32, message = "qd,kd->qk"}> : () -> ()
    %cst_91 = arith.constant dense<0.000000e+00> : vector<8x17xf32>
    %232 = tpu.matmul %230, %231, %cst_91 {dimension_numbers = #tpu.dot_dimension_numbers<[1], [1], [0], [0], [0, 0, 1, 0], [], []>} : vector<8x8xbf16>, vector<17x8xbf16>, vector<8x17xf32> -> vector<8x17xf32>
    "tpu.trace_stop"() : () -> ()
    %cst_92 = arith.constant dense<0xFF800000> : vector<8xf32>
    %233 = vector.multi_reduction <maximumf>, %232, %cst_92 [1] : vector<8x17xf32> to vector<8xf32>
    %234 = vector.shape_cast %233 : vector<8xf32> to vector<8x1xf32>
    %235 = vector.broadcast %234 : vector<8x1xf32> to vector<8x17xf32>
    %236 = arith.subf %232, %235 : vector<8x17xf32>
    %237 = math.exp %236 : vector<8x17xf32>
    %cst_93 = arith.constant dense<0.000000e+00> : vector<8xf32>
    %238 = vector.multi_reduction <add>, %237, %cst_93 [1] : vector<8x17xf32> to vector<8xf32>
    %239 = vector.shape_cast %238 : vector<8xf32> to vector<8x1xf32>
    %240 = tpu.reciprocal %239 {approx = true} : vector<8x1xf32> -> vector<8x1xf32>
    %241 = vector.broadcast %240 : vector<8x1xf32> to vector<8x17xf32>
    %242 = arith.mulf %237, %241 : vector<8x17xf32>
    %243 = arith.truncf %242 : vector<8x17xf32> to vector<8x17xbf16>
    %244 = vector.extract_strided_slice %181 {offsets = [0, 24], sizes = [17, 8], strides = [1, 1]} : vector<17x32xbf16> to vector<17x8xbf16>
    %cst_94 = arith.constant dense<0.000000e+00> : vector<8x8xf32>
    %245 = tpu.matmul %243, %244, %cst_94 {dimension_numbers = #tpu.dot_dimension_numbers<[1], [0], [0], [1], [0, 0, 1, 1], [], []>} : vector<8x17xbf16>, vector<17x8xbf16>, vector<8x8xf32> -> vector<8x8xf32>
    %246 = tpu.concatenate %197, %213, %229, %245 in 1 : vector<8x8xf32>, vector<8x8xf32>, vector<8x8xf32>, vector<8x8xf32> -> vector<8x32xf32>
    %247 = arith.truncf %246 : vector<8x32xf32> to vector<8x32xbf16>
    %cst_95 = arith.constant dense<0.000000e+00> : vector<8x32xf32>
    %248 = tpu.matmul %247, %174, %cst_95 {dimension_numbers = #tpu.dot_dimension_numbers<[1], [0], [0], [1], [0, 0, 1, 1], [], []>} : vector<8x32xbf16>, vector<32x32xbf16>, vector<8x32xf32> -> vector<8x32xf32>
    %249 = vector.broadcast %176 : vector<1x32xf32> to vector<8x32xf32>
    %250 = arith.addf %248, %249 : vector<8x32xf32>
    %251 = arith.addf %155, %250 : vector<8x32xf32>
    %c0_96 = arith.constant 0 : index
    %c0_97 = arith.constant 0 : index
    %c0_98 = arith.constant 0 : index
    %252 = vector.load %arg18[%c0_96, %c0_97, %c0_98] : memref<2x1x32xf32, #tpu.memory_space<vmem>>, vector<1x1x32xf32>
    %253 = vector.shape_cast %252 : vector<1x1x32xf32> to vector<1x32xf32>
    %c0_99 = arith.constant 0 : index
    %c0_100 = arith.constant 0 : index
    %c0_101 = arith.constant 0 : index
    %254 = vector.load %arg19[%c0_99, %c0_100, %c0_101] : memref<2x1x32xf32, #tpu.memory_space<vmem>>, vector<1x1x32xf32>
    %255 = vector.shape_cast %254 : vector<1x1x32xf32> to vector<1x32xf32>
    %cst_102 = arith.constant dense<0.000000e+00> : vector<8xf32>
    %256 = vector.multi_reduction <add>, %251, %cst_102 [1] : vector<8x32xf32> to vector<8xf32>
    %257 = vector.shape_cast %256 : vector<8xf32> to vector<8x1xf32>
    %cst_103 = arith.constant 3.200000e+01 : f32
    %258 = vector.broadcast %cst_103 : f32 to vector<8x1xf32>
    %259 = arith.divf %257, %258 : vector<8x1xf32>
    %260 = vector.broadcast %259 : vector<8x1xf32> to vector<8x32xf32>
    %261 = arith.subf %251, %260 : vector<8x32xf32>
    %262 = arith.mulf %261, %261 : vector<8x32xf32>
    %cst_104 = arith.constant dense<0.000000e+00> : vector<8xf32>
    %263 = vector.multi_reduction <add>, %262, %cst_104 [1] : vector<8x32xf32> to vector<8xf32>
    %264 = vector.shape_cast %263 : vector<8xf32> to vector<8x1xf32>
    %cst_105 = arith.constant 3.200000e+01 : f32
    %265 = vector.broadcast %cst_105 : f32 to vector<8x1xf32>
    %266 = arith.divf %264, %265 : vector<8x1xf32>
    %267 = vector.broadcast %259 : vector<8x1xf32> to vector<8x32xf32>
    %268 = arith.subf %251, %267 : vector<8x32xf32>
    %cst_106 = arith.constant 9.99999996E-13 : f32
    %269 = vector.broadcast %cst_106 : f32 to vector<8x1xf32>
    %270 = arith.addf %266, %269 : vector<8x1xf32>
    %271 = math.rsqrt %270 : vector<8x1xf32>
    %272 = vector.broadcast %271 : vector<8x1xf32> to vector<8x32xf32>
    %273 = arith.mulf %268, %272 : vector<8x32xf32>
    %274 = vector.broadcast %253 : vector<1x32xf32> to vector<8x32xf32>
    %275 = arith.mulf %273, %274 : vector<8x32xf32>
    %276 = vector.broadcast %255 : vector<1x32xf32> to vector<8x32xf32>
    %277 = arith.addf %275, %276 : vector<8x32xf32>
    %278 = arith.truncf %277 : vector<8x32xf32> to vector<8x32xbf16>
    %c0_107 = arith.constant 0 : index
    %c0_108 = arith.constant 0 : index
    %c0_109 = arith.constant 0 : index
    %279 = vector.load %arg20[%c0_107, %c0_108, %c0_109] : memref<2x32x64xbf16, #tpu.memory_space<vmem>>, vector<1x32x64xbf16>
    %280 = vector.shape_cast %279 : vector<1x32x64xbf16> to vector<32x64xbf16>
    %cst_110 = arith.constant dense<0.000000e+00> : vector<8x64xf32>
    %281 = tpu.matmul %278, %280, %cst_110 {dimension_numbers = #tpu.dot_dimension_numbers<[1], [0], [0], [1], [0, 0, 1, 1], [], []>} : vector<8x32xbf16>, vector<32x64xbf16>, vector<8x64xf32> -> vector<8x64xf32>
    %c0_111 = arith.constant 0 : index
    %c0_112 = arith.constant 0 : index
    %c0_113 = arith.constant 0 : index
    %282 = vector.load %arg21[%c0_111, %c0_112, %c0_113] : memref<2x1x64xf32, #tpu.memory_space<vmem>>, vector<1x1x64xf32>
    %283 = vector.shape_cast %282 : vector<1x1x64xf32> to vector<1x64xf32>
    %284 = vector.broadcast %283 : vector<1x64xf32> to vector<8x64xf32>
    %285 = arith.addf %281, %284 : vector<8x64xf32>
    %286 = arith.mulf %285, %285 : vector<8x64xf32>
    %287 = arith.mulf %285, %286 : vector<8x64xf32>
    %cst_114 = arith.constant 4.471500e-02 : f32
    %288 = vector.broadcast %cst_114 : f32 to vector<8x64xf32>
    %289 = arith.mulf %288, %287 : vector<8x64xf32>
    %290 = arith.addf %285, %289 : vector<8x64xf32>
    %cst_115 = arith.constant 0.797884583 : f32
    %291 = vector.broadcast %cst_115 : f32 to vector<8x64xf32>
    %292 = arith.mulf %291, %290 : vector<8x64xf32>
    %293 = math.tanh %292 : vector<8x64xf32>
    %cst_116 = arith.constant 1.000000e+00 : f32
    %294 = vector.broadcast %cst_116 : f32 to vector<8x64xf32>
    %295 = arith.addf %294, %293 : vector<8x64xf32>
    %cst_117 = arith.constant 5.000000e-01 : f32
    %296 = vector.broadcast %cst_117 : f32 to vector<8x64xf32>
    %297 = arith.mulf %296, %295 : vector<8x64xf32>
    %298 = arith.mulf %285, %297 : vector<8x64xf32>
    %299 = arith.truncf %298 : vector<8x64xf32> to vector<8x64xbf16>
    %c0_118 = arith.constant 0 : index
    %c0_119 = arith.constant 0 : index
    %c0_120 = arith.constant 0 : index
    %300 = vector.load %arg22[%c0_118, %c0_119, %c0_120] : memref<2x64x32xbf16, #tpu.memory_space<vmem>>, vector<1x64x32xbf16>
    %301 = vector.shape_cast %300 : vector<1x64x32xbf16> to vector<64x32xbf16>
    %cst_121 = arith.constant dense<0.000000e+00> : vector<8x32xf32>
    %302 = tpu.matmul %299, %301, %cst_121 {dimension_numbers = #tpu.dot_dimension_numbers<[1], [0], [0], [1], [0, 0, 1, 1], [], []>} : vector<8x64xbf16>, vector<64x32xbf16>, vector<8x32xf32> -> vector<8x32xf32>
    %c0_122 = arith.constant 0 : index
    %c0_123 = arith.constant 0 : index
    %c0_124 = arith.constant 0 : index
    %303 = vector.load %arg23[%c0_122, %c0_123, %c0_124] : memref<2x1x32xf32, #tpu.memory_space<vmem>>, vector<1x1x32xf32>
    %304 = vector.shape_cast %303 : vector<1x1x32xf32> to vector<1x32xf32>
    %305 = vector.broadcast %304 : vector<1x32xf32> to vector<8x32xf32>
    %306 = arith.addf %302, %305 : vector<8x32xf32>
    %307 = arith.addf %277, %306 : vector<8x32xf32>
    %c0_125 = arith.constant 0 : index
    %c0_126 = arith.constant 0 : index
    %c0_127 = arith.constant 0 : index
    %308 = vector.load %arg24[%c0_125, %c0_126, %c0_127] : memref<2x1x32xf32, #tpu.memory_space<vmem>>, vector<1x1x32xf32>
    %309 = vector.shape_cast %308 : vector<1x1x32xf32> to vector<1x32xf32>
    %c0_128 = arith.constant 0 : index
    %c0_129 = arith.constant 0 : index
    %c0_130 = arith.constant 0 : index
    %310 = vector.load %arg25[%c0_128, %c0_129, %c0_130] : memref<2x1x32xf32, #tpu.memory_space<vmem>>, vector<1x1x32xf32>
    %311 = vector.shape_cast %310 : vector<1x1x32xf32> to vector<1x32xf32>
    %cst_131 = arith.constant dense<0.000000e+00> : vector<8xf32>
    %312 = vector.multi_reduction <add>, %307, %cst_131 [1] : vector<8x32xf32> to vector<8xf32>
    %313 = vector.shape_cast %312 : vector<8xf32> to vector<8x1xf32>
    %cst_132 = arith.constant 3.200000e+01 : f32
    %314 = vector.broadcast %cst_132 : f32 to vector<8x1xf32>
    %315 = arith.divf %313, %314 : vector<8x1xf32>
    %316 = vector.broadcast %315 : vector<8x1xf32> to vector<8x32xf32>
    %317 = arith.subf %307, %316 : vector<8x32xf32>
    %318 = arith.mulf %317, %317 : vector<8x32xf32>
    %cst_133 = arith.constant dense<0.000000e+00> : vector<8xf32>
    %319 = vector.multi_reduction <add>, %318, %cst_133 [1] : vector<8x32xf32> to vector<8xf32>
    %320 = vector.shape_cast %319 : vector<8xf32> to vector<8x1xf32>
    %cst_134 = arith.constant 3.200000e+01 : f32
    %321 = vector.broadcast %cst_134 : f32 to vector<8x1xf32>
    %322 = arith.divf %320, %321 : vector<8x1xf32>
    %323 = vector.broadcast %315 : vector<8x1xf32> to vector<8x32xf32>
    %324 = arith.subf %307, %323 : vector<8x32xf32>
    %cst_135 = arith.constant 9.99999996E-13 : f32
    %325 = vector.broadcast %cst_135 : f32 to vector<8x1xf32>
    %326 = arith.addf %322, %325 : vector<8x1xf32>
    %327 = math.rsqrt %326 : vector<8x1xf32>
    %328 = vector.broadcast %327 : vector<8x1xf32> to vector<8x32xf32>
    %329 = arith.mulf %324, %328 : vector<8x32xf32>
    %330 = vector.broadcast %309 : vector<1x32xf32> to vector<8x32xf32>
    %331 = arith.mulf %329, %330 : vector<8x32xf32>
    %332 = vector.broadcast %311 : vector<1x32xf32> to vector<8x32xf32>
    %333 = arith.addf %331, %332 : vector<8x32xf32>
    %334 = vector.extract_strided_slice %154 {offsets = [8, 0], sizes = [8, 32], strides = [1, 1]} : vector<16x32xf32> to vector<8x32xf32>
    %335 = arith.truncf %334 : vector<8x32xf32> to vector<8x32xbf16>
    %c0_136 = arith.constant 0 : index
    %c0_137 = arith.constant 0 : index
    %c0_138 = arith.constant 0 : index
    %336 = vector.load %arg26[%c0_136, %c0_137, %c0_138] : memref<2x32x64xbf16, #tpu.memory_space<vmem>>, vector<1x32x64xbf16>
    %337 = vector.shape_cast %336 : vector<1x32x64xbf16> to vector<32x64xbf16>
    %cst_139 = arith.constant dense<0.000000e+00> : vector<8x64xf32>
    %338 = tpu.matmul %335, %337, %cst_139 {dimension_numbers = #tpu.dot_dimension_numbers<[1], [0], [0], [1], [0, 0, 1, 1], [], []>} : vector<8x32xbf16>, vector<32x64xbf16>, vector<8x64xf32> -> vector<8x64xf32>
    %c0_140 = arith.constant 0 : index
    %c0_141 = arith.constant 0 : index
    %c0_142 = arith.constant 0 : index
    %339 = vector.load %arg27[%c0_140, %c0_141, %c0_142] : memref<2x1x64xf32, #tpu.memory_space<vmem>>, vector<1x1x64xf32>
    %340 = vector.shape_cast %339 : vector<1x1x64xf32> to vector<1x64xf32>
    %341 = vector.broadcast %340 : vector<1x64xf32> to vector<8x64xf32>
    %342 = arith.addf %338, %341 : vector<8x64xf32>
    %343 = arith.mulf %342, %342 : vector<8x64xf32>
    %344 = arith.mulf %342, %343 : vector<8x64xf32>
    %cst_143 = arith.constant 4.471500e-02 : f32
    %345 = vector.broadcast %cst_143 : f32 to vector<8x64xf32>
    %346 = arith.mulf %345, %344 : vector<8x64xf32>
    %347 = arith.addf %342, %346 : vector<8x64xf32>
    %cst_144 = arith.constant 0.797884583 : f32
    %348 = vector.broadcast %cst_144 : f32 to vector<8x64xf32>
    %349 = arith.mulf %348, %347 : vector<8x64xf32>
    %350 = math.tanh %349 : vector<8x64xf32>
    %cst_145 = arith.constant 1.000000e+00 : f32
    %351 = vector.broadcast %cst_145 : f32 to vector<8x64xf32>
    %352 = arith.addf %351, %350 : vector<8x64xf32>
    %cst_146 = arith.constant 5.000000e-01 : f32
    %353 = vector.broadcast %cst_146 : f32 to vector<8x64xf32>
    %354 = arith.mulf %353, %352 : vector<8x64xf32>
    %355 = arith.mulf %342, %354 : vector<8x64xf32>
    %356 = arith.truncf %355 : vector<8x64xf32> to vector<8x64xbf16>
    %c0_147 = arith.constant 0 : index
    %c0_148 = arith.constant 0 : index
    %c0_149 = arith.constant 0 : index
    %357 = vector.load %arg28[%c0_147, %c0_148, %c0_149] : memref<2x64x32xbf16, #tpu.memory_space<vmem>>, vector<1x64x32xbf16>
    %358 = vector.shape_cast %357 : vector<1x64x32xbf16> to vector<64x32xbf16>
    %cst_150 = arith.constant dense<0.000000e+00> : vector<8x32xf32>
    %359 = tpu.matmul %356, %358, %cst_150 {dimension_numbers = #tpu.dot_dimension_numbers<[1], [0], [0], [1], [0, 0, 1, 1], [], []>} : vector<8x64xbf16>, vector<64x32xbf16>, vector<8x32xf32> -> vector<8x32xf32>
    %c0_151 = arith.constant 0 : index
    %c0_152 = arith.constant 0 : index
    %c0_153 = arith.constant 0 : index
    %360 = vector.load %arg29[%c0_151, %c0_152, %c0_153] : memref<2x1x32xf32, #tpu.memory_space<vmem>>, vector<1x1x32xf32>
    %361 = vector.shape_cast %360 : vector<1x1x32xf32> to vector<1x32xf32>
    %362 = vector.broadcast %361 : vector<1x32xf32> to vector<8x32xf32>
    %363 = arith.addf %359, %362 : vector<8x32xf32>
    %364 = arith.addf %334, %363 : vector<8x32xf32>
    %c0_154 = arith.constant 0 : index
    %c0_155 = arith.constant 0 : index
    %c0_156 = arith.constant 0 : index
    %365 = vector.load %arg30[%c0_154, %c0_155, %c0_156] : memref<2x1x32xf32, #tpu.memory_space<vmem>>, vector<1x1x32xf32>
    %366 = vector.shape_cast %365 : vector<1x1x32xf32> to vector<1x32xf32>
    %c0_157 = arith.constant 0 : index
    %c0_158 = arith.constant 0 : index
    %c0_159 = arith.constant 0 : index
    %367 = vector.load %arg31[%c0_157, %c0_158, %c0_159] : memref<2x1x32xf32, #tpu.memory_space<vmem>>, vector<1x1x32xf32>
    %368 = vector.shape_cast %367 : vector<1x1x32xf32> to vector<1x32xf32>
    %cst_160 = arith.constant dense<0.000000e+00> : vector<8xf32>
    %369 = vector.multi_reduction <add>, %364, %cst_160 [1] : vector<8x32xf32> to vector<8xf32>
    %370 = vector.shape_cast %369 : vector<8xf32> to vector<8x1xf32>
    %cst_161 = arith.constant 3.200000e+01 : f32
    %371 = vector.broadcast %cst_161 : f32 to vector<8x1xf32>
    %372 = arith.divf %370, %371 : vector<8x1xf32>
    %373 = vector.broadcast %372 : vector<8x1xf32> to vector<8x32xf32>
    %374 = arith.subf %364, %373 : vector<8x32xf32>
    %375 = arith.mulf %374, %374 : vector<8x32xf32>
    %cst_162 = arith.constant dense<0.000000e+00> : vector<8xf32>
    %376 = vector.multi_reduction <add>, %375, %cst_162 [1] : vector<8x32xf32> to vector<8xf32>
    %377 = vector.shape_cast %376 : vector<8xf32> to vector<8x1xf32>
    %cst_163 = arith.constant 3.200000e+01 : f32
    %378 = vector.broadcast %cst_163 : f32 to vector<8x1xf32>
    %379 = arith.divf %377, %378 : vector<8x1xf32>
    %380 = vector.broadcast %372 : vector<8x1xf32> to vector<8x32xf32>
    %381 = arith.subf %364, %380 : vector<8x32xf32>
    %cst_164 = arith.constant 9.99999996E-13 : f32
    %382 = vector.broadcast %cst_164 : f32 to vector<8x1xf32>
    %383 = arith.addf %379, %382 : vector<8x1xf32>
    %384 = math.rsqrt %383 : vector<8x1xf32>
    %385 = vector.broadcast %384 : vector<8x1xf32> to vector<8x32xf32>
    %386 = arith.mulf %381, %385 : vector<8x32xf32>
    %387 = vector.broadcast %366 : vector<1x32xf32> to vector<8x32xf32>
    %388 = arith.mulf %386, %387 : vector<8x32xf32>
    %389 = vector.broadcast %368 : vector<1x32xf32> to vector<8x32xf32>
    %390 = arith.addf %388, %389 : vector<8x32xf32>
    %391 = tpu.concatenate %333, %390 in 0 : vector<8x32xf32>, vector<8x32xf32> -> vector<16x32xf32>
    %392 = arith.truncf %391 : vector<16x32xf32> to vector<16x32xbf16>
    %c1 = arith.constant 1 : index
    %c0_165 = arith.constant 0 : index
    %c0_166 = arith.constant 0 : index
    %393 = vector.load %arg6[%c1, %c0_165, %c0_166] : memref<2x32x96xbf16, #tpu.memory_space<vmem>>, vector<1x32x96xbf16>
    %394 = vector.shape_cast %393 : vector<1x32x96xbf16> to vector<32x96xbf16>
    %cst_167 = arith.constant dense<0.000000e+00> : vector<16x96xf32>
    %395 = tpu.matmul %392, %394, %cst_167 {dimension_numbers = #tpu.dot_dimension_numbers<[1], [0], [0], [1], [0, 0, 1, 1], [], []>} : vector<16x32xbf16>, vector<32x96xbf16>, vector<16x96xf32> -> vector<16x96xf32>
    %c1_168 = arith.constant 1 : index
    %c0_169 = arith.constant 0 : index
    %c0_170 = arith.constant 0 : index
    %396 = vector.load %arg7[%c1_168, %c0_169, %c0_170] : memref<2x1x96xf32, #tpu.memory_space<vmem>>, vector<1x1x96xf32>
    %397 = vector.shape_cast %396 : vector<1x1x96xf32> to vector<1x96xf32>
    %398 = vector.broadcast %397 : vector<1x96xf32> to vector<16x96xf32>
    %399 = arith.addf %395, %398 : vector<16x96xf32>
    %400 = vector.extract_strided_slice %399 {offsets = [0, 0], sizes = [16, 32], strides = [1, 1]} : vector<16x96xf32> to vector<16x32xf32>
    %401 = vector.extract_strided_slice %399 {offsets = [0, 32], sizes = [16, 32], strides = [1, 1]} : vector<16x96xf32> to vector<16x32xf32>
    %402 = vector.extract_strided_slice %399 {offsets = [0, 64], sizes = [16, 32], strides = [1, 1]} : vector<16x96xf32> to vector<16x32xf32>
    %c1_171 = arith.constant 1 : index
    %c0_172 = arith.constant 0 : index
    %c0_173 = arith.constant 0 : index
    %403 = vector.load %arg8[%c1_171, %c0_172, %c0_173] : memref<2x32x32xbf16, #tpu.memory_space<vmem>>, vector<1x32x32xbf16>
    %404 = vector.shape_cast %403 : vector<1x32x32xbf16> to vector<32x32xbf16>
    %c1_174 = arith.constant 1 : index
    %c0_175 = arith.constant 0 : index
    %c0_176 = arith.constant 0 : index
    %405 = vector.load %arg9[%c1_174, %c0_175, %c0_176] : memref<2x1x32xf32, #tpu.memory_space<vmem>>, vector<1x1x32xf32>
    %406 = vector.shape_cast %405 : vector<1x1x32xf32> to vector<1x32xf32>
    %cst_177 = arith.constant 0.353553385 : f32
    %407 = vector.broadcast %cst_177 : f32 to vector<16x32xf32>
    %408 = arith.mulf %400, %407 : vector<16x32xf32>
    %409 = arith.truncf %408 : vector<16x32xf32> to vector<16x32xbf16>
    %410 = arith.truncf %401 : vector<16x32xf32> to vector<16x32xbf16>
    %411 = arith.truncf %402 : vector<16x32xf32> to vector<16x32xbf16>
    %412 = vector.extract_strided_slice %409 {offsets = [0, 0], sizes = [16, 8], strides = [1, 1]} : vector<16x32xbf16> to vector<16x8xbf16>
    %413 = vector.extract_strided_slice %410 {offsets = [0, 0], sizes = [16, 8], strides = [1, 1]} : vector<16x32xbf16> to vector<16x8xbf16>
    "tpu.trace_start"() <{level = 10 : i32, message = "qd,kd->qk"}> : () -> ()
    %cst_178 = arith.constant dense<0.000000e+00> : vector<16x16xf32>
    %414 = tpu.matmul %412, %413, %cst_178 {dimension_numbers = #tpu.dot_dimension_numbers<[1], [1], [0], [0], [0, 0, 1, 0], [], []>} : vector<16x8xbf16>, vector<16x8xbf16>, vector<16x16xf32> -> vector<16x16xf32>
    "tpu.trace_stop"() : () -> ()
    %415 = vector.broadcast %30 : vector<1x16xf32> to vector<16x16xf32>
    %416 = arith.addf %414, %415 : vector<16x16xf32>
    %cst_179 = arith.constant dense<0xFF800000> : vector<16xf32>
    %417 = vector.multi_reduction <maximumf>, %416, %cst_179 [1] : vector<16x16xf32> to vector<16xf32>
    %418 = vector.shape_cast %417 : vector<16xf32> to vector<16x1xf32>
    %419 = vector.broadcast %418 : vector<16x1xf32> to vector<16x16xf32>
    %420 = arith.subf %416, %419 : vector<16x16xf32>
    %421 = math.exp %420 : vector<16x16xf32>
    %cst_180 = arith.constant dense<0.000000e+00> : vector<16xf32>
    %422 = vector.multi_reduction <add>, %421, %cst_180 [1] : vector<16x16xf32> to vector<16xf32>
    %423 = vector.shape_cast %422 : vector<16xf32> to vector<16x1xf32>
    %424 = tpu.reciprocal %423 {approx = true} : vector<16x1xf32> -> vector<16x1xf32>
    %425 = vector.broadcast %424 : vector<16x1xf32> to vector<16x16xf32>
    %426 = arith.mulf %421, %425 : vector<16x16xf32>
    %427 = arith.truncf %426 : vector<16x16xf32> to vector<16x16xbf16>
    %428 = vector.extract_strided_slice %411 {offsets = [0, 0], sizes = [16, 8], strides = [1, 1]} : vector<16x32xbf16> to vector<16x8xbf16>
    %cst_181 = arith.constant dense<0.000000e+00> : vector<16x8xf32>
    %429 = tpu.matmul %427, %428, %cst_181 {dimension_numbers = #tpu.dot_dimension_numbers<[1], [0], [0], [1], [0, 0, 1, 1], [], []>} : vector<16x16xbf16>, vector<16x8xbf16>, vector<16x8xf32> -> vector<16x8xf32>
    %430 = vector.extract_strided_slice %409 {offsets = [0, 8], sizes = [16, 8], strides = [1, 1]} : vector<16x32xbf16> to vector<16x8xbf16>
    %431 = vector.extract_strided_slice %410 {offsets = [0, 8], sizes = [16, 8], strides = [1, 1]} : vector<16x32xbf16> to vector<16x8xbf16>
    "tpu.trace_start"() <{level = 10 : i32, message = "qd,kd->qk"}> : () -> ()
    %cst_182 = arith.constant dense<0.000000e+00> : vector<16x16xf32>
    %432 = tpu.matmul %430, %431, %cst_182 {dimension_numbers = #tpu.dot_dimension_numbers<[1], [1], [0], [0], [0, 0, 1, 0], [], []>} : vector<16x8xbf16>, vector<16x8xbf16>, vector<16x16xf32> -> vector<16x16xf32>
    "tpu.trace_stop"() : () -> ()
    %433 = vector.broadcast %30 : vector<1x16xf32> to vector<16x16xf32>
    %434 = arith.addf %432, %433 : vector<16x16xf32>
    %cst_183 = arith.constant dense<0xFF800000> : vector<16xf32>
    %435 = vector.multi_reduction <maximumf>, %434, %cst_183 [1] : vector<16x16xf32> to vector<16xf32>
    %436 = vector.shape_cast %435 : vector<16xf32> to vector<16x1xf32>
    %437 = vector.broadcast %436 : vector<16x1xf32> to vector<16x16xf32>
    %438 = arith.subf %434, %437 : vector<16x16xf32>
    %439 = math.exp %438 : vector<16x16xf32>
    %cst_184 = arith.constant dense<0.000000e+00> : vector<16xf32>
    %440 = vector.multi_reduction <add>, %439, %cst_184 [1] : vector<16x16xf32> to vector<16xf32>
    %441 = vector.shape_cast %440 : vector<16xf32> to vector<16x1xf32>
    %442 = tpu.reciprocal %441 {approx = true} : vector<16x1xf32> -> vector<16x1xf32>
    %443 = vector.broadcast %442 : vector<16x1xf32> to vector<16x16xf32>
    %444 = arith.mulf %439, %443 : vector<16x16xf32>
    %445 = arith.truncf %444 : vector<16x16xf32> to vector<16x16xbf16>
    %446 = vector.extract_strided_slice %411 {offsets = [0, 8], sizes = [16, 8], strides = [1, 1]} : vector<16x32xbf16> to vector<16x8xbf16>
    %cst_185 = arith.constant dense<0.000000e+00> : vector<16x8xf32>
    %447 = tpu.matmul %445, %446, %cst_185 {dimension_numbers = #tpu.dot_dimension_numbers<[1], [0], [0], [1], [0, 0, 1, 1], [], []>} : vector<16x16xbf16>, vector<16x8xbf16>, vector<16x8xf32> -> vector<16x8xf32>
    %448 = vector.extract_strided_slice %409 {offsets = [0, 16], sizes = [16, 8], strides = [1, 1]} : vector<16x32xbf16> to vector<16x8xbf16>
    %449 = vector.extract_strided_slice %410 {offsets = [0, 16], sizes = [16, 8], strides = [1, 1]} : vector<16x32xbf16> to vector<16x8xbf16>
    "tpu.trace_start"() <{level = 10 : i32, message = "qd,kd->qk"}> : () -> ()
    %cst_186 = arith.constant dense<0.000000e+00> : vector<16x16xf32>
    %450 = tpu.matmul %448, %449, %cst_186 {dimension_numbers = #tpu.dot_dimension_numbers<[1], [1], [0], [0], [0, 0, 1, 0], [], []>} : vector<16x8xbf16>, vector<16x8xbf16>, vector<16x16xf32> -> vector<16x16xf32>
    "tpu.trace_stop"() : () -> ()
    %451 = vector.broadcast %30 : vector<1x16xf32> to vector<16x16xf32>
    %452 = arith.addf %450, %451 : vector<16x16xf32>
    %cst_187 = arith.constant dense<0xFF800000> : vector<16xf32>
    %453 = vector.multi_reduction <maximumf>, %452, %cst_187 [1] : vector<16x16xf32> to vector<16xf32>
    %454 = vector.shape_cast %453 : vector<16xf32> to vector<16x1xf32>
    %455 = vector.broadcast %454 : vector<16x1xf32> to vector<16x16xf32>
    %456 = arith.subf %452, %455 : vector<16x16xf32>
    %457 = math.exp %456 : vector<16x16xf32>
    %cst_188 = arith.constant dense<0.000000e+00> : vector<16xf32>
    %458 = vector.multi_reduction <add>, %457, %cst_188 [1] : vector<16x16xf32> to vector<16xf32>
    %459 = vector.shape_cast %458 : vector<16xf32> to vector<16x1xf32>
    %460 = tpu.reciprocal %459 {approx = true} : vector<16x1xf32> -> vector<16x1xf32>
    %461 = vector.broadcast %460 : vector<16x1xf32> to vector<16x16xf32>
    %462 = arith.mulf %457, %461 : vector<16x16xf32>
    %463 = arith.truncf %462 : vector<16x16xf32> to vector<16x16xbf16>
    %464 = vector.extract_strided_slice %411 {offsets = [0, 16], sizes = [16, 8], strides = [1, 1]} : vector<16x32xbf16> to vector<16x8xbf16>
    %cst_189 = arith.constant dense<0.000000e+00> : vector<16x8xf32>
    %465 = tpu.matmul %463, %464, %cst_189 {dimension_numbers = #tpu.dot_dimension_numbers<[1], [0], [0], [1], [0, 0, 1, 1], [], []>} : vector<16x16xbf16>, vector<16x8xbf16>, vector<16x8xf32> -> vector<16x8xf32>
    %466 = vector.extract_strided_slice %409 {offsets = [0, 24], sizes = [16, 8], strides = [1, 1]} : vector<16x32xbf16> to vector<16x8xbf16>
    %467 = vector.extract_strided_slice %410 {offsets = [0, 24], sizes = [16, 8], strides = [1, 1]} : vector<16x32xbf16> to vector<16x8xbf16>
    "tpu.trace_start"() <{level = 10 : i32, message = "qd,kd->qk"}> : () -> ()
    %cst_190 = arith.constant dense<0.000000e+00> : vector<16x16xf32>
    %468 = tpu.matmul %466, %467, %cst_190 {dimension_numbers = #tpu.dot_dimension_numbers<[1], [1], [0], [0], [0, 0, 1, 0], [], []>} : vector<16x8xbf16>, vector<16x8xbf16>, vector<16x16xf32> -> vector<16x16xf32>
    "tpu.trace_stop"() : () -> ()
    %469 = vector.broadcast %30 : vector<1x16xf32> to vector<16x16xf32>
    %470 = arith.addf %468, %469 : vector<16x16xf32>
    %cst_191 = arith.constant dense<0xFF800000> : vector<16xf32>
    %471 = vector.multi_reduction <maximumf>, %470, %cst_191 [1] : vector<16x16xf32> to vector<16xf32>
    %472 = vector.shape_cast %471 : vector<16xf32> to vector<16x1xf32>
    %473 = vector.broadcast %472 : vector<16x1xf32> to vector<16x16xf32>
    %474 = arith.subf %470, %473 : vector<16x16xf32>
    %475 = math.exp %474 : vector<16x16xf32>
    %cst_192 = arith.constant dense<0.000000e+00> : vector<16xf32>
    %476 = vector.multi_reduction <add>, %475, %cst_192 [1] : vector<16x16xf32> to vector<16xf32>
    %477 = vector.shape_cast %476 : vector<16xf32> to vector<16x1xf32>
    %478 = tpu.reciprocal %477 {approx = true} : vector<16x1xf32> -> vector<16x1xf32>
    %479 = vector.broadcast %478 : vector<16x1xf32> to vector<16x16xf32>
    %480 = arith.mulf %475, %479 : vector<16x16xf32>
    %481 = arith.truncf %480 : vector<16x16xf32> to vector<16x16xbf16>
    %482 = vector.extract_strided_slice %411 {offsets = [0, 24], sizes = [16, 8], strides = [1, 1]} : vector<16x32xbf16> to vector<16x8xbf16>
    %cst_193 = arith.constant dense<0.000000e+00> : vector<16x8xf32>
    %483 = tpu.matmul %481, %482, %cst_193 {dimension_numbers = #tpu.dot_dimension_numbers<[1], [0], [0], [1], [0, 0, 1, 1], [], []>} : vector<16x16xbf16>, vector<16x8xbf16>, vector<16x8xf32> -> vector<16x8xf32>
    %484 = tpu.concatenate %429, %447, %465, %483 in 1 : vector<16x8xf32>, vector<16x8xf32>, vector<16x8xf32>, vector<16x8xf32> -> vector<16x32xf32>
    %485 = arith.truncf %484 : vector<16x32xf32> to vector<16x32xbf16>
    %cst_194 = arith.constant dense<0.000000e+00> : vector<16x32xf32>
    %486 = tpu.matmul %485, %404, %cst_194 {dimension_numbers = #tpu.dot_dimension_numbers<[1], [0], [0], [1], [0, 0, 1, 1], [], []>} : vector<16x32xbf16>, vector<32x32xbf16>, vector<16x32xf32> -> vector<16x32xf32>
    %487 = vector.broadcast %406 : vector<1x32xf32> to vector<16x32xf32>
    %488 = arith.addf %486, %487 : vector<16x32xf32>
    %489 = arith.addf %391, %488 : vector<16x32xf32>
    %c1_195 = arith.constant 1 : index
    %c0_196 = arith.constant 0 : index
    %c0_197 = arith.constant 0 : index
    %490 = vector.load %arg10[%c1_195, %c0_196, %c0_197] : memref<2x1x32xf32, #tpu.memory_space<vmem>>, vector<1x1x32xf32>
    %491 = vector.shape_cast %490 : vector<1x1x32xf32> to vector<1x32xf32>
    %c1_198 = arith.constant 1 : index
    %c0_199 = arith.constant 0 : index
    %c0_200 = arith.constant 0 : index
    %492 = vector.load %arg11[%c1_198, %c0_199, %c0_200] : memref<2x1x32xf32, #tpu.memory_space<vmem>>, vector<1x1x32xf32>
    %493 = vector.shape_cast %492 : vector<1x1x32xf32> to vector<1x32xf32>
    %cst_201 = arith.constant dense<0.000000e+00> : vector<16xf32>
    %494 = vector.multi_reduction <add>, %489, %cst_201 [1] : vector<16x32xf32> to vector<16xf32>
    %495 = vector.shape_cast %494 : vector<16xf32> to vector<16x1xf32>
    %cst_202 = arith.constant 3.200000e+01 : f32
    %496 = vector.broadcast %cst_202 : f32 to vector<16x1xf32>
    %497 = arith.divf %495, %496 : vector<16x1xf32>
    %498 = vector.broadcast %497 : vector<16x1xf32> to vector<16x32xf32>
    %499 = arith.subf %489, %498 : vector<16x32xf32>
    %500 = arith.mulf %499, %499 : vector<16x32xf32>
    %cst_203 = arith.constant dense<0.000000e+00> : vector<16xf32>
    %501 = vector.multi_reduction <add>, %500, %cst_203 [1] : vector<16x32xf32> to vector<16xf32>
    %502 = vector.shape_cast %501 : vector<16xf32> to vector<16x1xf32>
    %cst_204 = arith.constant 3.200000e+01 : f32
    %503 = vector.broadcast %cst_204 : f32 to vector<16x1xf32>
    %504 = arith.divf %502, %503 : vector<16x1xf32>
    %505 = vector.broadcast %497 : vector<16x1xf32> to vector<16x32xf32>
    %506 = arith.subf %489, %505 : vector<16x32xf32>
    %cst_205 = arith.constant 9.99999996E-13 : f32
    %507 = vector.broadcast %cst_205 : f32 to vector<16x1xf32>
    %508 = arith.addf %504, %507 : vector<16x1xf32>
    %509 = math.rsqrt %508 : vector<16x1xf32>
    %510 = vector.broadcast %509 : vector<16x1xf32> to vector<16x32xf32>
    %511 = arith.mulf %506, %510 : vector<16x32xf32>
    %512 = vector.broadcast %491 : vector<1x32xf32> to vector<16x32xf32>
    %513 = arith.mulf %511, %512 : vector<16x32xf32>
    %514 = vector.broadcast %493 : vector<1x32xf32> to vector<16x32xf32>
    %515 = arith.addf %513, %514 : vector<16x32xf32>
    %516 = vector.extract_strided_slice %515 {offsets = [0, 0], sizes = [8, 32], strides = [1, 1]} : vector<16x32xf32> to vector<8x32xf32>
    %517 = arith.truncf %516 : vector<8x32xf32> to vector<8x32xbf16>
    %c1_206 = arith.constant 1 : index
    %c0_207 = arith.constant 0 : index
    %c0_208 = arith.constant 0 : index
    %518 = vector.load %arg12[%c1_206, %c0_207, %c0_208] : memref<2x32x32xbf16, #tpu.memory_space<vmem>>, vector<1x32x32xbf16>
    %519 = vector.shape_cast %518 : vector<1x32x32xbf16> to vector<32x32xbf16>
    %cst_209 = arith.constant dense<0.000000e+00> : vector<8x32xf32>
    %520 = tpu.matmul %517, %519, %cst_209 {dimension_numbers = #tpu.dot_dimension_numbers<[1], [0], [0], [1], [0, 0, 1, 1], [], []>} : vector<8x32xbf16>, vector<32x32xbf16>, vector<8x32xf32> -> vector<8x32xf32>
    %c1_210 = arith.constant 1 : index
    %c0_211 = arith.constant 0 : index
    %c0_212 = arith.constant 0 : index
    %521 = vector.load %arg13[%c1_210, %c0_211, %c0_212] : memref<2x1x32xf32, #tpu.memory_space<vmem>>, vector<1x1x32xf32>
    %522 = vector.shape_cast %521 : vector<1x1x32xf32> to vector<1x32xf32>
    %523 = vector.broadcast %522 : vector<1x32xf32> to vector<8x32xf32>
    %524 = arith.addf %520, %523 : vector<8x32xf32>
    %c1_213 = arith.constant 1 : index
    %c0_214 = arith.constant 0 : index
    %c0_215 = arith.constant 0 : index
    %525 = vector.load %arg14[%c1_213, %c0_214, %c0_215] : memref<2x64x64xbf16, #tpu.memory_space<vmem>>, vector<1x64x64xbf16>
    %526 = vector.shape_cast %525 : vector<1x64x64xbf16> to vector<64x64xbf16>
    %cst_216 = arith.constant dense<0.000000e+00> : vector<17x64xf32>
    %527 = tpu.matmul %28, %526, %cst_216 {dimension_numbers = #tpu.dot_dimension_numbers<[1], [0], [0], [1], [0, 0, 1, 1], [], []>} : vector<17x64xbf16>, vector<64x64xbf16>, vector<17x64xf32> -> vector<17x64xf32>
    %c1_217 = arith.constant 1 : index
    %c0_218 = arith.constant 0 : index
    %c0_219 = arith.constant 0 : index
    %528 = vector.load %arg15[%c1_217, %c0_218, %c0_219] : memref<2x1x64xf32, #tpu.memory_space<vmem>>, vector<1x1x64xf32>
    %529 = vector.shape_cast %528 : vector<1x1x64xf32> to vector<1x64xf32>
    %530 = vector.broadcast %529 : vector<1x64xf32> to vector<17x64xf32>
    %531 = arith.addf %527, %530 : vector<17x64xf32>
    %532 = vector.extract_strided_slice %531 {offsets = [0, 0], sizes = [17, 32], strides = [1, 1]} : vector<17x64xf32> to vector<17x32xf32>
    %533 = vector.extract_strided_slice %531 {offsets = [0, 32], sizes = [17, 32], strides = [1, 1]} : vector<17x64xf32> to vector<17x32xf32>
    %c1_220 = arith.constant 1 : index
    %c0_221 = arith.constant 0 : index
    %c0_222 = arith.constant 0 : index
    %534 = vector.load %arg16[%c1_220, %c0_221, %c0_222] : memref<2x32x32xbf16, #tpu.memory_space<vmem>>, vector<1x32x32xbf16>
    %535 = vector.shape_cast %534 : vector<1x32x32xbf16> to vector<32x32xbf16>
    %c1_223 = arith.constant 1 : index
    %c0_224 = arith.constant 0 : index
    %c0_225 = arith.constant 0 : index
    %536 = vector.load %arg17[%c1_223, %c0_224, %c0_225] : memref<2x1x32xf32, #tpu.memory_space<vmem>>, vector<1x1x32xf32>
    %537 = vector.shape_cast %536 : vector<1x1x32xf32> to vector<1x32xf32>
    %cst_226 = arith.constant 0.353553385 : f32
    %538 = vector.broadcast %cst_226 : f32 to vector<8x32xf32>
    %539 = arith.mulf %524, %538 : vector<8x32xf32>
    %540 = arith.truncf %539 : vector<8x32xf32> to vector<8x32xbf16>
    %541 = arith.truncf %532 : vector<17x32xf32> to vector<17x32xbf16>
    %542 = arith.truncf %533 : vector<17x32xf32> to vector<17x32xbf16>
    %543 = vector.extract_strided_slice %540 {offsets = [0, 0], sizes = [8, 8], strides = [1, 1]} : vector<8x32xbf16> to vector<8x8xbf16>
    %544 = vector.extract_strided_slice %541 {offsets = [0, 0], sizes = [17, 8], strides = [1, 1]} : vector<17x32xbf16> to vector<17x8xbf16>
    "tpu.trace_start"() <{level = 10 : i32, message = "qd,kd->qk"}> : () -> ()
    %cst_227 = arith.constant dense<0.000000e+00> : vector<8x17xf32>
    %545 = tpu.matmul %543, %544, %cst_227 {dimension_numbers = #tpu.dot_dimension_numbers<[1], [1], [0], [0], [0, 0, 1, 0], [], []>} : vector<8x8xbf16>, vector<17x8xbf16>, vector<8x17xf32> -> vector<8x17xf32>
    "tpu.trace_stop"() : () -> ()
    %cst_228 = arith.constant dense<0xFF800000> : vector<8xf32>
    %546 = vector.multi_reduction <maximumf>, %545, %cst_228 [1] : vector<8x17xf32> to vector<8xf32>
    %547 = vector.shape_cast %546 : vector<8xf32> to vector<8x1xf32>
    %548 = vector.broadcast %547 : vector<8x1xf32> to vector<8x17xf32>
    %549 = arith.subf %545, %548 : vector<8x17xf32>
    %550 = math.exp %549 : vector<8x17xf32>
    %cst_229 = arith.constant dense<0.000000e+00> : vector<8xf32>
    %551 = vector.multi_reduction <add>, %550, %cst_229 [1] : vector<8x17xf32> to vector<8xf32>
    %552 = vector.shape_cast %551 : vector<8xf32> to vector<8x1xf32>
    %553 = tpu.reciprocal %552 {approx = true} : vector<8x1xf32> -> vector<8x1xf32>
    %554 = vector.broadcast %553 : vector<8x1xf32> to vector<8x17xf32>
    %555 = arith.mulf %550, %554 : vector<8x17xf32>
    %556 = arith.truncf %555 : vector<8x17xf32> to vector<8x17xbf16>
    %557 = vector.extract_strided_slice %542 {offsets = [0, 0], sizes = [17, 8], strides = [1, 1]} : vector<17x32xbf16> to vector<17x8xbf16>
    %cst_230 = arith.constant dense<0.000000e+00> : vector<8x8xf32>
    %558 = tpu.matmul %556, %557, %cst_230 {dimension_numbers = #tpu.dot_dimension_numbers<[1], [0], [0], [1], [0, 0, 1, 1], [], []>} : vector<8x17xbf16>, vector<17x8xbf16>, vector<8x8xf32> -> vector<8x8xf32>
    %559 = vector.extract_strided_slice %540 {offsets = [0, 8], sizes = [8, 8], strides = [1, 1]} : vector<8x32xbf16> to vector<8x8xbf16>
    %560 = vector.extract_strided_slice %541 {offsets = [0, 8], sizes = [17, 8], strides = [1, 1]} : vector<17x32xbf16> to vector<17x8xbf16>
    "tpu.trace_start"() <{level = 10 : i32, message = "qd,kd->qk"}> : () -> ()
    %cst_231 = arith.constant dense<0.000000e+00> : vector<8x17xf32>
    %561 = tpu.matmul %559, %560, %cst_231 {dimension_numbers = #tpu.dot_dimension_numbers<[1], [1], [0], [0], [0, 0, 1, 0], [], []>} : vector<8x8xbf16>, vector<17x8xbf16>, vector<8x17xf32> -> vector<8x17xf32>
    "tpu.trace_stop"() : () -> ()
    %cst_232 = arith.constant dense<0xFF800000> : vector<8xf32>
    %562 = vector.multi_reduction <maximumf>, %561, %cst_232 [1] : vector<8x17xf32> to vector<8xf32>
    %563 = vector.shape_cast %562 : vector<8xf32> to vector<8x1xf32>
    %564 = vector.broadcast %563 : vector<8x1xf32> to vector<8x17xf32>
    %565 = arith.subf %561, %564 : vector<8x17xf32>
    %566 = math.exp %565 : vector<8x17xf32>
    %cst_233 = arith.constant dense<0.000000e+00> : vector<8xf32>
    %567 = vector.multi_reduction <add>, %566, %cst_233 [1] : vector<8x17xf32> to vector<8xf32>
    %568 = vector.shape_cast %567 : vector<8xf32> to vector<8x1xf32>
    %569 = tpu.reciprocal %568 {approx = true} : vector<8x1xf32> -> vector<8x1xf32>
    %570 = vector.broadcast %569 : vector<8x1xf32> to vector<8x17xf32>
    %571 = arith.mulf %566, %570 : vector<8x17xf32>
    %572 = arith.truncf %571 : vector<8x17xf32> to vector<8x17xbf16>
    %573 = vector.extract_strided_slice %542 {offsets = [0, 8], sizes = [17, 8], strides = [1, 1]} : vector<17x32xbf16> to vector<17x8xbf16>
    %cst_234 = arith.constant dense<0.000000e+00> : vector<8x8xf32>
    %574 = tpu.matmul %572, %573, %cst_234 {dimension_numbers = #tpu.dot_dimension_numbers<[1], [0], [0], [1], [0, 0, 1, 1], [], []>} : vector<8x17xbf16>, vector<17x8xbf16>, vector<8x8xf32> -> vector<8x8xf32>
    %575 = vector.extract_strided_slice %540 {offsets = [0, 16], sizes = [8, 8], strides = [1, 1]} : vector<8x32xbf16> to vector<8x8xbf16>
    %576 = vector.extract_strided_slice %541 {offsets = [0, 16], sizes = [17, 8], strides = [1, 1]} : vector<17x32xbf16> to vector<17x8xbf16>
    "tpu.trace_start"() <{level = 10 : i32, message = "qd,kd->qk"}> : () -> ()
    %cst_235 = arith.constant dense<0.000000e+00> : vector<8x17xf32>
    %577 = tpu.matmul %575, %576, %cst_235 {dimension_numbers = #tpu.dot_dimension_numbers<[1], [1], [0], [0], [0, 0, 1, 0], [], []>} : vector<8x8xbf16>, vector<17x8xbf16>, vector<8x17xf32> -> vector<8x17xf32>
    "tpu.trace_stop"() : () -> ()
    %cst_236 = arith.constant dense<0xFF800000> : vector<8xf32>
    %578 = vector.multi_reduction <maximumf>, %577, %cst_236 [1] : vector<8x17xf32> to vector<8xf32>
    %579 = vector.shape_cast %578 : vector<8xf32> to vector<8x1xf32>
    %580 = vector.broadcast %579 : vector<8x1xf32> to vector<8x17xf32>
    %581 = arith.subf %577, %580 : vector<8x17xf32>
    %582 = math.exp %581 : vector<8x17xf32>
    %cst_237 = arith.constant dense<0.000000e+00> : vector<8xf32>
    %583 = vector.multi_reduction <add>, %582, %cst_237 [1] : vector<8x17xf32> to vector<8xf32>
    %584 = vector.shape_cast %583 : vector<8xf32> to vector<8x1xf32>
    %585 = tpu.reciprocal %584 {approx = true} : vector<8x1xf32> -> vector<8x1xf32>
    %586 = vector.broadcast %585 : vector<8x1xf32> to vector<8x17xf32>
    %587 = arith.mulf %582, %586 : vector<8x17xf32>
    %588 = arith.truncf %587 : vector<8x17xf32> to vector<8x17xbf16>
    %589 = vector.extract_strided_slice %542 {offsets = [0, 16], sizes = [17, 8], strides = [1, 1]} : vector<17x32xbf16> to vector<17x8xbf16>
    %cst_238 = arith.constant dense<0.000000e+00> : vector<8x8xf32>
    %590 = tpu.matmul %588, %589, %cst_238 {dimension_numbers = #tpu.dot_dimension_numbers<[1], [0], [0], [1], [0, 0, 1, 1], [], []>} : vector<8x17xbf16>, vector<17x8xbf16>, vector<8x8xf32> -> vector<8x8xf32>
    %591 = vector.extract_strided_slice %540 {offsets = [0, 24], sizes = [8, 8], strides = [1, 1]} : vector<8x32xbf16> to vector<8x8xbf16>
    %592 = vector.extract_strided_slice %541 {offsets = [0, 24], sizes = [17, 8], strides = [1, 1]} : vector<17x32xbf16> to vector<17x8xbf16>
    "tpu.trace_start"() <{level = 10 : i32, message = "qd,kd->qk"}> : () -> ()
    %cst_239 = arith.constant dense<0.000000e+00> : vector<8x17xf32>
    %593 = tpu.matmul %591, %592, %cst_239 {dimension_numbers = #tpu.dot_dimension_numbers<[1], [1], [0], [0], [0, 0, 1, 0], [], []>} : vector<8x8xbf16>, vector<17x8xbf16>, vector<8x17xf32> -> vector<8x17xf32>
    "tpu.trace_stop"() : () -> ()
    %cst_240 = arith.constant dense<0xFF800000> : vector<8xf32>
    %594 = vector.multi_reduction <maximumf>, %593, %cst_240 [1] : vector<8x17xf32> to vector<8xf32>
    %595 = vector.shape_cast %594 : vector<8xf32> to vector<8x1xf32>
    %596 = vector.broadcast %595 : vector<8x1xf32> to vector<8x17xf32>
    %597 = arith.subf %593, %596 : vector<8x17xf32>
    %598 = math.exp %597 : vector<8x17xf32>
    %cst_241 = arith.constant dense<0.000000e+00> : vector<8xf32>
    %599 = vector.multi_reduction <add>, %598, %cst_241 [1] : vector<8x17xf32> to vector<8xf32>
    %600 = vector.shape_cast %599 : vector<8xf32> to vector<8x1xf32>
    %601 = tpu.reciprocal %600 {approx = true} : vector<8x1xf32> -> vector<8x1xf32>
    %602 = vector.broadcast %601 : vector<8x1xf32> to vector<8x17xf32>
    %603 = arith.mulf %598, %602 : vector<8x17xf32>
    %604 = arith.truncf %603 : vector<8x17xf32> to vector<8x17xbf16>
    %605 = vector.extract_strided_slice %542 {offsets = [0, 24], sizes = [17, 8], strides = [1, 1]} : vector<17x32xbf16> to vector<17x8xbf16>
    %cst_242 = arith.constant dense<0.000000e+00> : vector<8x8xf32>
    %606 = tpu.matmul %604, %605, %cst_242 {dimension_numbers = #tpu.dot_dimension_numbers<[1], [0], [0], [1], [0, 0, 1, 1], [], []>} : vector<8x17xbf16>, vector<17x8xbf16>, vector<8x8xf32> -> vector<8x8xf32>
    %607 = tpu.concatenate %558, %574, %590, %606 in 1 : vector<8x8xf32>, vector<8x8xf32>, vector<8x8xf32>, vector<8x8xf32> -> vector<8x32xf32>
    %608 = arith.truncf %607 : vector<8x32xf32> to vector<8x32xbf16>
    %cst_243 = arith.constant dense<0.000000e+00> : vector<8x32xf32>
    %609 = tpu.matmul %608, %535, %cst_243 {dimension_numbers = #tpu.dot_dimension_numbers<[1], [0], [0], [1], [0, 0, 1, 1], [], []>} : vector<8x32xbf16>, vector<32x32xbf16>, vector<8x32xf32> -> vector<8x32xf32>
    %610 = vector.broadcast %537 : vector<1x32xf32> to vector<8x32xf32>
    %611 = arith.addf %609, %610 : vector<8x32xf32>
    %612 = arith.addf %516, %611 : vector<8x32xf32>
    %c1_244 = arith.constant 1 : index
    %c0_245 = arith.constant 0 : index
    %c0_246 = arith.constant 0 : index
    %613 = vector.load %arg18[%c1_244, %c0_245, %c0_246] : memref<2x1x32xf32, #tpu.memory_space<vmem>>, vector<1x1x32xf32>
    %614 = vector.shape_cast %613 : vector<1x1x32xf32> to vector<1x32xf32>
    %c1_247 = arith.constant 1 : index
    %c0_248 = arith.constant 0 : index
    %c0_249 = arith.constant 0 : index
    %615 = vector.load %arg19[%c1_247, %c0_248, %c0_249] : memref<2x1x32xf32, #tpu.memory_space<vmem>>, vector<1x1x32xf32>
    %616 = vector.shape_cast %615 : vector<1x1x32xf32> to vector<1x32xf32>
    %cst_250 = arith.constant dense<0.000000e+00> : vector<8xf32>
    %617 = vector.multi_reduction <add>, %612, %cst_250 [1] : vector<8x32xf32> to vector<8xf32>
    %618 = vector.shape_cast %617 : vector<8xf32> to vector<8x1xf32>
    %cst_251 = arith.constant 3.200000e+01 : f32
    %619 = vector.broadcast %cst_251 : f32 to vector<8x1xf32>
    %620 = arith.divf %618, %619 : vector<8x1xf32>
    %621 = vector.broadcast %620 : vector<8x1xf32> to vector<8x32xf32>
    %622 = arith.subf %612, %621 : vector<8x32xf32>
    %623 = arith.mulf %622, %622 : vector<8x32xf32>
    %cst_252 = arith.constant dense<0.000000e+00> : vector<8xf32>
    %624 = vector.multi_reduction <add>, %623, %cst_252 [1] : vector<8x32xf32> to vector<8xf32>
    %625 = vector.shape_cast %624 : vector<8xf32> to vector<8x1xf32>
    %cst_253 = arith.constant 3.200000e+01 : f32
    %626 = vector.broadcast %cst_253 : f32 to vector<8x1xf32>
    %627 = arith.divf %625, %626 : vector<8x1xf32>
    %628 = vector.broadcast %620 : vector<8x1xf32> to vector<8x32xf32>
    %629 = arith.subf %612, %628 : vector<8x32xf32>
    %cst_254 = arith.constant 9.99999996E-13 : f32
    %630 = vector.broadcast %cst_254 : f32 to vector<8x1xf32>
    %631 = arith.addf %627, %630 : vector<8x1xf32>
    %632 = math.rsqrt %631 : vector<8x1xf32>
    %633 = vector.broadcast %632 : vector<8x1xf32> to vector<8x32xf32>
    %634 = arith.mulf %629, %633 : vector<8x32xf32>
    %635 = vector.broadcast %614 : vector<1x32xf32> to vector<8x32xf32>
    %636 = arith.mulf %634, %635 : vector<8x32xf32>
    %637 = vector.broadcast %616 : vector<1x32xf32> to vector<8x32xf32>
    %638 = arith.addf %636, %637 : vector<8x32xf32>
    %639 = arith.truncf %638 : vector<8x32xf32> to vector<8x32xbf16>
    %c1_255 = arith.constant 1 : index
    %c0_256 = arith.constant 0 : index
    %c0_257 = arith.constant 0 : index
    %640 = vector.load %arg20[%c1_255, %c0_256, %c0_257] : memref<2x32x64xbf16, #tpu.memory_space<vmem>>, vector<1x32x64xbf16>
    %641 = vector.shape_cast %640 : vector<1x32x64xbf16> to vector<32x64xbf16>
    %cst_258 = arith.constant dense<0.000000e+00> : vector<8x64xf32>
    %642 = tpu.matmul %639, %641, %cst_258 {dimension_numbers = #tpu.dot_dimension_numbers<[1], [0], [0], [1], [0, 0, 1, 1], [], []>} : vector<8x32xbf16>, vector<32x64xbf16>, vector<8x64xf32> -> vector<8x64xf32>
    %c1_259 = arith.constant 1 : index
    %c0_260 = arith.constant 0 : index
    %c0_261 = arith.constant 0 : index
    %643 = vector.load %arg21[%c1_259, %c0_260, %c0_261] : memref<2x1x64xf32, #tpu.memory_space<vmem>>, vector<1x1x64xf32>
    %644 = vector.shape_cast %643 : vector<1x1x64xf32> to vector<1x64xf32>
    %645 = vector.broadcast %644 : vector<1x64xf32> to vector<8x64xf32>
    %646 = arith.addf %642, %645 : vector<8x64xf32>
    %647 = arith.mulf %646, %646 : vector<8x64xf32>
    %648 = arith.mulf %646, %647 : vector<8x64xf32>
    %cst_262 = arith.constant 4.471500e-02 : f32
    %649 = vector.broadcast %cst_262 : f32 to vector<8x64xf32>
    %650 = arith.mulf %649, %648 : vector<8x64xf32>
    %651 = arith.addf %646, %650 : vector<8x64xf32>
    %cst_263 = arith.constant 0.797884583 : f32
    %652 = vector.broadcast %cst_263 : f32 to vector<8x64xf32>
    %653 = arith.mulf %652, %651 : vector<8x64xf32>
    %654 = math.tanh %653 : vector<8x64xf32>
    %cst_264 = arith.constant 1.000000e+00 : f32
    %655 = vector.broadcast %cst_264 : f32 to vector<8x64xf32>
    %656 = arith.addf %655, %654 : vector<8x64xf32>
    %cst_265 = arith.constant 5.000000e-01 : f32
    %657 = vector.broadcast %cst_265 : f32 to vector<8x64xf32>
    %658 = arith.mulf %657, %656 : vector<8x64xf32>
    %659 = arith.mulf %646, %658 : vector<8x64xf32>
    %660 = arith.truncf %659 : vector<8x64xf32> to vector<8x64xbf16>
    %c1_266 = arith.constant 1 : index
    %c0_267 = arith.constant 0 : index
    %c0_268 = arith.constant 0 : index
    %661 = vector.load %arg22[%c1_266, %c0_267, %c0_268] : memref<2x64x32xbf16, #tpu.memory_space<vmem>>, vector<1x64x32xbf16>
    %662 = vector.shape_cast %661 : vector<1x64x32xbf16> to vector<64x32xbf16>
    %cst_269 = arith.constant dense<0.000000e+00> : vector<8x32xf32>
    %663 = tpu.matmul %660, %662, %cst_269 {dimension_numbers = #tpu.dot_dimension_numbers<[1], [0], [0], [1], [0, 0, 1, 1], [], []>} : vector<8x64xbf16>, vector<64x32xbf16>, vector<8x32xf32> -> vector<8x32xf32>
    %c1_270 = arith.constant 1 : index
    %c0_271 = arith.constant 0 : index
    %c0_272 = arith.constant 0 : index
    %664 = vector.load %arg23[%c1_270, %c0_271, %c0_272] : memref<2x1x32xf32, #tpu.memory_space<vmem>>, vector<1x1x32xf32>
    %665 = vector.shape_cast %664 : vector<1x1x32xf32> to vector<1x32xf32>
    %666 = vector.broadcast %665 : vector<1x32xf32> to vector<8x32xf32>
    %667 = arith.addf %663, %666 : vector<8x32xf32>
    %668 = arith.addf %638, %667 : vector<8x32xf32>
    %c1_273 = arith.constant 1 : index
    %c0_274 = arith.constant 0 : index
    %c0_275 = arith.constant 0 : index
    %669 = vector.load %arg24[%c1_273, %c0_274, %c0_275] : memref<2x1x32xf32, #tpu.memory_space<vmem>>, vector<1x1x32xf32>
    %670 = vector.shape_cast %669 : vector<1x1x32xf32> to vector<1x32xf32>
    %c1_276 = arith.constant 1 : index
    %c0_277 = arith.constant 0 : index
    %c0_278 = arith.constant 0 : index
    %671 = vector.load %arg25[%c1_276, %c0_277, %c0_278] : memref<2x1x32xf32, #tpu.memory_space<vmem>>, vector<1x1x32xf32>
    %672 = vector.shape_cast %671 : vector<1x1x32xf32> to vector<1x32xf32>
    %cst_279 = arith.constant dense<0.000000e+00> : vector<8xf32>
    %673 = vector.multi_reduction <add>, %668, %cst_279 [1] : vector<8x32xf32> to vector<8xf32>
    %674 = vector.shape_cast %673 : vector<8xf32> to vector<8x1xf32>
    %cst_280 = arith.constant 3.200000e+01 : f32
    %675 = vector.broadcast %cst_280 : f32 to vector<8x1xf32>
    %676 = arith.divf %674, %675 : vector<8x1xf32>
    %677 = vector.broadcast %676 : vector<8x1xf32> to vector<8x32xf32>
    %678 = arith.subf %668, %677 : vector<8x32xf32>
    %679 = arith.mulf %678, %678 : vector<8x32xf32>
    %cst_281 = arith.constant dense<0.000000e+00> : vector<8xf32>
    %680 = vector.multi_reduction <add>, %679, %cst_281 [1] : vector<8x32xf32> to vector<8xf32>
    %681 = vector.shape_cast %680 : vector<8xf32> to vector<8x1xf32>
    %cst_282 = arith.constant 3.200000e+01 : f32
    %682 = vector.broadcast %cst_282 : f32 to vector<8x1xf32>
    %683 = arith.divf %681, %682 : vector<8x1xf32>
    %684 = vector.broadcast %676 : vector<8x1xf32> to vector<8x32xf32>
    %685 = arith.subf %668, %684 : vector<8x32xf32>
    %cst_283 = arith.constant 9.99999996E-13 : f32
    %686 = vector.broadcast %cst_283 : f32 to vector<8x1xf32>
    %687 = arith.addf %683, %686 : vector<8x1xf32>
    %688 = math.rsqrt %687 : vector<8x1xf32>
    %689 = vector.broadcast %688 : vector<8x1xf32> to vector<8x32xf32>
    %690 = arith.mulf %685, %689 : vector<8x32xf32>
    %691 = vector.broadcast %670 : vector<1x32xf32> to vector<8x32xf32>
    %692 = arith.mulf %690, %691 : vector<8x32xf32>
    %693 = vector.broadcast %672 : vector<1x32xf32> to vector<8x32xf32>
    %694 = arith.addf %692, %693 : vector<8x32xf32>
    %695 = vector.extract_strided_slice %515 {offsets = [8, 0], sizes = [8, 32], strides = [1, 1]} : vector<16x32xf32> to vector<8x32xf32>
    %696 = arith.truncf %695 : vector<8x32xf32> to vector<8x32xbf16>
    %c1_284 = arith.constant 1 : index
    %c0_285 = arith.constant 0 : index
    %c0_286 = arith.constant 0 : index
    %697 = vector.load %arg26[%c1_284, %c0_285, %c0_286] : memref<2x32x64xbf16, #tpu.memory_space<vmem>>, vector<1x32x64xbf16>
    %698 = vector.shape_cast %697 : vector<1x32x64xbf16> to vector<32x64xbf16>
    %cst_287 = arith.constant dense<0.000000e+00> : vector<8x64xf32>
    %699 = tpu.matmul %696, %698, %cst_287 {dimension_numbers = #tpu.dot_dimension_numbers<[1], [0], [0], [1], [0, 0, 1, 1], [], []>} : vector<8x32xbf16>, vector<32x64xbf16>, vector<8x64xf32> -> vector<8x64xf32>
    %c1_288 = arith.constant 1 : index
    %c0_289 = arith.constant 0 : index
    %c0_290 = arith.constant 0 : index
    %700 = vector.load %arg27[%c1_288, %c0_289, %c0_290] : memref<2x1x64xf32, #tpu.memory_space<vmem>>, vector<1x1x64xf32>
    %701 = vector.shape_cast %700 : vector<1x1x64xf32> to vector<1x64xf32>
    %702 = vector.broadcast %701 : vector<1x64xf32> to vector<8x64xf32>
    %703 = arith.addf %699, %702 : vector<8x64xf32>
    %704 = arith.mulf %703, %703 : vector<8x64xf32>
    %705 = arith.mulf %703, %704 : vector<8x64xf32>
    %cst_291 = arith.constant 4.471500e-02 : f32
    %706 = vector.broadcast %cst_291 : f32 to vector<8x64xf32>
    %707 = arith.mulf %706, %705 : vector<8x64xf32>
    %708 = arith.addf %703, %707 : vector<8x64xf32>
    %cst_292 = arith.constant 0.797884583 : f32
    %709 = vector.broadcast %cst_292 : f32 to vector<8x64xf32>
    %710 = arith.mulf %709, %708 : vector<8x64xf32>
    %711 = math.tanh %710 : vector<8x64xf32>
    %cst_293 = arith.constant 1.000000e+00 : f32
    %712 = vector.broadcast %cst_293 : f32 to vector<8x64xf32>
    %713 = arith.addf %712, %711 : vector<8x64xf32>
    %cst_294 = arith.constant 5.000000e-01 : f32
    %714 = vector.broadcast %cst_294 : f32 to vector<8x64xf32>
    %715 = arith.mulf %714, %713 : vector<8x64xf32>
    %716 = arith.mulf %703, %715 : vector<8x64xf32>
    %717 = arith.truncf %716 : vector<8x64xf32> to vector<8x64xbf16>
    %c1_295 = arith.constant 1 : index
    %c0_296 = arith.constant 0 : index
    %c0_297 = arith.constant 0 : index
    %718 = vector.load %arg28[%c1_295, %c0_296, %c0_297] : memref<2x64x32xbf16, #tpu.memory_space<vmem>>, vector<1x64x32xbf16>
    %719 = vector.shape_cast %718 : vector<1x64x32xbf16> to vector<64x32xbf16>
    %cst_298 = arith.constant dense<0.000000e+00> : vector<8x32xf32>
    %720 = tpu.matmul %717, %719, %cst_298 {dimension_numbers = #tpu.dot_dimension_numbers<[1], [0], [0], [1], [0, 0, 1, 1], [], []>} : vector<8x64xbf16>, vector<64x32xbf16>, vector<8x32xf32> -> vector<8x32xf32>
    %c1_299 = arith.constant 1 : index
    %c0_300 = arith.constant 0 : index
    %c0_301 = arith.constant 0 : index
    %721 = vector.load %arg29[%c1_299, %c0_300, %c0_301] : memref<2x1x32xf32, #tpu.memory_space<vmem>>, vector<1x1x32xf32>
    %722 = vector.shape_cast %721 : vector<1x1x32xf32> to vector<1x32xf32>
    %723 = vector.broadcast %722 : vector<1x32xf32> to vector<8x32xf32>
    %724 = arith.addf %720, %723 : vector<8x32xf32>
    %725 = arith.addf %695, %724 : vector<8x32xf32>
    %c1_302 = arith.constant 1 : index
    %c0_303 = arith.constant 0 : index
    %c0_304 = arith.constant 0 : index
    %726 = vector.load %arg30[%c1_302, %c0_303, %c0_304] : memref<2x1x32xf32, #tpu.memory_space<vmem>>, vector<1x1x32xf32>
    %727 = vector.shape_cast %726 : vector<1x1x32xf32> to vector<1x32xf32>
    %c1_305 = arith.constant 1 : index
    %c0_306 = arith.constant 0 : index
    %c0_307 = arith.constant 0 : index
    %728 = vector.load %arg31[%c1_305, %c0_306, %c0_307] : memref<2x1x32xf32, #tpu.memory_space<vmem>>, vector<1x1x32xf32>
    %729 = vector.shape_cast %728 : vector<1x1x32xf32> to vector<1x32xf32>
    %cst_308 = arith.constant dense<0.000000e+00> : vector<8xf32>
    %730 = vector.multi_reduction <add>, %725, %cst_308 [1] : vector<8x32xf32> to vector<8xf32>
    %731 = vector.shape_cast %730 : vector<8xf32> to vector<8x1xf32>
    %cst_309 = arith.constant 3.200000e+01 : f32
    %732 = vector.broadcast %cst_309 : f32 to vector<8x1xf32>
    %733 = arith.divf %731, %732 : vector<8x1xf32>
    %734 = vector.broadcast %733 : vector<8x1xf32> to vector<8x32xf32>
    %735 = arith.subf %725, %734 : vector<8x32xf32>
    %736 = arith.mulf %735, %735 : vector<8x32xf32>
    %cst_310 = arith.constant dense<0.000000e+00> : vector<8xf32>
    %737 = vector.multi_reduction <add>, %736, %cst_310 [1] : vector<8x32xf32> to vector<8xf32>
    %738 = vector.shape_cast %737 : vector<8xf32> to vector<8x1xf32>
    %cst_311 = arith.constant 3.200000e+01 : f32
    %739 = vector.broadcast %cst_311 : f32 to vector<8x1xf32>
    %740 = arith.divf %738, %739 : vector<8x1xf32>
    %741 = vector.broadcast %733 : vector<8x1xf32> to vector<8x32xf32>
    %742 = arith.subf %725, %741 : vector<8x32xf32>
    %cst_312 = arith.constant 9.99999996E-13 : f32
    %743 = vector.broadcast %cst_312 : f32 to vector<8x1xf32>
    %744 = arith.addf %740, %743 : vector<8x1xf32>
    %745 = math.rsqrt %744 : vector<8x1xf32>
    %746 = vector.broadcast %745 : vector<8x1xf32> to vector<8x32xf32>
    %747 = arith.mulf %742, %746 : vector<8x32xf32>
    %748 = vector.broadcast %727 : vector<1x32xf32> to vector<8x32xf32>
    %749 = arith.mulf %747, %748 : vector<8x32xf32>
    %750 = vector.broadcast %729 : vector<1x32xf32> to vector<8x32xf32>
    %751 = arith.addf %749, %750 : vector<8x32xf32>
    %752 = tpu.concatenate %694, %751 in 0 : vector<8x32xf32>, vector<8x32xf32> -> vector<16x32xf32>
    %753 = vector.extract_strided_slice %752 {offsets = [0, 0], sizes = [8, 32], strides = [1, 1]} : vector<16x32xf32> to vector<8x32xf32>
    %c0_313 = arith.constant 0 : index
    %c0_314 = arith.constant 0 : index
    %c0_315 = arith.constant 0 : index
    %754 = vector.load %arg32[%c0_313, %c0_314, %c0_315] : memref<1x8x32xf32, #tpu.memory_space<vmem>>, vector<1x8x32xf32>
    %755 = vector.shape_cast %754 : vector<1x8x32xf32> to vector<8x32xf32>
    %756 = vector.shape_cast %753 : vector<8x32xf32> to vector<1x8x32xf32>
    tpu.vector_store %arg32[%c0_313, %c0_314, %c0_315], %756 {strides = array<i32>} : memref<1x8x32xf32, #tpu.memory_space<vmem>>, vector<1x8x32xf32>,
    return
  }
  func.func @transform_0(%arg0: i32) -> (i32, i32, i32) {
    %c0_i32 = arith.constant 0 : i32
    %c0_i32_0 = arith.constant 0 : i32
    %c0_i32_1 = arith.constant 0 : i32
    return %arg0, %c0_i32, %c0_i32_0 : i32, i32, i32
  }
  func.func @transform_1(%arg0: i32) -> (i32, i32, i32) {
    %c0_i32 = arith.constant 0 : i32
    %c0_i32_0 = arith.constant 0 : i32
    %c0_i32_1 = arith.constant 0 : i32
    return %arg0, %c0_i32, %c0_i32_0 : i32, i32, i32
  }
  func.func @transform_2(%arg0: i32) -> (i32, i32, i32) {
    %c0_i32 = arith.constant 0 : i32
    %c0_i32_0 = arith.constant 0 : i32
    %c0_i32_1 = arith.constant 0 : i32
    return %arg0, %c0_i32, %c0_i32_0 : i32, i32, i32
  }
  func.func @transform_3(%arg0: i32) -> (i32, i32) {
    %c0_i32 = arith.constant 0 : i32
    %c0_i32_0 = arith.constant 0 : i32
    %c0_i32_1 = arith.constant 0 : i32
    return %c0_i32, %c0_i32_0 : i32, i32
  }
  func.func @transform_4(%arg0: i32) -> (i32, i32) {
    %c0_i32 = arith.constant 0 : i32
    %c0_i32_0 = arith.constant 0 : i32
    %c0_i32_1 = arith.constant 0 : i32
    return %c0_i32, %c0_i32_0 : i32, i32
  }
  func.func @transform_5(%arg0: i32) -> (i32, i32, i32) {
    %c0_i32 = arith.constant 0 : i32
    %c0_i32_0 = arith.constant 0 : i32
    %c0_i32_1 = arith.constant 0 : i32
    %c0_i32_2 = arith.constant 0 : i32
    return %c0_i32, %c0_i32_0, %c0_i32_1 : i32, i32, i32
  }
  func.func @transform_6(%arg0: i32) -> (i32, i32, i32) {
    %c0_i32 = arith.constant 0 : i32
    %c0_i32_0 = arith.constant 0 : i32
    %c0_i32_1 = arith.constant 0 : i32
    %c0_i32_2 = arith.constant 0 : i32
    return %c0_i32, %c0_i32_0, %c0_i32_1 : i32, i32, i32
  }
  func.func @transform_7(%arg0: i32) -> (i32, i32, i32) {
    %c0_i32 = arith.constant 0 : i32
    %c0_i32_0 = arith.constant 0 : i32
    %c0_i32_1 = arith.constant 0 : i32
    %c0_i32_2 = arith.constant 0 : i32
    return %c0_i32, %c0_i32_0, %c0_i32_1 : i32, i32, i32
  }
  func.func @transform_8(%arg0: i32) -> (i32, i32, i32) {
    %c0_i32 = arith.constant 0 : i32
    %c0_i32_0 = arith.constant 0 : i32
    %c0_i32_1 = arith.constant 0 : i32
    %c0_i32_2 = arith.constant 0 : i32
    return %c0_i32, %c0_i32_0, %c0_i32_1 : i32, i32, i32
  }
  func.func @transform_9(%arg0: i32) -> (i32, i32, i32) {
    %c0_i32 = arith.constant 0 : i32
    %c0_i32_0 = arith.constant 0 : i32
    %c0_i32_1 = arith.constant 0 : i32
    %c0_i32_2 = arith.constant 0 : i32
    return %c0_i32, %c0_i32_0, %c0_i32_1 : i32, i32, i32
  }
  func.func @transform_10(%arg0: i32) -> (i32, i32, i32) {
    %c0_i32 = arith.constant 0 : i32
    %c0_i32_0 = arith.constant 0 : i32
    %c0_i32_1 = arith.constant 0 : i32
    %c0_i32_2 = arith.constant 0 : i32
    return %c0_i32, %c0_i32_0, %c0_i32_1 : i32, i32, i32
  }
  func.func @transform_11(%arg0: i32) -> (i32, i32, i32) {
    %c0_i32 = arith.constant 0 : i32
    %c0_i32_0 = arith.constant 0 : i32
    %c0_i32_1 = arith.constant 0 : i32
    %c0_i32_2 = arith.constant 0 : i32
    return %c0_i32, %c0_i32_0, %c0_i32_1 : i32, i32, i32
  }
  func.func @transform_12(%arg0: i32) -> (i32, i32, i32) {
    %c0_i32 = arith.constant 0 : i32
    %c0_i32_0 = arith.constant 0 : i32
    %c0_i32_1 = arith.constant 0 : i32
    %c0_i32_2 = arith.constant 0 : i32
    return %c0_i32, %c0_i32_0, %c0_i32_1 : i32, i32, i32
  }
  func.func @transform_13(%arg0: i32) -> (i32, i32, i32) {
    %c0_i32 = arith.constant 0 : i32
    %c0_i32_0 = arith.constant 0 : i32
    %c0_i32_1 = arith.constant 0 : i32
    %c0_i32_2 = arith.constant 0 : i32
    return %c0_i32, %c0_i32_0, %c0_i32_1 : i32, i32, i32
  }
  func.func @transform_14(%arg0: i32) -> (i32, i32, i32) {
    %c0_i32 = arith.constant 0 : i32
    %c0_i32_0 = arith.constant 0 : i32
    %c0_i32_1 = arith.constant 0 : i32
    %c0_i32_2 = arith.constant 0 : i32
    return %c0_i32, %c0_i32_0, %c0_i32_1 : i32, i32, i32
  }
  func.func @transform_15(%arg0: i32) -> (i32, i32, i32) {
    %c0_i32 = arith.constant 0 : i32
    %c0_i32_0 = arith.constant 0 : i32
    %c0_i32_1 = arith.constant 0 : i32
    %c0_i32_2 = arith.constant 0 : i32
    return %c0_i32, %c0_i32_0, %c0_i32_1 : i32, i32, i32
  }
  func.func @transform_16(%arg0: i32) -> (i32, i32, i32) {
    %c0_i32 = arith.constant 0 : i32
    %c0_i32_0 = arith.constant 0 : i32
    %c0_i32_1 = arith.constant 0 : i32
    %c0_i32_2 = arith.constant 0 : i32
    return %c0_i32, %c0_i32_0, %c0_i32_1 : i32, i32, i32
  }
  func.func @transform_17(%arg0: i32) -> (i32, i32, i32) {
    %c0_i32 = arith.constant 0 : i32
    %c0_i32_0 = arith.constant 0 : i32
    %c0_i32_1 = arith.constant 0 : i32
    %c0_i32_2 = arith.constant 0 : i32
    return %c0_i32, %c0_i32_0, %c0_i32_1 : i32, i32, i32
  }
  func.func @transform_18(%arg0: i32) -> (i32, i32, i32) {
    %c0_i32 = arith.constant 0 : i32
    %c0_i32_0 = arith.constant 0 : i32
    %c0_i32_1 = arith.constant 0 : i32
    %c0_i32_2 = arith.constant 0 : i32
    return %c0_i32, %c0_i32_0, %c0_i32_1 : i32, i32, i32
  }
  func.func @transform_19(%arg0: i32) -> (i32, i32, i32) {
    %c0_i32 = arith.constant 0 : i32
    %c0_i32_0 = arith.constant 0 : i32
    %c0_i32_1 = arith.constant 0 : i32
    %c0_i32_2 = arith.constant 0 : i32
    return %c0_i32, %c0_i32_0, %c0_i32_1 : i32, i32, i32
  }
  func.func @transform_20(%arg0: i32) -> (i32, i32, i32) {
    %c0_i32 = arith.constant 0 : i32
    %c0_i32_0 = arith.constant 0 : i32
    %c0_i32_1 = arith.constant 0 : i32
    %c0_i32_2 = arith.constant 0 : i32
    return %c0_i32, %c0_i32_0, %c0_i32_1 : i32, i32, i32
  }
  func.func @transform_21(%arg0: i32) -> (i32, i32, i32) {
    %c0_i32 = arith.constant 0 : i32
    %c0_i32_0 = arith.constant 0 : i32
    %c0_i32_1 = arith.constant 0 : i32
    %c0_i32_2 = arith.constant 0 : i32
    return %c0_i32, %c0_i32_0, %c0_i32_1 : i32, i32, i32
  }
  func.func @transform_22(%arg0: i32) -> (i32, i32, i32) {
    %c0_i32 = arith.constant 0 : i32
    %c0_i32_0 = arith.constant 0 : i32
    %c0_i32_1 = arith.constant 0 : i32
    %c0_i32_2 = arith.constant 0 : i32
    return %c0_i32, %c0_i32_0, %c0_i32_1 : i32, i32, i32
  }
  func.func @transform_23(%arg0: i32) -> (i32, i32, i32) {
    %c0_i32 = arith.constant 0 : i32
    %c0_i32_0 = arith.constant 0 : i32
    %c0_i32_1 = arith.constant 0 : i32
    %c0_i32_2 = arith.constant 0 : i32
    return %c0_i32, %c0_i32_0, %c0_i32_1 : i32, i32, i32
  }
  func.func @transform_24(%arg0: i32) -> (i32, i32, i32) {
    %c0_i32 = arith.constant 0 : i32
    %c0_i32_0 = arith.constant 0 : i32
    %c0_i32_1 = arith.constant 0 : i32
    %c0_i32_2 = arith.constant 0 : i32
    return %c0_i32, %c0_i32_0, %c0_i32_1 : i32, i32, i32
  }
  func.func @transform_25(%arg0: i32) -> (i32, i32, i32) {
    %c0_i32 = arith.constant 0 : i32
    %c0_i32_0 = arith.constant 0 : i32
    %c0_i32_1 = arith.constant 0 : i32
    %c0_i32_2 = arith.constant 0 : i32
    return %c0_i32, %c0_i32_0, %c0_i32_1 : i32, i32, i32
  }
  func.func @transform_26(%arg0: i32) -> (i32, i32, i32) {
    %c0_i32 = arith.constant 0 : i32
    %c0_i32_0 = arith.constant 0 : i32
    %c0_i32_1 = arith.constant 0 : i32
    %c0_i32_2 = arith.constant 0 : i32
    return %c0_i32, %c0_i32_0, %c0_i32_1 : i32, i32, i32
  }
  func.func @transform_27(%arg0: i32) -> (i32, i32, i32) {
    %c0_i32 = arith.constant 0 : i32
    %c0_i32_0 = arith.constant 0 : i32
    %c0_i32_1 = arith.constant 0 : i32
    %c0_i32_2 = arith.constant 0 : i32
    return %c0_i32, %c0_i32_0, %c0_i32_1 : i32, i32, i32
  }
  func.func @transform_28(%arg0: i32) -> (i32, i32, i32) {
    %c0_i32 = arith.constant 0 : i32
    %c0_i32_0 = arith.constant 0 : i32
    %c0_i32_1 = arith.constant 0 : i32
    %c0_i32_2 = arith.constant 0 : i32
    return %c0_i32, %c0_i32_0, %c0_i32_1 : i32, i32, i32
  }
  func.func @transform_29(%arg0: i32) -> (i32, i32, i32) {
    %c0_i32 = arith.constant 0 : i32
    %c0_i32_0 = arith.constant 0 : i32
    %c0_i32_1 = arith.constant 0 : i32
    %c0_i32_2 = arith.constant 0 : i32
    return %c0_i32, %c0_i32_0, %c0_i32_1 : i32, i32, i32
  }
  func.func @transform_30(%arg0: i32) -> (i32, i32, i32) {
    %c0_i32 = arith.constant 0 : i32
    %c0_i32_0 = arith.constant 0 : i32
    %c0_i32_1 = arith.constant 0 : i32
    %c0_i32_2 = arith.constant 0 : i32
    return %c0_i32, %c0_i32_0, %c0_i32_1 : i32, i32, i32
  }
  func.func @transform_31(%arg0: i32) -> (i32, i32, i32) {
    %c0_i32 = arith.constant 0 : i32
    %c0_i32_0 = arith.constant 0 : i32
    %c0_i32_1 = arith.constant 0 : i32
    return %arg0, %c0_i32, %c0_i32_0 : i32, i32, i32
  }
}

</mosaic_0001>

<llo_original>
// kernel: blip_forward.2
$region0: #{blip_forward.2}
  #allocation0 [shape = 'u32[]', space=smem, size = 0x4, offset = 0x4, fixed_abs, tag = 'smem constant byte address 0x4 - core index']
  #allocation1 [shape = 'u32[144,128]{1,0:T(1,128)}', space=vmem, size = 0x12000, scoped, tag = 'internal scratch']
  %s0 = inlined_call_operand.vmem [shape: f32[2,16,192], index: 0, kind: input, shape index: {}]
  %s1 = inlined_call_operand.vmem [shape: bf16[192,64], index: 1, kind: input, shape index: {}]
  %s2 = inlined_call_operand.vmem [shape: f32[1,64], index: 2, kind: input, shape index: {}]
  %s3 = inlined_call_operand.vmem [shape: f32[16,64], index: 3, kind: input, shape index: {}]
  %s4 = inlined_call_operand.vmem [shape: f32[1,64], index: 4, kind: input, shape index: {}]
  %s5 = inlined_call_operand.vmem [shape: f32[1,64], index: 5, kind: input, shape index: {}]
  %s6 = inlined_call_operand.vmem [shape: f32[2,1,64], index: 6, kind: input, shape index: {}]
  %s7 = inlined_call_operand.vmem [shape: f32[2,1,64], index: 7, kind: input, shape index: {}]
  %s8 = inlined_call_operand.vmem [shape: bf16[2,64,192], index: 8, kind: input, shape index: {}]
  %s9 = inlined_call_operand.vmem [shape: f32[2,1,192], index: 9, kind: input, shape index: {}]
  %s10 = inlined_call_operand.vmem [shape: bf16[2,64,64], index: 10, kind: input, shape index: {}]
  %s11 = inlined_call_operand.vmem [shape: f32[2,1,64], index: 11, kind: input, shape index: {}]
  %s12 = inlined_call_operand.vmem [shape: f32[2,1,64], index: 12, kind: input, shape index: {}]
  %s13 = inlined_call_operand.vmem [shape: f32[2,1,64], index: 13, kind: input, shape index: {}]
  %s14 = inlined_call_operand.vmem [shape: bf16[2,64,256], index: 14, kind: input, shape index: {}]
  %s15 = inlined_call_operand.vmem [shape: f32[2,1,256], index: 15, kind: input, shape index: {}]
  %s16 = inlined_call_operand.vmem [shape: bf16[2,256,64], index: 16, kind: input, shape index: {}]
  %s17 = inlined_call_operand.vmem [shape: f32[2,1,64], index: 17, kind: input, shape index: {}]
  %s18 = inlined_call_operand.vmem [shape: f32[1,64], index: 18, kind: input, shape index: {}]
  %s19 = inlined_call_operand.vmem [shape: f32[1,64], index: 19, kind: input, shape index: {}]
  %s20 = inlined_call_operand.vmem [shape: f32[2,17,64], index: 20, kind: output, shape index: {}]
  %s21 = sld [smem:[#allocation0]]
  $region113: #{blip_forward.2} parent=0
    _
  %s23 = ssub.s32 1, %s21
  %s24 = scalar_select 0, %s23, %s21
  loop: start=0, step=1, limit=4
  $region2: #{blip_forward.2} parent=0 // loop_pre_header
    _
  $region3: #{blip_forward.2} parent=0 // loop_header
    %s26 = sphi 0, %s30
    %p27 = scmp.ge.s32.totalorder %s26, 4
    %s36 = sphi 0, %s38
    %s39 = sphi 0, %s36
    %s40 = sphi 0, %s39
    %s56 = sphi 0, %s40
    %s60 = sphi 0, %s60
    %s62 = sphi 0, %s60
    %s63 = sphi 0, %s62
    %s77 = sphi 0, %s63
    %s81 = sphi 0, %s81
    %s83 = sphi 0, %s81
    %s84 = sphi 0, %s83
    %s98 = sphi 0, %s84
    %s102 = sphi 0, %s102
    %s104 = sphi 0, %s102
    %s105 = sphi 0, %s104
    %s119 = sphi 0, %s105
    %s123 = sphi 0, %s123
    %s125 = sphi 0, %s123
    %s126 = sphi 0, %s125
    %s140 = sphi 0, %s126
    %s144 = sphi 0, %s144
    %s146 = sphi 0, %s144
    %s147 = sphi 0, %s146
    %s161 = sphi 0, %s147
    %s165 = sphi 0, %s165
    %s167 = sphi 0, %s165
    %s168 = sphi 0, %s167
    %s182 = sphi 0, %s168
    %s186 = sphi 0, %s186
    %s188 = sphi 0, %s186
    %s189 = sphi 0, %s188
    %s203 = sphi 0, %s189
    %s207 = sphi 0, %s207
    %s209 = sphi 0, %s207
    %s210 = sphi 0, %s209
    %s224 = sphi 0, %s210
    %s228 = sphi 0, %s228
    %s230 = sphi 0, %s228
    %s231 = sphi 0, %s230
    %s245 = sphi 0, %s231
    %s249 = sphi 0, %s249
    %s251 = sphi 0, %s249
    %s252 = sphi 0, %s251
    %s266 = sphi 0, %s252
    %s270 = sphi 0, %s270
    %s272 = sphi 0, %s270
    %s273 = sphi 0, %s272
    %s287 = sphi 0, %s273
    %s291 = sphi 0, %s291
    %s293 = sphi 0, %s291
    %s294 = sphi 0, %s293
    %s308 = sphi 0, %s294
    %s312 = sphi 0, %s312
    %s314 = sphi 0, %s312
    %s315 = sphi 0, %s314
    %s329 = sphi 0, %s315
    %s333 = sphi 0, %s333
    %s335 = sphi 0, %s333
    %s336 = sphi 0, %s335
    %s350 = sphi 0, %s336
    %s354 = sphi 0, %s354
    %s356 = sphi 0, %s354
    %s357 = sphi 0, %s356
    %s371 = sphi 0, %s357
    %s375 = sphi 0, %s375
    %s377 = sphi 0, %s375
    %s378 = sphi 0, %s377
    %s392 = sphi 0, %s378
    %s396 = sphi 0, %s396
    %s398 = sphi 0, %s396
    %s399 = sphi 0, %s398
    %s413 = sphi 0, %s399
    %s417 = sphi 0, %s417
    %s419 = sphi 0, %s417
    %s420 = sphi 0, %s419
    %s434 = sphi 0, %s420
    %s438 = sphi 0, %s438
    %s440 = sphi 0, %s438
    %s441 = sphi 0, %s440
    %s455 = sphi 0, %s441
    %s461 = sphi 0, %s463
    %s464 = sphi 0, %s461
    %s465 = sphi 0, %s464
    %s481 = sphi 0, %s465
  $region4: #{blip_forward.2} parent=0 // loop_header_branch
    %29 = sbr.rel (%p27) target = $region8
  $region5: #{blip_forward.2} parent=0 // loop_body
    %s31 = ssub.s32 %s26, 1
    %s32 = ssub.s32 %s26, 2
    %s33 = sadd.s32 %s26, 1
    %s34 = ssub.s32 %s26, %s33
    %p35 = scmp.eq.s32.totalorder %s34, 0
    %s37 = sadd.s32 %s36, 1
    %s38 = scalar_select %p35, %s36, %s37
    %p41 = pneg %p35
    %p42 = scmp.eq.s32.totalorder %s26, 1
    %p43 = por %p41, %p42
    %p44 = scmp.ne.s32.totalorder %s36, %s39
    %p45 = scmp.eq.s32.totalorder %s26, 0
    %p46 = por %p44, %p45
    %p47 = scmp.ne.s32.totalorder %s36, %s39
    %p48 = scmp.eq.s32.totalorder %s31, 1
    %p49 = por %p47, %p48
    %p50 = scmp.ne.s32.totalorder %s39, %s40
    %p51 = scmp.eq.s32.totalorder %s31, 0
    %p52 = por %p50, %p51
    %p53 = scmp.ne.s32.totalorder %s39, %s40
    %p54 = scmp.eq.s32.totalorder %s32, 1
    %p55 = por %p53, %p54
    %p57 = scmp.ne.s32.totalorder %s40, %s56
    %p58 = scmp.eq.s32.totalorder %s32, 0
    %p59 = por %p57, %p58
    %s61 = sadd.s32 %s60, 1
    %p64 = scmp.eq.s32.totalorder %s26, 1
    %p65 = scmp.ne.s32.totalorder %s60, %s62
    %p66 = scmp.eq.s32.totalorder %s26, 0
    %p67 = por %p65, %p66
    %p68 = scmp.ne.s32.totalorder %s60, %s62
    %p69 = scmp.eq.s32.totalorder %s31, 1
    %p70 = por %p68, %p69
    %p71 = scmp.ne.s32.totalorder %s62, %s63
    %p72 = scmp.eq.s32.totalorder %s31, 0
    %p73 = por %p71, %p72
    %p74 = scmp.ne.s32.totalorder %s62, %s63
    %p75 = scmp.eq.s32.totalorder %s32, 1
    %p76 = por %p74, %p75
    %p78 = scmp.ne.s32.totalorder %s63, %s77
    %p79 = scmp.eq.s32.totalorder %s32, 0
    %p80 = por %p78, %p79
    %s82 = sadd.s32 %s81, 1
    %p85 = scmp.eq.s32.totalorder %s26, 1
    %p86 = scmp.ne.s32.totalorder %s81, %s83
    %p87 = scmp.eq.s32.totalorder %s26, 0
    %p88 = por %p86, %p87
    %p89 = scmp.ne.s32.totalorder %s81, %s83
    %p90 = scmp.eq.s32.totalorder %s31, 1
    %p91 = por %p89, %p90
    %p92 = scmp.ne.s32.totalorder %s83, %s84
    %p93 = scmp.eq.s32.totalorder %s31, 0
    %p94 = por %p92, %p93
    %p95 = scmp.ne.s32.totalorder %s83, %s84
    %p96 = scmp.eq.s32.totalorder %s32, 1
    %p97 = por %p95, %p96
    %p99 = scmp.ne.s32.totalorder %s84, %s98
    %p100 = scmp.eq.s32.totalorder %s32, 0
    %p101 = por %p99, %p100
    %s103 = sadd.s32 %s102, 1
    %p106 = scmp.eq.s32.totalorder %s26, 1
    %p107 = scmp.ne.s32.totalorder %s102, %s104
    %p108 = scmp.eq.s32.totalorder %s26, 0
    %p109 = por %p107, %p108
    %p110 = scmp.ne.s32.totalorder %s102, %s104
    %p111 = scmp.eq.s32.totalorder %s31, 1
    %p112 = por %p110, %p111
    %p113 = scmp.ne.s32.totalorder %s104, %s105
    %p114 = scmp.eq.s32.totalorder %s31, 0
    %p115 = por %p113, %p114
    %p116 = scmp.ne.s32.totalorder %s104, %s105
    %p117 = scmp.eq.s32.totalorder %s32, 1
    %p118 = por %p116, %p117
    %p120 = scmp.ne.s32.totalorder %s105, %s119
    %p121 = scmp.eq.s32.totalorder %s32, 0
    %p122 = por %p120, %p121
    %s124 = sadd.s32 %s123, 1
    %p127 = scmp.eq.s32.totalorder %s26, 1
    %p128 = scmp.ne.s32.totalorder %s123, %s125
    %p129 = scmp.eq.s32.totalorder %s26, 0
    %p130 = por %p128, %p129
    %p131 = scmp.ne.s32.totalorder %s123, %s125
    %p132 = scmp.eq.s32.totalorder %s31, 1
    %p133 = por %p131, %p132
    %p134 = scmp.ne.s32.totalorder %s125, %s126
    %p135 = scmp.eq.s32.totalorder %s31, 0
    %p136 = por %p134, %p135
    %p137 = scmp.ne.s32.totalorder %s125, %s126
    %p138 = scmp.eq.s32.totalorder %s32, 1
    %p139 = por %p137, %p138
    %p141 = scmp.ne.s32.totalorder %s126, %s140
    %p142 = scmp.eq.s32.totalorder %s32, 0
    %p143 = por %p141, %p142
    %s145 = sadd.s32 %s144, 1
    %p148 = scmp.eq.s32.totalorder %s26, 1
    %p149 = scmp.ne.s32.totalorder %s144, %s146
    %p150 = scmp.eq.s32.totalorder %s26, 0
    %p151 = por %p149, %p150
    %p152 = scmp.ne.s32.totalorder %s144, %s146
    %p153 = scmp.eq.s32.totalorder %s31, 1
    %p154 = por %p152, %p153
    %p155 = scmp.ne.s32.totalorder %s146, %s147
    %p156 = scmp.eq.s32.totalorder %s31, 0
    %p157 = por %p155, %p156
    %p158 = scmp.ne.s32.totalorder %s146, %s147
    %p159 = scmp.eq.s32.totalorder %s32, 1
    %p160 = por %p158, %p159
    %p162 = scmp.ne.s32.totalorder %s147, %s161
    %p163 = scmp.eq.s32.totalorder %s32, 0
    %p164 = por %p162, %p163
    %s166 = sadd.s32 %s165, 1
    %p169 = scmp.eq.s32.totalorder %s26, 1
    %p170 = scmp.ne.s32.totalorder %s165, %s167
    %p171 = scmp.eq.s32.totalorder %s26, 0
    %p172 = por %p170, %p171
    %p173 = scmp.ne.s32.totalorder %s165, %s167
    %p174 = scmp.eq.s32.totalorder %s31, 1
    %p175 = por %p173, %p174
    %p176 = scmp.ne.s32.totalorder %s167, %s168
    %p177 = scmp.eq.s32.totalorder %s31, 0
    %p178 = por %p176, %p177
    %p179 = scmp.ne.s32.totalorder %s167, %s168
    %p180 = scmp.eq.s32.totalorder %s32, 1
    %p181 = por %p179, %p180
    %p183 = scmp.ne.s32.totalorder %s168, %s182
    %p184 = scmp.eq.s32.totalorder %s32, 0
    %p185 = por %p183, %p184
    %s187 = sadd.s32 %s186, 1
    %p190 = scmp.eq.s32.totalorder %s26, 1
    %p191 = scmp.ne.s32.totalorder %s186, %s188
    %p192 = scmp.eq.s32.totalorder %s26, 0
    %p193 = por %p191, %p192
    %p194 = scmp.ne.s32.totalorder %s186, %s188
    %p195 = scmp.eq.s32.totalorder %s31, 1
    %p196 = por %p194, %p195
    %p197 = scmp.ne.s32.totalorder %s188, %s189
    %p198 = scmp.eq.s32.totalorder %s31, 0
    %p199 = por %p197, %p198
    %p200 = scmp.ne.s32.totalorder %s188, %s189
    %p201 = scmp.eq.s32.totalorder %s32, 1
    %p202 = por %p200, %p201
    %p204 = scmp.ne.s32.totalorder %s189, %s203
    %p205 = scmp.eq.s32.totalorder %s32, 0
    %p206 = por %p204, %p205
    %s208 = sadd.s32 %s207, 1
    %p211 = scmp.eq.s32.totalorder %s26, 1
    %p212 = scmp.ne.s32.totalorder %s207, %s209
    %p213 = scmp.eq.s32.totalorder %s26, 0
    %p214 = por %p212, %p213
    %p215 = scmp.ne.s32.totalorder %s207, %s209
    %p216 = scmp.eq.s32.totalorder %s31, 1
    %p217 = por %p215, %p216
    %p218 = scmp.ne.s32.totalorder %s209, %s210
    %p219 = scmp.eq.s32.totalorder %s31, 0
    %p220 = por %p218, %p219
    %p221 = scmp.ne.s32.totalorder %s209, %s210
    %p222 = scmp.eq.s32.totalorder %s32, 1
    %p223 = por %p221, %p222
    %p225 = scmp.ne.s32.totalorder %s210, %s224
    %p226 = scmp.eq.s32.totalorder %s32, 0
    %p227 = por %p225, %p226
    %s229 = sadd.s32 %s228, 1
    %p232 = scmp.eq.s32.totalorder %s26, 1
    %p233 = scmp.ne.s32.totalorder %s228, %s230
    %p234 = scmp.eq.s32.totalorder %s26, 0
    %p235 = por %p233, %p234
    %p236 = scmp.ne.s32.totalorder %s228, %s230
    %p237 = scmp.eq.s32.totalorder %s31, 1
    %p238 = por %p236, %p237
    %p239 = scmp.ne.s32.totalorder %s230, %s231
    %p240 = scmp.eq.s32.totalorder %s31, 0
    %p241 = por %p239, %p240
    %p242 = scmp.ne.s32.totalorder %s230, %s231
    %p243 = scmp.eq.s32.totalorder %s32, 1
    %p244 = por %p242, %p243
    %p246 = scmp.ne.s32.totalorder %s231, %s245
    %p247 = scmp.eq.s32.totalorder %s32, 0
    %p248 = por %p246, %p247
    %s250 = sadd.s32 %s249, 1
    %p253 = scmp.eq.s32.totalorder %s26, 1
    %p254 = scmp.ne.s32.totalorder %s249, %s251
    %p255 = scmp.eq.s32.totalorder %s26, 0
    %p256 = por %p254, %p255
    %p257 = scmp.ne.s32.totalorder %s249, %s251
    %p258 = scmp.eq.s32.totalorder %s31, 1
    %p259 = por %p257, %p258
    %p260 = scmp.ne.s32.totalorder %s251, %s252
    %p261 = scmp.eq.s32.totalorder %s31, 0
    %p262 = por %p260, %p261
    %p263 = scmp.ne.s32.totalorder %s251, %s252
    %p264 = scmp.eq.s32.totalorder %s32, 1
    %p265 = por %p263, %p264
    %p267 = scmp.ne.s32.totalorder %s252, %s266
    %p268 = scmp.eq.s32.totalorder %s32, 0
    %p269 = por %p267, %p268
    %s271 = sadd.s32 %s270, 1
    %p274 = scmp.eq.s32.totalorder %s26, 1
    %p275 = scmp.ne.s32.totalorder %s270, %s272
    %p276 = scmp.eq.s32.totalorder %s26, 0
    %p277 = por %p275, %p276
    %p278 = scmp.ne.s32.totalorder %s270, %s272
    %p279 = scmp.eq.s32.totalorder %s31, 1
    %p280 = por %p278, %p279
    %p281 = scmp.ne.s32.totalorder %s272, %s273
    %p282 = scmp.eq.s32.totalorder %s31, 0
    %p283 = por %p281, %p282
    %p284 = scmp.ne.s32.totalorder %s272, %s273
    %p285 = scmp.eq.s32.totalorder %s32, 1
    %p286 = por %p284, %p285
    %p288 = scmp.ne.s32.totalorder %s273, %s287
    %p289 = scmp.eq.s32.totalorder %s32, 0
    %p290 = por %p288, %p289
    %s292 = sadd.s32 %s291, 1
    %p295 = scmp.eq.s32.totalorder %s26, 1
    %p296 = scmp.ne.s32.totalorder %s291, %s293
    %p297 = scmp.eq.s32.totalorder %s26, 0
    %p298 = por %p296, %p297
    %p299 = scmp.ne.s32.totalorder %s291, %s293
    %p300 = scmp.eq.s32.totalorder %s31, 1
    %p301 = por %p299, %p300
    %p302 = scmp.ne.s32.totalorder %s293, %s294
    %p303 = scmp.eq.s32.totalorder %s31, 0
    %p304 = por %p302, %p303
    %p305 = scmp.ne.s32.totalorder %s293, %s294
    %p306 = scmp.eq.s32.totalorder %s32, 1
    %p307 = por %p305, %p306
    %p309 = scmp.ne.s32.totalorder %s294, %s308
    %p310 = scmp.eq.s32.totalorder %s32, 0
    %p311 = por %p309, %p310
    %s313 = sadd.s32 %s312, 1
    %p316 = scmp.eq.s32.totalorder %s26, 1
    %p317 = scmp.ne.s32.totalorder %s312, %s314
    %p318 = scmp.eq.s32.totalorder %s26, 0
    %p319 = por %p317, %p318
    %p320 = scmp.ne.s32.totalorder %s312, %s314
    %p321 = scmp.eq.s32.totalorder %s31, 1
    %p322 = por %p320, %p321
    %p323 = scmp.ne.s32.totalorder %s314, %s315
    %p324 = scmp.eq.s32.totalorder %s31, 0
    %p325 = por %p323, %p324
    %p326 = scmp.ne.s32.totalorder %s314, %s315
    %p327 = scmp.eq.s32.totalorder %s32, 1
    %p328 = por %p326, %p327
    %p330 = scmp.ne.s32.totalorder %s315, %s329
    %p331 = scmp.eq.s32.totalorder %s32, 0
    %p332 = por %p330, %p331
    %s334 = sadd.s32 %s333, 1
    %p337 = scmp.eq.s32.totalorder %s26, 1
    %p338 = scmp.ne.s32.totalorder %s333, %s335
    %p339 = scmp.eq.s32.totalorder %s26, 0
    %p340 = por %p338, %p339
    %p341 = scmp.ne.s32.totalorder %s333, %s335
    %p342 = scmp.eq.s32.totalorder %s31, 1
    %p343 = por %p341, %p342
    %p344 = scmp.ne.s32.totalorder %s335, %s336
    %p345 = scmp.eq.s32.totalorder %s31, 0
    %p346 = por %p344, %p345
    %p347 = scmp.ne.s32.totalorder %s335, %s336
    %p348 = scmp.eq.s32.totalorder %s32, 1
    %p349 = por %p347, %p348
    %p351 = scmp.ne.s32.totalorder %s336, %s350
    %p352 = scmp.eq.s32.totalorder %s32, 0
    %p353 = por %p351, %p352
    %s355 = sadd.s32 %s354, 1
    %p358 = scmp.eq.s32.totalorder %s26, 1
    %p359 = scmp.ne.s32.totalorder %s354, %s356
    %p360 = scmp.eq.s32.totalorder %s26, 0
    %p361 = por %p359, %p360
    %p362 = scmp.ne.s32.totalorder %s354, %s356
    %p363 = scmp.eq.s32.totalorder %s31, 1
    %p364 = por %p362, %p363
    %p365 = scmp.ne.s32.totalorder %s356, %s357
    %p366 = scmp.eq.s32.totalorder %s31, 0
    %p367 = por %p365, %p366
    %p368 = scmp.ne.s32.totalorder %s356, %s357
    %p369 = scmp.eq.s32.totalorder %s32, 1
    %p370 = por %p368, %p369
    %p372 = scmp.ne.s32.totalorder %s357, %s371
    %p373 = scmp.eq.s32.totalorder %s32, 0
    %p374 = por %p372, %p373
    %s376 = sadd.s32 %s375, 1
    %p379 = scmp.eq.s32.totalorder %s26, 1
    %p380 = scmp.ne.s32.totalorder %s375, %s377
    %p381 = scmp.eq.s32.totalorder %s26, 0
    %p382 = por %p380, %p381
    %p383 = scmp.ne.s32.totalorder %s375, %s377
    %p384 = scmp.eq.s32.totalorder %s31, 1
    %p385 = por %p383, %p384
    %p386 = scmp.ne.s32.totalorder %s377, %s378
    %p387 = scmp.eq.s32.totalorder %s31, 0
    %p388 = por %p386, %p387
    %p389 = scmp.ne.s32.totalorder %s377, %s378
    %p390 = scmp.eq.s32.totalorder %s32, 1
    %p391 = por %p389, %p390
    %p393 = scmp.ne.s32.totalorder %s378, %s392
    %p394 = scmp.eq.s32.totalorder %s32, 0
    %p395 = por %p393, %p394
    %s397 = sadd.s32 %s396, 1
    %p400 = scmp.eq.s32.totalorder %s26, 1
    %p401 = scmp.ne.s32.totalorder %s396, %s398
    %p402 = scmp.eq.s32.totalorder %s26, 0
    %p403 = por %p401, %p402
    %p404 = scmp.ne.s32.totalorder %s396, %s398
    %p405 = scmp.eq.s32.totalorder %s31, 1
    %p406 = por %p404, %p405
    %p407 = scmp.ne.s32.totalorder %s398, %s399
    %p408 = scmp.eq.s32.totalorder %s31, 0
    %p409 = por %p407, %p408
    %p410 = scmp.ne.s32.totalorder %s398, %s399
    %p411 = scmp.eq.s32.totalorder %s32, 1
    %p412 = por %p410, %p411
    %p414 = scmp.ne.s32.totalorder %s399, %s413
    %p415 = scmp.eq.s32.totalorder %s32, 0
    %p416 = por %p414, %p415
    %s418 = sadd.s32 %s417, 1
    %p421 = scmp.eq.s32.totalorder %s26, 1
    %p422 = scmp.ne.s32.totalorder %s417, %s419
    %p423 = scmp.eq.s32.totalorder %s26, 0
    %p424 = por %p422, %p423
    %p425 = scmp.ne.s32.totalorder %s417, %s419
    %p426 = scmp.eq.s32.totalorder %s31, 1
    %p427 = por %p425, %p426
    %p428 = scmp.ne.s32.totalorder %s419, %s420
    %p429 = scmp.eq.s32.totalorder %s31, 0
    %p430 = por %p428, %p429
    %p431 = scmp.ne.s32.totalorder %s419, %s420
    %p432 = scmp.eq.s32.totalorder %s32, 1
    %p433 = por %p431, %p432
    %p435 = scmp.ne.s32.totalorder %s420, %s434
    %p436 = scmp.eq.s32.totalorder %s32, 0
    %p437 = por %p435, %p436
    %s439 = sadd.s32 %s438, 1
    %p442 = scmp.eq.s32.totalorder %s26, 1
    %p443 = scmp.ne.s32.totalorder %s438, %s440
    %p444 = scmp.eq.s32.totalorder %s26, 0
    %p445 = por %p443, %p444
    %p446 = scmp.ne.s32.totalorder %s438, %s440
    %p447 = scmp.eq.s32.totalorder %s31, 1
    %p448 = por %p446, %p447
    %p449 = scmp.ne.s32.totalorder %s440, %s441
    %p450 = scmp.eq.s32.totalorder %s31, 0
    %p451 = por %p449, %p450
    %p452 = scmp.ne.s32.totalorder %s440, %s441
    %p453 = scmp.eq.s32.totalorder %s32, 1
    %p454 = por %p452, %p453
    %p456 = scmp.ne.s32.totalorder %s441, %s455
    %p457 = scmp.eq.s32.totalorder %s32, 0
    %p458 = por %p456, %p457
    %s459 = ssub.s32 %s26, %s33
    %p460 = scmp.eq.s32.totalorder %s459, 0
    %s462 = sadd.s32 %s461, 1
    %s463 = scalar_select %p460, %s461, %s462
    %p466 = pneg %p460
    %p467 = scmp.eq.s32.totalorder %s26, 1
    %p468 = por %p466, %p467
    %p469 = scmp.ne.s32.totalorder %s461, %s464
    %p470 = scmp.eq.s32.totalorder %s26, 0
    %p471 = por %p469, %p470
    %p472 = scmp.ne.s32.totalorder %s461, %s464
    %p473 = scmp.eq.s32.totalorder %s31, 1
    %p474 = por %p472, %p473
    %p475 = scmp.ne.s32.totalorder %s464, %s465
    %p476 = scmp.eq.s32.totalorder %s31, 0
    %p477 = por %p475, %p476
    %p478 = scmp.ne.s32.totalorder %s464, %s465
    %p479 = scmp.eq.s32.totalorder %s32, 1
    %p480 = por %p478, %p479
    %p482 = scmp.ne.s32.totalorder %s465, %s481
    %p483 = scmp.eq.s32.totalorder %s32, 0
    %p484 = por %p482, %p483
    %p485 = scmp.le.s32.totalorder 1, %s26
    %p486 = scmp.lt.s32.totalorder %s26, 3
    %p487 = pnand %p485, %p486
    %p488 = pneg %p487
    // Predicated region
    $region9: #{blip_forward.2} parent=5 // pred_check
      _
    $region10: #{blip_forward.2} parent=5 // pred_check_branch
      %490 = sbr.rel (%p487) target = $region12
    $region11: #{blip_forward.2} parent=5 // pred_region
      %s491 = ssub.s32 %s26, 1
      // Predicated region
      $region13: #{blip_forward.2} parent=11 // pred_check
        %p492 = pneg %p73
      $region14: #{blip_forward.2} parent=11 // pred_check_branch
        %494 = sbr.rel (%p492) target = $region16
      $region15: #{blip_forward.2} parent=11 // pred_region
        _
      $region16: #{blip_forward.2} parent=11 // pred_fallthru
        _
      // Predicated region
      $region17: #{blip_forward.2} parent=11 // pred_check
        %p495 = pneg %p94
      $region18: #{blip_forward.2} parent=11 // pred_check_branch
        %497 = sbr.rel (%p495) target = $region20
      $region19: #{blip_forward.2} parent=11 // pred_region
        _
      $region20: #{blip_forward.2} parent=11 // pred_fallthru
        _
      // Predicated region
      $region21: #{blip_forward.2} parent=11 // pred_check
        %p498 = pneg %p115
      $region22: #{blip_forward.2} parent=11 // pred_check_branch
        %500 = sbr.rel (%p498) target = $region24
      $region23: #{blip_forward.2} parent=11 // pred_region
        _
      $region24: #{blip_forward.2} parent=11 // pred_fallthru
        _
      // Predicated region
      $region25: #{blip_forward.2} parent=11 // pred_check
        %p501 = pneg %p136
      $region26: #{blip_forward.2} parent=11 // pred_check_branch
        %503 = sbr.rel (%p501) target = $region28
      $region27: #{blip_forward.2} parent=11 // pred_region
        _
      $region28: #{blip_forward.2} parent=11 // pred_fallthru
        _
      // Predicated region
      $region29: #{blip_forward.2} parent=11 // pred_check
        %p504 = pneg %p157
      $region30: #{blip_forward.2} parent=11 // pred_check_branch
        %506 = sbr.rel (%p504) target = $region32
      $region31: #{blip_forward.2} parent=11 // pred_region
        _
      $region32: #{blip_forward.2} parent=11 // pred_fallthru
        _
      // Predicated region
      $region33: #{blip_forward.2} parent=11 // pred_check
        %p507 = pneg %p178
      $region34: #{blip_forward.2} parent=11 // pred_check_branch
        %509 = sbr.rel (%p507) target = $region36
      $region35: #{blip_forward.2} parent=11 // pred_region
        _
      $region36: #{blip_forward.2} parent=11 // pred_fallthru
        _
      // Predicated region
      $region37: #{blip_forward.2} parent=11 // pred_check
        %p510 = pneg %p199
      $region38: #{blip_forward.2} parent=11 // pred_check_branch
        %512 = sbr.rel (%p510) target = $region40
      $region39: #{blip_forward.2} parent=11 // pred_region
        _
      $region40: #{blip_forward.2} parent=11 // pred_fallthru
        _
      // Predicated region
      $region41: #{blip_forward.2} parent=11 // pred_check
        %p513 = pneg %p220
      $region42: #{blip_forward.2} parent=11 // pred_check_branch
        %515 = sbr.rel (%p513) target = $region44
      $region43: #{blip_forward.2} parent=11 // pred_region
        _
      $region44: #{blip_forward.2} parent=11 // pred_fallthru
        _
      // Predicated region
      $region45: #{blip_forward.2} parent=11 // pred_check
        %p516 = pneg %p241
      $region46: #{blip_forward.2} parent=11 // pred_check_branch
        %518 = sbr.rel (%p516) target = $region48
      $region47: #{blip_forward.2} parent=11 // pred_region
        _
      $region48: #{blip_forward.2} parent=11 // pred_fallthru
        _
      // Predicated region
      $region49: #{blip_forward.2} parent=11 // pred_check
        %p519 = pneg %p262
      $region50: #{blip_forward.2} parent=11 // pred_check_branch
        %521 = sbr.rel (%p519) target = $region52
      $region51: #{blip_forward.2} parent=11 // pred_region
        _
      $region52: #{blip_forward.2} parent=11 // pred_fallthru
        _
      // Predicated region
      $region53: #{blip_forward.2} parent=11 // pred_check
        %p522 = pneg %p283
      $region54: #{blip_forward.2} parent=11 // pred_check_branch
        %524 = sbr.rel (%p522) target = $region56
      $region55: #{blip_forward.2} parent=11 // pred_region
        _
      $region56: #{blip_forward.2} parent=11 // pred_fallthru
        _
      // Predicated region
      $region57: #{blip_forward.2} parent=11 // pred_check
        %p525 = pneg %p304
      $region58: #{blip_forward.2} parent=11 // pred_check_branch
        %527 = sbr.rel (%p525) target = $region60
      $region59: #{blip_forward.2} parent=11 // pred_region
        _
      $region60: #{blip_forward.2} parent=11 // pred_fallthru
        _
      // Predicated region
      $region61: #{blip_forward.2} parent=11 // pred_check
        %p528 = pneg %p325
      $region62: #{blip_forward.2} parent=11 // pred_check_branch
        %530 = sbr.rel (%p528) target = $region64
      $region63: #{blip_forward.2} parent=11 // pred_region
        _
      $region64: #{blip_forward.2} parent=11 // pred_fallthru
        _
      // Predicated region
      $region65: #{blip_forward.2} parent=11 // pred_check
        %p531 = pneg %p346
      $region66: #{blip_forward.2} parent=11 // pred_check_branch
        %533 = sbr.rel (%p531) target = $region68
      $region67: #{blip_forward.2} parent=11 // pred_region
        _
      $region68: #{blip_forward.2} parent=11 // pred_fallthru
        _
      // Predicated region
      $region69: #{blip_forward.2} parent=11 // pred_check
        %p534 = pneg %p367
      $region70: #{blip_forward.2} parent=11 // pred_check_branch
        %536 = sbr.rel (%p534) target = $region72
      $region71: #{blip_forward.2} parent=11 // pred_region
        _
      $region72: #{blip_forward.2} parent=11 // pred_fallthru
        _
      // Predicated region
      $region73: #{blip_forward.2} parent=11 // pred_check
        %p537 = pneg %p388
      $region74: #{blip_forward.2} parent=11 // pred_check_branch
        %539 = sbr.rel (%p537) target = $region76
      $region75: #{blip_forward.2} parent=11 // pred_region
        _
      $region76: #{blip_forward.2} parent=11 // pred_fallthru
        _
      // Predicated region
      $region77: #{blip_forward.2} parent=11 // pred_check
        %p540 = pneg %p409
      $region78: #{blip_forward.2} parent=11 // pred_check_branch
        %542 = sbr.rel (%p540) target = $region80
      $region79: #{blip_forward.2} parent=11 // pred_region
        _
      $region80: #{blip_forward.2} parent=11 // pred_fallthru
        _
      // Predicated region
      $region81: #{blip_forward.2} parent=11 // pred_check
        %p543 = pneg %p430
      $region82: #{blip_forward.2} parent=11 // pred_check_branch
        %545 = sbr.rel (%p543) target = $region84
      $region83: #{blip_forward.2} parent=11 // pred_region
        _
      $region84: #{blip_forward.2} parent=11 // pred_fallthru
        _
      // Predicated region
      $region85: #{blip_forward.2} parent=11 // pred_check
        %p546 = pneg %p451
      $region86: #{blip_forward.2} parent=11 // pred_check_branch
        %548 = sbr.rel (%p546) target = $region88
      $region87: #{blip_forward.2} parent=11 // pred_region
        _
      $region88: #{blip_forward.2} parent=11 // pred_fallthru
        _
    $region12: #{blip_forward.2} parent=5 // pred_fallthru
      _
    %p549 = scmp.lt.s32.totalorder %s26, 2
    // Predicated region
    $region89: #{blip_forward.2} parent=5 // pred_check
      %p550 = pneg %p549
    $region90: #{blip_forward.2} parent=5 // pred_check_branch
      %552 = sbr.rel (%p550) target = $region92
    $region91: #{blip_forward.2} parent=5 // pred_region
      // Predicated region
      $region93: #{blip_forward.2} parent=91 // pred_check
        %p553 = pneg %p46
      $region94: #{blip_forward.2} parent=91 // pred_check_branch
        %555 = sbr.rel (%p553) target = $region96
      $region95: #{blip_forward.2} parent=91 // pred_region
        %p556 = scmp.lt.s32.totalorder %s26, 1
        %s557 = scalar_select %p556, %s26, 1
        %s558 = smul.addr %s557, 4
        %s559 = smul.addr %s558, 8
        %s560 = scalar_lea.vmem %s0, %s559
      $region96: #{blip_forward.2} parent=91 // pred_fallthru
        _
    $region92: #{blip_forward.2} parent=5 // pred_fallthru
      _
    %p561 = scmp.le.s32.totalorder 1, %s26
    %p562 = scmp.lt.s32.totalorder %s26, 3
    %p563 = pnand %p561, %p562
    %p564 = pneg %p563
    // Predicated region
    $region97: #{blip_forward.2} parent=5 // pred_check
      _
    $region98: #{blip_forward.2} parent=5 // pred_check_branch
      %566 = sbr.rel (%p563) target = $region100
    $region99: #{blip_forward.2} parent=5 // pred_region
      %s567 = ssub.s32 %s26, 1
      %p568 = scmp.lt.s32.totalorder %s31, 1
      %s569 = scalar_select %p568, %s31, 1
      %s570 = smul.addr %s569, 4
      %s571 = smul.addr %s570, 8
      %s572 = scalar_lea.vmem %s0, %s571
      %p573 = pneg %p52
      %p574 = pneg %p49
      %p575 = pneg %p73
      %p576 = pneg %p70
      %p577 = pneg %p94
      %p578 = pneg %p91
      %p579 = pneg %p115
      %p580 = pneg %p112
      %p581 = pneg %p136
      %p582 = pneg %p133
      %p583 = pneg %p157
      %p584 = pneg %p154
      %p585 = pneg %p178
      %p586 = pneg %p175
      %p587 = pneg %p199
      %p588 = pneg %p196
      %p589 = pneg %p220
      %p590 = pneg %p217
      %p591 = pneg %p241
      %p592 = pneg %p238
      %p593 = pneg %p262
      %p594 = pneg %p259
      %p595 = pneg %p283
      %p596 = pneg %p280
      %p597 = pneg %p304
      %p598 = pneg %p301
      %p599 = pneg %p325
      %p600 = pneg %p322
      %p601 = pneg %p346
      %p602 = pneg %p343
      %p603 = pneg %p367
      %p604 = pneg %p364
      %p605 = pneg %p388
      %p606 = pneg %p385
      %p607 = pneg %p409
      %p608 = pneg %p406
      %p609 = pneg %p430
      %p610 = pneg %p427
      %p611 = pneg %p451
      %p612 = pneg %p448
      %p613 = pneg %p477
      %p614 = pneg %p474
      %p615 = scmp.lt.s32.totalorder %s31, 1
      %s616 = scalar_select %p615, %s31, 1
      %s617 = smul.addr %s616, 3
      %s618 = smul.addr %s617, 8
      %s619 = scalar_lea.vmem %s20, %s618
      %p620 = scmp.lt.s32.totalorder %s31, 1
      %s621 = scalar_select %p620, %s31, 1
      %s622 = smul.addr %s621, 4
      %s623 = smul.addr %s622, 8
      %s624 = scalar_lea.vmem %s0, %s623
      %p625 = scmp.lt.s32.totalorder %s31, 1
      %s626 = scalar_select %p625, %s31, 1
      %s627 = smul.addr %s626, 3
      %s628 = smul.addr %s627, 8
      %s629 = scalar_lea.vmem %s20, %s628
      %v631 = vld [vmem:[%s624] sm:$0xff]
      %v632 = vld [vmem:[%s624 + $0x8] sm:$0xff]
      %v633 = vld [vmem:[%s624 + $0x10] sm:$0xff]
      %v634 = vld [vmem:[%s624 + $0x18] sm:$0xff]
      %v635 = vpack.c.bf16 %v633, %v631
      %v636 = vpack.c.bf16 %v634, %v632
      %v637 = vld [vmem:[%s1] sm:$0xf]
      %v638 = vld [vmem:[%s1 + $0x4] sm:$0xf]
      %v639 = vld [vmem:[%s1 + $0x8] sm:$0xf]
      %v640 = vld [vmem:[%s1 + $0xc] sm:$0xf]
      %v641 = vld [vmem:[%s1 + $0x10] sm:$0xf]
      %v642 = vld [vmem:[%s1 + $0x14] sm:$0xf]
      %v643 = vld [vmem:[%s1 + $0x18] sm:$0xf]
      %v644 = vld [vmem:[%s1 + $0x1c] sm:$0xf]
      %v645 = vld [vmem:[%s1 + $0x20] sm:$0xf]
      %v646 = vld [vmem:[%s1 + $0x24] sm:$0xf]
      %v647 = vld [vmem:[%s1 + $0x28] sm:$0xf]
      %v648 = vld [vmem:[%s1 + $0x2c] sm:$0xf]
      %v649 = vld [vmem:[%s1 + $0x30] sm:$0xf]
      %v650 = vld [vmem:[%s1 + $0x34] sm:$0xf]
      %v651 = vld [vmem:[%s1 + $0x38] sm:$0xf]
      %v652 = vld [vmem:[%s1 + $0x3c] sm:$0xf]
      %v653 = vld [vmem:[%s1 + $0x40] sm:$0xf]
      %v654 = vld [vmem:[%s1 + $0x44] sm:$0xf]
      %v655 = vld [vmem:[%s1 + $0x48] sm:$0xf]
      %v656 = vld [vmem:[%s1 + $0x4c] sm:$0xf]
      %v657 = vld [vmem:[%s1 + $0x50] sm:$0xf]
      %v658 = vld [vmem:[%s1 + $0x54] sm:$0xf]
      %v659 = vld [vmem:[%s1 + $0x58] sm:$0xf]
      %v660 = vld [vmem:[%s1 + $0x5c] sm:$0xf]
      %v661 = vld [vmem:[%s3] sm:$0xff]
      %v662 = vld [vmem:[%s3 + $0x8] sm:$0xff]
      %v687 = vunpack.c.l.b16 %v637
      %v688 = vunpack.c.l.b16 %v638
      %v689 = vunpack.c.l.b16 %v639
      %v690 = vunpack.c.l.b16 %v640
      %v691 = vunpack.c.l.b16 %v641
      %v692 = vunpack.c.l.b16 %v642
      %v693 = vunpack.c.l.b16 %v643
      %v694 = vunpack.c.l.b16 %v644
      %v695 = vunpack.c.l.b16 %v645
      %v696 = vunpack.c.l.b16 %v646
      %v697 = vunpack.c.l.b16 %v647
      %v698 = vunpack.c.l.b16 %v648
      %v699 = vunpack.c.l.b16 %v649
      %v700 = vunpack.c.l.b16 %v650
      %v701 = vunpack.c.l.b16 %v651
      %v702 = vunpack.c.l.b16 %v652
      %v703 = vunpack.c.l.b16 %v653
      %v704 = vunpack.c.l.b16 %v654
      %v705 = vunpack.c.l.b16 %v655
      %v706 = vunpack.c.l.b16 %v656
      %v707 = vunpack.c.l.b16 %v657
      %v708 = vunpack.c.l.b16 %v658
      %v709 = vunpack.c.l.b16 %v659
      %v710 = vunpack.c.l.b16 %v660
      %v711 = vpack.c.b16 %v688, %v687
      %v712 = vpack.c.b16 %v690, %v689
      %v713 = vpack.c.b16 %v692, %v691
      %v714 = vpack.c.b16 %v694, %v693
      %v715 = vpack.c.b16 %v696, %v695
      %v716 = vpack.c.b16 %v698, %v697
      %v717 = vpack.c.b16 %v700, %v699
      %v718 = vpack.c.b16 %v702, %v701
      %v719 = vpack.c.b16 %v704, %v703
      %v720 = vpack.c.b16 %v706, %v705
      %v721 = vpack.c.b16 %v708, %v707
      %v722 = vpack.c.b16 %v710, %v709
      %vm735 = vcmask 523264
      %v737 = vsel %vm735, %v636, 0
      %739 = vmatprep.subr.bf16.mxu0 0
      %740 = vmatpush1.bf16.msra.mxu0 %v711
      %741 = vmatprep.subr.bf16.mxu0 0
      %742 = vmatpush1.bf16.msra.mxu0 %v712
      %743 = vmatprep.subr.bf16.mxu0 0
      %744 = vmatpush1.bf16.msra.mxu0 %v713
      %745 = vmatprep.subr.bf16.mxu0 0
      %746 = vmatpush1.bf16.msra.mxu0 %v714
      %747 = vmatprep.subr.bf16.mxu0 0
      %748 = vmatpush1.bf16.msra.mxu0 %v715
      %749 = vmatprep.subr.bf16.mxu0 0
      %750 = vmatpush1.bf16.msra.mxu0 %v716
      %751 = vmatprep.subr.bf16.mxu0 0
      %752 = vmatpush1.bf16.msra.mxu0 %v717
      %753 = vmatprep.subr.bf16.mxu0 0
      %754 = vmatpush1.bf16.msra.mxu0 %v718
      %755 = vmatprep.subr.bf16.mxu0 0
      %756 = vmatpush1.bf16.msra.mxu0 %v719
      %757 = vmatprep.subr.bf16.mxu0 0
      %758 = vmatpush1.bf16.msra.mxu0 %v720
      %759 = vmatprep.subr.bf16.mxu0 0
      %760 = vmatpush1.bf16.msra.mxu0 %v721
      %761 = vmatprep.subr.bf16.mxu0 0
      %762 = vmatpush1.bf16.msra.mxu0 %v722
      %763 = vmatprep.subr.bf16.mxu0 0
      %764 = vmatpush1.bf16.msra.mxu0 0
      %765 = vmatprep.subr.bf16.mxu0 0
      %766 = vmatpush1.bf16.msra.mxu0 0
      %767 = vmatprep.subr.bf16.mxu0 0
      %768 = vmatpush1.bf16.msra.mxu0 0
      %769 = vmatprep.subr.bf16.mxu0 0
      %770 = vmatpush1.bf16.msra.mxu0 0
      %771 = vmatprep.mubr.bf16.mxu0 %v737
      %772 = vmatmul.mubr.bf16.gmra.mrb[0].mxu0 %v635
      %v773 = vpop.f32.mrb[0].mxu0
      %v774 = vadd.f32 %v661, %v773
      %v775 = vpop.f32.mrb[0].mxu0
      %v776 = vpop.f32.mrb[0].mxu0
      %v777 = vadd.f32 %v662, %v776
      %v778 = vpop.f32.mrb[0].mxu0
      %779 = vdwg.mxu0
      %v780 = vld [vmem:[%s2] sm:$0x1]
      %vm783 = vcmask 1040384
      %v784 = vrot.slane %v774, 7
      %v785 = vrot.slane %v777, 7
      %v786 = vsel %vm783, %v784, %v785
      %v790 = vsel %vm783, %v780, %v784
      %v791 = vld [vmem:[%s4] sm:$0x1]
      %v792 = vld [vmem:[%s5] sm:$0x1]
      %v793 = vsel %vm735, %v790, 0.0
      %794 = vadd.xlane.f32.xlu0 %v793
      %v795 = vpop.xlane.xlu0 %794
      %v796 = vsel %vm735, %v786, 0.0
      %797 = vadd.xlane.f32.xlu0 %v796
      %v798 = vpop.xlane.xlu0 %797
      %vm799 = vcmask 516096
      %v800 = vsel %vm799, %v785, 0.0
      %801 = vadd.xlane.f32.xlu0 %v800
      %v802 = vpop.xlane.xlu0 %801
      %v803 = vrcp.pop 64.0
      %v804 = vmul.f32 %v795, %v803
      %v805 = vmul.f32 %v798, %v803
      %v806 = vmul.f32 %v802, %v803
      %v807 = vsub.f32 %v790, %v804
      %v808 = vsub.f32 %v786, %v805
      %v809 = vsub.f32 %v785, %v806
      %v810 = vmul.f32 %v807, %v807
      %v811 = vmul.f32 %v808, %v808
      %v812 = vmul.f32 %v809, %v809
      %v813 = vsel %vm735, %v810, 0.0
      %814 = vadd.xlane.f32.xlu0 %v813
      %v815 = vpop.xlane.xlu0 %814
      %v816 = vsel %vm735, %v811, 0.0
      %817 = vadd.xlane.f32.xlu0 %v816
      %v818 = vpop.xlane.xlu0 %817
      %v819 = vsel %vm799, %v812, 0.0
      %820 = vadd.xlane.f32.xlu0 %v819
      %v821 = vpop.xlane.xlu0 %820
      %v822 = vmul.f32 %v815, %v803
      %v823 = vmul.f32 %v818, %v803
      %v824 = vmul.f32 %v821, %v803
      %v825 = vadd.f32 %v822, 1e-05
      %v826 = vadd.f32 %v823, 1e-05
      %v827 = vadd.f32 %v824, 1e-05
      %v828 = vrsqrt.pop %v825
      %v829 = vrsqrt.pop %v826
      %v830 = vrsqrt.pop %v827
      %v831 = vmul.f32 %v807, %v828
      %v832 = vmul.f32 %v808, %v829
      %v833 = vmul.f32 %v809, %v830
      %v835 = vlaneseq
      %v836 = vshrl.u32 %v835, 7
      %v837 = vsub.s32 0, %v836
      %v838 = vrot.slane %v791, %v837
      %v840 = vmul.f32 %v831, %v838
      %v841 = vmul.f32 %v832, %v838
      %v842 = vmul.f32 %v833, %v838
      %v844 = vlaneseq
      %v845 = vshrl.u32 %v844, 7
      %v846 = vsub.s32 0, %v845
      %v847 = vrot.slane %v792, %v846
      %v849 = vadd.f32 %v840, %v847
      %v850 = vadd.f32 %v841, %v847
      %v851 = vadd.f32 %v842, %v847
      %v852 = vld [vmem:[%s6] sm:$0x1]
      %v853 = vld [vmem:[%s7] sm:$0x1]
      %v854 = vsel %vm735, %v849, 0.0
      %855 = vadd.xlane.f32.xlu0 %v854
      %v856 = vpop.xlane.xlu0 %855
      %v857 = vsel %vm735, %v850, 0.0
      %858 = vadd.xlane.f32.xlu0 %v857
      %v859 = vpop.xlane.xlu0 %858
      %v860 = vsel %vm799, %v851, 0.0
      %861 = vadd.xlane.f32.xlu0 %v860
      %v862 = vpop.xlane.xlu0 %861
      %v863 = vmul.f32 %v856, %v803
      %v864 = vmul.f32 %v859, %v803
      %v865 = vmul.f32 %v862, %v803
      %v866 = vsub.f32 %v849, %v863
      %v867 = vsub.f32 %v850, %v864
      %v868 = vsub.f32 %v851, %v865
      %v869 = vmul.f32 %v866, %v866
      %v870 = vmul.f32 %v867, %v867
      %v871 = vmul.f32 %v868, %v868
      %v872 = vsel %vm735, %v869, 0.0
      %873 = vadd.xlane.f32.xlu0 %v872
      %v874 = vpop.xlane.xlu0 %873
      %v875 = vsel %vm735, %v870, 0.0
      %876 = vadd.xlane.f32.xlu0 %v875
      %v877 = vpop.xlane.xlu0 %876
      %v878 = vsel %vm799, %v871, 0.0
      %879 = vadd.xlane.f32.xlu0 %v878
      %v880 = vpop.xlane.xlu0 %879
      %v881 = vmul.f32 %v874, %v803
      %v882 = vmul.f32 %v877, %v803
      %v883 = vmul.f32 %v880, %v803
      %v884 = vadd.f32 %v881, 1e-05
      %v885 = vadd.f32 %v882, 1e-05
      %v886 = vadd.f32 %v883, 1e-05
      %v887 = vrsqrt.pop %v884
      %v888 = vrsqrt.pop %v885
      %v889 = vrsqrt.pop %v886
      %v890 = vmul.f32 %v866, %v887
      %v891 = vmul.f32 %v867, %v888
      %v892 = vmul.f32 %v868, %v889
      %v894 = vlaneseq
      %v895 = vshrl.u32 %v894, 7
      %v896 = vsub.s32 0, %v895
      %v897 = vrot.slane %v852, %v896
      %v899 = vmul.f32 %v890, %v897
      %v900 = vmul.f32 %v891, %v897
      %v901 = vmul.f32 %v892, %v897
      %v903 = vlaneseq
      %v904 = vshrl.u32 %v903, 7
      %v905 = vsub.s32 0, %v904
      %v906 = vrot.slane %v853, %v905
      %v908 = vadd.f32 %v899, %v906
      %v909 = vadd.f32 %v900, %v906
      %v910 = vadd.f32 %v901, %v906
      %v911 = vpack.c.bf16 %v909, %v908
      %v912 = vpack.c.bf16 %v910, %v910
      %v913 = vld [vmem:[%s8] sm:$0xff]
      %v914 = vld [vmem:[%s8 + $0x8] sm:$0xff]
      %v915 = vld [vmem:[%s8 + $0x10] sm:$0xff]
      %v916 = vld [vmem:[%s8 + $0x18] sm:$0xff]
      %v917 = vld [vmem:[%s8 + $0x20] sm:$0xff]
      %v918 = vld [vmem:[%s8 + $0x28] sm:$0xff]
      %v919 = vld [vmem:[%s8 + $0x30] sm:$0xff]
      %v920 = vld [vmem:[%s8 + $0x38] sm:$0xff]
      %v921 = vld [vmem:[%s9] sm:$0x3]
      %v923 = vlaneseq
      %v924 = vshrl.u32 %v923, 7
      %v925 = vsub.s32 0, %v924
      %v926 = vrot.slane %v921, %v925
      %v927 = vlaneseq
      %v928 = vshrl.u32 %v927, 7
      %v929 = vsub.s32 1, %v928
      %v930 = vrot.slane %v921, %v929
      %v941 = vunpack.c.l.b16 %v913
      %v942 = vunpack.c.h.b16 %v913
      %v943 = vunpack.c.l.b16 %v914
      %v944 = vunpack.c.h.b16 %v914
      %v945 = vunpack.c.l.b16 %v915
      %v946 = vunpack.c.h.b16 %v915
      %v947 = vunpack.c.l.b16 %v916
      %v948 = vunpack.c.h.b16 %v916
      %v949 = vunpack.c.l.b16 %v917
      %v950 = vunpack.c.h.b16 %v917
      %v951 = vunpack.c.l.b16 %v918
      %v952 = vunpack.c.h.b16 %v918
      %v953 = vunpack.c.l.b16 %v919
      %v954 = vunpack.c.h.b16 %v919
      %v955 = vunpack.c.l.b16 %v920
      %v956 = vunpack.c.h.b16 %v920
      %v957 = vpack.c.b16 %v943, %v941
      %v958 = vpack.c.b16 %v944, %v942
      %v959 = vpack.c.b16 %v947, %v945
      %v960 = vpack.c.b16 %v948, %v946
      %v961 = vpack.c.b16 %v951, %v949
      %v962 = vpack.c.b16 %v952, %v950
      %v963 = vpack.c.b16 %v955, %v953
      %v964 = vpack.c.b16 %v956, %v954
      %v974 = vsel %vm735, %v911, 0
      %v977 = vsel %vm735, %v912, 0
      %979 = vmatprep.subr.bf16.mxu0 %v958
      %980 = vmatpush1.bf16.msra.mxu0 %v957
      %981 = vmatprep.subr.bf16.mxu0 %v960
      %982 = vmatpush1.bf16.msra.mxu0 %v959
      %983 = vmatprep.subr.bf16.mxu0 %v962
      %984 = vmatpush1.bf16.msra.mxu0 %v961
      %985 = vmatprep.subr.bf16.mxu0 %v964
      %986 = vmatpush1.bf16.msra.mxu0 %v963
      %987 = vmatprep.subr.bf16.mxu0 0
      %988 = vmatpush1.bf16.msra.mxu0 0
      %989 = vmatprep.subr.bf16.mxu0 0
      %990 = vmatpush1.bf16.msra.mxu0 0
      %991 = vmatprep.subr.bf16.mxu0 0
      %992 = vmatpush1.bf16.msra.mxu0 0
      %993 = vmatprep.subr.bf16.mxu0 0
      %994 = vmatpush1.bf16.msra.mxu0 0
      %995 = vmatprep.subr.bf16.mxu0 0
      %996 = vmatpush1.bf16.msra.mxu0 0
      %997 = vmatprep.subr.bf16.mxu0 0
      %998 = vmatpush1.bf16.msra.mxu0 0
      %999 = vmatprep.subr.bf16.mxu0 0
      %1000 = vmatpush1.bf16.msra.mxu0 0
      %1001 = vmatprep.subr.bf16.mxu0 0
      %1002 = vmatpush1.bf16.msra.mxu0 0
      %1003 = vmatprep.subr.bf16.mxu0 0
      %1004 = vmatpush1.bf16.msra.mxu0 0
      %1005 = vmatprep.subr.bf16.mxu0 0
      %1006 = vmatpush1.bf16.msra.mxu0 0
      %1007 = vmatprep.subr.bf16.mxu0 0
      %1008 = vmatpush1.bf16.msra.mxu0 0
      %1009 = vmatprep.subr.bf16.mxu0 0
      %1010 = vmatpush1.bf16.msra.mxu0 0
      %1011 = vmatprep.mubr.bf16.mxu0 0
      %1012 = vmatmul.mubr.bf16.gmra.mrb[0].mxu0 %v974
      %v1013 = vpop.f32.mrb[0].mxu0
      %v1014 = vadd.f32 %v926, %v1013
      %v1015 = vpop.f32.mrb[0].mxu0
      %v1016 = vadd.f32 %v930, %v1015
      %v1017 = vpop.f32.mrb[0].mxu0
      %v1018 = vadd.f32 %v926, %v1017
      %v1019 = vpop.f32.mrb[0].mxu0
      %v1020 = vadd.f32 %v930, %v1019
      %1021 = vmatprep.mubr.bf16.mxu0 0
      %1022 = vmatmul.mubr.bf16.gmra.mrb[0].mxu0 %v977
      %v1023 = vpop.f32.mrb[0].mxu0
      %v1024 = vadd.f32 %v926, %v1023
      %v1025 = vpop.f32.mrb[0].mxu0
      %v1026 = vadd.f32 %v930, %v1025
      %v1027 = vpop.f32.mrb[0].mxu0
      %v1028 = vpop.f32.mrb[0].mxu0
      %1029 = vdwg.mxu0
      %v1030 = vld [vmem:[%s10] sm:$0xf]
      %v1031 = vld [vmem:[%s10 + $0x4] sm:$0xf]
      %v1032 = vld [vmem:[%s10 + $0x8] sm:$0xf]
      %v1033 = vld [vmem:[%s10 + $0xc] sm:$0xf]
      %v1034 = vld [vmem:[%s10 + $0x10] sm:$0xf]
      %v1035 = vld [vmem:[%s10 + $0x14] sm:$0xf]
      %v1036 = vld [vmem:[%s10 + $0x18] sm:$0xf]
      %v1037 = vld [vmem:[%s10 + $0x1c] sm:$0xf]
      %v1038 = vld [vmem:[%s11] sm:$0x1]
      %v1039 = vmul.f32 %v1014, 0.25
      %v1040 = vmul.f32 %v1018, 0.25
      %v1041 = vmul.f32 %v1024, 0.25
      %v1042 = vpack.c.bf16 %v1040, %v1039
      %v1043 = vpack.c.bf16 %v1041, %v1041
      %v1044 = vpack.c.bf16 %v1018, %v1014
      %v1045 = vpack.c.bf16 %v1024, %v1024
      %v1046 = vpack.c.bf16 %v1020, %v1016
      %v1047 = vpack.c.bf16 %v1026, %v1026
      %1050 = vrot.lane.b32.xlu0 %v1044, 64
      %v1051 = vpop.permute.xlu0 %1050
      %1052 = vrot.lane.b32.xlu0 %v1045, 64
      %v1053 = vpop.permute.xlu0 %1052
      %vm1054 = vcmask 130048
      %v1056 = vsel %vm1054, %v1042, 0
      %v1059 = vsel %vm1054, %v1043, 0
      %v1062 = vsel %vm1054, %v1051, 0
      %v1065 = vsel %vm1054, %v1053, 0
      %1067 = vmatprep.subr.bf16.mxu0 0
      %1068 = vmatpush1.bf16.xpose.msra.mxu0 %v1062
      %1069 = vmatprep.subr.bf16.mxu0 0
      %1070 = vmatpush1.bf16.xpose.msra.mxu0 %v1065
      %1071 = vmatprep.subr.bf16.mxu0 0
      %1072 = vmatpush1.bf16.xpose.msra.mxu0 0
      %1073 = vmatprep.subr.bf16.mxu0 0
      %1074 = vmatpush1.bf16.xpose.msra.mxu0 0
      %1075 = vmatprep.subr.bf16.mxu0 0
      %1076 = vmatpush1.bf16.xpose.msra.mxu0 0
      %1077 = vmatprep.subr.bf16.mxu0 0
      %1078 = vmatpush1.bf16.xpose.msra.mxu0 0
      %1079 = vmatprep.subr.bf16.mxu0 0
      %1080 = vmatpush1.bf16.xpose.msra.mxu0 0
      %1081 = vmatprep.subr.bf16.mxu0 0
      %1082 = vmatpush1.bf16.xpose.msra.mxu0 0
      %1083 = vmatprep.subr.bf16.mxu0 0
      %1084 = vmatpush1.bf16.xpose.msra.mxu0 0
      %1085 = vmatprep.subr.bf16.mxu0 0
      %1086 = vmatpush1.bf16.xpose.msra.mxu0 0
      %1087 = vmatprep.subr.bf16.mxu0 0
      %1088 = vmatpush1.bf16.xpose.msra.mxu0 0
      %1089 = vmatprep.subr.bf16.mxu0 0
      %1090 = vmatpush1.bf16.xpose.msra.mxu0 0
      %1091 = vmatprep.subr.bf16.mxu0 0
      %1092 = vmatpush1.bf16.xpose.msra.mxu0 0
      %1093 = vmatprep.subr.bf16.mxu0 0
      %1094 = vmatpush1.bf16.xpose.msra.mxu0 0
      %1095 = vmatprep.subr.bf16.mxu0 0
      %1096 = vmatpush1.bf16.xpose.msra.mxu0 0
      %1097 = vmatprep.subr.bf16.mxu0 0
      %1098 = vmatpush1.bf16.xpose.msra.mxu0 0
      %1099 = vmatprep.mubr.bf16.mxu0 0
      %1100 = vmatmul.mubr.bf16.gmra.mrb[0].mxu0 %v1056
      %v1101 = vpop.f32.mrb[0].mxu0
      %v1102 = vadd.f32 0.0, %v1101
      %v1103 = vpop.f32.mrb[0].mxu0
      %v1104 = vpop.f32.mrb[0].mxu0
      %v1105 = vadd.f32 0.0, %v1104
      %v1106 = vpop.f32.mrb[0].mxu0
      %1107 = vmatprep.mubr.bf16.mxu0 0
      %1108 = vmatmul.mubr.bf16.gmra.mrb[0].mxu0 %v1059
      %v1109 = vpop.f32.mrb[0].mxu0
      %v1110 = vadd.f32 0.0, %v1109
      %v1111 = vpop.f32.mrb[0].mxu0
      %v1112 = vpop.f32.mrb[0].mxu0
      %v1113 = vpop.f32.mrb[0].mxu0
      %1114 = vdwg.mxu0
      %vm1115 = vcmask 138240
      %v1116 = vsel %vm1115, %v1102, -inf
      %1117 = vmax.xlane.f32.xlu0 %v1116
      %v1118 = vpop.xlane.xlu0 %1117
      %v1119 = vsel %vm1115, %v1105, -inf
      %1120 = vmax.xlane.f32.xlu0 %v1119
      %v1121 = vpop.xlane.xlu0 %1120
      %vm1122 = vcmask 131072
      %v1123 = vsel %vm1122, %v1110, -inf
      %1124 = vmax.xlane.f32.xlu0 %v1123
      %v1125 = vpop.xlane.xlu0 %1124
      %v1126 = vsub.f32 %v1102, %v1118
      %v1127 = vsub.f32 %v1105, %v1121
      %v1128 = vsub.f32 %v1110, %v1125
      %v1129 = vmul.f32 %v1126, 1.442695
      %v1130 = vpow.pop %v1129
      %v1131 = vmul.f32 %v1127, 1.442695
      %v1132 = vpow.pop %v1131
      %v1133 = vmul.f32 %v1128, 1.442695
      %v1134 = vpow.pop %v1133
      %v1135 = vsel %vm1115, %v1130, 0.0
      %1136 = vadd.xlane.f32.xlu0 %v1135
      %v1137 = vpop.xlane.xlu0 %1136
      %v1138 = vsel %vm1115, %v1132, 0.0
      %1139 = vadd.xlane.f32.xlu0 %v1138
      %v1140 = vpop.xlane.xlu0 %1139
      %v1141 = vsel %vm1122, %v1134, 0.0
      %1142 = vadd.xlane.f32.xlu0 %v1141
      %v1143 = vpop.xlane.xlu0 %1142
      %v1144 = vrcp.pop %v1137
      %v1145 = vrcp.pop %v1140
      %v1146 = vrcp.pop %v1143
      %v1147 = vmul.f32 %v1130, %v1144
      %v1148 = vmul.f32 %v1132, %v1145
      %v1149 = vmul.f32 %v1134, %v1146
      %v1150 = vpack.c.bf16 %v1148, %v1147
      %v1151 = vpack.c.bf16 %v1149, %v1149
      %v1153 = vsel %vm1115, %v1150, 0
      %v1156 = vsel %vm1115, %v1151, 0
      %v1158 = vsel 0, 4294967295, 65535
      %v1159 = vsel %vm783, %v1158, 0
      %v1161 = vand.u32 %v1047, %v1159
      %1163 = vmatprep.subr.bf16.mxu0 0
      %1164 = vmatpush1.bf16.msra.mxu0 %v1046
      %1165 = vmatprep.subr.bf16.mxu0 0
      %1166 = vmatpush1.bf16.msra.mxu0 %v1161
      %1167 = vmatprep.subr.bf16.mxu0 0
      %1168 = vmatpush1.bf16.msra.mxu0 0
      %1169 = vmatprep.subr.bf16.mxu0 0
      %1170 = vmatpush1.bf16.msra.mxu0 0
      %1171 = vmatprep.subr.bf16.mxu0 0
      %1172 = vmatpush1.bf16.msra.mxu0 0
      %1173 = vmatprep.subr.bf16.mxu0 0
      %1174 = vmatpush1.bf16.msra.mxu0 0
      %1175 = vmatprep.subr.bf16.mxu0 0
      %1176 = vmatpush1.bf16.msra.mxu0 0
      %1177 = vmatprep.subr.bf16.mxu0 0
      %1178 = vmatpush1.bf16.msra.mxu0 0
      %1179 = vmatprep.subr.bf16.mxu0 0
      %1180 = vmatpush1.bf16.msra.mxu0 0
      %1181 = vmatprep.subr.bf16.mxu0 0
      %1182 = vmatpush1.bf16.msra.mxu0 0
      %1183 = vmatprep.subr.bf16.mxu0 0
      %1184 = vmatpush1.bf16.msra.mxu0 0
      %1185 = vmatprep.subr.bf16.mxu0 0
      %1186 = vmatpush1.bf16.msra.mxu0 0
      %1187 = vmatprep.subr.bf16.mxu0 0
      %1188 = vmatpush1.bf16.msra.mxu0 0
      %1189 = vmatprep.subr.bf16.mxu0 0
      %1190 = vmatpush1.bf16.msra.mxu0 0
      %1191 = vmatprep.subr.bf16.mxu0 0
      %1192 = vmatpush1.bf16.msra.mxu0 0
      %1193 = vmatprep.subr.bf16.mxu0 0
      %1194 = vmatpush1.bf16.msra.mxu0 0
      %1195 = vmatprep.mubr.bf16.mxu0 0
      %1196 = vmatmul.mubr.bf16.gmra.mrb[0].mxu0 %v1153
      %v1197 = vpop.f32.mrb[0].mxu0
      %v1198 = vadd.f32 0.0, %v1197
      %v1199 = vpop.f32.mrb[0].mxu0
      %v1200 = vpop.f32.mrb[0].mxu0
      %v1201 = vadd.f32 0.0, %v1200
      %v1202 = vpop.f32.mrb[0].mxu0
      %1203 = vmatprep.mubr.bf16.mxu0 0
      %1204 = vmatmul.mubr.bf16.gmra.mrb[0].mxu0 %v1156
      %v1205 = vpop.f32.mrb[0].mxu0
      %v1206 = vadd.f32 0.0, %v1205
      %v1207 = vpop.f32.mrb[0].mxu0
      %v1208 = vpop.f32.mrb[0].mxu0
      %v1209 = vpop.f32.mrb[0].mxu0
      %1210 = vdwg.mxu0
      %1213 = vrot.lane.b32.xlu0 %v1042, 112
      %v1214 = vpop.permute.xlu0 %1213
      %1215 = vrot.lane.b32.xlu0 %v1043, 112
      %v1216 = vpop.permute.xlu0 %1215
      %1217 = vrot.lane.b32.xlu0 %v1044, 48
      %v1218 = vpop.permute.xlu0 %1217
      %1219 = vrot.lane.b32.xlu0 %v1045, 48
      %v1220 = vpop.permute.xlu0 %1219
      %v1222 = vsel %vm1054, %v1214, 0
      %v1225 = vsel %vm1054, %v1216, 0
      %v1228 = vsel %vm1054, %v1218, 0
      %v1231 = vsel %vm1054, %v1220, 0
      %1233 = vmatprep.subr.bf16.mxu0 0
      %1234 = vmatpush1.bf16.xpose.msra.mxu0 %v1228
      %1235 = vmatprep.subr.bf16.mxu0 0
      %1236 = vmatpush1.bf16.xpose.msra.mxu0 %v1231
      %1237 = vmatprep.subr.bf16.mxu0 0
      %1238 = vmatpush1.bf16.xpose.msra.mxu0 0
      %1239 = vmatprep.subr.bf16.mxu0 0
      %1240 = vmatpush1.bf16.xpose.msra.mxu0 0
      %1241 = vmatprep.subr.bf16.mxu0 0
      %1242 = vmatpush1.bf16.xpose.msra.mxu0 0
      %1243 = vmatprep.subr.bf16.mxu0 0
      %1244 = vmatpush1.bf16.xpose.msra.mxu0 0
      %1245 = vmatprep.subr.bf16.mxu0 0
      %1246 = vmatpush1.bf16.xpose.msra.mxu0 0
      %1247 = vmatprep.subr.bf16.mxu0 0
      %1248 = vmatpush1.bf16.xpose.msra.mxu0 0
      %1249 = vmatprep.subr.bf16.mxu0 0
      %1250 = vmatpush1.bf16.xpose.msra.mxu0 0
      %1251 = vmatprep.subr.bf16.mxu0 0
      %1252 = vmatpush1.bf16.xpose.msra.mxu0 0
      %1253 = vmatprep.subr.bf16.mxu0 0
      %1254 = vmatpush1.bf16.xpose.msra.mxu0 0
      %1255 = vmatprep.subr.bf16.mxu0 0
      %1256 = vmatpush1.bf16.xpose.msra.mxu0 0
      %1257 = vmatprep.subr.bf16.mxu0 0
      %1258 = vmatpush1.bf16.xpose.msra.mxu0 0
      %1259 = vmatprep.subr.bf16.mxu0 0
      %1260 = vmatpush1.bf16.xpose.msra.mxu0 0
      %1261 = vmatprep.subr.bf16.mxu0 0
      %1262 = vmatpush1.bf16.xpose.msra.mxu0 0
      %1263 = vmatprep.subr.bf16.mxu0 0
      %1264 = vmatpush1.bf16.xpose.msra.mxu0 0
      %1265 = vmatprep.mubr.bf16.mxu0 0
      %1266 = vmatmul.mubr.bf16.gmra.mrb[0].mxu0 %v1222
      %v1267 = vpop.f32.mrb[0].mxu0
      %v1268 = vadd.f32 0.0, %v1267
      %v1269 = vpop.f32.mrb[0].mxu0
      %v1270 = vpop.f32.mrb[0].mxu0
      %v1271 = vadd.f32 0.0, %v1270
      %v1272 = vpop.f32.mrb[0].mxu0
      %1273 = vmatprep.mubr.bf16.mxu0 0
      %1274 = vmatmul.mubr.bf16.gmra.mrb[0].mxu0 %v1225
      %v1275 = vpop.f32.mrb[0].mxu0
      %v1276 = vadd.f32 0.0, %v1275
      %v1277 = vpop.f32.mrb[0].mxu0
      %v1278 = vpop.f32.mrb[0].mxu0
      %v1279 = vpop.f32.mrb[0].mxu0
      %1280 = vdwg.mxu0
      %v1281 = vsel %vm1115, %v1268, -inf
      %1282 = vmax.xlane.f32.xlu0 %v1281
      %v1283 = vpop.xlane.xlu0 %1282
      %v1284 = vsel %vm1115, %v1271, -inf
      %1285 = vmax.xlane.f32.xlu0 %v1284
      %v1286 = vpop.xlane.xlu0 %1285
      %v1287 = vsel %vm1122, %v1276, -inf
      %1288 = vmax.xlane.f32.xlu0 %v1287
      %v1289 = vpop.xlane.xlu0 %1288
      %v1290 = vsub.f32 %v1268, %v1283
      %v1291 = vsub.f32 %v1271, %v1286
      %v1292 = vsub.f32 %v1276, %v1289
      %v1293 = vmul.f32 %v1290, 1.442695
      %v1294 = vpow.pop %v1293
      %v1295 = vmul.f32 %v1291, 1.442695
      %v1296 = vpow.pop %v1295
      %v1297 = vmul.f32 %v1292, 1.442695
      %v1298 = vpow.pop %v1297
      %v1299 = vsel %vm1115, %v1294, 0.0
      %1300 = vadd.xlane.f32.xlu0 %v1299
      %v1301 = vpop.xlane.xlu0 %1300
      %v1302 = vsel %vm1115, %v1296, 0.0
      %1303 = vadd.xlane.f32.xlu0 %v1302
      %v1304 = vpop.xlane.xlu0 %1303
      %v1305 = vsel %vm1122, %v1298, 0.0
      %1306 = vadd.xlane.f32.xlu0 %v1305
      %v1307 = vpop.xlane.xlu0 %1306
      %v1308 = vrcp.pop %v1301
      %v1309 = vrcp.pop %v1304
      %v1310 = vrcp.pop %v1307
      %v1311 = vmul.f32 %v1294, %v1308
      %v1312 = vmul.f32 %v1296, %v1309
      %v1313 = vmul.f32 %v1298, %v1310
      %v1314 = vpack.c.bf16 %v1312, %v1311
      %v1315 = vpack.c.bf16 %v1313, %v1313
      %1318 = vrot.lane.b32.xlu0 %v1046, 112
      %v1319 = vpop.permute.xlu0 %1318
      %1320 = vrot.lane.b32.xlu0 %v1047, 112
      %v1321 = vpop.permute.xlu0 %1320
      %v1324 = vsel %vm1115, %v1314, 0
      %v1327 = vsel %vm1115, %v1315, 0
      %v1330 = vand.u32 %v1321, %v1159
      %1332 = vmatprep.subr.bf16.mxu0 0
      %1333 = vmatpush1.bf16.msra.mxu0 %v1319
      %1334 = vmatprep.subr.bf16.mxu0 0
      %1335 = vmatpush1.bf16.msra.mxu0 %v1330
      %1336 = vmatprep.subr.bf16.mxu0 0
      %1337 = vmatpush1.bf16.msra.mxu0 0
      %1338 = vmatprep.subr.bf16.mxu0 0
      %1339 = vmatpush1.bf16.msra.mxu0 0
      %1340 = vmatprep.subr.bf16.mxu0 0
      %1341 = vmatpush1.bf16.msra.mxu0 0
      %1342 = vmatprep.subr.bf16.mxu0 0
      %1343 = vmatpush1.bf16.msra.mxu0 0
      %1344 = vmatprep.subr.bf16.mxu0 0
      %1345 = vmatpush1.bf16.msra.mxu0 0
      %1346 = vmatprep.subr.bf16.mxu0 0
      %1347 = vmatpush1.bf16.msra.mxu0 0
      %1348 = vmatprep.subr.bf16.mxu0 0
      %1349 = vmatpush1.bf16.msra.mxu0 0
      %1350 = vmatprep.subr.bf16.mxu0 0
      %1351 = vmatpush1.bf16.msra.mxu0 0
      %1352 = vmatprep.subr.bf16.mxu0 0
      %1353 = vmatpush1.bf16.msra.mxu0 0
      %1354 = vmatprep.subr.bf16.mxu0 0
      %1355 = vmatpush1.bf16.msra.mxu0 0
      %1356 = vmatprep.subr.bf16.mxu0 0
      %1357 = vmatpush1.bf16.msra.mxu0 0
      %1358 = vmatprep.subr.bf16.mxu0 0
      %1359 = vmatpush1.bf16.msra.mxu0 0
      %1360 = vmatprep.subr.bf16.mxu0 0
      %1361 = vmatpush1.bf16.msra.mxu0 0
      %1362 = vmatprep.subr.bf16.mxu0 0
      %1363 = vmatpush1.bf16.msra.mxu0 0
      %1364 = vmatprep.mubr.bf16.mxu0 0
      %1365 = vmatmul.mubr.bf16.gmra.mrb[0].mxu0 %v1324
      %v1366 = vpop.f32.mrb[0].mxu0
      %v1367 = vadd.f32 0.0, %v1366
      %v1368 = vpop.f32.mrb[0].mxu0
      %v1369 = vpop.f32.mrb[0].mxu0
      %v1370 = vadd.f32 0.0, %v1369
      %v1371 = vpop.f32.mrb[0].mxu0
      %1372 = vmatprep.mubr.bf16.mxu0 0
      %1373 = vmatmul.mubr.bf16.gmra.mrb[0].mxu0 %v1327
      %v1374 = vpop.f32.mrb[0].mxu0
      %v1375 = vadd.f32 0.0, %v1374
      %v1376 = vpop.f32.mrb[0].mxu0
      %v1377 = vpop.f32.mrb[0].mxu0
      %v1378 = vpop.f32.mrb[0].mxu0
      %1379 = vdwg.mxu0
      %1380 = vrot.lane.b32.xlu0 %v1042, 96
      %v1381 = vpop.permute.xlu0 %1380
      %1382 = vrot.lane.b32.xlu0 %v1043, 96
      %v1383 = vpop.permute.xlu0 %1382
      %1384 = vrot.lane.b32.xlu0 %v1044, 32
      %v1385 = vpop.permute.xlu0 %1384
      %1386 = vrot.lane.b32.xlu0 %v1045, 32
      %v1387 = vpop.permute.xlu0 %1386
      %v1389 = vsel %vm1054, %v1381, 0
      %v1392 = vsel %vm1054, %v1383, 0
      %v1395 = vsel %vm1054, %v1385, 0
      %v1398 = vsel %vm1054, %v1387, 0
      %1400 = vmatprep.subr.bf16.mxu0 0
      %1401 = vmatpush1.bf16.xpose.msra.mxu0 %v1395
      %1402 = vmatprep.subr.bf16.mxu0 0
      %1403 = vmatpush1.bf16.xpose.msra.mxu0 %v1398
      %1404 = vmatprep.subr.bf16.mxu0 0
      %1405 = vmatpush1.bf16.xpose.msra.mxu0 0
      %1406 = vmatprep.subr.bf16.mxu0 0
      %1407 = vmatpush1.bf16.xpose.msra.mxu0 0
      %1408 = vmatprep.subr.bf16.mxu0 0
      %1409 = vmatpush1.bf16.xpose.msra.mxu0 0
      %1410 = vmatprep.subr.bf16.mxu0 0
      %1411 = vmatpush1.bf16.xpose.msra.mxu0 0
      %1412 = vmatprep.subr.bf16.mxu0 0
      %1413 = vmatpush1.bf16.xpose.msra.mxu0 0
      %1414 = vmatprep.subr.bf16.mxu0 0
      %1415 = vmatpush1.bf16.xpose.msra.mxu0 0
      %1416 = vmatprep.subr.bf16.mxu0 0
      %1417 = vmatpush1.bf16.xpose.msra.mxu0 0
      %1418 = vmatprep.subr.bf16.mxu0 0
      %1419 = vmatpush1.bf16.xpose.msra.mxu0 0
      %1420 = vmatprep.subr.bf16.mxu0 0
      %1421 = vmatpush1.bf16.xpose.msra.mxu0 0
      %1422 = vmatprep.subr.bf16.mxu0 0
      %1423 = vmatpush1.bf16.xpose.msra.mxu0 0
      %1424 = vmatprep.subr.bf16.mxu0 0
      %1425 = vmatpush1.bf16.xpose.msra.mxu0 0
      %1426 = vmatprep.subr.bf16.mxu0 0
      %1427 = vmatpush1.bf16.xpose.msra.mxu0 0
      %1428 = vmatprep.subr.bf16.mxu0 0
      %1429 = vmatpush1.bf16.xpose.msra.mxu0 0
      %1430 = vmatprep.subr.bf16.mxu0 0
      %1431 = vmatpush1.bf16.xpose.msra.mxu0 0
      %1432 = vmatprep.mubr.bf16.mxu0 0
      %1433 = vmatmul.mubr.bf16.gmra.mrb[0].mxu0 %v1389
      %v1434 = vpop.f32.mrb[0].mxu0
      %v1435 = vadd.f32 0.0, %v1434
      %v1436 = vpop.f32.mrb[0].mxu0
      %v1437 = vpop.f32.mrb[0].mxu0
      %v1438 = vadd.f32 0.0, %v1437
      %v1439 = vpop.f32.mrb[0].mxu0
      %1440 = vmatprep.mubr.bf16.mxu0 0
      %1441 = vmatmul.mubr.bf16.gmra.mrb[0].mxu0 %v1392
      %v1442 = vpop.f32.mrb[0].mxu0
      %v1443 = vadd.f32 0.0, %v1442
      %v1444 = vpop.f32.mrb[0].mxu0
      %v1445 = vpop.f32.mrb[0].mxu0
      %v1446 = vpop.f32.mrb[0].mxu0
      %1447 = vdwg.mxu0
      %v1448 = vsel %vm1115, %v1435, -inf
      %1449 = vmax.xlane.f32.xlu0 %v1448
      %v1450 = vpop.xlane.xlu0 %1449
      %v1451 = vsel %vm1115, %v1438, -inf
      %1452 = vmax.xlane.f32.xlu0 %v1451
      %v1453 = vpop.xlane.xlu0 %1452
      %v1454 = vsel %vm1122, %v1443, -inf
      %1455 = vmax.xlane.f32.xlu0 %v1454
      %v1456 = vpop.xlane.xlu0 %1455
      %v1457 = vsub.f32 %v1435, %v1450
      %v1458 = vsub.f32 %v1438, %v1453
      %v1459 = vsub.f32 %v1443, %v1456
      %v1460 = vmul.f32 %v1457, 1.442695
      %v1461 = vpow.pop %v1460
      %v1462 = vmul.f32 %v1458, 1.442695
      %v1463 = vpow.pop %v1462
      %v1464 = vmul.f32 %v1459, 1.442695
      %v1465 = vpow.pop %v1464
      %v1466 = vsel %vm1115, %v1461, 0.0
      %1467 = vadd.xlane.f32.xlu0 %v1466
      %v1468 = vpop.xlane.xlu0 %1467
      %v1469 = vsel %vm1115, %v1463, 0.0
      %1470 = vadd.xlane.f32.xlu0 %v1469
      %v1471 = vpop.xlane.xlu0 %1470
      %v1472 = vsel %vm1122, %v1465, 0.0
      %1473 = vadd.xlane.f32.xlu0 %v1472
      %v1474 = vpop.xlane.xlu0 %1473
      %v1475 = vrcp.pop %v1468
      %v1476 = vrcp.pop %v1471
      %v1477 = vrcp.pop %v1474
      %v1478 = vmul.f32 %v1461, %v1475
      %v1479 = vmul.f32 %v1463, %v1476
      %v1480 = vmul.f32 %v1465, %v1477
      %v1481 = vpack.c.bf16 %v1479, %v1478
      %v1482 = vpack.c.bf16 %v1480, %v1480
      %1483 = vrot.lane.b32.xlu0 %v1046, 96
      %v1484 = vpop.permute.xlu0 %1483
      %1485 = vrot.lane.b32.xlu0 %v1047, 96
      %v1486 = vpop.permute.xlu0 %1485
      %v1489 = vsel %vm1115, %v1481, 0
      %v1492 = vsel %vm1115, %v1482, 0
      %v1495 = vand.u32 %v1486, %v1159
      %1497 = vmatprep.subr.bf16.mxu0 0
      %1498 = vmatpush1.bf16.msra.mxu0 %v1484
      %1499 = vmatprep.subr.bf16.mxu0 0
      %1500 = vmatpush1.bf16.msra.mxu0 %v1495
      %1501 = vmatprep.subr.bf16.mxu0 0
      %1502 = vmatpush1.bf16.msra.mxu0 0
      %1503 = vmatprep.subr.bf16.mxu0 0
      %1504 = vmatpush1.bf16.msra.mxu0 0
      %1505 = vmatprep.subr.bf16.mxu0 0
      %1506 = vmatpush1.bf16.msra.mxu0 0
      %1507 = vmatprep.subr.bf16.mxu0 0
      %1508 = vmatpush1.bf16.msra.mxu0 0
      %1509 = vmatprep.subr.bf16.mxu0 0
      %1510 = vmatpush1.bf16.msra.mxu0 0
      %1511 = vmatprep.subr.bf16.mxu0 0
      %1512 = vmatpush1.bf16.msra.mxu0 0
      %1513 = vmatprep.subr.bf16.mxu0 0
      %1514 = vmatpush1.bf16.msra.mxu0 0
      %1515 = vmatprep.subr.bf16.mxu0 0
      %1516 = vmatpush1.bf16.msra.mxu0 0
      %1517 = vmatprep.subr.bf16.mxu0 0
      %1518 = vmatpush1.bf16.msra.mxu0 0
      %1519 = vmatprep.subr.bf16.mxu0 0
      %1520 = vmatpush1.bf16.msra.mxu0 0
      %1521 = vmatprep.subr.bf16.mxu0 0
      %1522 = vmatpush1.bf16.msra.mxu0 0
      %1523 = vmatprep.subr.bf16.mxu0 0
      %1524 = vmatpush1.bf16.msra.mxu0 0
      %1525 = vmatprep.subr.bf16.mxu0 0
      %1526 = vmatpush1.bf16.msra.mxu0 0
      %1527 = vmatprep.subr.bf16.mxu0 0
      %1528 = vmatpush1.bf16.msra.mxu0 0
      %1529 = vmatprep.mubr.bf16.mxu0 0
      %1530 = vmatmul.mubr.bf16.gmra.mrb[0].mxu0 %v1489
      %v1531 = vpop.f32.mrb[0].mxu0
      %v1532 = vadd.f32 0.0, %v1531
      %v1533 = vpop.f32.mrb[0].mxu0
      %v1534 = vpop.f32.mrb[0].mxu0
      %v1535 = vadd.f32 0.0, %v1534
      %v1536 = vpop.f32.mrb[0].mxu0
      %1537 = vmatprep.mubr.bf16.mxu0 0
      %1538 = vmatmul.mubr.bf16.gmra.mrb[0].mxu0 %v1492
      %v1539 = vpop.f32.mrb[0].mxu0
      %v1540 = vadd.f32 0.0, %v1539
      %v1541 = vpop.f32.mrb[0].mxu0
      %v1542 = vpop.f32.mrb[0].mxu0
      %v1543 = vpop.f32.mrb[0].mxu0
      %1544 = vdwg.mxu0
      %1545 = vrot.lane.b32.xlu0 %v1042, 80
      %v1546 = vpop.permute.xlu0 %1545
      %1547 = vrot.lane.b32.xlu0 %v1043, 80
      %v1548 = vpop.permute.xlu0 %1547
      %1549 = vrot.lane.b32.xlu0 %v1044, 16
      %v1550 = vpop.permute.xlu0 %1549
      %1551 = vrot.lane.b32.xlu0 %v1045, 16
      %v1552 = vpop.permute.xlu0 %1551
      %v1554 = vsel %vm1054, %v1546, 0
      %v1557 = vsel %vm1054, %v1548, 0
      %v1560 = vsel %vm1054, %v1550, 0
      %v1563 = vsel %vm1054, %v1552, 0
      %1565 = vmatprep.subr.bf16.mxu0 0
      %1566 = vmatpush1.bf16.xpose.msra.mxu0 %v1560
      %1567 = vmatprep.subr.bf16.mxu0 0
      %1568 = vmatpush1.bf16.xpose.msra.mxu0 %v1563
      %1569 = vmatprep.subr.bf16.mxu0 0
      %1570 = vmatpush1.bf16.xpose.msra.mxu0 0
      %1571 = vmatprep.subr.bf16.mxu0 0
      %1572 = vmatpush1.bf16.xpose.msra.mxu0 0
      %1573 = vmatprep.subr.bf16.mxu0 0
      %1574 = vmatpush1.bf16.xpose.msra.mxu0 0
      %1575 = vmatprep.subr.bf16.mxu0 0
      %1576 = vmatpush1.bf16.xpose.msra.mxu0 0
      %1577 = vmatprep.subr.bf16.mxu0 0
      %1578 = vmatpush1.bf16.xpose.msra.mxu0 0
      %1579 = vmatprep.subr.bf16.mxu0 0
      %1580 = vmatpush1.bf16.xpose.msra.mxu0 0
      %1581 = vmatprep.subr.bf16.mxu0 0
      %1582 = vmatpush1.bf16.xpose.msra.mxu0 0
      %1583 = vmatprep.subr.bf16.mxu0 0
      %1584 = vmatpush1.bf16.xpose.msra.mxu0 0
      %1585 = vmatprep.subr.bf16.mxu0 0
      %1586 = vmatpush1.bf16.xpose.msra.mxu0 0
      %1587 = vmatprep.subr.bf16.mxu0 0
      %1588 = vmatpush1.bf16.xpose.msra.mxu0 0
      %1589 = vmatprep.subr.bf16.mxu0 0
      %1590 = vmatpush1.bf16.xpose.msra.mxu0 0
      %1591 = vmatprep.subr.bf16.mxu0 0
      %1592 = vmatpush1.bf16.xpose.msra.mxu0 0
      %1593 = vmatprep.subr.bf16.mxu0 0
      %1594 = vmatpush1.bf16.xpose.msra.mxu0 0
      %1595 = vmatprep.subr.bf16.mxu0 0
      %1596 = vmatpush1.bf16.xpose.msra.mxu0 0
      %1597 = vmatprep.mubr.bf16.mxu0 0
      %1598 = vmatmul.mubr.bf16.gmra.mrb[0].mxu0 %v1554
      %v1599 = vpop.f32.mrb[0].mxu0
      %v1600 = vadd.f32 0.0, %v1599
      %v1601 = vpop.f32.mrb[0].mxu0
      %v1602 = vpop.f32.mrb[0].mxu0
      %v1603 = vadd.f32 0.0, %v1602
      %v1604 = vpop.f32.mrb[0].mxu0
      %1605 = vmatprep.mubr.bf16.mxu0 0
      %1606 = vmatmul.mubr.bf16.gmra.mrb[0].mxu0 %v1557
      %v1607 = vpop.f32.mrb[0].mxu0
      %v1608 = vadd.f32 0.0, %v1607
      %v1609 = vpop.f32.mrb[0].mxu0
      %v1610 = vpop.f32.mrb[0].mxu0
      %v1611 = vpop.f32.mrb[0].mxu0
      %1612 = vdwg.mxu0
      %v1613 = vsel %vm1115, %v1600, -inf
      %1614 = vmax.xlane.f32.xlu0 %v1613
      %v1615 = vpop.xlane.xlu0 %1614
      %v1616 = vsel %vm1115, %v1603, -inf
      %1617 = vmax.xlane.f32.xlu0 %v1616
      %v1618 = vpop.xlane.xlu0 %1617
      %v1619 = vsel %vm1122, %v1608, -inf
      %1620 = vmax.xlane.f32.xlu0 %v1619
      %v1621 = vpop.xlane.xlu0 %1620
      %v1622 = vsub.f32 %v1600, %v1615
      %v1623 = vsub.f32 %v1603, %v1618
      %v1624 = vsub.f32 %v1608, %v1621
      %v1625 = vmul.f32 %v1622, 1.442695
      %v1626 = vpow.pop %v1625
      %v1627 = vmul.f32 %v1623, 1.442695
      %v1628 = vpow.pop %v1627
      %v1629 = vmul.f32 %v1624, 1.442695
      %v1630 = vpow.pop %v1629
      %v1631 = vsel %vm1115, %v1626, 0.0
      %1632 = vadd.xlane.f32.xlu0 %v1631
      %v1633 = vpop.xlane.xlu0 %1632
      %v1634 = vsel %vm1115, %v1628, 0.0
      %1635 = vadd.xlane.f32.xlu0 %v1634
      %v1636 = vpop.xlane.xlu0 %1635
      %v1637 = vsel %vm1122, %v1630, 0.0
      %1638 = vadd.xlane.f32.xlu0 %v1637
      %v1639 = vpop.xlane.xlu0 %1638
      %v1640 = vrcp.pop %v1633
      %v1641 = vrcp.pop %v1636
      %v1642 = vrcp.pop %v1639
      %v1643 = vmul.f32 %v1626, %v1640
      %v1644 = vmul.f32 %v1628, %v1641
      %v1645 = vmul.f32 %v1630, %v1642
      %v1646 = vpack.c.bf16 %v1644, %v1643
      %v1647 = vpack.c.bf16 %v1645, %v1645
      %1648 = vrot.lane.b32.xlu0 %v1046, 80
      %v1649 = vpop.permute.xlu0 %1648
      %1650 = vrot.lane.b32.xlu0 %v1047, 80
      %v1651 = vpop.permute.xlu0 %1650
      %v1654 = vsel %vm1115, %v1646, 0
      %v1657 = vsel %vm1115, %v1647, 0
      %v1660 = vand.u32 %v1651, %v1159
      %1662 = vmatprep.subr.bf16.mxu0 0
      %1663 = vmatpush1.bf16.msra.mxu0 %v1649
      %1664 = vmatprep.subr.bf16.mxu0 0
      %1665 = vmatpush1.bf16.msra.mxu0 %v1660
      %1666 = vmatprep.subr.bf16.mxu0 0
      %1667 = vmatpush1.bf16.msra.mxu0 0
      %1668 = vmatprep.subr.bf16.mxu0 0
      %1669 = vmatpush1.bf16.msra.mxu0 0
      %1670 = vmatprep.subr.bf16.mxu0 0
      %1671 = vmatpush1.bf16.msra.mxu0 0
      %1672 = vmatprep.subr.bf16.mxu0 0
      %1673 = vmatpush1.bf16.msra.mxu0 0
      %1674 = vmatprep.subr.bf16.mxu0 0
      %1675 = vmatpush1.bf16.msra.mxu0 0
      %1676 = vmatprep.subr.bf16.mxu0 0
      %1677 = vmatpush1.bf16.msra.mxu0 0
      %1678 = vmatprep.subr.bf16.mxu0 0
      %1679 = vmatpush1.bf16.msra.mxu0 0
      %1680 = vmatprep.subr.bf16.mxu0 0
      %1681 = vmatpush1.bf16.msra.mxu0 0
      %1682 = vmatprep.subr.bf16.mxu0 0
      %1683 = vmatpush1.bf16.msra.mxu0 0
      %1684 = vmatprep.subr.bf16.mxu0 0
      %1685 = vmatpush1.bf16.msra.mxu0 0
      %1686 = vmatprep.subr.bf16.mxu0 0
      %1687 = vmatpush1.bf16.msra.mxu0 0
      %1688 = vmatprep.subr.bf16.mxu0 0
      %1689 = vmatpush1.bf16.msra.mxu0 0
      %1690 = vmatprep.subr.bf16.mxu0 0
      %1691 = vmatpush1.bf16.msra.mxu0 0
      %1692 = vmatprep.subr.bf16.mxu0 0
      %1693 = vmatpush1.bf16.msra.mxu0 0
      %1694 = vmatprep.mubr.bf16.mxu0 0
      %1695 = vmatmul.mubr.bf16.gmra.mrb[0].mxu0 %v1654
      %v1696 = vpop.f32.mrb[0].mxu0
      %v1697 = vadd.f32 0.0, %v1696
      %v1698 = vpop.f32.mrb[0].mxu0
      %v1699 = vpop.f32.mrb[0].mxu0
      %v1700 = vadd.f32 0.0, %v1699
      %v1701 = vpop.f32.mrb[0].mxu0
      %1702 = vmatprep.mubr.bf16.mxu0 0
      %1703 = vmatmul.mubr.bf16.gmra.mrb[0].mxu0 %v1657
      %v1704 = vpop.f32.mrb[0].mxu0
      %v1705 = vadd.f32 0.0, %v1704
      %v1706 = vpop.f32.mrb[0].mxu0
      %v1707 = vpop.f32.mrb[0].mxu0
      %v1708 = vpop.f32.mrb[0].mxu0
      %1709 = vdwg.mxu0
      %1713 = vrot.lane.b32.xlu0 %v1367, 16
      %v1714 = vpop.permute.xlu0 %1713
      %1715 = vrot.lane.b32.xlu0 %v1370, 16
      %v1716 = vpop.permute.xlu0 %1715
      %1717 = vrot.lane.b32.xlu0 %v1375, 16
      %v1718 = vpop.permute.xlu0 %1717
      %1725 = vrot.lane.b32.xlu0 %v1532, 32
      %v1726 = vpop.permute.xlu0 %1725
      %1727 = vrot.lane.b32.xlu0 %v1535, 32
      %v1728 = vpop.permute.xlu0 %1727
      %1729 = vrot.lane.b32.xlu0 %v1540, 32
      %v1730 = vpop.permute.xlu0 %1729
      %1737 = vrot.lane.b32.xlu0 %v1697, 48
      %v1738 = vpop.permute.xlu0 %1737
      %1739 = vrot.lane.b32.xlu0 %v1700, 48
      %v1740 = vpop.permute.xlu0 %1739
      %1741 = vrot.lane.b32.xlu0 %v1705, 48
      %v1742 = vpop.permute.xlu0 %1741
      %v1746 = vsel %vm1054, %v1198, %v1714
      %v1747 = vsel %vm1054, %v1201, %v1716
      %v1748 = vsel %vm1054, %v1206, %v1718
      %vm1749 = vcmask 261120
      %v1750 = vsel %vm1749, %v1746, %v1726
      %v1751 = vsel %vm1749, %v1747, %v1728
      %v1752 = vsel %vm1749, %v1748, %v1730
      %vm1753 = vcmask 392192
      %v1754 = vsel %vm1753, %v1750, %v1738
      %v1755 = vsel %vm1753, %v1751, %v1740
      %v1756 = vsel %vm1753, %v1752, %v1742
      %v1757 = vpack.c.bf16 %v1755, %v1754
      %v1758 = vpack.c.bf16 %v1756, %v1756
      %v1760 = vlaneseq
      %v1761 = vshrl.u32 %v1760, 7
      %v1762 = vsub.s32 0, %v1761
      %v1763 = vrot.slane %v1038, %v1762
      %v1773 = vunpack.c.l.b16 %v1030
      %v1774 = vunpack.c.l.b16 %v1031
      %v1775 = vunpack.c.l.b16 %v1032
      %v1776 = vunpack.c.l.b16 %v1033
      %v1777 = vunpack.c.l.b16 %v1034
      %v1778 = vunpack.c.l.b16 %v1035
      %v1779 = vunpack.c.l.b16 %v1036
      %v1780 = vunpack.c.l.b16 %v1037
      %v1781 = vpack.c.b16 %v1774, %v1773
      %v1782 = vpack.c.b16 %v1776, %v1775
      %v1783 = vpack.c.b16 %v1778, %v1777
      %v1784 = vpack.c.b16 %v1780, %v1779
      %v1790 = vsel %vm735, %v1757, 0
      %v1793 = vsel %vm735, %v1758, 0
      %1795 = vmatprep.subr.bf16.mxu0 0
      %1796 = vmatpush1.bf16.msra.mxu0 %v1781
      %1797 = vmatprep.subr.bf16.mxu0 0
      %1798 = vmatpush1.bf16.msra.mxu0 %v1782
      %1799 = vmatprep.subr.bf16.mxu0 0
      %1800 = vmatpush1.bf16.msra.mxu0 %v1783
      %1801 = vmatprep.subr.bf16.mxu0 0
      %1802 = vmatpush1.bf16.msra.mxu0 %v1784
      %1803 = vmatprep.subr.bf16.mxu0 0
      %1804 = vmatpush1.bf16.msra.mxu0 0
      %1805 = vmatprep.subr.bf16.mxu0 0
      %1806 = vmatpush1.bf16.msra.mxu0 0
      %1807 = vmatprep.subr.bf16.mxu0 0
      %1808 = vmatpush1.bf16.msra.mxu0 0
      %1809 = vmatprep.subr.bf16.mxu0 0
      %1810 = vmatpush1.bf16.msra.mxu0 0
      %1811 = vmatprep.subr.bf16.mxu0 0
      %1812 = vmatpush1.bf16.msra.mxu0 0
      %1813 = vmatprep.subr.bf16.mxu0 0
      %1814 = vmatpush1.bf16.msra.mxu0 0
      %1815 = vmatprep.subr.bf16.mxu0 0
      %1816 = vmatpush1.bf16.msra.mxu0 0
      %1817 = vmatprep.subr.bf16.mxu0 0
      %1818 = vmatpush1.bf16.msra.mxu0 0
      %1819 = vmatprep.subr.bf16.mxu0 0
      %1820 = vmatpush1.bf16.msra.mxu0 0
      %1821 = vmatprep.subr.bf16.mxu0 0
      %1822 = vmatpush1.bf16.msra.mxu0 0
      %1823 = vmatprep.subr.bf16.mxu0 0
      %1824 = vmatpush1.bf16.msra.mxu0 0
      %1825 = vmatprep.subr.bf16.mxu0 0
      %1826 = vmatpush1.bf16.msra.mxu0 0
      %1827 = vmatprep.mubr.bf16.mxu0 0
      %1828 = vmatmul.mubr.bf16.gmra.mrb[0].mxu0 %v1790
      %v1829 = vpop.f32.mrb[0].mxu0
      %v1830 = vadd.f32 %v1763, %v1829
      %v1831 = vpop.f32.mrb[0].mxu0
      %v1832 = vpop.f32.mrb[0].mxu0
      %v1833 = vadd.f32 %v1763, %v1832
      %v1834 = vpop.f32.mrb[0].mxu0
      %1835 = vmatprep.mubr.bf16.mxu0 0
      %1836 = vmatmul.mubr.bf16.gmra.mrb[0].mxu0 %v1793
      %v1837 = vpop.f32.mrb[0].mxu0
      %v1838 = vadd.f32 %v1763, %v1837
      %v1839 = vpop.f32.mrb[0].mxu0
      %v1840 = vpop.f32.mrb[0].mxu0
      %v1841 = vpop.f32.mrb[0].mxu0
      %1842 = vdwg.mxu0
      %v1843 = vadd.f32 %v849, %v1830
      %v1844 = vadd.f32 %v850, %v1833
      %v1845 = vadd.f32 %v851, %v1838
      %v1846 = vld [vmem:[%s12] sm:$0x1]
      %v1847 = vld [vmem:[%s13] sm:$0x1]
      %v1848 = vsel %vm735, %v1843, 0.0
      %1849 = vadd.xlane.f32.xlu0 %v1848
      %v1850 = vpop.xlane.xlu0 %1849
      %v1851 = vsel %vm735, %v1844, 0.0
      %1852 = vadd.xlane.f32.xlu0 %v1851
      %v1853 = vpop.xlane.xlu0 %1852
      %v1854 = vsel %vm799, %v1845, 0.0
      %1855 = vadd.xlane.f32.xlu0 %v1854
      %v1856 = vpop.xlane.xlu0 %1855
      %v1857 = vmul.f32 %v1850, %v803
      %v1858 = vmul.f32 %v1853, %v803
      %v1859 = vmul.f32 %v1856, %v803
      %v1860 = vsub.f32 %v1843, %v1857
      %v1861 = vsub.f32 %v1844, %v1858
      %v1862 = vsub.f32 %v1845, %v1859
      %v1863 = vmul.f32 %v1860, %v1860
      %v1864 = vmul.f32 %v1861, %v1861
      %v1865 = vmul.f32 %v1862, %v1862
      %v1866 = vsel %vm735, %v1863, 0.0
      %1867 = vadd.xlane.f32.xlu0 %v1866
      %v1868 = vpop.xlane.xlu0 %1867
      %v1869 = vsel %vm735, %v1864, 0.0
      %1870 = vadd.xlane.f32.xlu0 %v1869
      %v1871 = vpop.xlane.xlu0 %1870
      %v1872 = vsel %vm799, %v1865, 0.0
      %1873 = vadd.xlane.f32.xlu0 %v1872
      %v1874 = vpop.xlane.xlu0 %1873
      %v1875 = vmul.f32 %v1868, %v803
      %v1876 = vmul.f32 %v1871, %v803
      %v1877 = vmul.f32 %v1874, %v803
      %v1878 = vadd.f32 %v1875, 1e-05
      %v1879 = vadd.f32 %v1876, 1e-05
      %v1880 = vadd.f32 %v1877, 1e-05
      %v1881 = vrsqrt.pop %v1878
      %v1882 = vrsqrt.pop %v1879
      %v1883 = vrsqrt.pop %v1880
      %v1884 = vmul.f32 %v1860, %v1881
      %v1885 = vmul.f32 %v1861, %v1882
      %v1886 = vmul.f32 %v1862, %v1883
      %v1888 = vlaneseq
      %v1889 = vshrl.u32 %v1888, 7
      %v1890 = vsub.s32 0, %v1889
      %v1891 = vrot.slane %v1846, %v1890
      %v1893 = vmul.f32 %v1884, %v1891
      %v1894 = vmul.f32 %v1885, %v1891
      %v1895 = vmul.f32 %v1886, %v1891
      %v1897 = vlaneseq
      %v1898 = vshrl.u32 %v1897, 7
      %v1899 = vsub.s32 0, %v1898
      %v1900 = vrot.slane %v1847, %v1899
      %v1902 = vadd.f32 %v1893, %v1900
      %v1903 = vadd.f32 %v1894, %v1900
      %v1904 = vadd.f32 %v1895, %v1900
      %v1905 = vpack.c.bf16 %v1903, %v1902
      %v1906 = vpack.c.bf16 %v1904, %v1904
      %v1907 = vld [vmem:[%s14] sm:$0xff]
      %v1908 = vld [vmem:[%s14 + $0x8] sm:$0xff]
      %v1909 = vld [vmem:[%s14 + $0x10] sm:$0xff]
      %v1910 = vld [vmem:[%s14 + $0x18] sm:$0xff]
      %v1911 = vld [vmem:[%s14 + $0x20] sm:$0xff]
      %v1912 = vld [vmem:[%s14 + $0x28] sm:$0xff]
      %v1913 = vld [vmem:[%s14 + $0x30] sm:$0xff]
      %v1914 = vld [vmem:[%s14 + $0x38] sm:$0xff]
      %v1915 = vld [vmem:[%s15] sm:$0x3]
      %v1917 = vlaneseq
      %v1918 = vshrl.u32 %v1917, 7
      %v1919 = vsub.s32 0, %v1918
      %v1920 = vrot.slane %v1915, %v1919
      %v1921 = vlaneseq
      %v1922 = vshrl.u32 %v1921, 7
      %v1923 = vsub.s32 1, %v1922
      %v1924 = vrot.slane %v1915, %v1923
      %v1935 = vunpack.c.l.b16 %v1907
      %v1936 = vunpack.c.h.b16 %v1907
      %v1937 = vunpack.c.l.b16 %v1908
      %v1938 = vunpack.c.h.b16 %v1908
      %v1939 = vunpack.c.l.b16 %v1909
      %v1940 = vunpack.c.h.b16 %v1909
      %v1941 = vunpack.c.l.b16 %v1910
      %v1942 = vunpack.c.h.b16 %v1910
      %v1943 = vunpack.c.l.b16 %v1911
      %v1944 = vunpack.c.h.b16 %v1911
      %v1945 = vunpack.c.l.b16 %v1912
      %v1946 = vunpack.c.h.b16 %v1912
      %v1947 = vunpack.c.l.b16 %v1913
      %v1948 = vunpack.c.h.b16 %v1913
      %v1949 = vunpack.c.l.b16 %v1914
      %v1950 = vunpack.c.h.b16 %v1914
      %v1951 = vpack.c.b16 %v1937, %v1935
      %v1952 = vpack.c.b16 %v1938, %v1936
      %v1953 = vpack.c.b16 %v1941, %v1939
      %v1954 = vpack.c.b16 %v1942, %v1940
      %v1955 = vpack.c.b16 %v1945, %v1943
      %v1956 = vpack.c.b16 %v1946, %v1944
      %v1957 = vpack.c.b16 %v1949, %v1947
      %v1958 = vpack.c.b16 %v1950, %v1948
      %v1968 = vsel %vm735, %v1905, 0
      %v1971 = vsel %vm735, %v1906, 0
      %1973 = vmatprep.subr.bf16.mxu0 %v1952
      %1974 = vmatpush1.bf16.msra.mxu0 %v1951
      %1975 = vmatprep.subr.bf16.mxu0 %v1954
      %1976 = vmatpush1.bf16.msra.mxu0 %v1953
      %1977 = vmatprep.subr.bf16.mxu0 %v1956
      %1978 = vmatpush1.bf16.msra.mxu0 %v1955
      %1979 = vmatprep.subr.bf16.mxu0 %v1958
      %1980 = vmatpush1.bf16.msra.mxu0 %v1957
      %1981 = vmatprep.subr.bf16.mxu0 0
      %1982 = vmatpush1.bf16.msra.mxu0 0
      %1983 = vmatprep.subr.bf16.mxu0 0
      %1984 = vmatpush1.bf16.msra.mxu0 0
      %1985 = vmatprep.subr.bf16.mxu0 0
      %1986 = vmatpush1.bf16.msra.mxu0 0
      %1987 = vmatprep.subr.bf16.mxu0 0
      %1988 = vmatpush1.bf16.msra.mxu0 0
      %1989 = vmatprep.subr.bf16.mxu0 0
      %1990 = vmatpush1.bf16.msra.mxu0 0
      %1991 = vmatprep.subr.bf16.mxu0 0
      %1992 = vmatpush1.bf16.msra.mxu0 0
      %1993 = vmatprep.subr.bf16.mxu0 0
      %1994 = vmatpush1.bf16.msra.mxu0 0
      %1995 = vmatprep.subr.bf16.mxu0 0
      %1996 = vmatpush1.bf16.msra.mxu0 0
      %1997 = vmatprep.subr.bf16.mxu0 0
      %1998 = vmatpush1.bf16.msra.mxu0 0
      %1999 = vmatprep.subr.bf16.mxu0 0
      %2000 = vmatpush1.bf16.msra.mxu0 0
      %2001 = vmatprep.subr.bf16.mxu0 0
      %2002 = vmatpush1.bf16.msra.mxu0 0
      %2003 = vmatprep.subr.bf16.mxu0 0
      %2004 = vmatpush1.bf16.msra.mxu0 0
      %2005 = vmatprep.mubr.bf16.mxu0 0
      %2006 = vmatmul.mubr.bf16.gmra.mrb[0].mxu0 %v1968
      %v2007 = vpop.f32.mrb[0].mxu0
      %v2008 = vadd.f32 %v1920, %v2007
      %v2009 = vpop.f32.mrb[0].mxu0
      %v2010 = vadd.f32 %v1924, %v2009
      %v2011 = vpop.f32.mrb[0].mxu0
      %v2012 = vadd.f32 %v1920, %v2011
      %v2013 = vpop.f32.mrb[0].mxu0
      %v2014 = vadd.f32 %v1924, %v2013
      %2015 = vmatprep.mubr.bf16.mxu0 0
      %2016 = vmatmul.mubr.bf16.gmra.mrb[0].mxu0 %v1971
      %v2017 = vpop.f32.mrb[0].mxu0
      %v2018 = vadd.f32 %v1920, %v2017
      %v2019 = vpop.f32.mrb[0].mxu0
      %v2020 = vadd.f32 %v1924, %v2019
      %v2021 = vpop.f32.mrb[0].mxu0
      %v2022 = vpop.f32.mrb[0].mxu0
      %2023 = vdwg.mxu0
      %v2024 = vmul.f32 %v2008, %v2008
      %v2025 = vmul.f32 %v2010, %v2010
      %v2026 = vmul.f32 %v2012, %v2012
      %v2027 = vmul.f32 %v2014, %v2014
      %v2028 = vmul.f32 %v2018, %v2018
      %v2029 = vmul.f32 %v2020, %v2020
      %v2030 = vmul.f32 %v2008, %v2024
      %v2031 = vmul.f32 %v2010, %v2025
      %v2032 = vmul.f32 %v2012, %v2026
      %v2033 = vmul.f32 %v2014, %v2027
      %v2034 = vmul.f32 %v2018, %v2028
      %v2035 = vmul.f32 %v2020, %v2029
      %v2036 = vmul.f32 %v2030, 0.044715
      %v2037 = vmul.f32 %v2031, 0.044715
      %v2038 = vmul.f32 %v2032, 0.044715
      %v2039 = vmul.f32 %v2033, 0.044715
      %v2040 = vmul.f32 %v2034, 0.044715
      %v2041 = vmul.f32 %v2035, 0.044715
      %v2042 = vadd.f32 %v2008, %v2036
      %v2043 = vadd.f32 %v2010, %v2037
      %v2044 = vadd.f32 %v2012, %v2038
      %v2045 = vadd.f32 %v2014, %v2039
      %v2046 = vadd.f32 %v2018, %v2040
      %v2047 = vadd.f32 %v2020, %v2041
      %v2048 = vmul.f32 %v2042, 0.7978846
      %v2049 = vmul.f32 %v2043, 0.7978846
      %v2050 = vmul.f32 %v2044, 0.7978846
      %v2051 = vmul.f32 %v2045, 0.7978846
      %v2052 = vmul.f32 %v2046, 0.7978846
      %v2053 = vmul.f32 %v2047, 0.7978846
      %v2054 = vtanh.pop %v2048
      %v2055 = vtanh.pop %v2049
      %v2056 = vtanh.pop %v2050
      %v2057 = vtanh.pop %v2051
      %v2058 = vtanh.pop %v2052
      %v2059 = vtanh.pop %v2053
      %v2060 = vadd.f32 %v2054, 1.0
      %v2061 = vadd.f32 %v2055, 1.0
      %v2062 = vadd.f32 %v2056, 1.0
      %v2063 = vadd.f32 %v2057, 1.0
      %v2064 = vadd.f32 %v2058, 1.0
      %v2065 = vadd.f32 %v2059, 1.0
      %v2066 = vmul.f32 %v2060, 0.5
      %v2067 = vmul.f32 %v2061, 0.5
      %v2068 = vmul.f32 %v2062, 0.5
      %v2069 = vmul.f32 %v2063, 0.5
      %v2070 = vmul.f32 %v2064, 0.5
      %v2071 = vmul.f32 %v2065, 0.5
      %v2072 = vmul.f32 %v2008, %v2066
      %v2073 = vmul.f32 %v2010, %v2067
      %v2074 = vmul.f32 %v2012, %v2068
      %v2075 = vmul.f32 %v2014, %v2069
      %v2076 = vmul.f32 %v2018, %v2070
      %v2077 = vmul.f32 %v2020, %v2071
      %v2078 = vpack.c.bf16 %v2074, %v2072
      %v2079 = vpack.c.bf16 %v2075, %v2073
      %v2080 = vpack.c.bf16 %v2076, %v2076
      %v2081 = vpack.c.bf16 %v2077, %v2077
      %v2082 = vld [vmem:[%s16] sm:$0xf]
      %v2083 = vld [vmem:[%s16 + $0x4] sm:$0xf]
      %v2084 = vld [vmem:[%s16 + $0x8] sm:$0xf]
      %v2085 = vld [vmem:[%s16 + $0xc] sm:$0xf]
      %v2086 = vld [vmem:[%s16 + $0x10] sm:$0xf]
      %v2087 = vld [vmem:[%s16 + $0x14] sm:$0xf]
      %v2088 = vld [vmem:[%s16 + $0x18] sm:$0xf]
      %v2089 = vld [vmem:[%s16 + $0x1c] sm:$0xf]
      %v2090 = vld [vmem:[%s16 + $0x20] sm:$0xf]
      %v2091 = vld [vmem:[%s16 + $0x24] sm:$0xf]
      %v2092 = vld [vmem:[%s16 + $0x28] sm:$0xf]
      %v2093 = vld [vmem:[%s16 + $0x2c] sm:$0xf]
      %v2094 = vld [vmem:[%s16 + $0x30] sm:$0xf]
      %v2095 = vld [vmem:[%s16 + $0x34] sm:$0xf]
      %v2096 = vld [vmem:[%s16 + $0x38] sm:$0xf]
      %v2097 = vld [vmem:[%s16 + $0x3c] sm:$0xf]
      %v2098 = vld [vmem:[%s16 + $0x40] sm:$0xf]
      %v2099 = vld [vmem:[%s16 + $0x44] sm:$0xf]
      %v2100 = vld [vmem:[%s16 + $0x48] sm:$0xf]
      %v2101 = vld [vmem:[%s16 + $0x4c] sm:$0xf]
      %v2102 = vld [vmem:[%s16 + $0x50] sm:$0xf]
      %v2103 = vld [vmem:[%s16 + $0x54] sm:$0xf]
      %v2104 = vld [vmem:[%s16 + $0x58] sm:$0xf]
      %v2105 = vld [vmem:[%s16 + $0x5c] sm:$0xf]
      %v2106 = vld [vmem:[%s16 + $0x60] sm:$0xf]
      %v2107 = vld [vmem:[%s16 + $0x64] sm:$0xf]
      %v2108 = vld [vmem:[%s16 + $0x68] sm:$0xf]
      %v2109 = vld [vmem:[%s16 + $0x6c] sm:$0xf]
      %v2110 = vld [vmem:[%s16 + $0x70] sm:$0xf]
      %v2111 = vld [vmem:[%s16 + $0x74] sm:$0xf]
      %v2112 = vld [vmem:[%s16 + $0x78] sm:$0xf]
      %v2113 = vld [vmem:[%s16 + $0x7c] sm:$0xf]
      %v2146 = vunpack.c.l.b16 %v2082
      %v2147 = vunpack.c.l.b16 %v2083
      %v2148 = vunpack.c.l.b16 %v2084
      %v2149 = vunpack.c.l.b16 %v2085
      %v2150 = vunpack.c.l.b16 %v2086
      %v2151 = vunpack.c.l.b16 %v2087
      %v2152 = vunpack.c.l.b16 %v2088
      %v2153 = vunpack.c.l.b16 %v2089
      %v2154 = vunpack.c.l.b16 %v2090
      %v2155 = vunpack.c.l.b16 %v2091
      %v2156 = vunpack.c.l.b16 %v2092
      %v2157 = vunpack.c.l.b16 %v2093
      %v2158 = vunpack.c.l.b16 %v2094
      %v2159 = vunpack.c.l.b16 %v2095
      %v2160 = vunpack.c.l.b16 %v2096
      %v2161 = vunpack.c.l.b16 %v2097
      %v2162 = vunpack.c.l.b16 %v2098
      %v2163 = vunpack.c.l.b16 %v2099
      %v2164 = vunpack.c.l.b16 %v2100
      %v2165 = vunpack.c.l.b16 %v2101
      %v2166 = vunpack.c.l.b16 %v2102
      %v2167 = vunpack.c.l.b16 %v2103
      %v2168 = vunpack.c.l.b16 %v2104
      %v2169 = vunpack.c.l.b16 %v2105
      %v2170 = vunpack.c.l.b16 %v2106
      %v2171 = vunpack.c.l.b16 %v2107
      %v2172 = vunpack.c.l.b16 %v2108
      %v2173 = vunpack.c.l.b16 %v2109
      %v2174 = vunpack.c.l.b16 %v2110
      %v2175 = vunpack.c.l.b16 %v2111
      %v2176 = vunpack.c.l.b16 %v2112
      %v2177 = vunpack.c.l.b16 %v2113
      %v2178 = vpack.c.b16 %v2147, %v2146
      %v2179 = vpack.c.b16 %v2149, %v2148
      %v2180 = vpack.c.b16 %v2151, %v2150
      %v2181 = vpack.c.b16 %v2153, %v2152
      %v2182 = vpack.c.b16 %v2155, %v2154
      %v2183 = vpack.c.b16 %v2157, %v2156
      %v2184 = vpack.c.b16 %v2159, %v2158
      %v2185 = vpack.c.b16 %v2161, %v2160
      %v2186 = vpack.c.b16 %v2163, %v2162
      %v2187 = vpack.c.b16 %v2165, %v2164
      %v2188 = vpack.c.b16 %v2167, %v2166
      %v2189 = vpack.c.b16 %v2169, %v2168
      %v2190 = vpack.c.b16 %v2171, %v2170
      %v2191 = vpack.c.b16 %v2173, %v2172
      %v2192 = vpack.c.b16 %v2175, %v2174
      %v2193 = vpack.c.b16 %v2177, %v2176
      %2210 = vmatprep.subr.bf16.mxu0 0
      %2211 = vmatpush1.bf16.msra.mxu0 %v2178
      %2212 = vmatprep.subr.bf16.mxu0 0
      %2213 = vmatpush1.bf16.msra.mxu0 %v2179
      %2214 = vmatprep.subr.bf16.mxu0 0
      %2215 = vmatpush1.bf16.msra.mxu0 %v2180
      %2216 = vmatprep.subr.bf16.mxu0 0
      %2217 = vmatpush1.bf16.msra.mxu0 %v2181
      %2218 = vmatprep.subr.bf16.mxu0 0
      %2219 = vmatpush1.bf16.msra.mxu0 %v2182
      %2220 = vmatprep.subr.bf16.mxu0 0
      %2221 = vmatpush1.bf16.msra.mxu0 %v2183
      %2222 = vmatprep.subr.bf16.mxu0 0
      %2223 = vmatpush1.bf16.msra.mxu0 %v2184
      %2224 = vmatprep.subr.bf16.mxu0 0
      %2225 = vmatpush1.bf16.msra.mxu0 %v2185
      %2226 = vmatprep.subr.bf16.mxu0 0
      %2227 = vmatpush1.bf16.msra.mxu0 %v2186
      %2228 = vmatprep.subr.bf16.mxu0 0
      %2229 = vmatpush1.bf16.msra.mxu0 %v2187
      %2230 = vmatprep.subr.bf16.mxu0 0
      %2231 = vmatpush1.bf16.msra.mxu0 %v2188
      %2232 = vmatprep.subr.bf16.mxu0 0
      %2233 = vmatpush1.bf16.msra.mxu0 %v2189
      %2234 = vmatprep.subr.bf16.mxu0 0
      %2235 = vmatpush1.bf16.msra.mxu0 %v2190
      %2236 = vmatprep.subr.bf16.mxu0 0
      %2237 = vmatpush1.bf16.msra.mxu0 %v2191
      %2238 = vmatprep.subr.bf16.mxu0 0
      %2239 = vmatpush1.bf16.msra.mxu0 %v2192
      %2240 = vmatprep.subr.bf16.mxu0 0
      %2241 = vmatpush1.bf16.msra.mxu0 %v2193
      %2242 = vmatprep.mubr.bf16.mxu0 %v2079
      %2243 = vmatmul.mubr.bf16.gmra.mrb[0].mxu0 %v2078
      %v2244 = vpop.f32.mrb[0].mxu0
      %v2245 = vadd.f32 0.0, %v2244
      %v2246 = vpop.f32.mrb[0].mxu0
      %v2247 = vpop.f32.mrb[0].mxu0
      %v2248 = vadd.f32 0.0, %v2247
      %v2249 = vpop.f32.mrb[0].mxu0
      %2250 = vmatprep.mubr.bf16.mxu0 %v2081
      %2251 = vmatmul.mubr.bf16.gmra.mrb[0].mxu0 %v2080
      %v2252 = vpop.f32.mrb[0].mxu0
      %v2253 = vadd.f32 0.0, %v2252
      %v2254 = vpop.f32.mrb[0].mxu0
      %v2255 = vpop.f32.mrb[0].mxu0
      %v2256 = vpop.f32.mrb[0].mxu0
      %2257 = vdwg.mxu0
      %v2258 = vadd.f32 %v1843, %v2245
      %v2259 = vadd.f32 %v1844, %v2248
      %v2260 = vadd.f32 %v1845, %v2253
      %v2261 = vld [vmem:[%s17] sm:$0x1]
      %v2263 = vlaneseq
      %v2264 = vshrl.u32 %v2263, 7
      %v2265 = vsub.s32 0, %v2264
      %v2266 = vrot.slane %v2261, %v2265
      %v2268 = vadd.f32 %v2258, %v2266
      %v2269 = vadd.f32 %v2259, %v2266
      %v2270 = vadd.f32 %v2260, %v2266
      %s2271 = scalar_lea.vmem %s6, 1
      %v2272 = vld [vmem:[%s2271] sm:$0x1]
      %s2273 = scalar_lea.vmem %s7, 1
      %v2274 = vld [vmem:[%s2273] sm:$0x1]
      %v2275 = vsel %vm735, %v2268, 0.0
      %2276 = vadd.xlane.f32.xlu0 %v2275
      %v2277 = vpop.xlane.xlu0 %2276
      %v2278 = vsel %vm735, %v2269, 0.0
      %2279 = vadd.xlane.f32.xlu0 %v2278
      %v2280 = vpop.xlane.xlu0 %2279
      %v2281 = vsel %vm799, %v2270, 0.0
      %2282 = vadd.xlane.f32.xlu0 %v2281
      %v2283 = vpop.xlane.xlu0 %2282
      %v2284 = vmul.f32 %v2277, %v803
      %v2285 = vmul.f32 %v2280, %v803
      %v2286 = vmul.f32 %v2283, %v803
      %v2287 = vsub.f32 %v2268, %v2284
      %v2288 = vsub.f32 %v2269, %v2285
      %v2289 = vsub.f32 %v2270, %v2286
      %v2290 = vmul.f32 %v2287, %v2287
      %v2291 = vmul.f32 %v2288, %v2288
      %v2292 = vmul.f32 %v2289, %v2289
      %v2293 = vsel %vm735, %v2290, 0.0
      %2294 = vadd.xlane.f32.xlu0 %v2293
      %v2295 = vpop.xlane.xlu0 %2294
      %v2296 = vsel %vm735, %v2291, 0.0
      %2297 = vadd.xlane.f32.xlu0 %v2296
      %v2298 = vpop.xlane.xlu0 %2297
      %v2299 = vsel %vm799, %v2292, 0.0
      %2300 = vadd.xlane.f32.xlu0 %v2299
      %v2301 = vpop.xlane.xlu0 %2300
      %v2302 = vmul.f32 %v2295, %v803
      %v2303 = vmul.f32 %v2298, %v803
      %v2304 = vmul.f32 %v2301, %v803
      %v2305 = vadd.f32 %v2302, 1e-05
      %v2306 = vadd.f32 %v2303, 1e-05
      %v2307 = vadd.f32 %v2304, 1e-05
      %v2308 = vrsqrt.pop %v2305
      %v2309 = vrsqrt.pop %v2306
      %v2310 = vrsqrt.pop %v2307
      %v2311 = vmul.f32 %v2287, %v2308
      %v2312 = vmul.f32 %v2288, %v2309
      %v2313 = vmul.f32 %v2289, %v2310
      %v2315 = vlaneseq
      %v2316 = vshrl.u32 %v2315, 7
      %v2317 = vsub.s32 0, %v2316
      %v2318 = vrot.slane %v2272, %v2317
      %v2320 = vmul.f32 %v2311, %v2318
      %v2321 = vmul.f32 %v2312, %v2318
      %v2322 = vmul.f32 %v2313, %v2318
      %v2324 = vlaneseq
      %v2325 = vshrl.u32 %v2324, 7
      %v2326 = vsub.s32 0, %v2325
      %v2327 = vrot.slane %v2274, %v2326
      %v2329 = vadd.f32 %v2320, %v2327
      %v2330 = vadd.f32 %v2321, %v2327
      %v2331 = vadd.f32 %v2322, %v2327
      %v2332 = vpack.c.bf16 %v2330, %v2329
      %v2333 = vpack.c.bf16 %v2331, %v2331
      %s2334 = scalar_lea.vmem %s8, 64
      %v2335 = vld [vmem:[%s2334] sm:$0xff]
      %v2336 = vld [vmem:[%s2334 + $0x8] sm:$0xff]
      %v2337 = vld [vmem:[%s2334 + $0x10] sm:$0xff]
      %v2338 = vld [vmem:[%s2334 + $0x18] sm:$0xff]
      %v2339 = vld [vmem:[%s2334 + $0x20] sm:$0xff]
      %v2340 = vld [vmem:[%s2334 + $0x28] sm:$0xff]
      %v2341 = vld [vmem:[%s2334 + $0x30] sm:$0xff]
      %v2342 = vld [vmem:[%s2334 + $0x38] sm:$0xff]
      %s2343 = scalar_lea.vmem %s9, 2
      %v2344 = vld [vmem:[%s2343] sm:$0x3]
      %v2346 = vlaneseq
      %v2347 = vshrl.u32 %v2346, 7
      %v2348 = vsub.s32 0, %v2347
      %v2349 = vrot.slane %v2344, %v2348
      %v2350 = vlaneseq
      %v2351 = vshrl.u32 %v2350, 7
      %v2352 = vsub.s32 1, %v2351
      %v2353 = vrot.slane %v2344, %v2352
      %v2364 = vunpack.c.l.b16 %v2335
      %v2365 = vunpack.c.h.b16 %v2335
      %v2366 = vunpack.c.l.b16 %v2336
      %v2367 = vunpack.c.h.b16 %v2336
      %v2368 = vunpack.c.l.b16 %v2337
      %v2369 = vunpack.c.h.b16 %v2337
      %v2370 = vunpack.c.l.b16 %v2338
      %v2371 = vunpack.c.h.b16 %v2338
      %v2372 = vunpack.c.l.b16 %v2339
      %v2373 = vunpack.c.h.b16 %v2339
      %v2374 = vunpack.c.l.b16 %v2340
      %v2375 = vunpack.c.h.b16 %v2340
      %v2376 = vunpack.c.l.b16 %v2341
      %v2377 = vunpack.c.h.b16 %v2341
      %v2378 = vunpack.c.l.b16 %v2342
      %v2379 = vunpack.c.h.b16 %v2342
      %v2380 = vpack.c.b16 %v2366, %v2364
      %v2381 = vpack.c.b16 %v2367, %v2365
      %v2382 = vpack.c.b16 %v2370, %v2368
      %v2383 = vpack.c.b16 %v2371, %v2369
      %v2384 = vpack.c.b16 %v2374, %v2372
      %v2385 = vpack.c.b16 %v2375, %v2373
      %v2386 = vpack.c.b16 %v2378, %v2376
      %v2387 = vpack.c.b16 %v2379, %v2377
      %v2397 = vsel %vm735, %v2332, 0
      %v2400 = vsel %vm735, %v2333, 0
      %2402 = vmatprep.subr.bf16.mxu0 %v2381
      %2403 = vmatpush1.bf16.msra.mxu0 %v2380
      %2404 = vmatprep.subr.bf16.mxu0 %v2383
      %2405 = vmatpush1.bf16.msra.mxu0 %v2382
      %2406 = vmatprep.subr.bf16.mxu0 %v2385
      %2407 = vmatpush1.bf16.msra.mxu0 %v2384
      %2408 = vmatprep.subr.bf16.mxu0 %v2387
      %2409 = vmatpush1.bf16.msra.mxu0 %v2386
      %2410 = vmatprep.subr.bf16.mxu0 0
      %2411 = vmatpush1.bf16.msra.mxu0 0
      %2412 = vmatprep.subr.bf16.mxu0 0
      %2413 = vmatpush1.bf16.msra.mxu0 0
      %2414 = vmatprep.subr.bf16.mxu0 0
      %2415 = vmatpush1.bf16.msra.mxu0 0
      %2416 = vmatprep.subr.bf16.mxu0 0
      %2417 = vmatpush1.bf16.msra.mxu0 0
      %2418 = vmatprep.subr.bf16.mxu0 0
      %2419 = vmatpush1.bf16.msra.mxu0 0
      %2420 = vmatprep.subr.bf16.mxu0 0
      %2421 = vmatpush1.bf16.msra.mxu0 0
      %2422 = vmatprep.subr.bf16.mxu0 0
      %2423 = vmatpush1.bf16.msra.mxu0 0
      %2424 = vmatprep.subr.bf16.mxu0 0
      %2425 = vmatpush1.bf16.msra.mxu0 0
      %2426 = vmatprep.subr.bf16.mxu0 0
      %2427 = vmatpush1.bf16.msra.mxu0 0
      %2428 = vmatprep.subr.bf16.mxu0 0
      %2429 = vmatpush1.bf16.msra.mxu0 0
      %2430 = vmatprep.subr.bf16.mxu0 0
      %2431 = vmatpush1.bf16.msra.mxu0 0
      %2432 = vmatprep.subr.bf16.mxu0 0
      %2433 = vmatpush1.bf16.msra.mxu0 0
      %2434 = vmatprep.mubr.bf16.mxu0 0
      %2435 = vmatmul.mubr.bf16.gmra.mrb[0].mxu0 %v2397
      %v2436 = vpop.f32.mrb[0].mxu0
      %v2437 = vadd.f32 %v2349, %v2436
      %v2438 = vpop.f32.mrb[0].mxu0
      %v2439 = vadd.f32 %v2353, %v2438
      %v2440 = vpop.f32.mrb[0].mxu0
      %v2441 = vadd.f32 %v2349, %v2440
      %v2442 = vpop.f32.mrb[0].mxu0
      %v2443 = vadd.f32 %v2353, %v2442
      %2444 = vmatprep.mubr.bf16.mxu0 0
      %2445 = vmatmul.mubr.bf16.gmra.mrb[0].mxu0 %v2400
      %v2446 = vpop.f32.mrb[0].mxu0
      %v2447 = vadd.f32 %v2349, %v2446
      %v2448 = vpop.f32.mrb[0].mxu0
      %v2449 = vadd.f32 %v2353, %v2448
      %v2450 = vpop.f32.mrb[0].mxu0
      %v2451 = vpop.f32.mrb[0].mxu0
      %2452 = vdwg.mxu0
      %s2453 = scalar_lea.vmem %s10, 32
      %v2454 = vld [vmem:[%s2453] sm:$0xf]
      %v2455 = vld [vmem:[%s2453 + $0x4] sm:$0xf]
      %v2456 = vld [vmem:[%s2453 + $0x8] sm:$0xf]
      %v2457 = vld [vmem:[%s2453 + $0xc] sm:$0xf]
      %v2458 = vld [vmem:[%s2453 + $0x10] sm:$0xf]
      %v2459 = vld [vmem:[%s2453 + $0x14] sm:$0xf]
      %v2460 = vld [vmem:[%s2453 + $0x18] sm:$0xf]
      %v2461 = vld [vmem:[%s2453 + $0x1c] sm:$0xf]
      %s2462 = scalar_lea.vmem %s11, 1
      %v2463 = vld [vmem:[%s2462] sm:$0x1]
      %v2464 = vmul.f32 %v2437, 0.25
      %v2465 = vmul.f32 %v2441, 0.25
      %v2466 = vmul.f32 %v2447, 0.25
      %v2467 = vpack.c.bf16 %v2465, %v2464
      %v2468 = vpack.c.bf16 %v2466, %v2466
      %v2469 = vpack.c.bf16 %v2441, %v2437
      %v2470 = vpack.c.bf16 %v2447, %v2447
      %v2471 = vpack.c.bf16 %v2443, %v2439
      %v2472 = vpack.c.bf16 %v2449, %v2449
      %2475 = vrot.lane.b32.xlu0 %v2469, 64
      %v2476 = vpop.permute.xlu0 %2475
      %2477 = vrot.lane.b32.xlu0 %v2470, 64
      %v2478 = vpop.permute.xlu0 %2477
      %v2480 = vsel %vm1054, %v2467, 0
      %v2483 = vsel %vm1054, %v2468, 0
      %v2486 = vsel %vm1054, %v2476, 0
      %v2489 = vsel %vm1054, %v2478, 0
      %2491 = vmatprep.subr.bf16.mxu0 0
      %2492 = vmatpush1.bf16.xpose.msra.mxu0 %v2486
      %2493 = vmatprep.subr.bf16.mxu0 0
      %2494 = vmatpush1.bf16.xpose.msra.mxu0 %v2489
      %2495 = vmatprep.subr.bf16.mxu0 0
      %2496 = vmatpush1.bf16.xpose.msra.mxu0 0
      %2497 = vmatprep.subr.bf16.mxu0 0
      %2498 = vmatpush1.bf16.xpose.msra.mxu0 0
      %2499 = vmatprep.subr.bf16.mxu0 0
      %2500 = vmatpush1.bf16.xpose.msra.mxu0 0
      %2501 = vmatprep.subr.bf16.mxu0 0
      %2502 = vmatpush1.bf16.xpose.msra.mxu0 0
      %2503 = vmatprep.subr.bf16.mxu0 0
      %2504 = vmatpush1.bf16.xpose.msra.mxu0 0
      %2505 = vmatprep.subr.bf16.mxu0 0
      %2506 = vmatpush1.bf16.xpose.msra.mxu0 0
      %2507 = vmatprep.subr.bf16.mxu0 0
      %2508 = vmatpush1.bf16.xpose.msra.mxu0 0
      %2509 = vmatprep.subr.bf16.mxu0 0
      %2510 = vmatpush1.bf16.xpose.msra.mxu0 0
      %2511 = vmatprep.subr.bf16.mxu0 0
      %2512 = vmatpush1.bf16.xpose.msra.mxu0 0
      %2513 = vmatprep.subr.bf16.mxu0 0
      %2514 = vmatpush1.bf16.xpose.msra.mxu0 0
      %2515 = vmatprep.subr.bf16.mxu0 0
      %2516 = vmatpush1.bf16.xpose.msra.mxu0 0
      %2517 = vmatprep.subr.bf16.mxu0 0
      %2518 = vmatpush1.bf16.xpose.msra.mxu0 0
      %2519 = vmatprep.subr.bf16.mxu0 0
      %2520 = vmatpush1.bf16.xpose.msra.mxu0 0
      %2521 = vmatprep.subr.bf16.mxu0 0
      %2522 = vmatpush1.bf16.xpose.msra.mxu0 0
      %2523 = vmatprep.mubr.bf16.mxu0 0
      %2524 = vmatmul.mubr.bf16.gmra.mrb[0].mxu0 %v2480
      %v2525 = vpop.f32.mrb[0].mxu0
      %v2526 = vadd.f32 0.0, %v2525
      %v2527 = vpop.f32.mrb[0].mxu0
      %v2528 = vpop.f32.mrb[0].mxu0
      %v2529 = vadd.f32 0.0, %v2528
      %v2530 = vpop.f32.mrb[0].mxu0
      %2531 = vmatprep.mubr.bf16.mxu0 0
      %2532 = vmatmul.mubr.bf16.gmra.mrb[0].mxu0 %v2483
      %v2533 = vpop.f32.mrb[0].mxu0
      %v2534 = vadd.f32 0.0, %v2533
      %v2535 = vpop.f32.mrb[0].mxu0
      %v2536 = vpop.f32.mrb[0].mxu0
      %v2537 = vpop.f32.mrb[0].mxu0
      %2538 = vdwg.mxu0
      %v2539 = vsel %vm1115, %v2526, -inf
      %2540 = vmax.xlane.f32.xlu0 %v2539
      %v2541 = vpop.xlane.xlu0 %2540
      %v2542 = vsel %vm1115, %v2529, -inf
      %2543 = vmax.xlane.f32.xlu0 %v2542
      %v2544 = vpop.xlane.xlu0 %2543
      %v2545 = vsel %vm1122, %v2534, -inf
      %2546 = vmax.xlane.f32.xlu0 %v2545
      %v2547 = vpop.xlane.xlu0 %2546
      %v2548 = vsub.f32 %v2526, %v2541
      %v2549 = vsub.f32 %v2529, %v2544
      %v2550 = vsub.f32 %v2534, %v2547
      %v2551 = vmul.f32 %v2548, 1.442695
      %v2552 = vpow.pop %v2551
      %v2553 = vmul.f32 %v2549, 1.442695
      %v2554 = vpow.pop %v2553
      %v2555 = vmul.f32 %v2550, 1.442695
      %v2556 = vpow.pop %v2555
      %v2557 = vsel %vm1115, %v2552, 0.0
      %2558 = vadd.xlane.f32.xlu0 %v2557
      %v2559 = vpop.xlane.xlu0 %2558
      %v2560 = vsel %vm1115, %v2554, 0.0
      %2561 = vadd.xlane.f32.xlu0 %v2560
      %v2562 = vpop.xlane.xlu0 %2561
      %v2563 = vsel %vm1122, %v2556, 0.0
      %2564 = vadd.xlane.f32.xlu0 %v2563
      %v2565 = vpop.xlane.xlu0 %2564
      %v2566 = vrcp.pop %v2559
      %v2567 = vrcp.pop %v2562
      %v2568 = vrcp.pop %v2565
      %v2569 = vmul.f32 %v2552, %v2566
      %v2570 = vmul.f32 %v2554, %v2567
      %v2571 = vmul.f32 %v2556, %v2568
      %v2572 = vpack.c.bf16 %v2570, %v2569
      %v2573 = vpack.c.bf16 %v2571, %v2571
      %v2575 = vsel %vm1115, %v2572, 0
      %v2578 = vsel %vm1115, %v2573, 0
      %v2581 = vand.u32 %v2472, %v1159
      %2583 = vmatprep.subr.bf16.mxu0 0
      %2584 = vmatpush1.bf16.msra.mxu0 %v2471
      %2585 = vmatprep.subr.bf16.mxu0 0
      %2586 = vmatpush1.bf16.msra.mxu0 %v2581
      %2587 = vmatprep.subr.bf16.mxu0 0
      %2588 = vmatpush1.bf16.msra.mxu0 0
      %2589 = vmatprep.subr.bf16.mxu0 0
      %2590 = vmatpush1.bf16.msra.mxu0 0
      %2591 = vmatprep.subr.bf16.mxu0 0
      %2592 = vmatpush1.bf16.msra.mxu0 0
      %2593 = vmatprep.subr.bf16.mxu0 0
      %2594 = vmatpush1.bf16.msra.mxu0 0
      %2595 = vmatprep.subr.bf16.mxu0 0
      %2596 = vmatpush1.bf16.msra.mxu0 0
      %2597 = vmatprep.subr.bf16.mxu0 0
      %2598 = vmatpush1.bf16.msra.mxu0 0
      %2599 = vmatprep.subr.bf16.mxu0 0
      %2600 = vmatpush1.bf16.msra.mxu0 0
      %2601 = vmatprep.subr.bf16.mxu0 0
      %2602 = vmatpush1.bf16.msra.mxu0 0
      %2603 = vmatprep.subr.bf16.mxu0 0
      %2604 = vmatpush1.bf16.msra.mxu0 0
      %2605 = vmatprep.subr.bf16.mxu0 0
      %2606 = vmatpush1.bf16.msra.mxu0 0
      %2607 = vmatprep.subr.bf16.mxu0 0
      %2608 = vmatpush1.bf16.msra.mxu0 0
      %2609 = vmatprep.subr.bf16.mxu0 0
      %2610 = vmatpush1.bf16.msra.mxu0 0
      %2611 = vmatprep.subr.bf16.mxu0 0
      %2612 = vmatpush1.bf16.msra.mxu0 0
      %2613 = vmatprep.subr.bf16.mxu0 0
      %2614 = vmatpush1.bf16.msra.mxu0 0
      %2615 = vmatprep.mubr.bf16.mxu0 0
      %2616 = vmatmul.mubr.bf16.gmra.mrb[0].mxu0 %v2575
      %v2617 = vpop.f32.mrb[0].mxu0
      %v2618 = vadd.f32 0.0, %v2617
      %v2619 = vpop.f32.mrb[0].mxu0
      %v2620 = vpop.f32.mrb[0].mxu0
      %v2621 = vadd.f32 0.0, %v2620
      %v2622 = vpop.f32.mrb[0].mxu0
      %2623 = vmatprep.mubr.bf16.mxu0 0
      %2624 = vmatmul.mubr.bf16.gmra.mrb[0].mxu0 %v2578
      %v2625 = vpop.f32.mrb[0].mxu0
      %v2626 = vadd.f32 0.0, %v2625
      %v2627 = vpop.f32.mrb[0].mxu0
      %v2628 = vpop.f32.mrb[0].mxu0
      %v2629 = vpop.f32.mrb[0].mxu0
      %2630 = vdwg.mxu0
      %2633 = vrot.lane.b32.xlu0 %v2467, 112
      %v2634 = vpop.permute.xlu0 %2633
      %2635 = vrot.lane.b32.xlu0 %v2468, 112
      %v2636 = vpop.permute.xlu0 %2635
      %2637 = vrot.lane.b32.xlu0 %v2469, 48
      %v2638 = vpop.permute.xlu0 %2637
      %2639 = vrot.lane.b32.xlu0 %v2470, 48
      %v2640 = vpop.permute.xlu0 %2639
      %v2642 = vsel %vm1054, %v2634, 0
      %v2645 = vsel %vm1054, %v2636, 0
      %v2648 = vsel %vm1054, %v2638, 0
      %v2651 = vsel %vm1054, %v2640, 0
      %2653 = vmatprep.subr.bf16.mxu0 0
      %2654 = vmatpush1.bf16.xpose.msra.mxu0 %v2648
      %2655 = vmatprep.subr.bf16.mxu0 0
      %2656 = vmatpush1.bf16.xpose.msra.mxu0 %v2651
      %2657 = vmatprep.subr.bf16.mxu0 0
      %2658 = vmatpush1.bf16.xpose.msra.mxu0 0
      %2659 = vmatprep.subr.bf16.mxu0 0
      %2660 = vmatpush1.bf16.xpose.msra.mxu0 0
      %2661 = vmatprep.subr.bf16.mxu0 0
      %2662 = vmatpush1.bf16.xpose.msra.mxu0 0
      %2663 = vmatprep.subr.bf16.mxu0 0
      %2664 = vmatpush1.bf16.xpose.msra.mxu0 0
      %2665 = vmatprep.subr.bf16.mxu0 0
      %2666 = vmatpush1.bf16.xpose.msra.mxu0 0
      %2667 = vmatprep.subr.bf16.mxu0 0
      %2668 = vmatpush1.bf16.xpose.msra.mxu0 0
      %2669 = vmatprep.subr.bf16.mxu0 0
      %2670 = vmatpush1.bf16.xpose.msra.mxu0 0
      %2671 = vmatprep.subr.bf16.mxu0 0
      %2672 = vmatpush1.bf16.xpose.msra.mxu0 0
      %2673 = vmatprep.subr.bf16.mxu0 0
      %2674 = vmatpush1.bf16.xpose.msra.mxu0 0
      %2675 = vmatprep.subr.bf16.mxu0 0
      %2676 = vmatpush1.bf16.xpose.msra.mxu0 0
      %2677 = vmatprep.subr.bf16.mxu0 0
      %2678 = vmatpush1.bf16.xpose.msra.mxu0 0
      %2679 = vmatprep.subr.bf16.mxu0 0
      %2680 = vmatpush1.bf16.xpose.msra.mxu0 0
      %2681 = vmatprep.subr.bf16.mxu0 0
      %2682 = vmatpush1.bf16.xpose.msra.mxu0 0
      %2683 = vmatprep.subr.bf16.mxu0 0
      %2684 = vmatpush1.bf16.xpose.msra.mxu0 0
      %2685 = vmatprep.mubr.bf16.mxu0 0
      %2686 = vmatmul.mubr.bf16.gmra.mrb[0].mxu0 %v2642
      %v2687 = vpop.f32.mrb[0].mxu0
      %v2688 = vadd.f32 0.0, %v2687
      %v2689 = vpop.f32.mrb[0].mxu0
      %v2690 = vpop.f32.mrb[0].mxu0
      %v2691 = vadd.f32 0.0, %v2690
      %v2692 = vpop.f32.mrb[0].mxu0
      %2693 = vmatprep.mubr.bf16.mxu0 0
      %2694 = vmatmul.mubr.bf16.gmra.mrb[0].mxu0 %v2645
      %v2695 = vpop.f32.mrb[0].mxu0
      %v2696 = vadd.f32 0.0, %v2695
      %v2697 = vpop.f32.mrb[0].mxu0
      %v2698 = vpop.f32.mrb[0].mxu0
      %v2699 = vpop.f32.mrb[0].mxu0
      %2700 = vdwg.mxu0
      %v2701 = vsel %vm1115, %v2688, -inf
      %2702 = vmax.xlane.f32.xlu0 %v2701
      %v2703 = vpop.xlane.xlu0 %2702
      %v2704 = vsel %vm1115, %v2691, -inf
      %2705 = vmax.xlane.f32.xlu0 %v2704
      %v2706 = vpop.xlane.xlu0 %2705
      %v2707 = vsel %vm1122, %v2696, -inf
      %2708 = vmax.xlane.f32.xlu0 %v2707
      %v2709 = vpop.xlane.xlu0 %2708
      %v2710 = vsub.f32 %v2688, %v2703
      %v2711 = vsub.f32 %v2691, %v2706
      %v2712 = vsub.f32 %v2696, %v2709
      %v2713 = vmul.f32 %v2710, 1.442695
      %v2714 = vpow.pop %v2713
      %v2715 = vmul.f32 %v2711, 1.442695
      %v2716 = vpow.pop %v2715
      %v2717 = vmul.f32 %v2712, 1.442695
      %v2718 = vpow.pop %v2717
      %v2719 = vsel %vm1115, %v2714, 0.0
      %2720 = vadd.xlane.f32.xlu0 %v2719
      %v2721 = vpop.xlane.xlu0 %2720
      %v2722 = vsel %vm1115, %v2716, 0.0
      %2723 = vadd.xlane.f32.xlu0 %v2722
      %v2724 = vpop.xlane.xlu0 %2723
      %v2725 = vsel %vm1122, %v2718, 0.0
      %2726 = vadd.xlane.f32.xlu0 %v2725
      %v2727 = vpop.xlane.xlu0 %2726
      %v2728 = vrcp.pop %v2721
      %v2729 = vrcp.pop %v2724
      %v2730 = vrcp.pop %v2727
      %v2731 = vmul.f32 %v2714, %v2728
      %v2732 = vmul.f32 %v2716, %v2729
      %v2733 = vmul.f32 %v2718, %v2730
      %v2734 = vpack.c.bf16 %v2732, %v2731
      %v2735 = vpack.c.bf16 %v2733, %v2733
      %2738 = vrot.lane.b32.xlu0 %v2471, 112
      %v2739 = vpop.permute.xlu0 %2738
      %2740 = vrot.lane.b32.xlu0 %v2472, 112
      %v2741 = vpop.permute.xlu0 %2740
      %v2744 = vsel %vm1115, %v2734, 0
      %v2747 = vsel %vm1115, %v2735, 0
      %v2750 = vand.u32 %v2741, %v1159
      %2752 = vmatprep.subr.bf16.mxu0 0
      %2753 = vmatpush1.bf16.msra.mxu0 %v2739
      %2754 = vmatprep.subr.bf16.mxu0 0
      %2755 = vmatpush1.bf16.msra.mxu0 %v2750
      %2756 = vmatprep.subr.bf16.mxu0 0
      %2757 = vmatpush1.bf16.msra.mxu0 0
      %2758 = vmatprep.subr.bf16.mxu0 0
      %2759 = vmatpush1.bf16.msra.mxu0 0
      %2760 = vmatprep.subr.bf16.mxu0 0
      %2761 = vmatpush1.bf16.msra.mxu0 0
      %2762 = vmatprep.subr.bf16.mxu0 0
      %2763 = vmatpush1.bf16.msra.mxu0 0
      %2764 = vmatprep.subr.bf16.mxu0 0
      %2765 = vmatpush1.bf16.msra.mxu0 0
      %2766 = vmatprep.subr.bf16.mxu0 0
      %2767 = vmatpush1.bf16.msra.mxu0 0
      %2768 = vmatprep.subr.bf16.mxu0 0
      %2769 = vmatpush1.bf16.msra.mxu0 0
      %2770 = vmatprep.subr.bf16.mxu0 0
      %2771 = vmatpush1.bf16.msra.mxu0 0
      %2772 = vmatprep.subr.bf16.mxu0 0
      %2773 = vmatpush1.bf16.msra.mxu0 0
      %2774 = vmatprep.subr.bf16.mxu0 0
      %2775 = vmatpush1.bf16.msra.mxu0 0
      %2776 = vmatprep.subr.bf16.mxu0 0
      %2777 = vmatpush1.bf16.msra.mxu0 0
      %2778 = vmatprep.subr.bf16.mxu0 0
      %2779 = vmatpush1.bf16.msra.mxu0 0
      %2780 = vmatprep.subr.bf16.mxu0 0
      %2781 = vmatpush1.bf16.msra.mxu0 0
      %2782 = vmatprep.subr.bf16.mxu0 0
      %2783 = vmatpush1.bf16.msra.mxu0 0
      %2784 = vmatprep.mubr.bf16.mxu0 0
      %2785 = vmatmul.mubr.bf16.gmra.mrb[0].mxu0 %v2744
      %v2786 = vpop.f32.mrb[0].mxu0
      %v2787 = vadd.f32 0.0, %v2786
      %v2788 = vpop.f32.mrb[0].mxu0
      %v2789 = vpop.f32.mrb[0].mxu0
      %v2790 = vadd.f32 0.0, %v2789
      %v2791 = vpop.f32.mrb[0].mxu0
      %2792 = vmatprep.mubr.bf16.mxu0 0
      %2793 = vmatmul.mubr.bf16.gmra.mrb[0].mxu0 %v2747
      %v2794 = vpop.f32.mrb[0].mxu0
      %v2795 = vadd.f32 0.0, %v2794
      %v2796 = vpop.f32.mrb[0].mxu0
      %v2797 = vpop.f32.mrb[0].mxu0
      %v2798 = vpop.f32.mrb[0].mxu0
      %2799 = vdwg.mxu0
      %2800 = vrot.lane.b32.xlu0 %v2467, 96
      %v2801 = vpop.permute.xlu0 %2800
      %2802 = vrot.lane.b32.xlu0 %v2468, 96
      %v2803 = vpop.permute.xlu0 %2802
      %2804 = vrot.lane.b32.xlu0 %v2469, 32
      %v2805 = vpop.permute.xlu0 %2804
      %2806 = vrot.lane.b32.xlu0 %v2470, 32
      %v2807 = vpop.permute.xlu0 %2806
      %v2809 = vsel %vm1054, %v2801, 0
      %v2812 = vsel %vm1054, %v2803, 0
      %v2815 = vsel %vm1054, %v2805, 0
      %v2818 = vsel %vm1054, %v2807, 0
      %2820 = vmatprep.subr.bf16.mxu0 0
      %2821 = vmatpush1.bf16.xpose.msra.mxu0 %v2815
      %2822 = vmatprep.subr.bf16.mxu0 0
      %2823 = vmatpush1.bf16.xpose.msra.mxu0 %v2818
      %2824 = vmatprep.subr.bf16.mxu0 0
      %2825 = vmatpush1.bf16.xpose.msra.mxu0 0
      %2826 = vmatprep.subr.bf16.mxu0 0
      %2827 = vmatpush1.bf16.xpose.msra.mxu0 0
      %2828 = vmatprep.subr.bf16.mxu0 0
      %2829 = vmatpush1.bf16.xpose.msra.mxu0 0
      %2830 = vmatprep.subr.bf16.mxu0 0
      %2831 = vmatpush1.bf16.xpose.msra.mxu0 0
      %2832 = vmatprep.subr.bf16.mxu0 0
      %2833 = vmatpush1.bf16.xpose.msra.mxu0 0
      %2834 = vmatprep.subr.bf16.mxu0 0
      %2835 = vmatpush1.bf16.xpose.msra.mxu0 0
      %2836 = vmatprep.subr.bf16.mxu0 0
      %2837 = vmatpush1.bf16.xpose.msra.mxu0 0
      %2838 = vmatprep.subr.bf16.mxu0 0
      %2839 = vmatpush1.bf16.xpose.msra.mxu0 0
      %2840 = vmatprep.subr.bf16.mxu0 0
      %2841 = vmatpush1.bf16.xpose.msra.mxu0 0
      %2842 = vmatprep.subr.bf16.mxu0 0
      %2843 = vmatpush1.bf16.xpose.msra.mxu0 0
      %2844 = vmatprep.subr.bf16.mxu0 0
      %2845 = vmatpush1.bf16.xpose.msra.mxu0 0
      %2846 = vmatprep.subr.bf16.mxu0 0
      %2847 = vmatpush1.bf16.xpose.msra.mxu0 0
      %2848 = vmatprep.subr.bf16.mxu0 0
      %2849 = vmatpush1.bf16.xpose.msra.mxu0 0
      %2850 = vmatprep.subr.bf16.mxu0 0
      %2851 = vmatpush1.bf16.xpose.msra.mxu0 0
      %2852 = vmatprep.mubr.bf16.mxu0 0
      %2853 = vmatmul.mubr.bf16.gmra.mrb[0].mxu0 %v2809
      %v2854 = vpop.f32.mrb[0].mxu0
      %v2855 = vadd.f32 0.0, %v2854
      %v2856 = vpop.f32.mrb[0].mxu0
      %v2857 = vpop.f32.mrb[0].mxu0
      %v2858 = vadd.f32 0.0, %v2857
      %v2859 = vpop.f32.mrb[0].mxu0
      %2860 = vmatprep.mubr.bf16.mxu0 0
      %2861 = vmatmul.mubr.bf16.gmra.mrb[0].mxu0 %v2812
      %v2862 = vpop.f32.mrb[0].mxu0
      %v2863 = vadd.f32 0.0, %v2862
      %v2864 = vpop.f32.mrb[0].mxu0
      %v2865 = vpop.f32.mrb[0].mxu0
      %v2866 = vpop.f32.mrb[0].mxu0
      %2867 = vdwg.mxu0
      %v2868 = vsel %vm1115, %v2855, -inf
      %2869 = vmax.xlane.f32.xlu0 %v2868
      %v2870 = vpop.xlane.xlu0 %2869
      %v2871 = vsel %vm1115, %v2858, -inf
      %2872 = vmax.xlane.f32.xlu0 %v2871
      %v2873 = vpop.xlane.xlu0 %2872
      %v2874 = vsel %vm1122, %v2863, -inf
      %2875 = vmax.xlane.f32.xlu0 %v2874
      %v2876 = vpop.xlane.xlu0 %2875
      %v2877 = vsub.f32 %v2855, %v2870
      %v2878 = vsub.f32 %v2858, %v2873
      %v2879 = vsub.f32 %v2863, %v2876
      %v2880 = vmul.f32 %v2877, 1.442695
      %v2881 = vpow.pop %v2880
      %v2882 = vmul.f32 %v2878, 1.442695
      %v2883 = vpow.pop %v2882
      %v2884 = vmul.f32 %v2879, 1.442695
      %v2885 = vpow.pop %v2884
      %v2886 = vsel %vm1115, %v2881, 0.0
      %2887 = vadd.xlane.f32.xlu0 %v2886
      %v2888 = vpop.xlane.xlu0 %2887
      %v2889 = vsel %vm1115, %v2883, 0.0
      %2890 = vadd.xlane.f32.xlu0 %v2889
      %v2891 = vpop.xlane.xlu0 %2890
      %v2892 = vsel %vm1122, %v2885, 0.0
      %2893 = vadd.xlane.f32.xlu0 %v2892
      %v2894 = vpop.xlane.xlu0 %2893
      %v2895 = vrcp.pop %v2888
      %v2896 = vrcp.pop %v2891
      %v2897 = vrcp.pop %v2894
      %v2898 = vmul.f32 %v2881, %v2895
      %v2899 = vmul.f32 %v2883, %v2896
      %v2900 = vmul.f32 %v2885, %v2897
      %v2901 = vpack.c.bf16 %v2899, %v2898
      %v2902 = vpack.c.bf16 %v2900, %v2900
      %2903 = vrot.lane.b32.xlu0 %v2471, 96
      %v2904 = vpop.permute.xlu0 %2903
      %2905 = vrot.lane.b32.xlu0 %v2472, 96
      %v2906 = vpop.permute.xlu0 %2905
      %v2909 = vsel %vm1115, %v2901, 0
      %v2912 = vsel %vm1115, %v2902, 0
      %v2915 = vand.u32 %v2906, %v1159
      %2917 = vmatprep.subr.bf16.mxu0 0
      %2918 = vmatpush1.bf16.msra.mxu0 %v2904
      %2919 = vmatprep.subr.bf16.mxu0 0
      %2920 = vmatpush1.bf16.msra.mxu0 %v2915
      %2921 = vmatprep.subr.bf16.mxu0 0
      %2922 = vmatpush1.bf16.msra.mxu0 0
      %2923 = vmatprep.subr.bf16.mxu0 0
      %2924 = vmatpush1.bf16.msra.mxu0 0
      %2925 = vmatprep.subr.bf16.mxu0 0
      %2926 = vmatpush1.bf16.msra.mxu0 0
      %2927 = vmatprep.subr.bf16.mxu0 0
      %2928 = vmatpush1.bf16.msra.mxu0 0
      %2929 = vmatprep.subr.bf16.mxu0 0
      %2930 = vmatpush1.bf16.msra.mxu0 0
      %2931 = vmatprep.subr.bf16.mxu0 0
      %2932 = vmatpush1.bf16.msra.mxu0 0
      %2933 = vmatprep.subr.bf16.mxu0 0
      %2934 = vmatpush1.bf16.msra.mxu0 0
      %2935 = vmatprep.subr.bf16.mxu0 0
      %2936 = vmatpush1.bf16.msra.mxu0 0
      %2937 = vmatprep.subr.bf16.mxu0 0
      %2938 = vmatpush1.bf16.msra.mxu0 0
      %2939 = vmatprep.subr.bf16.mxu0 0
      %2940 = vmatpush1.bf16.msra.mxu0 0
      %2941 = vmatprep.subr.bf16.mxu0 0
      %2942 = vmatpush1.bf16.msra.mxu0 0
      %2943 = vmatprep.subr.bf16.mxu0 0
      %2944 = vmatpush1.bf16.msra.mxu0 0
      %2945 = vmatprep.subr.bf16.mxu0 0
      %2946 = vmatpush1.bf16.msra.mxu0 0
      %2947 = vmatprep.subr.bf16.mxu0 0
      %2948 = vmatpush1.bf16.msra.mxu0 0
      %2949 = vmatprep.mubr.bf16.mxu0 0
      %2950 = vmatmul.mubr.bf16.gmra.mrb[0].mxu0 %v2909
      %v2951 = vpop.f32.mrb[0].mxu0
      %v2952 = vadd.f32 0.0, %v2951
      %v2953 = vpop.f32.mrb[0].mxu0
      %v2954 = vpop.f32.mrb[0].mxu0
      %v2955 = vadd.f32 0.0, %v2954
      %v2956 = vpop.f32.mrb[0].mxu0
      %2957 = vmatprep.mubr.bf16.mxu0 0
      %2958 = vmatmul.mubr.bf16.gmra.mrb[0].mxu0 %v2912
      %v2959 = vpop.f32.mrb[0].mxu0
      %v2960 = vadd.f32 0.0, %v2959
      %v2961 = vpop.f32.mrb[0].mxu0
      %v2962 = vpop.f32.mrb[0].mxu0
      %v2963 = vpop.f32.mrb[0].mxu0
      %2964 = vdwg.mxu0
      %2965 = vrot.lane.b32.xlu0 %v2467, 80
      %v2966 = vpop.permute.xlu0 %2965
      %2967 = vrot.lane.b32.xlu0 %v2468, 80
      %v2968 = vpop.permute.xlu0 %2967
      %2969 = vrot.lane.b32.xlu0 %v2469, 16
      %v2970 = vpop.permute.xlu0 %2969
      %2971 = vrot.lane.b32.xlu0 %v2470, 16
      %v2972 = vpop.permute.xlu0 %2971
      %v2974 = vsel %vm1054, %v2966, 0
      %v2977 = vsel %vm1054, %v2968, 0
      %v2980 = vsel %vm1054, %v2970, 0
      %v2983 = vsel %vm1054, %v2972, 0
      %2985 = vmatprep.subr.bf16.mxu0 0
      %2986 = vmatpush1.bf16.xpose.msra.mxu0 %v2980
      %2987 = vmatprep.subr.bf16.mxu0 0
      %2988 = vmatpush1.bf16.xpose.msra.mxu0 %v2983
      %2989 = vmatprep.subr.bf16.mxu0 0
      %2990 = vmatpush1.bf16.xpose.msra.mxu0 0
      %2991 = vmatprep.subr.bf16.mxu0 0
      %2992 = vmatpush1.bf16.xpose.msra.mxu0 0
      %2993 = vmatprep.subr.bf16.mxu0 0
      %2994 = vmatpush1.bf16.xpose.msra.mxu0 0
      %2995 = vmatprep.subr.bf16.mxu0 0
      %2996 = vmatpush1.bf16.xpose.msra.mxu0 0
      %2997 = vmatprep.subr.bf16.mxu0 0
      %2998 = vmatpush1.bf16.xpose.msra.mxu0 0
      %2999 = vmatprep.subr.bf16.mxu0 0
      %3000 = vmatpush1.bf16.xpose.msra.mxu0 0
      %3001 = vmatprep.subr.bf16.mxu0 0
      %3002 = vmatpush1.bf16.xpose.msra.mxu0 0
      %3003 = vmatprep.subr.bf16.mxu0 0
      %3004 = vmatpush1.bf16.xpose.msra.mxu0 0
      %3005 = vmatprep.subr.bf16.mxu0 0
      %3006 = vmatpush1.bf16.xpose.msra.mxu0 0
      %3007 = vmatprep.subr.bf16.mxu0 0
      %3008 = vmatpush1.bf16.xpose.msra.mxu0 0
      %3009 = vmatprep.subr.bf16.mxu0 0
      %3010 = vmatpush1.bf16.xpose.msra.mxu0 0
      %3011 = vmatprep.subr.bf16.mxu0 0
      %3012 = vmatpush1.bf16.xpose.msra.mxu0 0
      %3013 = vmatprep.subr.bf16.mxu0 0
      %3014 = vmatpush1.bf16.xpose.msra.mxu0 0
      %3015 = vmatprep.subr.bf16.mxu0 0
      %3016 = vmatpush1.bf16.xpose.msra.mxu0 0
      %3017 = vmatprep.mubr.bf16.mxu0 0
      %3018 = vmatmul.mubr.bf16.gmra.mrb[0].mxu0 %v2974
      %v3019 = vpop.f32.mrb[0].mxu0
      %v3020 = vadd.f32 0.0, %v3019
      %v3021 = vpop.f32.mrb[0].mxu0
      %v3022 = vpop.f32.mrb[0].mxu0
      %v3023 = vadd.f32 0.0, %v3022
      %v3024 = vpop.f32.mrb[0].mxu0
      %3025 = vmatprep.mubr.bf16.mxu0 0
      %3026 = vmatmul.mubr.bf16.gmra.mrb[0].mxu0 %v2977
      %v3027 = vpop.f32.mrb[0].mxu0
      %v3028 = vadd.f32 0.0, %v3027
      %v3029 = vpop.f32.mrb[0].mxu0
      %v3030 = vpop.f32.mrb[0].mxu0
      %v3031 = vpop.f32.mrb[0].mxu0
      %3032 = vdwg.mxu0
      %v3033 = vsel %vm1115, %v3020, -inf
      %3034 = vmax.xlane.f32.xlu0 %v3033
      %v3035 = vpop.xlane.xlu0 %3034
      %v3036 = vsel %vm1115, %v3023, -inf
      %3037 = vmax.xlane.f32.xlu0 %v3036
      %v3038 = vpop.xlane.xlu0 %3037
      %v3039 = vsel %vm1122, %v3028, -inf
      %3040 = vmax.xlane.f32.xlu0 %v3039
      %v3041 = vpop.xlane.xlu0 %3040
      %v3042 = vsub.f32 %v3020, %v3035
      %v3043 = vsub.f32 %v3023, %v3038
      %v3044 = vsub.f32 %v3028, %v3041
      %v3045 = vmul.f32 %v3042, 1.442695
      %v3046 = vpow.pop %v3045
      %v3047 = vmul.f32 %v3043, 1.442695
      %v3048 = vpow.pop %v3047
      %v3049 = vmul.f32 %v3044, 1.442695
      %v3050 = vpow.pop %v3049
      %v3051 = vsel %vm1115, %v3046, 0.0
      %3052 = vadd.xlane.f32.xlu0 %v3051
      %v3053 = vpop.xlane.xlu0 %3052
      %v3054 = vsel %vm1115, %v3048, 0.0
      %3055 = vadd.xlane.f32.xlu0 %v3054
      %v3056 = vpop.xlane.xlu0 %3055
      %v3057 = vsel %vm1122, %v3050, 0.0
      %3058 = vadd.xlane.f32.xlu0 %v3057
      %v3059 = vpop.xlane.xlu0 %3058
      %v3060 = vrcp.pop %v3053
      %v3061 = vrcp.pop %v3056
      %v3062 = vrcp.pop %v3059
      %v3063 = vmul.f32 %v3046, %v3060
      %v3064 = vmul.f32 %v3048, %v3061
      %v3065 = vmul.f32 %v3050, %v3062
      %v3066 = vpack.c.bf16 %v3064, %v3063
      %v3067 = vpack.c.bf16 %v3065, %v3065
      %3068 = vrot.lane.b32.xlu0 %v2471, 80
      %v3069 = vpop.permute.xlu0 %3068
      %3070 = vrot.lane.b32.xlu0 %v2472, 80
      %v3071 = vpop.permute.xlu0 %3070
      %v3074 = vsel %vm1115, %v3066, 0
      %v3077 = vsel %vm1115, %v3067, 0
      %v3080 = vand.u32 %v3071, %v1159
      %3082 = vmatprep.subr.bf16.mxu0 0
      %3083 = vmatpush1.bf16.msra.mxu0 %v3069
      %3084 = vmatprep.subr.bf16.mxu0 0
      %3085 = vmatpush1.bf16.msra.mxu0 %v3080
      %3086 = vmatprep.subr.bf16.mxu0 0
      %3087 = vmatpush1.bf16.msra.mxu0 0
      %3088 = vmatprep.subr.bf16.mxu0 0
      %3089 = vmatpush1.bf16.msra.mxu0 0
      %3090 = vmatprep.subr.bf16.mxu0 0
      %3091 = vmatpush1.bf16.msra.mxu0 0
      %3092 = vmatprep.subr.bf16.mxu0 0
      %3093 = vmatpush1.bf16.msra.mxu0 0
      %3094 = vmatprep.subr.bf16.mxu0 0
      %3095 = vmatpush1.bf16.msra.mxu0 0
      %3096 = vmatprep.subr.bf16.mxu0 0
      %3097 = vmatpush1.bf16.msra.mxu0 0
      %3098 = vmatprep.subr.bf16.mxu0 0
      %3099 = vmatpush1.bf16.msra.mxu0 0
      %3100 = vmatprep.subr.bf16.mxu0 0
      %3101 = vmatpush1.bf16.msra.mxu0 0
      %3102 = vmatprep.subr.bf16.mxu0 0
      %3103 = vmatpush1.bf16.msra.mxu0 0
      %3104 = vmatprep.subr.bf16.mxu0 0
      %3105 = vmatpush1.bf16.msra.mxu0 0
      %3106 = vmatprep.subr.bf16.mxu0 0
      %3107 = vmatpush1.bf16.msra.mxu0 0
      %3108 = vmatprep.subr.bf16.mxu0 0
      %3109 = vmatpush1.bf16.msra.mxu0 0
      %3110 = vmatprep.subr.bf16.mxu0 0
      %3111 = vmatpush1.bf16.msra.mxu0 0
      %3112 = vmatprep.subr.bf16.mxu0 0
      %3113 = vmatpush1.bf16.msra.mxu0 0
      %3114 = vmatprep.mubr.bf16.mxu0 0
      %3115 = vmatmul.mubr.bf16.gmra.mrb[0].mxu0 %v3074
      %v3116 = vpop.f32.mrb[0].mxu0
      %v3117 = vadd.f32 0.0, %v3116
      %v3118 = vpop.f32.mrb[0].mxu0
      %v3119 = vpop.f32.mrb[0].mxu0
      %v3120 = vadd.f32 0.0, %v3119
      %v3121 = vpop.f32.mrb[0].mxu0
      %3122 = vmatprep.mubr.bf16.mxu0 0
      %3123 = vmatmul.mubr.bf16.gmra.mrb[0].mxu0 %v3077
      %v3124 = vpop.f32.mrb[0].mxu0
      %v3125 = vadd.f32 0.0, %v3124
      %v3126 = vpop.f32.mrb[0].mxu0
      %v3127 = vpop.f32.mrb[0].mxu0
      %v3128 = vpop.f32.mrb[0].mxu0
      %3129 = vdwg.mxu0
      %3133 = vrot.lane.b32.xlu0 %v2787, 16
      %v3134 = vpop.permute.xlu0 %3133
      %3135 = vrot.lane.b32.xlu0 %v2790, 16
      %v3136 = vpop.permute.xlu0 %3135
      %3137 = vrot.lane.b32.xlu0 %v2795, 16
      %v3138 = vpop.permute.xlu0 %3137
      %3145 = vrot.lane.b32.xlu0 %v2952, 32
      %v3146 = vpop.permute.xlu0 %3145
      %3147 = vrot.lane.b32.xlu0 %v2955, 32
      %v3148 = vpop.permute.xlu0 %3147
      %3149 = vrot.lane.b32.xlu0 %v2960, 32
      %v3150 = vpop.permute.xlu0 %3149
      %3157 = vrot.lane.b32.xlu0 %v3117, 48
      %v3158 = vpop.permute.xlu0 %3157
      %3159 = vrot.lane.b32.xlu0 %v3120, 48
      %v3160 = vpop.permute.xlu0 %3159
      %3161 = vrot.lane.b32.xlu0 %v3125, 48
      %v3162 = vpop.permute.xlu0 %3161
      %v3166 = vsel %vm1054, %v2618, %v3134
      %v3167 = vsel %vm1054, %v2621, %v3136
      %v3168 = vsel %vm1054, %v2626, %v3138
      %v3169 = vsel %vm1749, %v3166, %v3146
      %v3170 = vsel %vm1749, %v3167, %v3148
      %v3171 = vsel %vm1749, %v3168, %v3150
      %v3172 = vsel %vm1753, %v3169, %v3158
      %v3173 = vsel %vm1753, %v3170, %v3160
      %v3174 = vsel %vm1753, %v3171, %v3162
      %v3175 = vpack.c.bf16 %v3173, %v3172
      %v3176 = vpack.c.bf16 %v3174, %v3174
      %v3178 = vlaneseq
      %v3179 = vshrl.u32 %v3178, 7
      %v3180 = vsub.s32 0, %v3179
      %v3181 = vrot.slane %v2463, %v3180
      %v3191 = vunpack.c.l.b16 %v2454
      %v3192 = vunpack.c.l.b16 %v2455
      %v3193 = vunpack.c.l.b16 %v2456
      %v3194 = vunpack.c.l.b16 %v2457
      %v3195 = vunpack.c.l.b16 %v2458
      %v3196 = vunpack.c.l.b16 %v2459
      %v3197 = vunpack.c.l.b16 %v2460
      %v3198 = vunpack.c.l.b16 %v2461
      %v3199 = vpack.c.b16 %v3192, %v3191
      %v3200 = vpack.c.b16 %v3194, %v3193
      %v3201 = vpack.c.b16 %v3196, %v3195
      %v3202 = vpack.c.b16 %v3198, %v3197
      %v3208 = vsel %vm735, %v3175, 0
      %v3211 = vsel %vm735, %v3176, 0
      %3213 = vmatprep.subr.bf16.mxu0 0
      %3214 = vmatpush1.bf16.msra.mxu0 %v3199
      %3215 = vmatprep.subr.bf16.mxu0 0
      %3216 = vmatpush1.bf16.msra.mxu0 %v3200
      %3217 = vmatprep.subr.bf16.mxu0 0
      %3218 = vmatpush1.bf16.msra.mxu0 %v3201
      %3219 = vmatprep.subr.bf16.mxu0 0
      %3220 = vmatpush1.bf16.msra.mxu0 %v3202
      %3221 = vmatprep.subr.bf16.mxu0 0
      %3222 = vmatpush1.bf16.msra.mxu0 0
      %3223 = vmatprep.subr.bf16.mxu0 0
      %3224 = vmatpush1.bf16.msra.mxu0 0
      %3225 = vmatprep.subr.bf16.mxu0 0
      %3226 = vmatpush1.bf16.msra.mxu0 0
      %3227 = vmatprep.subr.bf16.mxu0 0
      %3228 = vmatpush1.bf16.msra.mxu0 0
      %3229 = vmatprep.subr.bf16.mxu0 0
      %3230 = vmatpush1.bf16.msra.mxu0 0
      %3231 = vmatprep.subr.bf16.mxu0 0
      %3232 = vmatpush1.bf16.msra.mxu0 0
      %3233 = vmatprep.subr.bf16.mxu0 0
      %3234 = vmatpush1.bf16.msra.mxu0 0
      %3235 = vmatprep.subr.bf16.mxu0 0
      %3236 = vmatpush1.bf16.msra.mxu0 0
      %3237 = vmatprep.subr.bf16.mxu0 0
      %3238 = vmatpush1.bf16.msra.mxu0 0
      %3239 = vmatprep.subr.bf16.mxu0 0
      %3240 = vmatpush1.bf16.msra.mxu0 0
      %3241 = vmatprep.subr.bf16.mxu0 0
      %3242 = vmatpush1.bf16.msra.mxu0 0
      %3243 = vmatprep.subr.bf16.mxu0 0
      %3244 = vmatpush1.bf16.msra.mxu0 0
      %3245 = vmatprep.mubr.bf16.mxu0 0
      %3246 = vmatmul.mubr.bf16.gmra.mrb[0].mxu0 %v3208
      %v3247 = vpop.f32.mrb[0].mxu0
      %v3248 = vadd.f32 %v3181, %v3247
      %v3249 = vpop.f32.mrb[0].mxu0
      %v3250 = vpop.f32.mrb[0].mxu0
      %v3251 = vadd.f32 %v3181, %v3250
      %v3252 = vpop.f32.mrb[0].mxu0
      %3253 = vmatprep.mubr.bf16.mxu0 0
      %3254 = vmatmul.mubr.bf16.gmra.mrb[0].mxu0 %v3211
      %v3255 = vpop.f32.mrb[0].mxu0
      %v3256 = vadd.f32 %v3181, %v3255
      %v3257 = vpop.f32.mrb[0].mxu0
      %v3258 = vpop.f32.mrb[0].mxu0
      %v3259 = vpop.f32.mrb[0].mxu0
      %3260 = vdwg.mxu0
      %v3261 = vadd.f32 %v2268, %v3248
      %v3262 = vadd.f32 %v2269, %v3251
      %v3263 = vadd.f32 %v2270, %v3256
      %s3264 = scalar_lea.vmem %s12, 1
      %v3265 = vld [vmem:[%s3264] sm:$0x1]
      %s3266 = scalar_lea.vmem %s13, 1
      %v3267 = vld [vmem:[%s3266] sm:$0x1]
      %v3268 = vsel %vm735, %v3261, 0.0
      %3269 = vadd.xlane.f32.xlu0 %v3268
      %v3270 = vpop.xlane.xlu0 %3269
      %v3271 = vsel %vm735, %v3262, 0.0
      %3272 = vadd.xlane.f32.xlu0 %v3271
      %v3273 = vpop.xlane.xlu0 %3272
      %v3274 = vsel %vm799, %v3263, 0.0
      %3275 = vadd.xlane.f32.xlu0 %v3274
      %v3276 = vpop.xlane.xlu0 %3275
      %v3277 = vmul.f32 %v3270, %v803
      %v3278 = vmul.f32 %v3273, %v803
      %v3279 = vmul.f32 %v3276, %v803
      %v3280 = vsub.f32 %v3261, %v3277
      %v3281 = vsub.f32 %v3262, %v3278
      %v3282 = vsub.f32 %v3263, %v3279
      %v3283 = vmul.f32 %v3280, %v3280
      %v3284 = vmul.f32 %v3281, %v3281
      %v3285 = vmul.f32 %v3282, %v3282
      %v3286 = vsel %vm735, %v3283, 0.0
      %3287 = vadd.xlane.f32.xlu0 %v3286
      %v3288 = vpop.xlane.xlu0 %3287
      %v3289 = vsel %vm735, %v3284, 0.0
      %3290 = vadd.xlane.f32.xlu0 %v3289
      %v3291 = vpop.xlane.xlu0 %3290
      %v3292 = vsel %vm799, %v3285, 0.0
      %3293 = vadd.xlane.f32.xlu0 %v3292
      %v3294 = vpop.xlane.xlu0 %3293
      %v3295 = vmul.f32 %v3288, %v803
      %v3296 = vmul.f32 %v3291, %v803
      %v3297 = vmul.f32 %v3294, %v803
      %v3298 = vadd.f32 %v3295, 1e-05
      %v3299 = vadd.f32 %v3296, 1e-05
      %v3300 = vadd.f32 %v3297, 1e-05
      %v3301 = vrsqrt.pop %v3298
      %v3302 = vrsqrt.pop %v3299
      %v3303 = vrsqrt.pop %v3300
      %v3304 = vmul.f32 %v3280, %v3301
      %v3305 = vmul.f32 %v3281, %v3302
      %v3306 = vmul.f32 %v3282, %v3303
      %v3308 = vlaneseq
      %v3309 = vshrl.u32 %v3308, 7
      %v3310 = vsub.s32 0, %v3309
      %v3311 = vrot.slane %v3265, %v3310
      %v3313 = vmul.f32 %v3304, %v3311
      %v3314 = vmul.f32 %v3305, %v3311
      %v3315 = vmul.f32 %v3306, %v3311
      %v3317 = vlaneseq
      %v3318 = vshrl.u32 %v3317, 7
      %v3319 = vsub.s32 0, %v3318
      %v3320 = vrot.slane %v3267, %v3319
      %v3322 = vadd.f32 %v3313, %v3320
      %v3323 = vadd.f32 %v3314, %v3320
      %v3324 = vadd.f32 %v3315, %v3320
      %v3325 = vpack.c.bf16 %v3323, %v3322
      %v3326 = vpack.c.bf16 %v3324, %v3324
      %s3327 = scalar_lea.vmem %s14, 64
      %v3328 = vld [vmem:[%s3327] sm:$0xff]
      %v3329 = vld [vmem:[%s3327 + $0x8] sm:$0xff]
      %v3330 = vld [vmem:[%s3327 + $0x10] sm:$0xff]
      %v3331 = vld [vmem:[%s3327 + $0x18] sm:$0xff]
      %v3332 = vld [vmem:[%s3327 + $0x20] sm:$0xff]
      %v3333 = vld [vmem:[%s3327 + $0x28] sm:$0xff]
      %v3334 = vld [vmem:[%s3327 + $0x30] sm:$0xff]
      %v3335 = vld [vmem:[%s3327 + $0x38] sm:$0xff]
      %s3336 = scalar_lea.vmem %s15, 2
      %v3337 = vld [vmem:[%s3336] sm:$0x3]
      %v3339 = vlaneseq
      %v3340 = vshrl.u32 %v3339, 7
      %v3341 = vsub.s32 0, %v3340
      %v3342 = vrot.slane %v3337, %v3341
      %v3343 = vlaneseq
      %v3344 = vshrl.u32 %v3343, 7
      %v3345 = vsub.s32 1, %v3344
      %v3346 = vrot.slane %v3337, %v3345
      %v3357 = vunpack.c.l.b16 %v3328
      %v3358 = vunpack.c.h.b16 %v3328
      %v3359 = vunpack.c.l.b16 %v3329
      %v3360 = vunpack.c.h.b16 %v3329
      %v3361 = vunpack.c.l.b16 %v3330
      %v3362 = vunpack.c.h.b16 %v3330
      %v3363 = vunpack.c.l.b16 %v3331
      %v3364 = vunpack.c.h.b16 %v3331
      %v3365 = vunpack.c.l.b16 %v3332
      %v3366 = vunpack.c.h.b16 %v3332
      %v3367 = vunpack.c.l.b16 %v3333
      %v3368 = vunpack.c.h.b16 %v3333
      %v3369 = vunpack.c.l.b16 %v3334
      %v3370 = vunpack.c.h.b16 %v3334
      %v3371 = vunpack.c.l.b16 %v3335
      %v3372 = vunpack.c.h.b16 %v3335
      %v3373 = vpack.c.b16 %v3359, %v3357
      %v3374 = vpack.c.b16 %v3360, %v3358
      %v3375 = vpack.c.b16 %v3363, %v3361
      %v3376 = vpack.c.b16 %v3364, %v3362
      %v3377 = vpack.c.b16 %v3367, %v3365
      %v3378 = vpack.c.b16 %v3368, %v3366
      %v3379 = vpack.c.b16 %v3371, %v3369
      %v3380 = vpack.c.b16 %v3372, %v3370
      %v3390 = vsel %vm735, %v3325, 0
      %v3393 = vsel %vm735, %v3326, 0
      %3395 = vmatprep.subr.bf16.mxu0 %v3374
      %3396 = vmatpush1.bf16.msra.mxu0 %v3373
      %3397 = vmatprep.subr.bf16.mxu0 %v3376
      %3398 = vmatpush1.bf16.msra.mxu0 %v3375
      %3399 = vmatprep.subr.bf16.mxu0 %v3378
      %3400 = vmatpush1.bf16.msra.mxu0 %v3377
      %3401 = vmatprep.subr.bf16.mxu0 %v3380
      %3402 = vmatpush1.bf16.msra.mxu0 %v3379
      %3403 = vmatprep.subr.bf16.mxu0 0
      %3404 = vmatpush1.bf16.msra.mxu0 0
      %3405 = vmatprep.subr.bf16.mxu0 0
      %3406 = vmatpush1.bf16.msra.mxu0 0
      %3407 = vmatprep.subr.bf16.mxu0 0
      %3408 = vmatpush1.bf16.msra.mxu0 0
      %3409 = vmatprep.subr.bf16.mxu0 0
      %3410 = vmatpush1.bf16.msra.mxu0 0
      %3411 = vmatprep.subr.bf16.mxu0 0
      %3412 = vmatpush1.bf16.msra.mxu0 0
      %3413 = vmatprep.subr.bf16.mxu0 0
      %3414 = vmatpush1.bf16.msra.mxu0 0
      %3415 = vmatprep.subr.bf16.mxu0 0
      %3416 = vmatpush1.bf16.msra.mxu0 0
      %3417 = vmatprep.subr.bf16.mxu0 0
      %3418 = vmatpush1.bf16.msra.mxu0 0
      %3419 = vmatprep.subr.bf16.mxu0 0
      %3420 = vmatpush1.bf16.msra.mxu0 0
      %3421 = vmatprep.subr.bf16.mxu0 0
      %3422 = vmatpush1.bf16.msra.mxu0 0
      %3423 = vmatprep.subr.bf16.mxu0 0
      %3424 = vmatpush1.bf16.msra.mxu0 0
      %3425 = vmatprep.subr.bf16.mxu0 0
      %3426 = vmatpush1.bf16.msra.mxu0 0
      %3427 = vmatprep.mubr.bf16.mxu0 0
      %3428 = vmatmul.mubr.bf16.gmra.mrb[0].mxu0 %v3390
      %v3429 = vpop.f32.mrb[0].mxu0
      %v3430 = vadd.f32 %v3342, %v3429
      %v3431 = vpop.f32.mrb[0].mxu0
      %v3432 = vadd.f32 %v3346, %v3431
      %v3433 = vpop.f32.mrb[0].mxu0
      %v3434 = vadd.f32 %v3342, %v3433
      %v3435 = vpop.f32.mrb[0].mxu0
      %v3436 = vadd.f32 %v3346, %v3435
      %3437 = vmatprep.mubr.bf16.mxu0 0
      %3438 = vmatmul.mubr.bf16.gmra.mrb[0].mxu0 %v3393
      %v3439 = vpop.f32.mrb[0].mxu0
      %v3440 = vadd.f32 %v3342, %v3439
      %v3441 = vpop.f32.mrb[0].mxu0
      %v3442 = vadd.f32 %v3346, %v3441
      %v3443 = vpop.f32.mrb[0].mxu0
      %v3444 = vpop.f32.mrb[0].mxu0
      %3445 = vdwg.mxu0
      %v3446 = vmul.f32 %v3430, %v3430
      %v3447 = vmul.f32 %v3432, %v3432
      %v3448 = vmul.f32 %v3434, %v3434
      %v3449 = vmul.f32 %v3436, %v3436
      %v3450 = vmul.f32 %v3440, %v3440
      %v3451 = vmul.f32 %v3442, %v3442
      %v3452 = vmul.f32 %v3430, %v3446
      %v3453 = vmul.f32 %v3432, %v3447
      %v3454 = vmul.f32 %v3434, %v3448
      %v3455 = vmul.f32 %v3436, %v3449
      %v3456 = vmul.f32 %v3440, %v3450
      %v3457 = vmul.f32 %v3442, %v3451
      %v3458 = vmul.f32 %v3452, 0.044715
      %v3459 = vmul.f32 %v3453, 0.044715
      %v3460 = vmul.f32 %v3454, 0.044715
      %v3461 = vmul.f32 %v3455, 0.044715
      %v3462 = vmul.f32 %v3456, 0.044715
      %v3463 = vmul.f32 %v3457, 0.044715
      %v3464 = vadd.f32 %v3430, %v3458
      %v3465 = vadd.f32 %v3432, %v3459
      %v3466 = vadd.f32 %v3434, %v3460
      %v3467 = vadd.f32 %v3436, %v3461
      %v3468 = vadd.f32 %v3440, %v3462
      %v3469 = vadd.f32 %v3442, %v3463
      %v3470 = vmul.f32 %v3464, 0.7978846
      %v3471 = vmul.f32 %v3465, 0.7978846
      %v3472 = vmul.f32 %v3466, 0.7978846
      %v3473 = vmul.f32 %v3467, 0.7978846
      %v3474 = vmul.f32 %v3468, 0.7978846
      %v3475 = vmul.f32 %v3469, 0.7978846
      %v3476 = vtanh.pop %v3470
      %v3477 = vtanh.pop %v3471
      %v3478 = vtanh.pop %v3472
      %v3479 = vtanh.pop %v3473
      %v3480 = vtanh.pop %v3474
      %v3481 = vtanh.pop %v3475
      %v3482 = vadd.f32 %v3476, 1.0
      %v3483 = vadd.f32 %v3477, 1.0
      %v3484 = vadd.f32 %v3478, 1.0
      %v3485 = vadd.f32 %v3479, 1.0
      %v3486 = vadd.f32 %v3480, 1.0
      %v3487 = vadd.f32 %v3481, 1.0
      %v3488 = vmul.f32 %v3482, 0.5
      %v3489 = vmul.f32 %v3483, 0.5
      %v3490 = vmul.f32 %v3484, 0.5
      %v3491 = vmul.f32 %v3485, 0.5
      %v3492 = vmul.f32 %v3486, 0.5
      %v3493 = vmul.f32 %v3487, 0.5
      %v3494 = vmul.f32 %v3430, %v3488
      %v3495 = vmul.f32 %v3432, %v3489
      %v3496 = vmul.f32 %v3434, %v3490
      %v3497 = vmul.f32 %v3436, %v3491
      %v3498 = vmul.f32 %v3440, %v3492
      %v3499 = vmul.f32 %v3442, %v3493
      %v3500 = vpack.c.bf16 %v3496, %v3494
      %v3501 = vpack.c.bf16 %v3497, %v3495
      %v3502 = vpack.c.bf16 %v3498, %v3498
      %v3503 = vpack.c.bf16 %v3499, %v3499
      %s3504 = scalar_lea.vmem %s16, 128
      %v3505 = vld [vmem:[%s3504] sm:$0xf]
      %v3506 = vld [vmem:[%s3504 + $0x4] sm:$0xf]
      %v3507 = vld [vmem:[%s3504 + $0x8] sm:$0xf]
      %v3508 = vld [vmem:[%s3504 + $0xc] sm:$0xf]
      %v3509 = vld [vmem:[%s3504 + $0x10] sm:$0xf]
      %v3510 = vld [vmem:[%s3504 + $0x14] sm:$0xf]
      %v3511 = vld [vmem:[%s3504 + $0x18] sm:$0xf]
      %v3512 = vld [vmem:[%s3504 + $0x1c] sm:$0xf]
      %v3513 = vld [vmem:[%s3504 + $0x20] sm:$0xf]
      %v3514 = vld [vmem:[%s3504 + $0x24] sm:$0xf]
      %v3515 = vld [vmem:[%s3504 + $0x28] sm:$0xf]
      %v3516 = vld [vmem:[%s3504 + $0x2c] sm:$0xf]
      %v3517 = vld [vmem:[%s3504 + $0x30] sm:$0xf]
      %v3518 = vld [vmem:[%s3504 + $0x34] sm:$0xf]
      %v3519 = vld [vmem:[%s3504 + $0x38] sm:$0xf]
      %v3520 = vld [vmem:[%s3504 + $0x3c] sm:$0xf]
      %v3521 = vld [vmem:[%s3504 + $0x40] sm:$0xf]
      %v3522 = vld [vmem:[%s3504 + $0x44] sm:$0xf]
      %v3523 = vld [vmem:[%s3504 + $0x48] sm:$0xf]
      %v3524 = vld [vmem:[%s3504 + $0x4c] sm:$0xf]
      %v3525 = vld [vmem:[%s3504 + $0x50] sm:$0xf]
      %v3526 = vld [vmem:[%s3504 + $0x54] sm:$0xf]
      %v3527 = vld [vmem:[%s3504 + $0x58] sm:$0xf]
      %v3528 = vld [vmem:[%s3504 + $0x5c] sm:$0xf]
      %v3529 = vld [vmem:[%s3504 + $0x60] sm:$0xf]
      %v3530 = vld [vmem:[%s3504 + $0x64] sm:$0xf]
      %v3531 = vld [vmem:[%s3504 + $0x68] sm:$0xf]
      %v3532 = vld [vmem:[%s3504 + $0x6c] sm:$0xf]
      %v3533 = vld [vmem:[%s3504 + $0x70] sm:$0xf]
      %v3534 = vld [vmem:[%s3504 + $0x74] sm:$0xf]
      %v3535 = vld [vmem:[%s3504 + $0x78] sm:$0xf]
      %v3536 = vld [vmem:[%s3504 + $0x7c] sm:$0xf]
      %v3569 = vunpack.c.l.b16 %v3505
      %v3570 = vunpack.c.l.b16 %v3506
      %v3571 = vunpack.c.l.b16 %v3507
      %v3572 = vunpack.c.l.b16 %v3508
      %v3573 = vunpack.c.l.b16 %v3509
      %v3574 = vunpack.c.l.b16 %v3510
      %v3575 = vunpack.c.l.b16 %v3511
      %v3576 = vunpack.c.l.b16 %v3512
      %v3577 = vunpack.c.l.b16 %v3513
      %v3578 = vunpack.c.l.b16 %v3514
      %v3579 = vunpack.c.l.b16 %v3515
      %v3580 = vunpack.c.l.b16 %v3516
      %v3581 = vunpack.c.l.b16 %v3517
      %v3582 = vunpack.c.l.b16 %v3518
      %v3583 = vunpack.c.l.b16 %v3519
      %v3584 = vunpack.c.l.b16 %v3520
      %v3585 = vunpack.c.l.b16 %v3521
      %v3586 = vunpack.c.l.b16 %v3522
      %v3587 = vunpack.c.l.b16 %v3523
      %v3588 = vunpack.c.l.b16 %v3524
      %v3589 = vunpack.c.l.b16 %v3525
      %v3590 = vunpack.c.l.b16 %v3526
      %v3591 = vunpack.c.l.b16 %v3527
      %v3592 = vunpack.c.l.b16 %v3528
      %v3593 = vunpack.c.l.b16 %v3529
      %v3594 = vunpack.c.l.b16 %v3530
      %v3595 = vunpack.c.l.b16 %v3531
      %v3596 = vunpack.c.l.b16 %v3532
      %v3597 = vunpack.c.l.b16 %v3533
      %v3598 = vunpack.c.l.b16 %v3534
      %v3599 = vunpack.c.l.b16 %v3535
      %v3600 = vunpack.c.l.b16 %v3536
      %v3601 = vpack.c.b16 %v3570, %v3569
      %v3602 = vpack.c.b16 %v3572, %v3571
      %v3603 = vpack.c.b16 %v3574, %v3573
      %v3604 = vpack.c.b16 %v3576, %v3575
      %v3605 = vpack.c.b16 %v3578, %v3577
      %v3606 = vpack.c.b16 %v3580, %v3579
      %v3607 = vpack.c.b16 %v3582, %v3581
      %v3608 = vpack.c.b16 %v3584, %v3583
      %v3609 = vpack.c.b16 %v3586, %v3585
      %v3610 = vpack.c.b16 %v3588, %v3587
      %v3611 = vpack.c.b16 %v3590, %v3589
      %v3612 = vpack.c.b16 %v3592, %v3591
      %v3613 = vpack.c.b16 %v3594, %v3593
      %v3614 = vpack.c.b16 %v3596, %v3595
      %v3615 = vpack.c.b16 %v3598, %v3597
      %v3616 = vpack.c.b16 %v3600, %v3599
      %3633 = vmatprep.subr.bf16.mxu0 0
      %3634 = vmatpush1.bf16.msra.mxu0 %v3601
      %3635 = vmatprep.subr.bf16.mxu0 0
      %3636 = vmatpush1.bf16.msra.mxu0 %v3602
      %3637 = vmatprep.subr.bf16.mxu0 0
      %3638 = vmatpush1.bf16.msra.mxu0 %v3603
      %3639 = vmatprep.subr.bf16.mxu0 0
      %3640 = vmatpush1.bf16.msra.mxu0 %v3604
      %3641 = vmatprep.subr.bf16.mxu0 0
      %3642 = vmatpush1.bf16.msra.mxu0 %v3605
      %3643 = vmatprep.subr.bf16.mxu0 0
      %3644 = vmatpush1.bf16.msra.mxu0 %v3606
      %3645 = vmatprep.subr.bf16.mxu0 0
      %3646 = vmatpush1.bf16.msra.mxu0 %v3607
      %3647 = vmatprep.subr.bf16.mxu0 0
      %3648 = vmatpush1.bf16.msra.mxu0 %v3608
      %3649 = vmatprep.subr.bf16.mxu0 0
      %3650 = vmatpush1.bf16.msra.mxu0 %v3609
      %3651 = vmatprep.subr.bf16.mxu0 0
      %3652 = vmatpush1.bf16.msra.mxu0 %v3610
      %3653 = vmatprep.subr.bf16.mxu0 0
      %3654 = vmatpush1.bf16.msra.mxu0 %v3611
      %3655 = vmatprep.subr.bf16.mxu0 0
      %3656 = vmatpush1.bf16.msra.mxu0 %v3612
      %3657 = vmatprep.subr.bf16.mxu0 0
      %3658 = vmatpush1.bf16.msra.mxu0 %v3613
      %3659 = vmatprep.subr.bf16.mxu0 0
      %3660 = vmatpush1.bf16.msra.mxu0 %v3614
      %3661 = vmatprep.subr.bf16.mxu0 0
      %3662 = vmatpush1.bf16.msra.mxu0 %v3615
      %3663 = vmatprep.subr.bf16.mxu0 0
      %3664 = vmatpush1.bf16.msra.mxu0 %v3616
      %3665 = vmatprep.mubr.bf16.mxu0 %v3501
      %3666 = vmatmul.mubr.bf16.gmra.mrb[0].mxu0 %v3500
      %v3667 = vpop.f32.mrb[0].mxu0
      %v3668 = vadd.f32 0.0, %v3667
      %v3669 = vpop.f32.mrb[0].mxu0
      %v3670 = vpop.f32.mrb[0].mxu0
      %v3671 = vadd.f32 0.0, %v3670
      %v3672 = vpop.f32.mrb[0].mxu0
      %3673 = vmatprep.mubr.bf16.mxu0 %v3503
      %3674 = vmatmul.mubr.bf16.gmra.mrb[0].mxu0 %v3502
      %v3675 = vpop.f32.mrb[0].mxu0
      %v3676 = vadd.f32 0.0, %v3675
      %v3677 = vpop.f32.mrb[0].mxu0
      %v3678 = vpop.f32.mrb[0].mxu0
      %v3679 = vpop.f32.mrb[0].mxu0
      %3680 = vdwg.mxu0
      %v3681 = vadd.f32 %v3261, %v3668
      %v3682 = vadd.f32 %v3262, %v3671
      %v3683 = vadd.f32 %v3263, %v3676
      %s3684 = scalar_lea.vmem %s17, 1
      %v3685 = vld [vmem:[%s3684] sm:$0x1]
      %v3687 = vlaneseq
      %v3688 = vshrl.u32 %v3687, 7
      %v3689 = vsub.s32 0, %v3688
      %v3690 = vrot.slane %v3685, %v3689
      %v3692 = vadd.f32 %v3681, %v3690
      %v3693 = vadd.f32 %v3682, %v3690
      %v3694 = vadd.f32 %v3683, %v3690
      %v3695 = vld [vmem:[%s18] sm:$0x1]
      %v3696 = vld [vmem:[%s19] sm:$0x1]
      %v3697 = vsel %vm735, %v3692, 0.0
      %3698 = vadd.xlane.f32.xlu0 %v3697
      %v3699 = vpop.xlane.xlu0 %3698
      %v3700 = vsel %vm735, %v3693, 0.0
      %3701 = vadd.xlane.f32.xlu0 %v3700
      %v3702 = vpop.xlane.xlu0 %3701
      %v3703 = vsel %vm799, %v3694, 0.0
      %3704 = vadd.xlane.f32.xlu0 %v3703
      %v3705 = vpop.xlane.xlu0 %3704
      %v3706 = vmul.f32 %v3699, %v803
      %v3707 = vmul.f32 %v3702, %v803
      %v3708 = vmul.f32 %v3705, %v803
      %v3709 = vsub.f32 %v3692, %v3706
      %v3710 = vsub.f32 %v3693, %v3707
      %v3711 = vsub.f32 %v3694, %v3708
      %v3712 = vmul.f32 %v3709, %v3709
      %v3713 = vmul.f32 %v3710, %v3710
      %v3714 = vmul.f32 %v3711, %v3711
      %v3715 = vsel %vm735, %v3712, 0.0
      %3716 = vadd.xlane.f32.xlu0 %v3715
      %v3717 = vpop.xlane.xlu0 %3716
      %v3718 = vsel %vm735, %v3713, 0.0
      %3719 = vadd.xlane.f32.xlu0 %v3718
      %v3720 = vpop.xlane.xlu0 %3719
      %v3721 = vsel %vm799, %v3714, 0.0
      %3722 = vadd.xlane.f32.xlu0 %v3721
      %v3723 = vpop.xlane.xlu0 %3722
      %v3724 = vmul.f32 %v3717, %v803
      %v3725 = vmul.f32 %v3720, %v803
      %v3726 = vmul.f32 %v3723, %v803
      %v3727 = vadd.f32 %v3724, 1e-05
      %v3728 = vadd.f32 %v3725, 1e-05
      %v3729 = vadd.f32 %v3726, 1e-05
      %v3730 = vrsqrt.pop %v3727
      %v3731 = vrsqrt.pop %v3728
      %v3732 = vrsqrt.pop %v3729
      %v3733 = vmul.f32 %v3709, %v3730
      %v3734 = vmul.f32 %v3710, %v3731
      %v3735 = vmul.f32 %v3711, %v3732
      %v3737 = vlaneseq
      %v3738 = vshrl.u32 %v3737, 7
      %v3739 = vsub.s32 0, %v3738
      %v3740 = vrot.slane %v3695, %v3739
      %v3742 = vmul.f32 %v3733, %v3740
      %v3743 = vmul.f32 %v3734, %v3740
      %v3744 = vmul.f32 %v3735, %v3740
      %v3746 = vlaneseq
      %v3747 = vshrl.u32 %v3746, 7
      %v3748 = vsub.s32 0, %v3747
      %v3749 = vrot.slane %v3696, %v3748
      %v3751 = vadd.f32 %v3742, %v3749
      %v3752 = vadd.f32 %v3743, %v3749
      %v3753 = vadd.f32 %v3744, %v3749
      %3754 = vst.msk [vmem:[%s629] sm:$0xff] %vm735, %v3751
      %3755 = vst.msk [vmem:[%s629 + $0x8] sm:$0xff] %vm735, %v3752
      %3756 = vst.msk [vmem:[%s629 + $0x10] sm:$0x1] %vm799, %v3753
      %p3757 = scmp.lt.s32.totalorder %s31, 1
      %s3758 = scalar_select %p3757, %s31, 1
      %s3759 = smul.addr %s3758, 3
      %s3760 = smul.addr %s3759, 8
      %s3761 = scalar_lea.vmem %s20, %s3760
      // Predicated region
      $region101: #{blip_forward.2} parent=99 // pred_check
        %p3762 = pneg %p474
      $region102: #{blip_forward.2} parent=99 // pred_check_branch
        %3764 = sbr.rel (%p3762) target = $region104
      $region103: #{blip_forward.2} parent=99 // pred_region
        _
      $region104: #{blip_forward.2} parent=99 // pred_fallthru
        _
    $region100: #{blip_forward.2} parent=5 // pred_fallthru
      _
    %p3765 = scmp.le.s32.totalorder 2, %s26
    // Predicated region
    $region105: #{blip_forward.2} parent=5 // pred_check
      %p3766 = pneg %p3765
    $region106: #{blip_forward.2} parent=5 // pred_check_branch
      %3768 = sbr.rel (%p3766) target = $region108
    $region107: #{blip_forward.2} parent=5 // pred_region
      %s3769 = ssub.s32 %s26, 2
      // Predicated region
      $region109: #{blip_forward.2} parent=107 // pred_check
        %p3770 = pneg %p480
      $region110: #{blip_forward.2} parent=107 // pred_check_branch
        %3772 = sbr.rel (%p3770) target = $region112
      $region111: #{blip_forward.2} parent=107 // pred_region
        %p3773 = scmp.lt.s32.totalorder %s32, 1
        %s3774 = scalar_select %p3773, %s32, 1
        %s3775 = smul.addr %s3774, 3
        %s3776 = smul.addr %s3775, 8
        %s3777 = scalar_lea.vmem %s20, %s3776
      $region112: #{blip_forward.2} parent=107 // pred_fallthru
        _
    $region108: #{blip_forward.2} parent=5 // pred_fallthru
      _
  $region6: #{blip_forward.2} parent=0 // loop_footer
    %s30 = sadd.s32 1, %s26
  $region7: #{blip_forward.2} parent=0 // loop_footer_branch
    %25 = sbr.rel target = $region3
  $region8: #{blip_forward.2} parent=0 // loop_exit
    _

// kernel: blip_forward.3
$region0: #{blip_forward.3}
  #allocation0 [shape = 'u32[]', space=smem, size = 0x4, offset = 0x4, fixed_abs, tag = 'smem constant byte address 0x4 - core index']
  #allocation1 [shape = 'u32[144,128]{1,0:T(1,128)}', space=vmem, size = 0x12000, scoped, tag = 'internal scratch']
  %s0 = inlined_call_operand.smem [shape: u32[32], index: -1, kind: input, shape index: {}]
  %s1 = sld [smem:[%s0]]
  %s2 = scalar_lea.smem %s0, 1
  %s3 = sld [smem:[%s2]]
  %s4 = scalar_lea.smem %s0, 2
  %s5 = sld [smem:[%s4]]
  %s6 = scalar_lea.smem %s0, 3
  %s7 = sld [smem:[%s6]]
  %s8 = scalar_lea.smem %s0, 4
  %s9 = sld [smem:[%s8]]
  %s10 = scalar_lea.smem %s0, 5
  %s11 = sld [smem:[%s10]]
  %s12 = scalar_lea.smem %s0, 6
  %s13 = sld [smem:[%s12]]
  %s14 = scalar_lea.smem %s0, 7
  %s15 = sld [smem:[%s14]]
  %s16 = scalar_lea.smem %s0, 8
  %s17 = sld [smem:[%s16]]
  %s18 = scalar_lea.smem %s0, 9
  %s19 = sld [smem:[%s18]]
  %s20 = scalar_lea.smem %s0, 10
  %s21 = sld [smem:[%s20]]
  %s22 = scalar_lea.smem %s0, 11
  %s23 = sld [smem:[%s22]]
  %s24 = scalar_lea.smem %s0, 12
  %s25 = sld [smem:[%s24]]
  %s26 = scalar_lea.smem %s0, 13
  %s27 = sld [smem:[%s26]]
  %s28 = scalar_lea.smem %s0, 14
  %s29 = sld [smem:[%s28]]
  %s30 = scalar_lea.smem %s0, 15
  %s31 = sld [smem:[%s30]]
  %s32 = scalar_lea.smem %s0, 16
  %s33 = sld [smem:[%s32]]
  %s34 = scalar_lea.smem %s0, 17
  %s35 = sld [smem:[%s34]]
  %s36 = scalar_lea.smem %s0, 18
  %s37 = sld [smem:[%s36]]
  %s38 = scalar_lea.smem %s0, 19
  %s39 = sld [smem:[%s38]]
  %s40 = scalar_lea.smem %s0, 20
  %s41 = sld [smem:[%s40]]
  %s42 = scalar_lea.smem %s0, 21
  %s43 = sld [smem:[%s42]]
  %s44 = scalar_lea.smem %s0, 22
  %s45 = sld [smem:[%s44]]
  %s46 = scalar_lea.smem %s0, 23
  %s47 = sld [smem:[%s46]]
  %s48 = scalar_lea.smem %s0, 24
  %s49 = sld [smem:[%s48]]
  %s50 = scalar_lea.smem %s0, 25
  %s51 = sld [smem:[%s50]]
  %s52 = scalar_lea.smem %s0, 26
  %s53 = sld [smem:[%s52]]
  %s54 = scalar_lea.smem %s0, 27
  %s55 = sld [smem:[%s54]]
  %s56 = scalar_lea.smem %s0, 28
  %s57 = sld [smem:[%s56]]
  %s58 = scalar_lea.smem %s0, 29
  %s59 = sld [smem:[%s58]]
  %s60 = scalar_lea.smem %s0, 30
  %s61 = sld [smem:[%s60]]
  %s62 = scalar_lea.smem %s0, 31
  %s63 = sld [smem:[%s62]]
  %s64 = sld [smem:[#allocation0]]
  $region157: #{blip_forward.3} parent=0
    _
  %s66 = ssub.s32 1, %s64
  %s67 = scalar_select 0, %s66, %s64
  $region1: #{blip_forward.3} parent=0
    #allocation2 [shape = 'u8[8192]{0}', space=vmem, size = 0x2000, scoped, tag = 'output window, operand 0']
    #allocation3 [shape = 's32[2]{0}', space=sflag, size = 0x8, scoped, tag = 'scoped memory for blip_forward.3']
    %68 = vsyncpa [#allocation3], 0
    %s69 = scalar_lea.sflag [#allocation3], 1
    %70 = vsyncpa %s69, 0
    loop: start=0, step=1, limit=4
    $region2: #{blip_forward.3} parent=1 // loop_pre_header
      _
    $region3: #{blip_forward.3} parent=1 // loop_header
      %s72 = sphi 0, %s76
      %p73 = scmp.ge.s32.totalorder %s72, 4
      %s82 = sphi 0, %s84
      %s85 = sphi 0, %s82
      %s86 = sphi 0, %s85
      %s102 = sphi 0, %s86
      %s108 = sphi 0, %s110
      %s111 = sphi 0, %s108
      %s112 = sphi 0, %s111
      %s128 = sphi 0, %s112
      %s134 = sphi 0, %s136
      %s137 = sphi 0, %s134
      %s138 = sphi 0, %s137
      %s154 = sphi 0, %s138
      %s158 = sphi 0, %s158
      %s160 = sphi 0, %s158
      %s161 = sphi 0, %s160
      %s175 = sphi 0, %s161
      %s179 = sphi 0, %s179
      %s181 = sphi 0, %s179
      %s182 = sphi 0, %s181
      %s196 = sphi 0, %s182
      %s200 = sphi 0, %s200
      %s202 = sphi 0, %s200
      %s203 = sphi 0, %s202
      %s217 = sphi 0, %s203
      %s221 = sphi 0, %s221
      %s223 = sphi 0, %s221
      %s224 = sphi 0, %s223
      %s238 = sphi 0, %s224
      %s242 = sphi 0, %s242
      %s244 = sphi 0, %s242
      %s245 = sphi 0, %s244
      %s259 = sphi 0, %s245
      %s263 = sphi 0, %s263
      %s265 = sphi 0, %s263
      %s266 = sphi 0, %s265
      %s280 = sphi 0, %s266
      %s284 = sphi 0, %s284
      %s286 = sphi 0, %s284
      %s287 = sphi 0, %s286
      %s301 = sphi 0, %s287
      %s305 = sphi 0, %s305
      %s307 = sphi 0, %s305
      %s308 = sphi 0, %s307
      %s322 = sphi 0, %s308
      %s326 = sphi 0, %s326
      %s328 = sphi 0, %s326
      %s329 = sphi 0, %s328
      %s343 = sphi 0, %s329
      %s347 = sphi 0, %s347
      %s349 = sphi 0, %s347
      %s350 = sphi 0, %s349
      %s364 = sphi 0, %s350
      %s368 = sphi 0, %s368
      %s370 = sphi 0, %s368
      %s371 = sphi 0, %s370
      %s385 = sphi 0, %s371
      %s389 = sphi 0, %s389
      %s391 = sphi 0, %s389
      %s392 = sphi 0, %s391
      %s406 = sphi 0, %s392
      %s410 = sphi 0, %s410
      %s412 = sphi 0, %s410
      %s413 = sphi 0, %s412
      %s427 = sphi 0, %s413
      %s431 = sphi 0, %s431
      %s433 = sphi 0, %s431
      %s434 = sphi 0, %s433
      %s448 = sphi 0, %s434
      %s452 = sphi 0, %s452
      %s454 = sphi 0, %s452
      %s455 = sphi 0, %s454
      %s469 = sphi 0, %s455
      %s473 = sphi 0, %s473
      %s475 = sphi 0, %s473
      %s476 = sphi 0, %s475
      %s490 = sphi 0, %s476
      %s494 = sphi 0, %s494
      %s496 = sphi 0, %s494
      %s497 = sphi 0, %s496
      %s511 = sphi 0, %s497
      %s515 = sphi 0, %s515
      %s517 = sphi 0, %s515
      %s518 = sphi 0, %s517
      %s532 = sphi 0, %s518
      %s536 = sphi 0, %s536
      %s538 = sphi 0, %s536
      %s539 = sphi 0, %s538
      %s553 = sphi 0, %s539
      %s557 = sphi 0, %s557
      %s559 = sphi 0, %s557
      %s560 = sphi 0, %s559
      %s574 = sphi 0, %s560
      %s578 = sphi 0, %s578
      %s580 = sphi 0, %s578
      %s581 = sphi 0, %s580
      %s595 = sphi 0, %s581
      %s599 = sphi 0, %s599
      %s601 = sphi 0, %s599
      %s602 = sphi 0, %s601
      %s616 = sphi 0, %s602
      %s620 = sphi 0, %s620
      %s622 = sphi 0, %s620
      %s623 = sphi 0, %s622
      %s637 = sphi 0, %s623
      %s641 = sphi 0, %s641
      %s643 = sphi 0, %s641
      %s644 = sphi 0, %s643
      %s658 = sphi 0, %s644
      %s662 = sphi 0, %s662
      %s664 = sphi 0, %s662
      %s665 = sphi 0, %s664
      %s679 = sphi 0, %s665
      %s683 = sphi 0, %s683
      %s685 = sphi 0, %s683
      %s686 = sphi 0, %s685
      %s700 = sphi 0, %s686
      %s704 = sphi 0, %s704
      %s706 = sphi 0, %s704
      %s707 = sphi 0, %s706
      %s721 = sphi 0, %s707
      %s725 = sphi 0, %s725
      %s727 = sphi 0, %s725
      %s728 = sphi 0, %s727
      %s742 = sphi 0, %s728
      %s748 = sphi 0, %s750
      %s751 = sphi 0, %s748
      %s752 = sphi 0, %s751
      %s768 = sphi 0, %s752
    $region4: #{blip_forward.3} parent=1 // loop_header_branch
      %75 = sbr.rel (%p73) target = $region8
    $region5: #{blip_forward.3} parent=1 // loop_body
      %s77 = ssub.s32 %s72, 1
      %s78 = ssub.s32 %s72, 2
      %s79 = sadd.s32 %s72, 1
      %s80 = ssub.s32 %s72, %s79
      %p81 = scmp.eq.s32.totalorder %s80, 0
      %s83 = sadd.s32 %s82, 1
      %s84 = scalar_select %p81, %s82, %s83
      %p87 = pneg %p81
      %p88 = scmp.eq.s32.totalorder %s72, 1
      %p89 = por %p87, %p88
      %p90 = scmp.ne.s32.totalorder %s82, %s85
      %p91 = scmp.eq.s32.totalorder %s72, 0
      %p92 = por %p90, %p91
      %p93 = scmp.ne.s32.totalorder %s82, %s85
      %p94 = scmp.eq.s32.totalorder %s77, 1
      %p95 = por %p93, %p94
      %p96 = scmp.ne.s32.totalorder %s85, %s86
      %p97 = scmp.eq.s32.totalorder %s77, 0
      %p98 = por %p96, %p97
      %p99 = scmp.ne.s32.totalorder %s85, %s86
      %p100 = scmp.eq.s32.totalorder %s78, 1
      %p101 = por %p99, %p100
      %p103 = scmp.ne.s32.totalorder %s86, %s102
      %p104 = scmp.eq.s32.totalorder %s78, 0
      %p105 = por %p103, %p104
      %s106 = ssub.s32 %s72, %s79
      %p107 = scmp.eq.s32.totalorder %s106, 0
      %s109 = sadd.s32 %s108, 1
      %s110 = scalar_select %p107, %s108, %s109
      %p113 = pneg %p107
      %p114 = scmp.eq.s32.totalorder %s72, 1
      %p115 = por %p113, %p114
      %p116 = scmp.ne.s32.totalorder %s108, %s111
      %p117 = scmp.eq.s32.totalorder %s72, 0
      %p118 = por %p116, %p117
      %p119 = scmp.ne.s32.totalorder %s108, %s111
      %p120 = scmp.eq.s32.totalorder %s77, 1
      %p121 = por %p119, %p120
      %p122 = scmp.ne.s32.totalorder %s111, %s112
      %p123 = scmp.eq.s32.totalorder %s77, 0
      %p124 = por %p122, %p123
      %p125 = scmp.ne.s32.totalorder %s111, %s112
      %p126 = scmp.eq.s32.totalorder %s78, 1
      %p127 = por %p125, %p126
      %p129 = scmp.ne.s32.totalorder %s112, %s128
      %p130 = scmp.eq.s32.totalorder %s78, 0
      %p131 = por %p129, %p130
      %s132 = ssub.s32 %s72, %s79
      %p133 = scmp.eq.s32.totalorder %s132, 0
      %s135 = sadd.s32 %s134, 1
      %s136 = scalar_select %p133, %s134, %s135
      %p139 = pneg %p133
      %p140 = scmp.eq.s32.totalorder %s72, 1
      %p141 = por %p139, %p140
      %p142 = scmp.ne.s32.totalorder %s134, %s137
      %p143 = scmp.eq.s32.totalorder %s72, 0
      %p144 = por %p142, %p143
      %p145 = scmp.ne.s32.totalorder %s134, %s137
      %p146 = scmp.eq.s32.totalorder %s77, 1
      %p147 = por %p145, %p146
      %p148 = scmp.ne.s32.totalorder %s137, %s138
      %p149 = scmp.eq.s32.totalorder %s77, 0
      %p150 = por %p148, %p149
      %p151 = scmp.ne.s32.totalorder %s137, %s138
      %p152 = scmp.eq.s32.totalorder %s78, 1
      %p153 = por %p151, %p152
      %p155 = scmp.ne.s32.totalorder %s138, %s154
      %p156 = scmp.eq.s32.totalorder %s78, 0
      %p157 = por %p155, %p156
      %s159 = sadd.s32 %s158, 1
      %p162 = scmp.eq.s32.totalorder %s72, 1
      %p163 = scmp.ne.s32.totalorder %s158, %s160
      %p164 = scmp.eq.s32.totalorder %s72, 0
      %p165 = por %p163, %p164
      %p166 = scmp.ne.s32.totalorder %s158, %s160
      %p167 = scmp.eq.s32.totalorder %s77, 1
      %p168 = por %p166, %p167
      %p169 = scmp.ne.s32.totalorder %s160, %s161
      %p170 = scmp.eq.s32.totalorder %s77, 0
      %p171 = por %p169, %p170
      %p172 = scmp.ne.s32.totalorder %s160, %s161
      %p173 = scmp.eq.s32.totalorder %s78, 1
      %p174 = por %p172, %p173
      %p176 = scmp.ne.s32.totalorder %s161, %s175
      %p177 = scmp.eq.s32.totalorder %s78, 0
      %p178 = por %p176, %p177
      %s180 = sadd.s32 %s179, 1
      %p183 = scmp.eq.s32.totalorder %s72, 1
      %p184 = scmp.ne.s32.totalorder %s179, %s181
      %p185 = scmp.eq.s32.totalorder %s72, 0
      %p186 = por %p184, %p185
      %p187 = scmp.ne.s32.totalorder %s179, %s181
      %p188 = scmp.eq.s32.totalorder %s77, 1
      %p189 = por %p187, %p188
      %p190 = scmp.ne.s32.totalorder %s181, %s182
      %p191 = scmp.eq.s32.totalorder %s77, 0
      %p192 = por %p190, %p191
      %p193 = scmp.ne.s32.totalorder %s181, %s182
      %p194 = scmp.eq.s32.totalorder %s78, 1
      %p195 = por %p193, %p194
      %p197 = scmp.ne.s32.totalorder %s182, %s196
      %p198 = scmp.eq.s32.totalorder %s78, 0
      %p199 = por %p197, %p198
      %s201 = sadd.s32 %s200, 1
      %p204 = scmp.eq.s32.totalorder %s72, 1
      %p205 = scmp.ne.s32.totalorder %s200, %s202
      %p206 = scmp.eq.s32.totalorder %s72, 0
      %p207 = por %p205, %p206
      %p208 = scmp.ne.s32.totalorder %s200, %s202
      %p209 = scmp.eq.s32.totalorder %s77, 1
      %p210 = por %p208, %p209
      %p211 = scmp.ne.s32.totalorder %s202, %s203
      %p212 = scmp.eq.s32.totalorder %s77, 0
      %p213 = por %p211, %p212
      %p214 = scmp.ne.s32.totalorder %s202, %s203
      %p215 = scmp.eq.s32.totalorder %s78, 1
      %p216 = por %p214, %p215
      %p218 = scmp.ne.s32.totalorder %s203, %s217
      %p219 = scmp.eq.s32.totalorder %s78, 0
      %p220 = por %p218, %p219
      %s222 = sadd.s32 %s221, 1
      %p225 = scmp.eq.s32.totalorder %s72, 1
      %p226 = scmp.ne.s32.totalorder %s221, %s223
      %p227 = scmp.eq.s32.totalorder %s72, 0
      %p228 = por %p226, %p227
      %p229 = scmp.ne.s32.totalorder %s221, %s223
      %p230 = scmp.eq.s32.totalorder %s77, 1
      %p231 = por %p229, %p230
      %p232 = scmp.ne.s32.totalorder %s223, %s224
      %p233 = scmp.eq.s32.totalorder %s77, 0
      %p234 = por %p232, %p233
      %p235 = scmp.ne.s32.totalorder %s223, %s224
      %p236 = scmp.eq.s32.totalorder %s78, 1
      %p237 = por %p235, %p236
      %p239 = scmp.ne.s32.totalorder %s224, %s238
      %p240 = scmp.eq.s32.totalorder %s78, 0
      %p241 = por %p239, %p240
      %s243 = sadd.s32 %s242, 1
      %p246 = scmp.eq.s32.totalorder %s72, 1
      %p247 = scmp.ne.s32.totalorder %s242, %s244
      %p248 = scmp.eq.s32.totalorder %s72, 0
      %p249 = por %p247, %p248
      %p250 = scmp.ne.s32.totalorder %s242, %s244
      %p251 = scmp.eq.s32.totalorder %s77, 1
      %p252 = por %p250, %p251
      %p253 = scmp.ne.s32.totalorder %s244, %s245
      %p254 = scmp.eq.s32.totalorder %s77, 0
      %p255 = por %p253, %p254
      %p256 = scmp.ne.s32.totalorder %s244, %s245
      %p257 = scmp.eq.s32.totalorder %s78, 1
      %p258 = por %p256, %p257
      %p260 = scmp.ne.s32.totalorder %s245, %s259
      %p261 = scmp.eq.s32.totalorder %s78, 0
      %p262 = por %p260, %p261
      %s264 = sadd.s32 %s263, 1
      %p267 = scmp.eq.s32.totalorder %s72, 1
      %p268 = scmp.ne.s32.totalorder %s263, %s265
      %p269 = scmp.eq.s32.totalorder %s72, 0
      %p270 = por %p268, %p269
      %p271 = scmp.ne.s32.totalorder %s263, %s265
      %p272 = scmp.eq.s32.totalorder %s77, 1
      %p273 = por %p271, %p272
      %p274 = scmp.ne.s32.totalorder %s265, %s266
      %p275 = scmp.eq.s32.totalorder %s77, 0
      %p276 = por %p274, %p275
      %p277 = scmp.ne.s32.totalorder %s265, %s266
      %p278 = scmp.eq.s32.totalorder %s78, 1
      %p279 = por %p277, %p278
      %p281 = scmp.ne.s32.totalorder %s266, %s280
      %p282 = scmp.eq.s32.totalorder %s78, 0
      %p283 = por %p281, %p282
      %s285 = sadd.s32 %s284, 1
      %p288 = scmp.eq.s32.totalorder %s72, 1
      %p289 = scmp.ne.s32.totalorder %s284, %s286
      %p290 = scmp.eq.s32.totalorder %s72, 0
      %p291 = por %p289, %p290
      %p292 = scmp.ne.s32.totalorder %s284, %s286
      %p293 = scmp.eq.s32.totalorder %s77, 1
      %p294 = por %p292, %p293
      %p295 = scmp.ne.s32.totalorder %s286, %s287
      %p296 = scmp.eq.s32.totalorder %s77, 0
      %p297 = por %p295, %p296
      %p298 = scmp.ne.s32.totalorder %s286, %s287
      %p299 = scmp.eq.s32.totalorder %s78, 1
      %p300 = por %p298, %p299
      %p302 = scmp.ne.s32.totalorder %s287, %s301
      %p303 = scmp.eq.s32.totalorder %s78, 0
      %p304 = por %p302, %p303
      %s306 = sadd.s32 %s305, 1
      %p309 = scmp.eq.s32.totalorder %s72, 1
      %p310 = scmp.ne.s32.totalorder %s305, %s307
      %p311 = scmp.eq.s32.totalorder %s72, 0
      %p312 = por %p310, %p311
      %p313 = scmp.ne.s32.totalorder %s305, %s307
      %p314 = scmp.eq.s32.totalorder %s77, 1
      %p315 = por %p313, %p314
      %p316 = scmp.ne.s32.totalorder %s307, %s308
      %p317 = scmp.eq.s32.totalorder %s77, 0
      %p318 = por %p316, %p317
      %p319 = scmp.ne.s32.totalorder %s307, %s308
      %p320 = scmp.eq.s32.totalorder %s78, 1
      %p321 = por %p319, %p320
      %p323 = scmp.ne.s32.totalorder %s308, %s322
      %p324 = scmp.eq.s32.totalorder %s78, 0
      %p325 = por %p323, %p324
      %s327 = sadd.s32 %s326, 1
      %p330 = scmp.eq.s32.totalorder %s72, 1
      %p331 = scmp.ne.s32.totalorder %s326, %s328
      %p332 = scmp.eq.s32.totalorder %s72, 0
      %p333 = por %p331, %p332
      %p334 = scmp.ne.s32.totalorder %s326, %s328
      %p335 = scmp.eq.s32.totalorder %s77, 1
      %p336 = por %p334, %p335
      %p337 = scmp.ne.s32.totalorder %s328, %s329
      %p338 = scmp.eq.s32.totalorder %s77, 0
      %p339 = por %p337, %p338
      %p340 = scmp.ne.s32.totalorder %s328, %s329
      %p341 = scmp.eq.s32.totalorder %s78, 1
      %p342 = por %p340, %p341
      %p344 = scmp.ne.s32.totalorder %s329, %s343
      %p345 = scmp.eq.s32.totalorder %s78, 0
      %p346 = por %p344, %p345
      %s348 = sadd.s32 %s347, 1
      %p351 = scmp.eq.s32.totalorder %s72, 1
      %p352 = scmp.ne.s32.totalorder %s347, %s349
      %p353 = scmp.eq.s32.totalorder %s72, 0
      %p354 = por %p352, %p353
      %p355 = scmp.ne.s32.totalorder %s347, %s349
      %p356 = scmp.eq.s32.totalorder %s77, 1
      %p357 = por %p355, %p356
      %p358 = scmp.ne.s32.totalorder %s349, %s350
      %p359 = scmp.eq.s32.totalorder %s77, 0
      %p360 = por %p358, %p359
      %p361 = scmp.ne.s32.totalorder %s349, %s350
      %p362 = scmp.eq.s32.totalorder %s78, 1
      %p363 = por %p361, %p362
      %p365 = scmp.ne.s32.totalorder %s350, %s364
      %p366 = scmp.eq.s32.totalorder %s78, 0
      %p367 = por %p365, %p366
      %s369 = sadd.s32 %s368, 1
      %p372 = scmp.eq.s32.totalorder %s72, 1
      %p373 = scmp.ne.s32.totalorder %s368, %s370
      %p374 = scmp.eq.s32.totalorder %s72, 0
      %p375 = por %p373, %p374
      %p376 = scmp.ne.s32.totalorder %s368, %s370
      %p377 = scmp.eq.s32.totalorder %s77, 1
      %p378 = por %p376, %p377
      %p379 = scmp.ne.s32.totalorder %s370, %s371
      %p380 = scmp.eq.s32.totalorder %s77, 0
      %p381 = por %p379, %p380
      %p382 = scmp.ne.s32.totalorder %s370, %s371
      %p383 = scmp.eq.s32.totalorder %s78, 1
      %p384 = por %p382, %p383
      %p386 = scmp.ne.s32.totalorder %s371, %s385
      %p387 = scmp.eq.s32.totalorder %s78, 0
      %p388 = por %p386, %p387
      %s390 = sadd.s32 %s389, 1
      %p393 = scmp.eq.s32.totalorder %s72, 1
      %p394 = scmp.ne.s32.totalorder %s389, %s391
      %p395 = scmp.eq.s32.totalorder %s72, 0
      %p396 = por %p394, %p395
      %p397 = scmp.ne.s32.totalorder %s389, %s391
      %p398 = scmp.eq.s32.totalorder %s77, 1
      %p399 = por %p397, %p398
      %p400 = scmp.ne.s32.totalorder %s391, %s392
      %p401 = scmp.eq.s32.totalorder %s77, 0
      %p402 = por %p400, %p401
      %p403 = scmp.ne.s32.totalorder %s391, %s392
      %p404 = scmp.eq.s32.totalorder %s78, 1
      %p405 = por %p403, %p404
      %p407 = scmp.ne.s32.totalorder %s392, %s406
      %p408 = scmp.eq.s32.totalorder %s78, 0
      %p409 = por %p407, %p408
      %s411 = sadd.s32 %s410, 1
      %p414 = scmp.eq.s32.totalorder %s72, 1
      %p415 = scmp.ne.s32.totalorder %s410, %s412
      %p416 = scmp.eq.s32.totalorder %s72, 0
      %p417 = por %p415, %p416
      %p418 = scmp.ne.s32.totalorder %s410, %s412
      %p419 = scmp.eq.s32.totalorder %s77, 1
      %p420 = por %p418, %p419
      %p421 = scmp.ne.s32.totalorder %s412, %s413
      %p422 = scmp.eq.s32.totalorder %s77, 0
      %p423 = por %p421, %p422
      %p424 = scmp.ne.s32.totalorder %s412, %s413
      %p425 = scmp.eq.s32.totalorder %s78, 1
      %p426 = por %p424, %p425
      %p428 = scmp.ne.s32.totalorder %s413, %s427
      %p429 = scmp.eq.s32.totalorder %s78, 0
      %p430 = por %p428, %p429
      %s432 = sadd.s32 %s431, 1
      %p435 = scmp.eq.s32.totalorder %s72, 1
      %p436 = scmp.ne.s32.totalorder %s431, %s433
      %p437 = scmp.eq.s32.totalorder %s72, 0
      %p438 = por %p436, %p437
      %p439 = scmp.ne.s32.totalorder %s431, %s433
      %p440 = scmp.eq.s32.totalorder %s77, 1
      %p441 = por %p439, %p440
      %p442 = scmp.ne.s32.totalorder %s433, %s434
      %p443 = scmp.eq.s32.totalorder %s77, 0
      %p444 = por %p442, %p443
      %p445 = scmp.ne.s32.totalorder %s433, %s434
      %p446 = scmp.eq.s32.totalorder %s78, 1
      %p447 = por %p445, %p446
      %p449 = scmp.ne.s32.totalorder %s434, %s448
      %p450 = scmp.eq.s32.totalorder %s78, 0
      %p451 = por %p449, %p450
      %s453 = sadd.s32 %s452, 1
      %p456 = scmp.eq.s32.totalorder %s72, 1
      %p457 = scmp.ne.s32.totalorder %s452, %s454
      %p458 = scmp.eq.s32.totalorder %s72, 0
      %p459 = por %p457, %p458
      %p460 = scmp.ne.s32.totalorder %s452, %s454
      %p461 = scmp.eq.s32.totalorder %s77, 1
      %p462 = por %p460, %p461
      %p463 = scmp.ne.s32.totalorder %s454, %s455
      %p464 = scmp.eq.s32.totalorder %s77, 0
      %p465 = por %p463, %p464
      %p466 = scmp.ne.s32.totalorder %s454, %s455
      %p467 = scmp.eq.s32.totalorder %s78, 1
      %p468 = por %p466, %p467
      %p470 = scmp.ne.s32.totalorder %s455, %s469
      %p471 = scmp.eq.s32.totalorder %s78, 0
      %p472 = por %p470, %p471
      %s474 = sadd.s32 %s473, 1
      %p477 = scmp.eq.s32.totalorder %s72, 1
      %p478 = scmp.ne.s32.totalorder %s473, %s475
      %p479 = scmp.eq.s32.totalorder %s72, 0
      %p480 = por %p478, %p479
      %p481 = scmp.ne.s32.totalorder %s473, %s475
      %p482 = scmp.eq.s32.totalorder %s77, 1
      %p483 = por %p481, %p482
      %p484 = scmp.ne.s32.totalorder %s475, %s476
      %p485 = scmp.eq.s32.totalorder %s77, 0
      %p486 = por %p484, %p485
      %p487 = scmp.ne.s32.totalorder %s475, %s476
      %p488 = scmp.eq.s32.totalorder %s78, 1
      %p489 = por %p487, %p488
      %p491 = scmp.ne.s32.totalorder %s476, %s490
      %p492 = scmp.eq.s32.totalorder %s78, 0
      %p493 = por %p491, %p492
      %s495 = sadd.s32 %s494, 1
      %p498 = scmp.eq.s32.totalorder %s72, 1
      %p499 = scmp.ne.s32.totalorder %s494, %s496
      %p500 = scmp.eq.s32.totalorder %s72, 0
      %p501 = por %p499, %p500
      %p502 = scmp.ne.s32.totalorder %s494, %s496
      %p503 = scmp.eq.s32.totalorder %s77, 1
      %p504 = por %p502, %p503
      %p505 = scmp.ne.s32.totalorder %s496, %s497
      %p506 = scmp.eq.s32.totalorder %s77, 0
      %p507 = por %p505, %p506
      %p508 = scmp.ne.s32.totalorder %s496, %s497
      %p509 = scmp.eq.s32.totalorder %s78, 1
      %p510 = por %p508, %p509
      %p512 = scmp.ne.s32.totalorder %s497, %s511
      %p513 = scmp.eq.s32.totalorder %s78, 0
      %p514 = por %p512, %p513
      %s516 = sadd.s32 %s515, 1
      %p519 = scmp.eq.s32.totalorder %s72, 1
      %p520 = scmp.ne.s32.totalorder %s515, %s517
      %p521 = scmp.eq.s32.totalorder %s72, 0
      %p522 = por %p520, %p521
      %p523 = scmp.ne.s32.totalorder %s515, %s517
      %p524 = scmp.eq.s32.totalorder %s77, 1
      %p525 = por %p523, %p524
      %p526 = scmp.ne.s32.totalorder %s517, %s518
      %p527 = scmp.eq.s32.totalorder %s77, 0
      %p528 = por %p526, %p527
      %p529 = scmp.ne.s32.totalorder %s517, %s518
      %p530 = scmp.eq.s32.totalorder %s78, 1
      %p531 = por %p529, %p530
      %p533 = scmp.ne.s32.totalorder %s518, %s532
      %p534 = scmp.eq.s32.totalorder %s78, 0
      %p535 = por %p533, %p534
      %s537 = sadd.s32 %s536, 1
      %p540 = scmp.eq.s32.totalorder %s72, 1
      %p541 = scmp.ne.s32.totalorder %s536, %s538
      %p542 = scmp.eq.s32.totalorder %s72, 0
      %p543 = por %p541, %p542
      %p544 = scmp.ne.s32.totalorder %s536, %s538
      %p545 = scmp.eq.s32.totalorder %s77, 1
      %p546 = por %p544, %p545
      %p547 = scmp.ne.s32.totalorder %s538, %s539
      %p548 = scmp.eq.s32.totalorder %s77, 0
      %p549 = por %p547, %p548
      %p550 = scmp.ne.s32.totalorder %s538, %s539
      %p551 = scmp.eq.s32.totalorder %s78, 1
      %p552 = por %p550, %p551
      %p554 = scmp.ne.s32.totalorder %s539, %s553
      %p555 = scmp.eq.s32.totalorder %s78, 0
      %p556 = por %p554, %p555
      %s558 = sadd.s32 %s557, 1
      %p561 = scmp.eq.s32.totalorder %s72, 1
      %p562 = scmp.ne.s32.totalorder %s557, %s559
      %p563 = scmp.eq.s32.totalorder %s72, 0
      %p564 = por %p562, %p563
      %p565 = scmp.ne.s32.totalorder %s557, %s559
      %p566 = scmp.eq.s32.totalorder %s77, 1
      %p567 = por %p565, %p566
      %p568 = scmp.ne.s32.totalorder %s559, %s560
      %p569 = scmp.eq.s32.totalorder %s77, 0
      %p570 = por %p568, %p569
      %p571 = scmp.ne.s32.totalorder %s559, %s560
      %p572 = scmp.eq.s32.totalorder %s78, 1
      %p573 = por %p571, %p572
      %p575 = scmp.ne.s32.totalorder %s560, %s574
      %p576 = scmp.eq.s32.totalorder %s78, 0
      %p577 = por %p575, %p576
      %s579 = sadd.s32 %s578, 1
      %p582 = scmp.eq.s32.totalorder %s72, 1
      %p583 = scmp.ne.s32.totalorder %s578, %s580
      %p584 = scmp.eq.s32.totalorder %s72, 0
      %p585 = por %p583, %p584
      %p586 = scmp.ne.s32.totalorder %s578, %s580
      %p587 = scmp.eq.s32.totalorder %s77, 1
      %p588 = por %p586, %p587
      %p589 = scmp.ne.s32.totalorder %s580, %s581
      %p590 = scmp.eq.s32.totalorder %s77, 0
      %p591 = por %p589, %p590
      %p592 = scmp.ne.s32.totalorder %s580, %s581
      %p593 = scmp.eq.s32.totalorder %s78, 1
      %p594 = por %p592, %p593
      %p596 = scmp.ne.s32.totalorder %s581, %s595
      %p597 = scmp.eq.s32.totalorder %s78, 0
      %p598 = por %p596, %p597
      %s600 = sadd.s32 %s599, 1
      %p603 = scmp.eq.s32.totalorder %s72, 1
      %p604 = scmp.ne.s32.totalorder %s599, %s601
      %p605 = scmp.eq.s32.totalorder %s72, 0
      %p606 = por %p604, %p605
      %p607 = scmp.ne.s32.totalorder %s599, %s601
      %p608 = scmp.eq.s32.totalorder %s77, 1
      %p609 = por %p607, %p608
      %p610 = scmp.ne.s32.totalorder %s601, %s602
      %p611 = scmp.eq.s32.totalorder %s77, 0
      %p612 = por %p610, %p611
      %p613 = scmp.ne.s32.totalorder %s601, %s602
      %p614 = scmp.eq.s32.totalorder %s78, 1
      %p615 = por %p613, %p614
      %p617 = scmp.ne.s32.totalorder %s602, %s616
      %p618 = scmp.eq.s32.totalorder %s78, 0
      %p619 = por %p617, %p618
      %s621 = sadd.s32 %s620, 1
      %p624 = scmp.eq.s32.totalorder %s72, 1
      %p625 = scmp.ne.s32.totalorder %s620, %s622
      %p626 = scmp.eq.s32.totalorder %s72, 0
      %p627 = por %p625, %p626
      %p628 = scmp.ne.s32.totalorder %s620, %s622
      %p629 = scmp.eq.s32.totalorder %s77, 1
      %p630 = por %p628, %p629
      %p631 = scmp.ne.s32.totalorder %s622, %s623
      %p632 = scmp.eq.s32.totalorder %s77, 0
      %p633 = por %p631, %p632
      %p634 = scmp.ne.s32.totalorder %s622, %s623
      %p635 = scmp.eq.s32.totalorder %s78, 1
      %p636 = por %p634, %p635
      %p638 = scmp.ne.s32.totalorder %s623, %s637
      %p639 = scmp.eq.s32.totalorder %s78, 0
      %p640 = por %p638, %p639
      %s642 = sadd.s32 %s641, 1
      %p645 = scmp.eq.s32.totalorder %s72, 1
      %p646 = scmp.ne.s32.totalorder %s641, %s643
      %p647 = scmp.eq.s32.totalorder %s72, 0
      %p648 = por %p646, %p647
      %p649 = scmp.ne.s32.totalorder %s641, %s643
      %p650 = scmp.eq.s32.totalorder %s77, 1
      %p651 = por %p649, %p650
      %p652 = scmp.ne.s32.totalorder %s643, %s644
      %p653 = scmp.eq.s32.totalorder %s77, 0
      %p654 = por %p652, %p653
      %p655 = scmp.ne.s32.totalorder %s643, %s644
      %p656 = scmp.eq.s32.totalorder %s78, 1
      %p657 = por %p655, %p656
      %p659 = scmp.ne.s32.totalorder %s644, %s658
      %p660 = scmp.eq.s32.totalorder %s78, 0
      %p661 = por %p659, %p660
      %s663 = sadd.s32 %s662, 1
      %p666 = scmp.eq.s32.totalorder %s72, 1
      %p667 = scmp.ne.s32.totalorder %s662, %s664
      %p668 = scmp.eq.s32.totalorder %s72, 0
      %p669 = por %p667, %p668
      %p670 = scmp.ne.s32.totalorder %s662, %s664
      %p671 = scmp.eq.s32.totalorder %s77, 1
      %p672 = por %p670, %p671
      %p673 = scmp.ne.s32.totalorder %s664, %s665
      %p674 = scmp.eq.s32.totalorder %s77, 0
      %p675 = por %p673, %p674
      %p676 = scmp.ne.s32.totalorder %s664, %s665
      %p677 = scmp.eq.s32.totalorder %s78, 1
      %p678 = por %p676, %p677
      %p680 = scmp.ne.s32.totalorder %s665, %s679
      %p681 = scmp.eq.s32.totalorder %s78, 0
      %p682 = por %p680, %p681
      %s684 = sadd.s32 %s683, 1
      %p687 = scmp.eq.s32.totalorder %s72, 1
      %p688 = scmp.ne.s32.totalorder %s683, %s685
      %p689 = scmp.eq.s32.totalorder %s72, 0
      %p690 = por %p688, %p689
      %p691 = scmp.ne.s32.totalorder %s683, %s685
      %p692 = scmp.eq.s32.totalorder %s77, 1
      %p693 = por %p691, %p692
      %p694 = scmp.ne.s32.totalorder %s685, %s686
      %p695 = scmp.eq.s32.totalorder %s77, 0
      %p696 = por %p694, %p695
      %p697 = scmp.ne.s32.totalorder %s685, %s686
      %p698 = scmp.eq.s32.totalorder %s78, 1
      %p699 = por %p697, %p698
      %p701 = scmp.ne.s32.totalorder %s686, %s700
      %p702 = scmp.eq.s32.totalorder %s78, 0
      %p703 = por %p701, %p702
      %s705 = sadd.s32 %s704, 1
      %p708 = scmp.eq.s32.totalorder %s72, 1
      %p709 = scmp.ne.s32.totalorder %s704, %s706
      %p710 = scmp.eq.s32.totalorder %s72, 0
      %p711 = por %p709, %p710
      %p712 = scmp.ne.s32.totalorder %s704, %s706
      %p713 = scmp.eq.s32.totalorder %s77, 1
      %p714 = por %p712, %p713
      %p715 = scmp.ne.s32.totalorder %s706, %s707
      %p716 = scmp.eq.s32.totalorder %s77, 0
      %p717 = por %p715, %p716
      %p718 = scmp.ne.s32.totalorder %s706, %s707
      %p719 = scmp.eq.s32.totalorder %s78, 1
      %p720 = por %p718, %p719
      %p722 = scmp.ne.s32.totalorder %s707, %s721
      %p723 = scmp.eq.s32.totalorder %s78, 0
      %p724 = por %p722, %p723
      %s726 = sadd.s32 %s725, 1
      %p729 = scmp.eq.s32.totalorder %s72, 1
      %p730 = scmp.ne.s32.totalorder %s725, %s727
      %p731 = scmp.eq.s32.totalorder %s72, 0
      %p732 = por %p730, %p731
      %p733 = scmp.ne.s32.totalorder %s725, %s727
      %p734 = scmp.eq.s32.totalorder %s77, 1
      %p735 = por %p733, %p734
      %p736 = scmp.ne.s32.totalorder %s727, %s728
      %p737 = scmp.eq.s32.totalorder %s77, 0
      %p738 = por %p736, %p737
      %p739 = scmp.ne.s32.totalorder %s727, %s728
      %p740 = scmp.eq.s32.totalorder %s78, 1
      %p741 = por %p739, %p740
      %p743 = scmp.ne.s32.totalorder %s728, %s742
      %p744 = scmp.eq.s32.totalorder %s78, 0
      %p745 = por %p743, %p744
      %s746 = ssub.s32 %s72, %s79
      %p747 = scmp.eq.s32.totalorder %s746, 0
      %s749 = sadd.s32 %s748, 1
      %s750 = scalar_select %p747, %s748, %s749
      %p753 = pneg %p747
      %p754 = scmp.eq.s32.totalorder %s72, 1
      %p755 = por %p753, %p754
      %p756 = scmp.ne.s32.totalorder %s748, %s751
      %p757 = scmp.eq.s32.totalorder %s72, 0
      %p758 = por %p756, %p757
      %p759 = scmp.ne.s32.totalorder %s748, %s751
      %p760 = scmp.eq.s32.totalorder %s77, 1
      %p761 = por %p759, %p760
      %p762 = scmp.ne.s32.totalorder %s751, %s752
      %p763 = scmp.eq.s32.totalorder %s77, 0
      %p764 = por %p762, %p763
      %p765 = scmp.ne.s32.totalorder %s751, %s752
      %p766 = scmp.eq.s32.totalorder %s78, 1
      %p767 = por %p765, %p766
      %p769 = scmp.ne.s32.totalorder %s752, %s768
      %p770 = scmp.eq.s32.totalorder %s78, 0
      %p771 = por %p769, %p770
      %p772 = scmp.le.s32.totalorder 1, %s72
      %p773 = scmp.lt.s32.totalorder %s72, 3
      %p774 = pnand %p772, %p773
      %p775 = pneg %p774
      // Predicated region
      $region9: #{blip_forward.3} parent=5 // pred_check
        _
      $region10: #{blip_forward.3} parent=5 // pred_check_branch
        %777 = sbr.rel (%p774) target = $region12
      $region11: #{blip_forward.3} parent=5 // pred_region
        %s778 = ssub.s32 %s72, 1
        // Predicated region
        $region13: #{blip_forward.3} parent=11 // pred_check
          %p779 = pneg %p171
        $region14: #{blip_forward.3} parent=11 // pred_check_branch
          %781 = sbr.rel (%p779) target = $region16
        $region15: #{blip_forward.3} parent=11 // pred_region
          _
        $region16: #{blip_forward.3} parent=11 // pred_fallthru
          _
        // Predicated region
        $region17: #{blip_forward.3} parent=11 // pred_check
          %p782 = pneg %p192
        $region18: #{blip_forward.3} parent=11 // pred_check_branch
          %784 = sbr.rel (%p782) target = $region20
        $region19: #{blip_forward.3} parent=11 // pred_region
          _
        $region20: #{blip_forward.3} parent=11 // pred_fallthru
          _
        // Predicated region
        $region21: #{blip_forward.3} parent=11 // pred_check
          %p785 = pneg %p213
        $region22: #{blip_forward.3} parent=11 // pred_check_branch
          %787 = sbr.rel (%p785) target = $region24
        $region23: #{blip_forward.3} parent=11 // pred_region
          _
        $region24: #{blip_forward.3} parent=11 // pred_fallthru
          _
        // Predicated region
        $region25: #{blip_forward.3} parent=11 // pred_check
          %p788 = pneg %p234
        $region26: #{blip_forward.3} parent=11 // pred_check_branch
          %790 = sbr.rel (%p788) target = $region28
        $region27: #{blip_forward.3} parent=11 // pred_region
          _
        $region28: #{blip_forward.3} parent=11 // pred_fallthru
          _
        // Predicated region
        $region29: #{blip_forward.3} parent=11 // pred_check
          %p791 = pneg %p255
        $region30: #{blip_forward.3} parent=11 // pred_check_branch
          %793 = sbr.rel (%p791) target = $region32
        $region31: #{blip_forward.3} parent=11 // pred_region
          _
        $region32: #{blip_forward.3} parent=11 // pred_fallthru
          _
        // Predicated region
        $region33: #{blip_forward.3} parent=11 // pred_check
          %p794 = pneg %p276
        $region34: #{blip_forward.3} parent=11 // pred_check_branch
          %796 = sbr.rel (%p794) target = $region36
        $region35: #{blip_forward.3} parent=11 // pred_region
          _
        $region36: #{blip_forward.3} parent=11 // pred_fallthru
          _
        // Predicated region
        $region37: #{blip_forward.3} parent=11 // pred_check
          %p797 = pneg %p297
        $region38: #{blip_forward.3} parent=11 // pred_check_branch
          %799 = sbr.rel (%p797) target = $region40
        $region39: #{blip_forward.3} parent=11 // pred_region
          _
        $region40: #{blip_forward.3} parent=11 // pred_fallthru
          _
        // Predicated region
        $region41: #{blip_forward.3} parent=11 // pred_check
          %p800 = pneg %p318
        $region42: #{blip_forward.3} parent=11 // pred_check_branch
          %802 = sbr.rel (%p800) target = $region44
        $region43: #{blip_forward.3} parent=11 // pred_region
          _
        $region44: #{blip_forward.3} parent=11 // pred_fallthru
          _
        // Predicated region
        $region45: #{blip_forward.3} parent=11 // pred_check
          %p803 = pneg %p339
        $region46: #{blip_forward.3} parent=11 // pred_check_branch
          %805 = sbr.rel (%p803) target = $region48
        $region47: #{blip_forward.3} parent=11 // pred_region
          _
        $region48: #{blip_forward.3} parent=11 // pred_fallthru
          _
        // Predicated region
        $region49: #{blip_forward.3} parent=11 // pred_check
          %p806 = pneg %p360
        $region50: #{blip_forward.3} parent=11 // pred_check_branch
          %808 = sbr.rel (%p806) target = $region52
        $region51: #{blip_forward.3} parent=11 // pred_region
          _
        $region52: #{blip_forward.3} parent=11 // pred_fallthru
          _
        // Predicated region
        $region53: #{blip_forward.3} parent=11 // pred_check
          %p809 = pneg %p381
        $region54: #{blip_forward.3} parent=11 // pred_check_branch
          %811 = sbr.rel (%p809) target = $region56
        $region55: #{blip_forward.3} parent=11 // pred_region
          _
        $region56: #{blip_forward.3} parent=11 // pred_fallthru
          _
        // Predicated region
        $region57: #{blip_forward.3} parent=11 // pred_check
          %p812 = pneg %p402
        $region58: #{blip_forward.3} parent=11 // pred_check_branch
          %814 = sbr.rel (%p812) target = $region60
        $region59: #{blip_forward.3} parent=11 // pred_region
          _
        $region60: #{blip_forward.3} parent=11 // pred_fallthru
          _
        // Predicated region
        $region61: #{blip_forward.3} parent=11 // pred_check
          %p815 = pneg %p423
        $region62: #{blip_forward.3} parent=11 // pred_check_branch
          %817 = sbr.rel (%p815) target = $region64
        $region63: #{blip_forward.3} parent=11 // pred_region
          _
        $region64: #{blip_forward.3} parent=11 // pred_fallthru
          _
        // Predicated region
        $region65: #{blip_forward.3} parent=11 // pred_check
          %p818 = pneg %p444
        $region66: #{blip_forward.3} parent=11 // pred_check_branch
          %820 = sbr.rel (%p818) target = $region68
        $region67: #{blip_forward.3} parent=11 // pred_region
          _
        $region68: #{blip_forward.3} parent=11 // pred_fallthru
          _
        // Predicated region
        $region69: #{blip_forward.3} parent=11 // pred_check
          %p821 = pneg %p465
        $region70: #{blip_forward.3} parent=11 // pred_check_branch
          %823 = sbr.rel (%p821) target = $region72
        $region71: #{blip_forward.3} parent=11 // pred_region
          _
        $region72: #{blip_forward.3} parent=11 // pred_fallthru
          _
        // Predicated region
        $region73: #{blip_forward.3} parent=11 // pred_check
          %p824 = pneg %p486
        $region74: #{blip_forward.3} parent=11 // pred_check_branch
          %826 = sbr.rel (%p824) target = $region76
        $region75: #{blip_forward.3} parent=11 // pred_region
          _
        $region76: #{blip_forward.3} parent=11 // pred_fallthru
          _
        // Predicated region
        $region77: #{blip_forward.3} parent=11 // pred_check
          %p827 = pneg %p507
        $region78: #{blip_forward.3} parent=11 // pred_check_branch
          %829 = sbr.rel (%p827) target = $region80
        $region79: #{blip_forward.3} parent=11 // pred_region
          _
        $region80: #{blip_forward.3} parent=11 // pred_fallthru
          _
        // Predicated region
        $region81: #{blip_forward.3} parent=11 // pred_check
          %p830 = pneg %p528
        $region82: #{blip_forward.3} parent=11 // pred_check_branch
          %832 = sbr.rel (%p830) target = $region84
        $region83: #{blip_forward.3} parent=11 // pred_region
          _
        $region84: #{blip_forward.3} parent=11 // pred_fallthru
          _
        // Predicated region
        $region85: #{blip_forward.3} parent=11 // pred_check
          %p833 = pneg %p549
        $region86: #{blip_forward.3} parent=11 // pred_check_branch
          %835 = sbr.rel (%p833) target = $region88
        $region87: #{blip_forward.3} parent=11 // pred_region
          _
        $region88: #{blip_forward.3} parent=11 // pred_fallthru
          _
        // Predicated region
        $region89: #{blip_forward.3} parent=11 // pred_check
          %p836 = pneg %p570
        $region90: #{blip_forward.3} parent=11 // pred_check_branch
          %838 = sbr.rel (%p836) target = $region92
        $region91: #{blip_forward.3} parent=11 // pred_region
          _
        $region92: #{blip_forward.3} parent=11 // pred_fallthru
          _
        // Predicated region
        $region93: #{blip_forward.3} parent=11 // pred_check
          %p839 = pneg %p591
        $region94: #{blip_forward.3} parent=11 // pred_check_branch
          %841 = sbr.rel (%p839) target = $region96
        $region95: #{blip_forward.3} parent=11 // pred_region
          _
        $region96: #{blip_forward.3} parent=11 // pred_fallthru
          _
        // Predicated region
        $region97: #{blip_forward.3} parent=11 // pred_check
          %p842 = pneg %p612
        $region98: #{blip_forward.3} parent=11 // pred_check_branch
          %844 = sbr.rel (%p842) target = $region100
        $region99: #{blip_forward.3} parent=11 // pred_region
          _
        $region100: #{blip_forward.3} parent=11 // pred_fallthru
          _
        // Predicated region
        $region101: #{blip_forward.3} parent=11 // pred_check
          %p845 = pneg %p633
        $region102: #{blip_forward.3} parent=11 // pred_check_branch
          %847 = sbr.rel (%p845) target = $region104
        $region103: #{blip_forward.3} parent=11 // pred_region
          _
        $region104: #{blip_forward.3} parent=11 // pred_fallthru
          _
        // Predicated region
        $region105: #{blip_forward.3} parent=11 // pred_check
          %p848 = pneg %p654
        $region106: #{blip_forward.3} parent=11 // pred_check_branch
          %850 = sbr.rel (%p848) target = $region108
        $region107: #{blip_forward.3} parent=11 // pred_region
          _
        $region108: #{blip_forward.3} parent=11 // pred_fallthru
          _
        // Predicated region
        $region109: #{blip_forward.3} parent=11 // pred_check
          %p851 = pneg %p675
        $region110: #{blip_forward.3} parent=11 // pred_check_branch
          %853 = sbr.rel (%p851) target = $region112
        $region111: #{blip_forward.3} parent=11 // pred_region
          _
        $region112: #{blip_forward.3} parent=11 // pred_fallthru
          _
        // Predicated region
        $region113: #{blip_forward.3} parent=11 // pred_check
          %p854 = pneg %p696
        $region114: #{blip_forward.3} parent=11 // pred_check_branch
          %856 = sbr.rel (%p854) target = $region116
        $region115: #{blip_forward.3} parent=11 // pred_region
          _
        $region116: #{blip_forward.3} parent=11 // pred_fallthru
          _
        // Predicated region
        $region117: #{blip_forward.3} parent=11 // pred_check
          %p857 = pneg %p717
        $region118: #{blip_forward.3} parent=11 // pred_check_branch
          %859 = sbr.rel (%p857) target = $region120
        $region119: #{blip_forward.3} parent=11 // pred_region
          _
        $region120: #{blip_forward.3} parent=11 // pred_fallthru
          _
        // Predicated region
        $region121: #{blip_forward.3} parent=11 // pred_check
          %p860 = pneg %p738
        $region122: #{blip_forward.3} parent=11 // pred_check_branch
          %862 = sbr.rel (%p860) target = $region124
        $region123: #{blip_forward.3} parent=11 // pred_region
          _
        $region124: #{blip_forward.3} parent=11 // pred_fallthru
          _
      $region12: #{blip_forward.3} parent=5 // pred_fallthru
        _
      %p863 = scmp.lt.s32.totalorder %s72, 2
      // Predicated region
      $region125: #{blip_forward.3} parent=5 // pred_check
        %p864 = pneg %p863
      $region126: #{blip_forward.3} parent=5 // pred_check_branch
        %866 = sbr.rel (%p864) target = $region128
      $region127: #{blip_forward.3} parent=5 // pred_region
        // Predicated region
        $region129: #{blip_forward.3} parent=127 // pred_check
          %p867 = pneg %p92
        $region130: #{blip_forward.3} parent=127 // pred_check_branch
          %869 = sbr.rel (%p867) target = $region132
        $region131: #{blip_forward.3} parent=127 // pred_region
          %p870 = scmp.lt.s32.totalorder %s72, 1
          %s871 = scalar_select %p870, %s72, 1
          %s872 = smul.addr %s871, 2
          %s873 = smul.addr %s872, 8
          %s874 = scalar_lea.vmem %s1, %s873
        $region132: #{blip_forward.3} parent=127 // pred_fallthru
          _
        // Predicated region
        $region133: #{blip_forward.3} parent=127 // pred_check
          %p875 = pneg %p118
        $region134: #{blip_forward.3} parent=127 // pred_check_branch
          %877 = sbr.rel (%p875) target = $region136
        $region135: #{blip_forward.3} parent=127 // pred_region
          %p878 = scmp.lt.s32.totalorder %s72, 1
          %s879 = scalar_select %p878, %s72, 1
          %s880 = smul.addr %s879, 3
          %s881 = smul.addr %s880, 8
          %s882 = scalar_lea.vmem %s3, %s881
        $region136: #{blip_forward.3} parent=127 // pred_fallthru
          _
        // Predicated region
        $region137: #{blip_forward.3} parent=127 // pred_check
          %p883 = pneg %p144
        $region138: #{blip_forward.3} parent=127 // pred_check_branch
          %885 = sbr.rel (%p883) target = $region140
        $region139: #{blip_forward.3} parent=127 // pred_region
          %p886 = scmp.lt.s32.totalorder %s72, 1
          %s887 = scalar_select %p886, %s72, 1
          %s888 = scalar_lea.vmem %s5, %s887
        $region140: #{blip_forward.3} parent=127 // pred_fallthru
          _
      $region128: #{blip_forward.3} parent=5 // pred_fallthru
        _
      %p889 = scmp.le.s32.totalorder 1, %s72
      %p890 = scmp.lt.s32.totalorder %s72, 3
      %p891 = pnand %p889, %p890
      %p892 = pneg %p891
      // Predicated region
      $region141: #{blip_forward.3} parent=5 // pred_check
        _
      $region142: #{blip_forward.3} parent=5 // pred_check_branch
        %894 = sbr.rel (%p891) target = $region144
      $region143: #{blip_forward.3} parent=5 // pred_region
        %s895 = ssub.s32 %s72, 1
        %p896 = scmp.lt.s32.totalorder %s77, 1
        %s897 = scalar_select %p896, %s77, 1
        %s898 = smul.addr %s897, 2
        %s899 = smul.addr %s898, 8
        %s900 = scalar_lea.vmem %s1, %s899
        %p901 = pneg %p98
        %p902 = pneg %p95
        %p903 = scmp.lt.s32.totalorder %s77, 1
        %s904 = scalar_select %p903, %s77, 1
        %s905 = smul.addr %s904, 3
        %s906 = smul.addr %s905, 8
        %s907 = scalar_lea.vmem %s3, %s906
        %p908 = pneg %p124
        %p909 = pneg %p121
        %p910 = scmp.lt.s32.totalorder %s77, 1
        %s911 = scalar_select %p910, %s77, 1
        %s912 = scalar_lea.vmem %s5, %s911
        %p913 = pneg %p150
        %p914 = pneg %p147
        %p915 = pneg %p171
        %p916 = pneg %p168
        %p917 = pneg %p192
        %p918 = pneg %p189
        %p919 = pneg %p213
        %p920 = pneg %p210
        %p921 = pneg %p234
        %p922 = pneg %p231
        %p923 = pneg %p255
        %p924 = pneg %p252
        %p925 = pneg %p276
        %p926 = pneg %p273
        %p927 = pneg %p297
        %p928 = pneg %p294
        %p929 = pneg %p318
        %p930 = pneg %p315
        %p931 = pneg %p339
        %p932 = pneg %p336
        %p933 = pneg %p360
        %p934 = pneg %p357
        %p935 = pneg %p381
        %p936 = pneg %p378
        %p937 = pneg %p402
        %p938 = pneg %p399
        %p939 = pneg %p423
        %p940 = pneg %p420
        %p941 = pneg %p444
        %p942 = pneg %p441
        %p943 = pneg %p465
        %p944 = pneg %p462
        %p945 = pneg %p486
        %p946 = pneg %p483
        %p947 = pneg %p507
        %p948 = pneg %p504
        %p949 = pneg %p528
        %p950 = pneg %p525
        %p951 = pneg %p549
        %p952 = pneg %p546
        %p953 = pneg %p570
        %p954 = pneg %p567
        %p955 = pneg %p591
        %p956 = pneg %p588
        %p957 = pneg %p612
        %p958 = pneg %p609
        %p959 = pneg %p633
        %p960 = pneg %p630
        %p961 = pneg %p654
        %p962 = pneg %p651
        %p963 = pneg %p675
        %p964 = pneg %p672
        %p965 = pneg %p696
        %p966 = pneg %p693
        %p967 = pneg %p717
        %p968 = pneg %p714
        %p969 = pneg %p738
        %p970 = pneg %p735
        %p971 = pneg %p764
        %p972 = pneg %p761
        %s973 = sand.u32 %s751, 1
        %s974 = scalar_lea.sflag [#allocation3], %s973
        %s975 = sand.u32 %s751, 1
        %s976 = smul.addr %s975, 8
        %s977 = scalar_lea.vmem [#allocation2], %s976
        %p978 = scmp.lt.s32.totalorder %s77, 1
        %s979 = scalar_select %p978, %s77, 1
        %s980 = smul.addr %s979, 2
        %s981 = smul.addr %s980, 8
        %s982 = scalar_lea.vmem %s1, %s981
        %p983 = scmp.lt.s32.totalorder %s77, 1
        %s984 = scalar_select %p983, %s77, 1
        %s985 = smul.addr %s984, 3
        %s986 = smul.addr %s985, 8
        %s987 = scalar_lea.vmem %s3, %s986
        %p988 = scmp.lt.s32.totalorder %s77, 1
        %s989 = scalar_select %p988, %s77, 1
        %s990 = scalar_lea.vmem %s5, %s989
        %v992 = vld [vmem:[%s982] sm:$0xff]
        %v993 = vld [vmem:[%s982 + $0x8] sm:$0xff]
        %v994 = vld [vmem:[%s7] sm:$0x1]
        %v995 = vld [vmem:[%s9] sm:$0x1]
        %vm996 = vcmask 261120
        %v997 = vsel %vm996, %v992, 0.0
        %998 = vadd.xlane.f32.xlu0 %v997
        %v999 = vpop.xlane.xlu0 %998
        %v1000 = vsel %vm996, %v993, 0.0
        %1001 = vadd.xlane.f32.xlu0 %v1000
        %v1002 = vpop.xlane.xlu0 %1001
        %v1003 = vrcp.pop 32.0
        %v1004 = vmul.f32 %v999, %v1003
        %v1005 = vmul.f32 %v1002, %v1003
        %v1006 = vsub.f32 %v992, %v1004
        %v1007 = vsub.f32 %v993, %v1005
        %v1008 = vmul.f32 %v1006, %v1006
        %v1009 = vmul.f32 %v1007, %v1007
        %v1010 = vsel %vm996, %v1008, 0.0
        %1011 = vadd.xlane.f32.xlu0 %v1010
        %v1012 = vpop.xlane.xlu0 %1011
        %v1013 = vsel %vm996, %v1009, 0.0
        %1014 = vadd.xlane.f32.xlu0 %v1013
        %v1015 = vpop.xlane.xlu0 %1014
        %v1016 = vmul.f32 %v1012, %v1003
        %v1017 = vmul.f32 %v1015, %v1003
        %v1018 = vadd.f32 %v1016, 1e-12
        %v1019 = vadd.f32 %v1017, 1e-12
        %v1020 = vrsqrt.pop %v1018
        %v1021 = vrsqrt.pop %v1019
        %v1022 = vmul.f32 %v1006, %v1020
        %v1023 = vmul.f32 %v1007, %v1021
        %v1025 = vlaneseq
        %v1026 = vshrl.u32 %v1025, 7
        %v1027 = vsub.s32 0, %v1026
        %v1028 = vrot.slane %v994, %v1027
        %v1030 = vmul.f32 %v1022, %v1028
        %v1031 = vmul.f32 %v1023, %v1028
        %v1033 = vlaneseq
        %v1034 = vshrl.u32 %v1033, 7
        %v1035 = vsub.s32 0, %v1034
        %v1036 = vrot.slane %v995, %v1035
        %v1038 = vadd.f32 %v1030, %v1036
        %v1039 = vadd.f32 %v1031, %v1036
        %v1040 = vld [vmem:[%s987] sm:$0xff]
        %v1041 = vld [vmem:[%s987 + $0x8] sm:$0xff]
        %v1042 = vld [vmem:[%s987 + $0x10] sm:$0x1]
        %v1043 = vpack.c.bf16 %v1041, %v1040
        %v1044 = vpack.c.bf16 %v1042, %v1042
        %v1045 = vld [vmem:[%s990] sm:$0x1]
        %v1046 = vpack.c.bf16 %v1039, %v1038
        %v1047 = vld [vmem:[%s11] sm:$0xf]
        %v1048 = vld [vmem:[%s11 + $0x4] sm:$0xf]
        %v1049 = vld [vmem:[%s11 + $0x8] sm:$0xf]
        %v1050 = vld [vmem:[%s11 + $0xc] sm:$0xf]
        %v1051 = vld [vmem:[%s13] sm:$0x1]
        %v1053 = vlaneseq
        %v1054 = vshrl.u32 %v1053, 7
        %v1055 = vsub.s32 0, %v1054
        %v1056 = vrot.slane %v1051, %v1055
        %v1062 = vunpack.c.l.b16 %v1047
        %v1063 = vunpack.c.l.b16 %v1048
        %v1064 = vunpack.c.l.b16 %v1049
        %v1065 = vunpack.c.l.b16 %v1050
        %v1066 = vpack.c.b16 %v1063, %v1062
        %v1067 = vpack.c.b16 %v1065, %v1064
        %v1071 = vsel %vm996, %v1046, 0
        %1073 = vmatprep.subr.bf16.mxu0 0
        %1074 = vmatpush1.bf16.msra.mxu0 %v1066
        %1075 = vmatprep.subr.bf16.mxu0 0
        %1076 = vmatpush1.bf16.msra.mxu0 %v1067
        %1077 = vmatprep.subr.bf16.mxu0 0
        %1078 = vmatpush1.bf16.msra.mxu0 0
        %1079 = vmatprep.subr.bf16.mxu0 0
        %1080 = vmatpush1.bf16.msra.mxu0 0
        %1081 = vmatprep.subr.bf16.mxu0 0
        %1082 = vmatpush1.bf16.msra.mxu0 0
        %1083 = vmatprep.subr.bf16.mxu0 0
        %1084 = vmatpush1.bf16.msra.mxu0 0
        %1085 = vmatprep.subr.bf16.mxu0 0
        %1086 = vmatpush1.bf16.msra.mxu0 0
        %1087 = vmatprep.subr.bf16.mxu0 0
        %1088 = vmatpush1.bf16.msra.mxu0 0
        %1089 = vmatprep.subr.bf16.mxu0 0
        %1090 = vmatpush1.bf16.msra.mxu0 0
        %1091 = vmatprep.subr.bf16.mxu0 0
        %1092 = vmatpush1.bf16.msra.mxu0 0
        %1093 = vmatprep.subr.bf16.mxu0 0
        %1094 = vmatpush1.bf16.msra.mxu0 0
        %1095 = vmatprep.subr.bf16.mxu0 0
        %1096 = vmatpush1.bf16.msra.mxu0 0
        %1097 = vmatprep.subr.bf16.mxu0 0
        %1098 = vmatpush1.bf16.msra.mxu0 0
        %1099 = vmatprep.subr.bf16.mxu0 0
        %1100 = vmatpush1.bf16.msra.mxu0 0
        %1101 = vmatprep.subr.bf16.mxu0 0
        %1102 = vmatpush1.bf16.msra.mxu0 0
        %1103 = vmatprep.subr.bf16.mxu0 0
        %1104 = vmatpush1.bf16.msra.mxu0 0
        %1105 = vmatprep.mubr.bf16.mxu0 0
        %1106 = vmatmul.mubr.bf16.gmra.mrb[0].mxu0 %v1071
        %v1107 = vpop.f32.mrb[0].mxu0
        %v1108 = vadd.f32 %v1056, %v1107
        %v1109 = vpop.f32.mrb[0].mxu0
        %v1110 = vpop.f32.mrb[0].mxu0
        %v1111 = vadd.f32 %v1056, %v1110
        %v1112 = vpop.f32.mrb[0].mxu0
        %1113 = vdwg.mxu0
        %v1114 = vld [vmem:[%s15] sm:$0xf]
        %v1115 = vld [vmem:[%s15 + $0x4] sm:$0xf]
        %v1116 = vld [vmem:[%s15 + $0x8] sm:$0xf]
        %v1117 = vld [vmem:[%s15 + $0xc] sm:$0xf]
        %v1118 = vld [vmem:[%s17] sm:$0x1]
        %v1119 = vmul.f32 %v1108, 0.35355338
        %v1120 = vmul.f32 %v1111, 0.35355338
        %v1121 = vpack.c.bf16 %v1120, %v1119
        %v1122 = vpack.c.bf16 %v1111, %v1108
        %v1124 = vlaneseq
        %v1125 = vshrl.u32 %v1124, 7
        %v1126 = vsub.s32 0, %v1125
        %v1127 = vrot.slane %v1045, %v1126
        %1130 = vrot.lane.b32.xlu0 %v1122, 96
        %v1131 = vpop.permute.xlu0 %1130
        %vm1132 = vcmask 64512
        %v1134 = vsel %vm1132, %v1121, 0
        %v1137 = vsel %vm1132, %v1131, 0
        %1139 = vmatprep.subr.bf16.mxu0 0
        %1140 = vmatpush1.bf16.xpose.msra.mxu0 %v1137
        %1141 = vmatprep.subr.bf16.mxu0 0
        %1142 = vmatpush1.bf16.xpose.msra.mxu0 0
        %1143 = vmatprep.subr.bf16.mxu0 0
        %1144 = vmatpush1.bf16.xpose.msra.mxu0 0
        %1145 = vmatprep.subr.bf16.mxu0 0
        %1146 = vmatpush1.bf16.xpose.msra.mxu0 0
        %1147 = vmatprep.subr.bf16.mxu0 0
        %1148 = vmatpush1.bf16.xpose.msra.mxu0 0
        %1149 = vmatprep.subr.bf16.mxu0 0
        %1150 = vmatpush1.bf16.xpose.msra.mxu0 0
        %1151 = vmatprep.subr.bf16.mxu0 0
        %1152 = vmatpush1.bf16.xpose.msra.mxu0 0
        %1153 = vmatprep.subr.bf16.mxu0 0
        %1154 = vmatpush1.bf16.xpose.msra.mxu0 0
        %1155 = vmatprep.subr.bf16.mxu0 0
        %1156 = vmatpush1.bf16.xpose.msra.mxu0 0
        %1157 = vmatprep.subr.bf16.mxu0 0
        %1158 = vmatpush1.bf16.xpose.msra.mxu0 0
        %1159 = vmatprep.subr.bf16.mxu0 0
        %1160 = vmatpush1.bf16.xpose.msra.mxu0 0
        %1161 = vmatprep.subr.bf16.mxu0 0
        %1162 = vmatpush1.bf16.xpose.msra.mxu0 0
        %1163 = vmatprep.subr.bf16.mxu0 0
        %1164 = vmatpush1.bf16.xpose.msra.mxu0 0
        %1165 = vmatprep.subr.bf16.mxu0 0
        %1166 = vmatpush1.bf16.xpose.msra.mxu0 0
        %1167 = vmatprep.subr.bf16.mxu0 0
        %1168 = vmatpush1.bf16.xpose.msra.mxu0 0
        %1169 = vmatprep.subr.bf16.mxu0 0
        %1170 = vmatpush1.bf16.xpose.msra.mxu0 0
        %1171 = vmatprep.mubr.bf16.mxu0 0
        %1172 = vmatmul.mubr.bf16.gmra.mrb[0].mxu0 %v1134
        %v1173 = vpop.f32.mrb[0].mxu0
        %v1174 = vadd.f32 %v1127, %v1173
        %v1175 = vpop.f32.mrb[0].mxu0
        %v1176 = vpop.f32.mrb[0].mxu0
        %v1177 = vadd.f32 %v1127, %v1176
        %v1178 = vpop.f32.mrb[0].mxu0
        %1179 = vdwg.mxu0
        %vm1180 = vcmask 130048
        %v1181 = vsel %vm1180, %v1174, -inf
        %1182 = vmax.xlane.f32.xlu0 %v1181
        %v1183 = vpop.xlane.xlu0 %1182
        %v1184 = vsel %vm1180, %v1177, -inf
        %1185 = vmax.xlane.f32.xlu0 %v1184
        %v1186 = vpop.xlane.xlu0 %1185
        %v1187 = vsub.f32 %v1174, %v1183
        %v1188 = vsub.f32 %v1177, %v1186
        %v1189 = vmul.f32 %v1187, 1.442695
        %v1190 = vpow.pop %v1189
        %v1191 = vmul.f32 %v1188, 1.442695
        %v1192 = vpow.pop %v1191
        %v1193 = vsel %vm1180, %v1190, 0.0
        %1194 = vadd.xlane.f32.xlu0 %v1193
        %v1195 = vpop.xlane.xlu0 %1194
        %v1196 = vsel %vm1180, %v1192, 0.0
        %1197 = vadd.xlane.f32.xlu0 %v1196
        %v1198 = vpop.xlane.xlu0 %1197
        %v1199 = vrcp.pop %v1195
        %v1200 = vrcp.pop %v1198
        %v1201 = vmul.f32 %v1190, %v1199
        %v1202 = vmul.f32 %v1192, %v1200
        %v1203 = vpack.c.bf16 %v1202, %v1201
        %1204 = vrot.lane.b32.xlu0 %v1122, 64
        %v1205 = vpop.permute.xlu0 %1204
        %v1208 = vsel %vm1180, %v1203, 0
        %1210 = vmatprep.subr.bf16.mxu0 0
        %1211 = vmatpush1.bf16.msra.mxu0 %v1205
        %1212 = vmatprep.subr.bf16.mxu0 0
        %1213 = vmatpush1.bf16.msra.mxu0 0
        %1214 = vmatprep.subr.bf16.mxu0 0
        %1215 = vmatpush1.bf16.msra.mxu0 0
        %1216 = vmatprep.subr.bf16.mxu0 0
        %1217 = vmatpush1.bf16.msra.mxu0 0
        %1218 = vmatprep.subr.bf16.mxu0 0
        %1219 = vmatpush1.bf16.msra.mxu0 0
        %1220 = vmatprep.subr.bf16.mxu0 0
        %1221 = vmatpush1.bf16.msra.mxu0 0
        %1222 = vmatprep.subr.bf16.mxu0 0
        %1223 = vmatpush1.bf16.msra.mxu0 0
        %1224 = vmatprep.subr.bf16.mxu0 0
        %1225 = vmatpush1.bf16.msra.mxu0 0
        %1226 = vmatprep.subr.bf16.mxu0 0
        %1227 = vmatpush1.bf16.msra.mxu0 0
        %1228 = vmatprep.subr.bf16.mxu0 0
        %1229 = vmatpush1.bf16.msra.mxu0 0
        %1230 = vmatprep.subr.bf16.mxu0 0
        %1231 = vmatpush1.bf16.msra.mxu0 0
        %1232 = vmatprep.subr.bf16.mxu0 0
        %1233 = vmatpush1.bf16.msra.mxu0 0
        %1234 = vmatprep.subr.bf16.mxu0 0
        %1235 = vmatpush1.bf16.msra.mxu0 0
        %1236 = vmatprep.subr.bf16.mxu0 0
        %1237 = vmatpush1.bf16.msra.mxu0 0
        %1238 = vmatprep.subr.bf16.mxu0 0
        %1239 = vmatpush1.bf16.msra.mxu0 0
        %1240 = vmatprep.subr.bf16.mxu0 0
        %1241 = vmatpush1.bf16.msra.mxu0 0
        %1242 = vmatprep.mubr.bf16.mxu0 0
        %1243 = vmatmul.mubr.bf16.gmra.mrb[0].mxu0 %v1208
        %v1244 = vpop.f32.mrb[0].mxu0
        %v1245 = vadd.f32 0.0, %v1244
        %v1246 = vpop.f32.mrb[0].mxu0
        %v1247 = vpop.f32.mrb[0].mxu0
        %v1248 = vadd.f32 0.0, %v1247
        %v1249 = vpop.f32.mrb[0].mxu0
        %1250 = vdwg.mxu0
        %1252 = vrot.lane.b32.xlu0 %v1121, 120
        %v1253 = vpop.permute.xlu0 %1252
        %1254 = vrot.lane.b32.xlu0 %v1122, 88
        %v1255 = vpop.permute.xlu0 %1254
        %v1257 = vsel %vm1132, %v1253, 0
        %v1260 = vsel %vm1132, %v1255, 0
        %1262 = vmatprep.subr.bf16.mxu0 0
        %1263 = vmatpush1.bf16.xpose.msra.mxu0 %v1260
        %1264 = vmatprep.subr.bf16.mxu0 0
        %1265 = vmatpush1.bf16.xpose.msra.mxu0 0
        %1266 = vmatprep.subr.bf16.mxu0 0
        %1267 = vmatpush1.bf16.xpose.msra.mxu0 0
        %1268 = vmatprep.subr.bf16.mxu0 0
        %1269 = vmatpush1.bf16.xpose.msra.mxu0 0
        %1270 = vmatprep.subr.bf16.mxu0 0
        %1271 = vmatpush1.bf16.xpose.msra.mxu0 0
        %1272 = vmatprep.subr.bf16.mxu0 0
        %1273 = vmatpush1.bf16.xpose.msra.mxu0 0
        %1274 = vmatprep.subr.bf16.mxu0 0
        %1275 = vmatpush1.bf16.xpose.msra.mxu0 0
        %1276 = vmatprep.subr.bf16.mxu0 0
        %1277 = vmatpush1.bf16.xpose.msra.mxu0 0
        %1278 = vmatprep.subr.bf16.mxu0 0
        %1279 = vmatpush1.bf16.xpose.msra.mxu0 0
        %1280 = vmatprep.subr.bf16.mxu0 0
        %1281 = vmatpush1.bf16.xpose.msra.mxu0 0
        %1282 = vmatprep.subr.bf16.mxu0 0
        %1283 = vmatpush1.bf16.xpose.msra.mxu0 0
        %1284 = vmatprep.subr.bf16.mxu0 0
        %1285 = vmatpush1.bf16.xpose.msra.mxu0 0
        %1286 = vmatprep.subr.bf16.mxu0 0
        %1287 = vmatpush1.bf16.xpose.msra.mxu0 0
        %1288 = vmatprep.subr.bf16.mxu0 0
        %1289 = vmatpush1.bf16.xpose.msra.mxu0 0
        %1290 = vmatprep.subr.bf16.mxu0 0
        %1291 = vmatpush1.bf16.xpose.msra.mxu0 0
        %1292 = vmatprep.subr.bf16.mxu0 0
        %1293 = vmatpush1.bf16.xpose.msra.mxu0 0
        %1294 = vmatprep.mubr.bf16.mxu0 0
        %1295 = vmatmul.mubr.bf16.gmra.mrb[0].mxu0 %v1257
        %v1296 = vpop.f32.mrb[0].mxu0
        %v1297 = vadd.f32 %v1127, %v1296
        %v1298 = vpop.f32.mrb[0].mxu0
        %v1299 = vpop.f32.mrb[0].mxu0
        %v1300 = vadd.f32 %v1127, %v1299
        %v1301 = vpop.f32.mrb[0].mxu0
        %1302 = vdwg.mxu0
        %v1303 = vsel %vm1180, %v1297, -inf
        %1304 = vmax.xlane.f32.xlu0 %v1303
        %v1305 = vpop.xlane.xlu0 %1304
        %v1306 = vsel %vm1180, %v1300, -inf
        %1307 = vmax.xlane.f32.xlu0 %v1306
        %v1308 = vpop.xlane.xlu0 %1307
        %v1309 = vsub.f32 %v1297, %v1305
        %v1310 = vsub.f32 %v1300, %v1308
        %v1311 = vmul.f32 %v1309, 1.442695
        %v1312 = vpow.pop %v1311
        %v1313 = vmul.f32 %v1310, 1.442695
        %v1314 = vpow.pop %v1313
        %v1315 = vsel %vm1180, %v1312, 0.0
        %1316 = vadd.xlane.f32.xlu0 %v1315
        %v1317 = vpop.xlane.xlu0 %1316
        %v1318 = vsel %vm1180, %v1314, 0.0
        %1319 = vadd.xlane.f32.xlu0 %v1318
        %v1320 = vpop.xlane.xlu0 %1319
        %v1321 = vrcp.pop %v1317
        %v1322 = vrcp.pop %v1320
        %v1323 = vmul.f32 %v1312, %v1321
        %v1324 = vmul.f32 %v1314, %v1322
        %v1325 = vpack.c.bf16 %v1324, %v1323
        %1326 = vrot.lane.b32.xlu0 %v1122, 56
        %v1327 = vpop.permute.xlu0 %1326
        %v1330 = vsel %vm1180, %v1325, 0
        %1332 = vmatprep.subr.bf16.mxu0 0
        %1333 = vmatpush1.bf16.msra.mxu0 %v1327
        %1334 = vmatprep.subr.bf16.mxu0 0
        %1335 = vmatpush1.bf16.msra.mxu0 0
        %1336 = vmatprep.subr.bf16.mxu0 0
        %1337 = vmatpush1.bf16.msra.mxu0 0
        %1338 = vmatprep.subr.bf16.mxu0 0
        %1339 = vmatpush1.bf16.msra.mxu0 0
        %1340 = vmatprep.subr.bf16.mxu0 0
        %1341 = vmatpush1.bf16.msra.mxu0 0
        %1342 = vmatprep.subr.bf16.mxu0 0
        %1343 = vmatpush1.bf16.msra.mxu0 0
        %1344 = vmatprep.subr.bf16.mxu0 0
        %1345 = vmatpush1.bf16.msra.mxu0 0
        %1346 = vmatprep.subr.bf16.mxu0 0
        %1347 = vmatpush1.bf16.msra.mxu0 0
        %1348 = vmatprep.subr.bf16.mxu0 0
        %1349 = vmatpush1.bf16.msra.mxu0 0
        %1350 = vmatprep.subr.bf16.mxu0 0
        %1351 = vmatpush1.bf16.msra.mxu0 0
        %1352 = vmatprep.subr.bf16.mxu0 0
        %1353 = vmatpush1.bf16.msra.mxu0 0
        %1354 = vmatprep.subr.bf16.mxu0 0
        %1355 = vmatpush1.bf16.msra.mxu0 0
        %1356 = vmatprep.subr.bf16.mxu0 0
        %1357 = vmatpush1.bf16.msra.mxu0 0
        %1358 = vmatprep.subr.bf16.mxu0 0
        %1359 = vmatpush1.bf16.msra.mxu0 0
        %1360 = vmatprep.subr.bf16.mxu0 0
        %1361 = vmatpush1.bf16.msra.mxu0 0
        %1362 = vmatprep.subr.bf16.mxu0 0
        %1363 = vmatpush1.bf16.msra.mxu0 0
        %1364 = vmatprep.mubr.bf16.mxu0 0
        %1365 = vmatmul.mubr.bf16.gmra.mrb[0].mxu0 %v1330
        %v1366 = vpop.f32.mrb[0].mxu0
        %v1367 = vadd.f32 0.0, %v1366
        %v1368 = vpop.f32.mrb[0].mxu0
        %v1369 = vpop.f32.mrb[0].mxu0
        %v1370 = vadd.f32 0.0, %v1369
        %v1371 = vpop.f32.mrb[0].mxu0
        %1372 = vdwg.mxu0
        %1373 = vrot.lane.b32.xlu0 %v1121, 112
        %v1374 = vpop.permute.xlu0 %1373
        %1375 = vrot.lane.b32.xlu0 %v1122, 80
        %v1376 = vpop.permute.xlu0 %1375
        %v1378 = vsel %vm1132, %v1374, 0
        %v1381 = vsel %vm1132, %v1376, 0
        %1383 = vmatprep.subr.bf16.mxu0 0
        %1384 = vmatpush1.bf16.xpose.msra.mxu0 %v1381
        %1385 = vmatprep.subr.bf16.mxu0 0
        %1386 = vmatpush1.bf16.xpose.msra.mxu0 0
        %1387 = vmatprep.subr.bf16.mxu0 0
        %1388 = vmatpush1.bf16.xpose.msra.mxu0 0
        %1389 = vmatprep.subr.bf16.mxu0 0
        %1390 = vmatpush1.bf16.xpose.msra.mxu0 0
        %1391 = vmatprep.subr.bf16.mxu0 0
        %1392 = vmatpush1.bf16.xpose.msra.mxu0 0
        %1393 = vmatprep.subr.bf16.mxu0 0
        %1394 = vmatpush1.bf16.xpose.msra.mxu0 0
        %1395 = vmatprep.subr.bf16.mxu0 0
        %1396 = vmatpush1.bf16.xpose.msra.mxu0 0
        %1397 = vmatprep.subr.bf16.mxu0 0
        %1398 = vmatpush1.bf16.xpose.msra.mxu0 0
        %1399 = vmatprep.subr.bf16.mxu0 0
        %1400 = vmatpush1.bf16.xpose.msra.mxu0 0
        %1401 = vmatprep.subr.bf16.mxu0 0
        %1402 = vmatpush1.bf16.xpose.msra.mxu0 0
        %1403 = vmatprep.subr.bf16.mxu0 0
        %1404 = vmatpush1.bf16.xpose.msra.mxu0 0
        %1405 = vmatprep.subr.bf16.mxu0 0
        %1406 = vmatpush1.bf16.xpose.msra.mxu0 0
        %1407 = vmatprep.subr.bf16.mxu0 0
        %1408 = vmatpush1.bf16.xpose.msra.mxu0 0
        %1409 = vmatprep.subr.bf16.mxu0 0
        %1410 = vmatpush1.bf16.xpose.msra.mxu0 0
        %1411 = vmatprep.subr.bf16.mxu0 0
        %1412 = vmatpush1.bf16.xpose.msra.mxu0 0
        %1413 = vmatprep.subr.bf16.mxu0 0
        %1414 = vmatpush1.bf16.xpose.msra.mxu0 0
        %1415 = vmatprep.mubr.bf16.mxu0 0
        %1416 = vmatmul.mubr.bf16.gmra.mrb[0].mxu0 %v1378
        %v1417 = vpop.f32.mrb[0].mxu0
        %v1418 = vadd.f32 %v1127, %v1417
        %v1419 = vpop.f32.mrb[0].mxu0
        %v1420 = vpop.f32.mrb[0].mxu0
        %v1421 = vadd.f32 %v1127, %v1420
        %v1422 = vpop.f32.mrb[0].mxu0
        %1423 = vdwg.mxu0
        %v1424 = vsel %vm1180, %v1418, -inf
        %1425 = vmax.xlane.f32.xlu0 %v1424
        %v1426 = vpop.xlane.xlu0 %1425
        %v1427 = vsel %vm1180, %v1421, -inf
        %1428 = vmax.xlane.f32.xlu0 %v1427
        %v1429 = vpop.xlane.xlu0 %1428
        %v1430 = vsub.f32 %v1418, %v1426
        %v1431 = vsub.f32 %v1421, %v1429
        %v1432 = vmul.f32 %v1430, 1.442695
        %v1433 = vpow.pop %v1432
        %v1434 = vmul.f32 %v1431, 1.442695
        %v1435 = vpow.pop %v1434
        %v1436 = vsel %vm1180, %v1433, 0.0
        %1437 = vadd.xlane.f32.xlu0 %v1436
        %v1438 = vpop.xlane.xlu0 %1437
        %v1439 = vsel %vm1180, %v1435, 0.0
        %1440 = vadd.xlane.f32.xlu0 %v1439
        %v1441 = vpop.xlane.xlu0 %1440
        %v1442 = vrcp.pop %v1438
        %v1443 = vrcp.pop %v1441
        %v1444 = vmul.f32 %v1433, %v1442
        %v1445 = vmul.f32 %v1435, %v1443
        %v1446 = vpack.c.bf16 %v1445, %v1444
        %1447 = vrot.lane.b32.xlu0 %v1122, 48
        %v1448 = vpop.permute.xlu0 %1447
        %v1451 = vsel %vm1180, %v1446, 0
        %1453 = vmatprep.subr.bf16.mxu0 0
        %1454 = vmatpush1.bf16.msra.mxu0 %v1448
        %1455 = vmatprep.subr.bf16.mxu0 0
        %1456 = vmatpush1.bf16.msra.mxu0 0
        %1457 = vmatprep.subr.bf16.mxu0 0
        %1458 = vmatpush1.bf16.msra.mxu0 0
        %1459 = vmatprep.subr.bf16.mxu0 0
        %1460 = vmatpush1.bf16.msra.mxu0 0
        %1461 = vmatprep.subr.bf16.mxu0 0
        %1462 = vmatpush1.bf16.msra.mxu0 0
        %1463 = vmatprep.subr.bf16.mxu0 0
        %1464 = vmatpush1.bf16.msra.mxu0 0
        %1465 = vmatprep.subr.bf16.mxu0 0
        %1466 = vmatpush1.bf16.msra.mxu0 0
        %1467 = vmatprep.subr.bf16.mxu0 0
        %1468 = vmatpush1.bf16.msra.mxu0 0
        %1469 = vmatprep.subr.bf16.mxu0 0
        %1470 = vmatpush1.bf16.msra.mxu0 0
        %1471 = vmatprep.subr.bf16.mxu0 0
        %1472 = vmatpush1.bf16.msra.mxu0 0
        %1473 = vmatprep.subr.bf16.mxu0 0
        %1474 = vmatpush1.bf16.msra.mxu0 0
        %1475 = vmatprep.subr.bf16.mxu0 0
        %1476 = vmatpush1.bf16.msra.mxu0 0
        %1477 = vmatprep.subr.bf16.mxu0 0
        %1478 = vmatpush1.bf16.msra.mxu0 0
        %1479 = vmatprep.subr.bf16.mxu0 0
        %1480 = vmatpush1.bf16.msra.mxu0 0
        %1481 = vmatprep.subr.bf16.mxu0 0
        %1482 = vmatpush1.bf16.msra.mxu0 0
        %1483 = vmatprep.subr.bf16.mxu0 0
        %1484 = vmatpush1.bf16.msra.mxu0 0
        %1485 = vmatprep.mubr.bf16.mxu0 0
        %1486 = vmatmul.mubr.bf16.gmra.mrb[0].mxu0 %v1451
        %v1487 = vpop.f32.mrb[0].mxu0
        %v1488 = vadd.f32 0.0, %v1487
        %v1489 = vpop.f32.mrb[0].mxu0
        %v1490 = vpop.f32.mrb[0].mxu0
        %v1491 = vadd.f32 0.0, %v1490
        %v1492 = vpop.f32.mrb[0].mxu0
        %1493 = vdwg.mxu0
        %1494 = vrot.lane.b32.xlu0 %v1121, 104
        %v1495 = vpop.permute.xlu0 %1494
        %1496 = vrot.lane.b32.xlu0 %v1122, 72
        %v1497 = vpop.permute.xlu0 %1496
        %v1499 = vsel %vm1132, %v1495, 0
        %v1502 = vsel %vm1132, %v1497, 0
        %1504 = vmatprep.subr.bf16.mxu0 0
        %1505 = vmatpush1.bf16.xpose.msra.mxu0 %v1502
        %1506 = vmatprep.subr.bf16.mxu0 0
        %1507 = vmatpush1.bf16.xpose.msra.mxu0 0
        %1508 = vmatprep.subr.bf16.mxu0 0
        %1509 = vmatpush1.bf16.xpose.msra.mxu0 0
        %1510 = vmatprep.subr.bf16.mxu0 0
        %1511 = vmatpush1.bf16.xpose.msra.mxu0 0
        %1512 = vmatprep.subr.bf16.mxu0 0
        %1513 = vmatpush1.bf16.xpose.msra.mxu0 0
        %1514 = vmatprep.subr.bf16.mxu0 0
        %1515 = vmatpush1.bf16.xpose.msra.mxu0 0
        %1516 = vmatprep.subr.bf16.mxu0 0
        %1517 = vmatpush1.bf16.xpose.msra.mxu0 0
        %1518 = vmatprep.subr.bf16.mxu0 0
        %1519 = vmatpush1.bf16.xpose.msra.mxu0 0
        %1520 = vmatprep.subr.bf16.mxu0 0
        %1521 = vmatpush1.bf16.xpose.msra.mxu0 0
        %1522 = vmatprep.subr.bf16.mxu0 0
        %1523 = vmatpush1.bf16.xpose.msra.mxu0 0
        %1524 = vmatprep.subr.bf16.mxu0 0
        %1525 = vmatpush1.bf16.xpose.msra.mxu0 0
        %1526 = vmatprep.subr.bf16.mxu0 0
        %1527 = vmatpush1.bf16.xpose.msra.mxu0 0
        %1528 = vmatprep.subr.bf16.mxu0 0
        %1529 = vmatpush1.bf16.xpose.msra.mxu0 0
        %1530 = vmatprep.subr.bf16.mxu0 0
        %1531 = vmatpush1.bf16.xpose.msra.mxu0 0
        %1532 = vmatprep.subr.bf16.mxu0 0
        %1533 = vmatpush1.bf16.xpose.msra.mxu0 0
        %1534 = vmatprep.subr.bf16.mxu0 0
        %1535 = vmatpush1.bf16.xpose.msra.mxu0 0
        %1536 = vmatprep.mubr.bf16.mxu0 0
        %1537 = vmatmul.mubr.bf16.gmra.mrb[0].mxu0 %v1499
        %v1538 = vpop.f32.mrb[0].mxu0
        %v1539 = vadd.f32 %v1127, %v1538
        %v1540 = vpop.f32.mrb[0].mxu0
        %v1541 = vpop.f32.mrb[0].mxu0
        %v1542 = vadd.f32 %v1127, %v1541
        %v1543 = vpop.f32.mrb[0].mxu0
        %1544 = vdwg.mxu0
        %v1545 = vsel %vm1180, %v1539, -inf
        %1546 = vmax.xlane.f32.xlu0 %v1545
        %v1547 = vpop.xlane.xlu0 %1546
        %v1548 = vsel %vm1180, %v1542, -inf
        %1549 = vmax.xlane.f32.xlu0 %v1548
        %v1550 = vpop.xlane.xlu0 %1549
        %v1551 = vsub.f32 %v1539, %v1547
        %v1552 = vsub.f32 %v1542, %v1550
        %v1553 = vmul.f32 %v1551, 1.442695
        %v1554 = vpow.pop %v1553
        %v1555 = vmul.f32 %v1552, 1.442695
        %v1556 = vpow.pop %v1555
        %v1557 = vsel %vm1180, %v1554, 0.0
        %1558 = vadd.xlane.f32.xlu0 %v1557
        %v1559 = vpop.xlane.xlu0 %1558
        %v1560 = vsel %vm1180, %v1556, 0.0
        %1561 = vadd.xlane.f32.xlu0 %v1560
        %v1562 = vpop.xlane.xlu0 %1561
        %v1563 = vrcp.pop %v1559
        %v1564 = vrcp.pop %v1562
        %v1565 = vmul.f32 %v1554, %v1563
        %v1566 = vmul.f32 %v1556, %v1564
        %v1567 = vpack.c.bf16 %v1566, %v1565
        %1568 = vrot.lane.b32.xlu0 %v1122, 40
        %v1569 = vpop.permute.xlu0 %1568
        %v1572 = vsel %vm1180, %v1567, 0
        %1574 = vmatprep.subr.bf16.mxu0 0
        %1575 = vmatpush1.bf16.msra.mxu0 %v1569
        %1576 = vmatprep.subr.bf16.mxu0 0
        %1577 = vmatpush1.bf16.msra.mxu0 0
        %1578 = vmatprep.subr.bf16.mxu0 0
        %1579 = vmatpush1.bf16.msra.mxu0 0
        %1580 = vmatprep.subr.bf16.mxu0 0
        %1581 = vmatpush1.bf16.msra.mxu0 0
        %1582 = vmatprep.subr.bf16.mxu0 0
        %1583 = vmatpush1.bf16.msra.mxu0 0
        %1584 = vmatprep.subr.bf16.mxu0 0
        %1585 = vmatpush1.bf16.msra.mxu0 0
        %1586 = vmatprep.subr.bf16.mxu0 0
        %1587 = vmatpush1.bf16.msra.mxu0 0
        %1588 = vmatprep.subr.bf16.mxu0 0
        %1589 = vmatpush1.bf16.msra.mxu0 0
        %1590 = vmatprep.subr.bf16.mxu0 0
        %1591 = vmatpush1.bf16.msra.mxu0 0
        %1592 = vmatprep.subr.bf16.mxu0 0
        %1593 = vmatpush1.bf16.msra.mxu0 0
        %1594 = vmatprep.subr.bf16.mxu0 0
        %1595 = vmatpush1.bf16.msra.mxu0 0
        %1596 = vmatprep.subr.bf16.mxu0 0
        %1597 = vmatpush1.bf16.msra.mxu0 0
        %1598 = vmatprep.subr.bf16.mxu0 0
        %1599 = vmatpush1.bf16.msra.mxu0 0
        %1600 = vmatprep.subr.bf16.mxu0 0
        %1601 = vmatpush1.bf16.msra.mxu0 0
        %1602 = vmatprep.subr.bf16.mxu0 0
        %1603 = vmatpush1.bf16.msra.mxu0 0
        %1604 = vmatprep.subr.bf16.mxu0 0
        %1605 = vmatpush1.bf16.msra.mxu0 0
        %1606 = vmatprep.mubr.bf16.mxu0 0
        %1607 = vmatmul.mubr.bf16.gmra.mrb[0].mxu0 %v1572
        %v1608 = vpop.f32.mrb[0].mxu0
        %v1609 = vadd.f32 0.0, %v1608
        %v1610 = vpop.f32.mrb[0].mxu0
        %v1611 = vpop.f32.mrb[0].mxu0
        %v1612 = vadd.f32 0.0, %v1611
        %v1613 = vpop.f32.mrb[0].mxu0
        %1614 = vdwg.mxu0
        %1617 = vrot.lane.b32.xlu0 %v1367, 8
        %v1618 = vpop.permute.xlu0 %1617
        %1619 = vrot.lane.b32.xlu0 %v1370, 8
        %v1620 = vpop.permute.xlu0 %1619
        %1625 = vrot.lane.b32.xlu0 %v1488, 16
        %v1626 = vpop.permute.xlu0 %1625
        %1627 = vrot.lane.b32.xlu0 %v1491, 16
        %v1628 = vpop.permute.xlu0 %1627
        %1633 = vrot.lane.b32.xlu0 %v1609, 24
        %v1634 = vpop.permute.xlu0 %1633
        %1635 = vrot.lane.b32.xlu0 %v1612, 24
        %v1636 = vpop.permute.xlu0 %1635
        %v1639 = vsel %vm1132, %v1245, %v1618
        %v1640 = vsel %vm1132, %v1248, %v1620
        %v1641 = vsel %vm1180, %v1639, %v1626
        %v1642 = vsel %vm1180, %v1640, %v1628
        %vm1643 = vcmask 195584
        %v1644 = vsel %vm1643, %v1641, %v1634
        %v1645 = vsel %vm1643, %v1642, %v1636
        %v1646 = vpack.c.bf16 %v1645, %v1644
        %v1648 = vlaneseq
        %v1649 = vshrl.u32 %v1648, 7
        %v1650 = vsub.s32 0, %v1649
        %v1651 = vrot.slane %v1118, %v1650
        %v1657 = vunpack.c.l.b16 %v1114
        %v1658 = vunpack.c.l.b16 %v1115
        %v1659 = vunpack.c.l.b16 %v1116
        %v1660 = vunpack.c.l.b16 %v1117
        %v1661 = vpack.c.b16 %v1658, %v1657
        %v1662 = vpack.c.b16 %v1660, %v1659
        %v1666 = vsel %vm996, %v1646, 0
        %1668 = vmatprep.subr.bf16.mxu0 0
        %1669 = vmatpush1.bf16.msra.mxu0 %v1661
        %1670 = vmatprep.subr.bf16.mxu0 0
        %1671 = vmatpush1.bf16.msra.mxu0 %v1662
        %1672 = vmatprep.subr.bf16.mxu0 0
        %1673 = vmatpush1.bf16.msra.mxu0 0
        %1674 = vmatprep.subr.bf16.mxu0 0
        %1675 = vmatpush1.bf16.msra.mxu0 0
        %1676 = vmatprep.subr.bf16.mxu0 0
        %1677 = vmatpush1.bf16.msra.mxu0 0
        %1678 = vmatprep.subr.bf16.mxu0 0
        %1679 = vmatpush1.bf16.msra.mxu0 0
        %1680 = vmatprep.subr.bf16.mxu0 0
        %1681 = vmatpush1.bf16.msra.mxu0 0
        %1682 = vmatprep.subr.bf16.mxu0 0
        %1683 = vmatpush1.bf16.msra.mxu0 0
        %1684 = vmatprep.subr.bf16.mxu0 0
        %1685 = vmatpush1.bf16.msra.mxu0 0
        %1686 = vmatprep.subr.bf16.mxu0 0
        %1687 = vmatpush1.bf16.msra.mxu0 0
        %1688 = vmatprep.subr.bf16.mxu0 0
        %1689 = vmatpush1.bf16.msra.mxu0 0
        %1690 = vmatprep.subr.bf16.mxu0 0
        %1691 = vmatpush1.bf16.msra.mxu0 0
        %1692 = vmatprep.subr.bf16.mxu0 0
        %1693 = vmatpush1.bf16.msra.mxu0 0
        %1694 = vmatprep.subr.bf16.mxu0 0
        %1695 = vmatpush1.bf16.msra.mxu0 0
        %1696 = vmatprep.subr.bf16.mxu0 0
        %1697 = vmatpush1.bf16.msra.mxu0 0
        %1698 = vmatprep.subr.bf16.mxu0 0
        %1699 = vmatpush1.bf16.msra.mxu0 0
        %1700 = vmatprep.mubr.bf16.mxu0 0
        %1701 = vmatmul.mubr.bf16.gmra.mrb[0].mxu0 %v1666
        %v1702 = vpop.f32.mrb[0].mxu0
        %v1703 = vadd.f32 %v1651, %v1702
        %v1704 = vpop.f32.mrb[0].mxu0
        %v1705 = vpop.f32.mrb[0].mxu0
        %v1706 = vadd.f32 %v1651, %v1705
        %v1707 = vpop.f32.mrb[0].mxu0
        %1708 = vdwg.mxu0
        %v1709 = vadd.f32 %v1038, %v1703
        %v1710 = vadd.f32 %v1039, %v1706
        %v1711 = vld [vmem:[%s19] sm:$0x1]
        %v1712 = vld [vmem:[%s21] sm:$0x1]
        %v1713 = vsel %vm996, %v1709, 0.0
        %1714 = vadd.xlane.f32.xlu0 %v1713
        %v1715 = vpop.xlane.xlu0 %1714
        %v1716 = vsel %vm996, %v1710, 0.0
        %1717 = vadd.xlane.f32.xlu0 %v1716
        %v1718 = vpop.xlane.xlu0 %1717
        %v1719 = vmul.f32 %v1715, %v1003
        %v1720 = vmul.f32 %v1718, %v1003
        %v1721 = vsub.f32 %v1709, %v1719
        %v1722 = vsub.f32 %v1710, %v1720
        %v1723 = vmul.f32 %v1721, %v1721
        %v1724 = vmul.f32 %v1722, %v1722
        %v1725 = vsel %vm996, %v1723, 0.0
        %1726 = vadd.xlane.f32.xlu0 %v1725
        %v1727 = vpop.xlane.xlu0 %1726
        %v1728 = vsel %vm996, %v1724, 0.0
        %1729 = vadd.xlane.f32.xlu0 %v1728
        %v1730 = vpop.xlane.xlu0 %1729
        %v1731 = vmul.f32 %v1727, %v1003
        %v1732 = vmul.f32 %v1730, %v1003
        %v1733 = vadd.f32 %v1731, 1e-12
        %v1734 = vadd.f32 %v1732, 1e-12
        %v1735 = vrsqrt.pop %v1733
        %v1736 = vrsqrt.pop %v1734
        %v1737 = vmul.f32 %v1721, %v1735
        %v1738 = vmul.f32 %v1722, %v1736
        %v1740 = vlaneseq
        %v1741 = vshrl.u32 %v1740, 7
        %v1742 = vsub.s32 0, %v1741
        %v1743 = vrot.slane %v1711, %v1742
        %v1745 = vmul.f32 %v1737, %v1743
        %v1746 = vmul.f32 %v1738, %v1743
        %v1748 = vlaneseq
        %v1749 = vshrl.u32 %v1748, 7
        %v1750 = vsub.s32 0, %v1749
        %v1751 = vrot.slane %v1712, %v1750
        %v1753 = vadd.f32 %v1745, %v1751
        %v1754 = vadd.f32 %v1746, %v1751
        %v1755 = vpack.c.bf16 %v1753, %v1753
        %v1756 = vld [vmem:[%s23] sm:$0xf]
        %v1757 = vld [vmem:[%s23 + $0x4] sm:$0xf]
        %v1758 = vld [vmem:[%s23 + $0x8] sm:$0xf]
        %v1759 = vld [vmem:[%s23 + $0xc] sm:$0xf]
        %v1760 = vld [vmem:[%s25] sm:$0x1]
        %v1762 = vlaneseq
        %v1763 = vshrl.u32 %v1762, 7
        %v1764 = vsub.s32 0, %v1763
        %v1765 = vrot.slane %v1760, %v1764
        %v1771 = vunpack.c.l.b16 %v1756
        %v1772 = vunpack.c.l.b16 %v1757
        %v1773 = vunpack.c.l.b16 %v1758
        %v1774 = vunpack.c.l.b16 %v1759
        %v1775 = vpack.c.b16 %v1772, %v1771
        %v1776 = vpack.c.b16 %v1774, %v1773
        %v1780 = vsel %vm996, %v1755, 0
        %1782 = vmatprep.subr.bf16.mxu0 0
        %1783 = vmatpush1.bf16.msra.mxu0 %v1775
        %1784 = vmatprep.subr.bf16.mxu0 0
        %1785 = vmatpush1.bf16.msra.mxu0 %v1776
        %1786 = vmatprep.subr.bf16.mxu0 0
        %1787 = vmatpush1.bf16.msra.mxu0 0
        %1788 = vmatprep.subr.bf16.mxu0 0
        %1789 = vmatpush1.bf16.msra.mxu0 0
        %1790 = vmatprep.subr.bf16.mxu0 0
        %1791 = vmatpush1.bf16.msra.mxu0 0
        %1792 = vmatprep.subr.bf16.mxu0 0
        %1793 = vmatpush1.bf16.msra.mxu0 0
        %1794 = vmatprep.subr.bf16.mxu0 0
        %1795 = vmatpush1.bf16.msra.mxu0 0
        %1796 = vmatprep.subr.bf16.mxu0 0
        %1797 = vmatpush1.bf16.msra.mxu0 0
        %1798 = vmatprep.subr.bf16.mxu0 0
        %1799 = vmatpush1.bf16.msra.mxu0 0
        %1800 = vmatprep.subr.bf16.mxu0 0
        %1801 = vmatpush1.bf16.msra.mxu0 0
        %1802 = vmatprep.subr.bf16.mxu0 0
        %1803 = vmatpush1.bf16.msra.mxu0 0
        %1804 = vmatprep.subr.bf16.mxu0 0
        %1805 = vmatpush1.bf16.msra.mxu0 0
        %1806 = vmatprep.subr.bf16.mxu0 0
        %1807 = vmatpush1.bf16.msra.mxu0 0
        %1808 = vmatprep.subr.bf16.mxu0 0
        %1809 = vmatpush1.bf16.msra.mxu0 0
        %1810 = vmatprep.subr.bf16.mxu0 0
        %1811 = vmatpush1.bf16.msra.mxu0 0
        %1812 = vmatprep.subr.bf16.mxu0 0
        %1813 = vmatpush1.bf16.msra.mxu0 0
        %1814 = vmatprep.mubr.bf16.mxu0 0
        %1815 = vmatmul.mubr.bf16.gmra.mrb[0].mxu0 %v1780
        %v1816 = vpop.f32.mrb[0].mxu0
        %v1817 = vadd.f32 %v1765, %v1816
        %v1818 = vpop.f32.mrb[0].mxu0
        %v1819 = vpop.f32.mrb[0].mxu0
        %v1820 = vpop.f32.mrb[0].mxu0
        %1821 = vdwg.mxu0
        %v1822 = vld [vmem:[%s27] sm:$0xf]
        %v1823 = vld [vmem:[%s27 + $0x4] sm:$0xf]
        %v1824 = vld [vmem:[%s27 + $0x8] sm:$0xf]
        %v1825 = vld [vmem:[%s27 + $0xc] sm:$0xf]
        %v1826 = vld [vmem:[%s27 + $0x10] sm:$0xf]
        %v1827 = vld [vmem:[%s27 + $0x14] sm:$0xf]
        %v1828 = vld [vmem:[%s27 + $0x18] sm:$0xf]
        %v1829 = vld [vmem:[%s27 + $0x1c] sm:$0xf]
        %v1830 = vld [vmem:[%s29] sm:$0x1]
        %v1832 = vlaneseq
        %v1833 = vshrl.u32 %v1832, 7
        %v1834 = vsub.s32 0, %v1833
        %v1835 = vrot.slane %v1830, %v1834
        %v1845 = vunpack.c.l.b16 %v1822
        %v1846 = vunpack.c.l.b16 %v1823
        %v1847 = vunpack.c.l.b16 %v1824
        %v1848 = vunpack.c.l.b16 %v1825
        %v1849 = vunpack.c.l.b16 %v1826
        %v1850 = vunpack.c.l.b16 %v1827
        %v1851 = vunpack.c.l.b16 %v1828
        %v1852 = vunpack.c.l.b16 %v1829
        %v1853 = vpack.c.b16 %v1846, %v1845
        %v1854 = vpack.c.b16 %v1848, %v1847
        %v1855 = vpack.c.b16 %v1850, %v1849
        %v1856 = vpack.c.b16 %v1852, %v1851
        %vm1861 = vcmask 523264
        %v1863 = vsel %vm1861, %v1043, 0
        %v1866 = vsel %vm1861, %v1044, 0
        %1868 = vmatprep.subr.bf16.mxu0 0
        %1869 = vmatpush1.bf16.msra.mxu0 %v1853
        %1870 = vmatprep.subr.bf16.mxu0 0
        %1871 = vmatpush1.bf16.msra.mxu0 %v1854
        %1872 = vmatprep.subr.bf16.mxu0 0
        %1873 = vmatpush1.bf16.msra.mxu0 %v1855
        %1874 = vmatprep.subr.bf16.mxu0 0
        %1875 = vmatpush1.bf16.msra.mxu0 %v1856
        %1876 = vmatprep.subr.bf16.mxu0 0
        %1877 = vmatpush1.bf16.msra.mxu0 0
        %1878 = vmatprep.subr.bf16.mxu0 0
        %1879 = vmatpush1.bf16.msra.mxu0 0
        %1880 = vmatprep.subr.bf16.mxu0 0
        %1881 = vmatpush1.bf16.msra.mxu0 0
        %1882 = vmatprep.subr.bf16.mxu0 0
        %1883 = vmatpush1.bf16.msra.mxu0 0
        %1884 = vmatprep.subr.bf16.mxu0 0
        %1885 = vmatpush1.bf16.msra.mxu0 0
        %1886 = vmatprep.subr.bf16.mxu0 0
        %1887 = vmatpush1.bf16.msra.mxu0 0
        %1888 = vmatprep.subr.bf16.mxu0 0
        %1889 = vmatpush1.bf16.msra.mxu0 0
        %1890 = vmatprep.subr.bf16.mxu0 0
        %1891 = vmatpush1.bf16.msra.mxu0 0
        %1892 = vmatprep.subr.bf16.mxu0 0
        %1893 = vmatpush1.bf16.msra.mxu0 0
        %1894 = vmatprep.subr.bf16.mxu0 0
        %1895 = vmatpush1.bf16.msra.mxu0 0
        %1896 = vmatprep.subr.bf16.mxu0 0
        %1897 = vmatpush1.bf16.msra.mxu0 0
        %1898 = vmatprep.subr.bf16.mxu0 0
        %1899 = vmatpush1.bf16.msra.mxu0 0
        %1900 = vmatprep.mubr.bf16.mxu0 0
        %1901 = vmatmul.mubr.bf16.gmra.mrb[0].mxu0 %v1863
        %v1902 = vpop.f32.mrb[0].mxu0
        %v1903 = vadd.f32 %v1835, %v1902
        %v1904 = vpop.f32.mrb[0].mxu0
        %v1905 = vpop.f32.mrb[0].mxu0
        %v1906 = vadd.f32 %v1835, %v1905
        %v1907 = vpop.f32.mrb[0].mxu0
        %1908 = vmatprep.mubr.bf16.mxu0 0
        %1909 = vmatmul.mubr.bf16.gmra.mrb[0].mxu0 %v1866
        %v1910 = vpop.f32.mrb[0].mxu0
        %v1911 = vadd.f32 %v1835, %v1910
        %v1912 = vpop.f32.mrb[0].mxu0
        %v1913 = vpop.f32.mrb[0].mxu0
        %v1914 = vpop.f32.mrb[0].mxu0
        %1915 = vdwg.mxu0
        %v1916 = vld [vmem:[%s31] sm:$0xf]
        %v1917 = vld [vmem:[%s31 + $0x4] sm:$0xf]
        %v1918 = vld [vmem:[%s31 + $0x8] sm:$0xf]
        %v1919 = vld [vmem:[%s31 + $0xc] sm:$0xf]
        %v1920 = vld [vmem:[%s33] sm:$0x1]
        %v1921 = vmul.f32 %v1817, 0.35355338
        %v1922 = vpack.c.bf16 %v1921, %v1921
        %v1923 = vpack.c.bf16 %v1906, %v1903
        %v1924 = vpack.c.bf16 %v1911, %v1911
        %v1926 = vsel %vm1132, %v1922, 0
        %v1929 = vsel %vm1132, %v1923, 0
        %v1932 = vsel %vm1132, %v1924, 0
        %1934 = vmatprep.subr.bf16.mxu0 0
        %1935 = vmatpush1.bf16.xpose.msra.mxu0 %v1929
        %1936 = vmatprep.subr.bf16.mxu0 0
        %1937 = vmatpush1.bf16.xpose.msra.mxu0 %v1932
        %1938 = vmatprep.subr.bf16.mxu0 0
        %1939 = vmatpush1.bf16.xpose.msra.mxu0 0
        %1940 = vmatprep.subr.bf16.mxu0 0
        %1941 = vmatpush1.bf16.xpose.msra.mxu0 0
        %1942 = vmatprep.subr.bf16.mxu0 0
        %1943 = vmatpush1.bf16.xpose.msra.mxu0 0
        %1944 = vmatprep.subr.bf16.mxu0 0
        %1945 = vmatpush1.bf16.xpose.msra.mxu0 0
        %1946 = vmatprep.subr.bf16.mxu0 0
        %1947 = vmatpush1.bf16.xpose.msra.mxu0 0
        %1948 = vmatprep.subr.bf16.mxu0 0
        %1949 = vmatpush1.bf16.xpose.msra.mxu0 0
        %1950 = vmatprep.subr.bf16.mxu0 0
        %1951 = vmatpush1.bf16.xpose.msra.mxu0 0
        %1952 = vmatprep.subr.bf16.mxu0 0
        %1953 = vmatpush1.bf16.xpose.msra.mxu0 0
        %1954 = vmatprep.subr.bf16.mxu0 0
        %1955 = vmatpush1.bf16.xpose.msra.mxu0 0
        %1956 = vmatprep.subr.bf16.mxu0 0
        %1957 = vmatpush1.bf16.xpose.msra.mxu0 0
        %1958 = vmatprep.subr.bf16.mxu0 0
        %1959 = vmatpush1.bf16.xpose.msra.mxu0 0
        %1960 = vmatprep.subr.bf16.mxu0 0
        %1961 = vmatpush1.bf16.xpose.msra.mxu0 0
        %1962 = vmatprep.subr.bf16.mxu0 0
        %1963 = vmatpush1.bf16.xpose.msra.mxu0 0
        %1964 = vmatprep.subr.bf16.mxu0 0
        %1965 = vmatpush1.bf16.xpose.msra.mxu0 0
        %1966 = vmatprep.mubr.bf16.mxu0 0
        %1967 = vmatmul.mubr.bf16.gmra.mrb[0].mxu0 %v1926
        %v1968 = vpop.f32.mrb[0].mxu0
        %v1969 = vadd.f32 0.0, %v1968
        %v1970 = vpop.f32.mrb[0].mxu0
        %v1971 = vpop.f32.mrb[0].mxu0
        %v1972 = vpop.f32.mrb[0].mxu0
        %1973 = vdwg.mxu0
        %vm1974 = vcmask 138240
        %v1975 = vsel %vm1974, %v1969, -inf
        %1976 = vmax.xlane.f32.xlu0 %v1975
        %v1977 = vpop.xlane.xlu0 %1976
        %v1978 = vsub.f32 %v1969, %v1977
        %v1979 = vmul.f32 %v1978, 1.442695
        %v1980 = vpow.pop %v1979
        %v1981 = vsel %vm1974, %v1980, 0.0
        %1982 = vadd.xlane.f32.xlu0 %v1981
        %v1983 = vpop.xlane.xlu0 %1982
        %v1984 = vrcp.pop %v1983
        %v1985 = vmul.f32 %v1980, %v1984
        %v1986 = vpack.c.bf16 %v1985, %v1985
        %1989 = vrot.lane.b32.xlu0 %v1923, 96
        %v1990 = vpop.permute.xlu0 %1989
        %1991 = vrot.lane.b32.xlu0 %v1924, 96
        %v1992 = vpop.permute.xlu0 %1991
        %v1995 = vsel %vm1974, %v1986, 0
        %vm1997 = vcmask 1040384
        %v1998 = vsel 0, 4294967295, 65535
        %v1999 = vsel %vm1997, %v1998, 0
        %v2001 = vand.u32 %v1992, %v1999
        %2003 = vmatprep.subr.bf16.mxu0 0
        %2004 = vmatpush1.bf16.msra.mxu0 %v1990
        %2005 = vmatprep.subr.bf16.mxu0 0
        %2006 = vmatpush1.bf16.msra.mxu0 %v2001
        %2007 = vmatprep.subr.bf16.mxu0 0
        %2008 = vmatpush1.bf16.msra.mxu0 0
        %2009 = vmatprep.subr.bf16.mxu0 0
        %2010 = vmatpush1.bf16.msra.mxu0 0
        %2011 = vmatprep.subr.bf16.mxu0 0
        %2012 = vmatpush1.bf16.msra.mxu0 0
        %2013 = vmatprep.subr.bf16.mxu0 0
        %2014 = vmatpush1.bf16.msra.mxu0 0
        %2015 = vmatprep.subr.bf16.mxu0 0
        %2016 = vmatpush1.bf16.msra.mxu0 0
        %2017 = vmatprep.subr.bf16.mxu0 0
        %2018 = vmatpush1.bf16.msra.mxu0 0
        %2019 = vmatprep.subr.bf16.mxu0 0
        %2020 = vmatpush1.bf16.msra.mxu0 0
        %2021 = vmatprep.subr.bf16.mxu0 0
        %2022 = vmatpush1.bf16.msra.mxu0 0
        %2023 = vmatprep.subr.bf16.mxu0 0
        %2024 = vmatpush1.bf16.msra.mxu0 0
        %2025 = vmatprep.subr.bf16.mxu0 0
        %2026 = vmatpush1.bf16.msra.mxu0 0
        %2027 = vmatprep.subr.bf16.mxu0 0
        %2028 = vmatpush1.bf16.msra.mxu0 0
        %2029 = vmatprep.subr.bf16.mxu0 0
        %2030 = vmatpush1.bf16.msra.mxu0 0
        %2031 = vmatprep.subr.bf16.mxu0 0
        %2032 = vmatpush1.bf16.msra.mxu0 0
        %2033 = vmatprep.subr.bf16.mxu0 0
        %2034 = vmatpush1.bf16.msra.mxu0 0
        %2035 = vmatprep.mubr.bf16.mxu0 0
        %2036 = vmatmul.mubr.bf16.gmra.mrb[0].mxu0 %v1995
        %v2037 = vpop.f32.mrb[0].mxu0
        %v2038 = vadd.f32 0.0, %v2037
        %v2039 = vpop.f32.mrb[0].mxu0
        %v2040 = vpop.f32.mrb[0].mxu0
        %v2041 = vpop.f32.mrb[0].mxu0
        %2042 = vdwg.mxu0
        %2044 = vrot.lane.b32.xlu0 %v1922, 120
        %v2045 = vpop.permute.xlu0 %2044
        %2046 = vrot.lane.b32.xlu0 %v1923, 120
        %v2047 = vpop.permute.xlu0 %2046
        %2048 = vrot.lane.b32.xlu0 %v1924, 120
        %v2049 = vpop.permute.xlu0 %2048
        %v2051 = vsel %vm1132, %v2045, 0
        %v2054 = vsel %vm1132, %v2047, 0
        %v2057 = vsel %vm1132, %v2049, 0
        %2059 = vmatprep.subr.bf16.mxu0 0
        %2060 = vmatpush1.bf16.xpose.msra.mxu0 %v2054
        %2061 = vmatprep.subr.bf16.mxu0 0
        %2062 = vmatpush1.bf16.xpose.msra.mxu0 %v2057
        %2063 = vmatprep.subr.bf16.mxu0 0
        %2064 = vmatpush1.bf16.xpose.msra.mxu0 0
        %2065 = vmatprep.subr.bf16.mxu0 0
        %2066 = vmatpush1.bf16.xpose.msra.mxu0 0
        %2067 = vmatprep.subr.bf16.mxu0 0
        %2068 = vmatpush1.bf16.xpose.msra.mxu0 0
        %2069 = vmatprep.subr.bf16.mxu0 0
        %2070 = vmatpush1.bf16.xpose.msra.mxu0 0
        %2071 = vmatprep.subr.bf16.mxu0 0
        %2072 = vmatpush1.bf16.xpose.msra.mxu0 0
        %2073 = vmatprep.subr.bf16.mxu0 0
        %2074 = vmatpush1.bf16.xpose.msra.mxu0 0
        %2075 = vmatprep.subr.bf16.mxu0 0
        %2076 = vmatpush1.bf16.xpose.msra.mxu0 0
        %2077 = vmatprep.subr.bf16.mxu0 0
        %2078 = vmatpush1.bf16.xpose.msra.mxu0 0
        %2079 = vmatprep.subr.bf16.mxu0 0
        %2080 = vmatpush1.bf16.xpose.msra.mxu0 0
        %2081 = vmatprep.subr.bf16.mxu0 0
        %2082 = vmatpush1.bf16.xpose.msra.mxu0 0
        %2083 = vmatprep.subr.bf16.mxu0 0
        %2084 = vmatpush1.bf16.xpose.msra.mxu0 0
        %2085 = vmatprep.subr.bf16.mxu0 0
        %2086 = vmatpush1.bf16.xpose.msra.mxu0 0
        %2087 = vmatprep.subr.bf16.mxu0 0
        %2088 = vmatpush1.bf16.xpose.msra.mxu0 0
        %2089 = vmatprep.subr.bf16.mxu0 0
        %2090 = vmatpush1.bf16.xpose.msra.mxu0 0
        %2091 = vmatprep.mubr.bf16.mxu0 0
        %2092 = vmatmul.mubr.bf16.gmra.mrb[0].mxu0 %v2051
        %v2093 = vpop.f32.mrb[0].mxu0
        %v2094 = vadd.f32 0.0, %v2093
        %v2095 = vpop.f32.mrb[0].mxu0
        %v2096 = vpop.f32.mrb[0].mxu0
        %v2097 = vpop.f32.mrb[0].mxu0
        %2098 = vdwg.mxu0
        %v2099 = vsel %vm1974, %v2094, -inf
        %2100 = vmax.xlane.f32.xlu0 %v2099
        %v2101 = vpop.xlane.xlu0 %2100
        %v2102 = vsub.f32 %v2094, %v2101
        %v2103 = vmul.f32 %v2102, 1.442695
        %v2104 = vpow.pop %v2103
        %v2105 = vsel %vm1974, %v2104, 0.0
        %2106 = vadd.xlane.f32.xlu0 %v2105
        %v2107 = vpop.xlane.xlu0 %2106
        %v2108 = vrcp.pop %v2107
        %v2109 = vmul.f32 %v2104, %v2108
        %v2110 = vpack.c.bf16 %v2109, %v2109
        %2111 = vrot.lane.b32.xlu0 %v1923, 88
        %v2112 = vpop.permute.xlu0 %2111
        %2113 = vrot.lane.b32.xlu0 %v1924, 88
        %v2114 = vpop.permute.xlu0 %2113
        %v2117 = vsel %vm1974, %v2110, 0
        %v2120 = vand.u32 %v2114, %v1999
        %2122 = vmatprep.subr.bf16.mxu0 0
        %2123 = vmatpush1.bf16.msra.mxu0 %v2112
        %2124 = vmatprep.subr.bf16.mxu0 0
        %2125 = vmatpush1.bf16.msra.mxu0 %v2120
        %2126 = vmatprep.subr.bf16.mxu0 0
        %2127 = vmatpush1.bf16.msra.mxu0 0
        %2128 = vmatprep.subr.bf16.mxu0 0
        %2129 = vmatpush1.bf16.msra.mxu0 0
        %2130 = vmatprep.subr.bf16.mxu0 0
        %2131 = vmatpush1.bf16.msra.mxu0 0
        %2132 = vmatprep.subr.bf16.mxu0 0
        %2133 = vmatpush1.bf16.msra.mxu0 0
        %2134 = vmatprep.subr.bf16.mxu0 0
        %2135 = vmatpush1.bf16.msra.mxu0 0
        %2136 = vmatprep.subr.bf16.mxu0 0
        %2137 = vmatpush1.bf16.msra.mxu0 0
        %2138 = vmatprep.subr.bf16.mxu0 0
        %2139 = vmatpush1.bf16.msra.mxu0 0
        %2140 = vmatprep.subr.bf16.mxu0 0
        %2141 = vmatpush1.bf16.msra.mxu0 0
        %2142 = vmatprep.subr.bf16.mxu0 0
        %2143 = vmatpush1.bf16.msra.mxu0 0
        %2144 = vmatprep.subr.bf16.mxu0 0
        %2145 = vmatpush1.bf16.msra.mxu0 0
        %2146 = vmatprep.subr.bf16.mxu0 0
        %2147 = vmatpush1.bf16.msra.mxu0 0
        %2148 = vmatprep.subr.bf16.mxu0 0
        %2149 = vmatpush1.bf16.msra.mxu0 0
        %2150 = vmatprep.subr.bf16.mxu0 0
        %2151 = vmatpush1.bf16.msra.mxu0 0
        %2152 = vmatprep.subr.bf16.mxu0 0
        %2153 = vmatpush1.bf16.msra.mxu0 0
        %2154 = vmatprep.mubr.bf16.mxu0 0
        %2155 = vmatmul.mubr.bf16.gmra.mrb[0].mxu0 %v2117
        %v2156 = vpop.f32.mrb[0].mxu0
        %v2157 = vadd.f32 0.0, %v2156
        %v2158 = vpop.f32.mrb[0].mxu0
        %v2159 = vpop.f32.mrb[0].mxu0
        %v2160 = vpop.f32.mrb[0].mxu0
        %2161 = vdwg.mxu0
        %2162 = vrot.lane.b32.xlu0 %v1922, 112
        %v2163 = vpop.permute.xlu0 %2162
        %2164 = vrot.lane.b32.xlu0 %v1923, 112
        %v2165 = vpop.permute.xlu0 %2164
        %2166 = vrot.lane.b32.xlu0 %v1924, 112
        %v2167 = vpop.permute.xlu0 %2166
        %v2169 = vsel %vm1132, %v2163, 0
        %v2172 = vsel %vm1132, %v2165, 0
        %v2175 = vsel %vm1132, %v2167, 0
        %2177 = vmatprep.subr.bf16.mxu0 0
        %2178 = vmatpush1.bf16.xpose.msra.mxu0 %v2172
        %2179 = vmatprep.subr.bf16.mxu0 0
        %2180 = vmatpush1.bf16.xpose.msra.mxu0 %v2175
        %2181 = vmatprep.subr.bf16.mxu0 0
        %2182 = vmatpush1.bf16.xpose.msra.mxu0 0
        %2183 = vmatprep.subr.bf16.mxu0 0
        %2184 = vmatpush1.bf16.xpose.msra.mxu0 0
        %2185 = vmatprep.subr.bf16.mxu0 0
        %2186 = vmatpush1.bf16.xpose.msra.mxu0 0
        %2187 = vmatprep.subr.bf16.mxu0 0
        %2188 = vmatpush1.bf16.xpose.msra.mxu0 0
        %2189 = vmatprep.subr.bf16.mxu0 0
        %2190 = vmatpush1.bf16.xpose.msra.mxu0 0
        %2191 = vmatprep.subr.bf16.mxu0 0
        %2192 = vmatpush1.bf16.xpose.msra.mxu0 0
        %2193 = vmatprep.subr.bf16.mxu0 0
        %2194 = vmatpush1.bf16.xpose.msra.mxu0 0
        %2195 = vmatprep.subr.bf16.mxu0 0
        %2196 = vmatpush1.bf16.xpose.msra.mxu0 0
        %2197 = vmatprep.subr.bf16.mxu0 0
        %2198 = vmatpush1.bf16.xpose.msra.mxu0 0
        %2199 = vmatprep.subr.bf16.mxu0 0
        %2200 = vmatpush1.bf16.xpose.msra.mxu0 0
        %2201 = vmatprep.subr.bf16.mxu0 0
        %2202 = vmatpush1.bf16.xpose.msra.mxu0 0
        %2203 = vmatprep.subr.bf16.mxu0 0
        %2204 = vmatpush1.bf16.xpose.msra.mxu0 0
        %2205 = vmatprep.subr.bf16.mxu0 0
        %2206 = vmatpush1.bf16.xpose.msra.mxu0 0
        %2207 = vmatprep.subr.bf16.mxu0 0
        %2208 = vmatpush1.bf16.xpose.msra.mxu0 0
        %2209 = vmatprep.mubr.bf16.mxu0 0
        %2210 = vmatmul.mubr.bf16.gmra.mrb[0].mxu0 %v2169
        %v2211 = vpop.f32.mrb[0].mxu0
        %v2212 = vadd.f32 0.0, %v2211
        %v2213 = vpop.f32.mrb[0].mxu0
        %v2214 = vpop.f32.mrb[0].mxu0
        %v2215 = vpop.f32.mrb[0].mxu0
        %2216 = vdwg.mxu0
        %v2217 = vsel %vm1974, %v2212, -inf
        %2218 = vmax.xlane.f32.xlu0 %v2217
        %v2219 = vpop.xlane.xlu0 %2218
        %v2220 = vsub.f32 %v2212, %v2219
        %v2221 = vmul.f32 %v2220, 1.442695
        %v2222 = vpow.pop %v2221
        %v2223 = vsel %vm1974, %v2222, 0.0
        %2224 = vadd.xlane.f32.xlu0 %v2223
        %v2225 = vpop.xlane.xlu0 %2224
        %v2226 = vrcp.pop %v2225
        %v2227 = vmul.f32 %v2222, %v2226
        %v2228 = vpack.c.bf16 %v2227, %v2227
        %2229 = vrot.lane.b32.xlu0 %v1923, 80
        %v2230 = vpop.permute.xlu0 %2229
        %2231 = vrot.lane.b32.xlu0 %v1924, 80
        %v2232 = vpop.permute.xlu0 %2231
        %v2235 = vsel %vm1974, %v2228, 0
        %v2238 = vand.u32 %v2232, %v1999
        %2240 = vmatprep.subr.bf16.mxu0 0
        %2241 = vmatpush1.bf16.msra.mxu0 %v2230
        %2242 = vmatprep.subr.bf16.mxu0 0
        %2243 = vmatpush1.bf16.msra.mxu0 %v2238
        %2244 = vmatprep.subr.bf16.mxu0 0
        %2245 = vmatpush1.bf16.msra.mxu0 0
        %2246 = vmatprep.subr.bf16.mxu0 0
        %2247 = vmatpush1.bf16.msra.mxu0 0
        %2248 = vmatprep.subr.bf16.mxu0 0
        %2249 = vmatpush1.bf16.msra.mxu0 0
        %2250 = vmatprep.subr.bf16.mxu0 0
        %2251 = vmatpush1.bf16.msra.mxu0 0
        %2252 = vmatprep.subr.bf16.mxu0 0
        %2253 = vmatpush1.bf16.msra.mxu0 0
        %2254 = vmatprep.subr.bf16.mxu0 0
        %2255 = vmatpush1.bf16.msra.mxu0 0
        %2256 = vmatprep.subr.bf16.mxu0 0
        %2257 = vmatpush1.bf16.msra.mxu0 0
        %2258 = vmatprep.subr.bf16.mxu0 0
        %2259 = vmatpush1.bf16.msra.mxu0 0
        %2260 = vmatprep.subr.bf16.mxu0 0
        %2261 = vmatpush1.bf16.msra.mxu0 0
        %2262 = vmatprep.subr.bf16.mxu0 0
        %2263 = vmatpush1.bf16.msra.mxu0 0
        %2264 = vmatprep.subr.bf16.mxu0 0
        %2265 = vmatpush1.bf16.msra.mxu0 0
        %2266 = vmatprep.subr.bf16.mxu0 0
        %2267 = vmatpush1.bf16.msra.mxu0 0
        %2268 = vmatprep.subr.bf16.mxu0 0
        %2269 = vmatpush1.bf16.msra.mxu0 0
        %2270 = vmatprep.subr.bf16.mxu0 0
        %2271 = vmatpush1.bf16.msra.mxu0 0
        %2272 = vmatprep.mubr.bf16.mxu0 0
        %2273 = vmatmul.mubr.bf16.gmra.mrb[0].mxu0 %v2235
        %v2274 = vpop.f32.mrb[0].mxu0
        %v2275 = vadd.f32 0.0, %v2274
        %v2276 = vpop.f32.mrb[0].mxu0
        %v2277 = vpop.f32.mrb[0].mxu0
        %v2278 = vpop.f32.mrb[0].mxu0
        %2279 = vdwg.mxu0
        %2280 = vrot.lane.b32.xlu0 %v1922, 104
        %v2281 = vpop.permute.xlu0 %2280
        %2282 = vrot.lane.b32.xlu0 %v1923, 104
        %v2283 = vpop.permute.xlu0 %2282
        %2284 = vrot.lane.b32.xlu0 %v1924, 104
        %v2285 = vpop.permute.xlu0 %2284
        %v2287 = vsel %vm1132, %v2281, 0
        %v2290 = vsel %vm1132, %v2283, 0
        %v2293 = vsel %vm1132, %v2285, 0
        %2295 = vmatprep.subr.bf16.mxu0 0
        %2296 = vmatpush1.bf16.xpose.msra.mxu0 %v2290
        %2297 = vmatprep.subr.bf16.mxu0 0
        %2298 = vmatpush1.bf16.xpose.msra.mxu0 %v2293
        %2299 = vmatprep.subr.bf16.mxu0 0
        %2300 = vmatpush1.bf16.xpose.msra.mxu0 0
        %2301 = vmatprep.subr.bf16.mxu0 0
        %2302 = vmatpush1.bf16.xpose.msra.mxu0 0
        %2303 = vmatprep.subr.bf16.mxu0 0
        %2304 = vmatpush1.bf16.xpose.msra.mxu0 0
        %2305 = vmatprep.subr.bf16.mxu0 0
        %2306 = vmatpush1.bf16.xpose.msra.mxu0 0
        %2307 = vmatprep.subr.bf16.mxu0 0
        %2308 = vmatpush1.bf16.xpose.msra.mxu0 0
        %2309 = vmatprep.subr.bf16.mxu0 0
        %2310 = vmatpush1.bf16.xpose.msra.mxu0 0
        %2311 = vmatprep.subr.bf16.mxu0 0
        %2312 = vmatpush1.bf16.xpose.msra.mxu0 0
        %2313 = vmatprep.subr.bf16.mxu0 0
        %2314 = vmatpush1.bf16.xpose.msra.mxu0 0
        %2315 = vmatprep.subr.bf16.mxu0 0
        %2316 = vmatpush1.bf16.xpose.msra.mxu0 0
        %2317 = vmatprep.subr.bf16.mxu0 0
        %2318 = vmatpush1.bf16.xpose.msra.mxu0 0
        %2319 = vmatprep.subr.bf16.mxu0 0
        %2320 = vmatpush1.bf16.xpose.msra.mxu0 0
        %2321 = vmatprep.subr.bf16.mxu0 0
        %2322 = vmatpush1.bf16.xpose.msra.mxu0 0
        %2323 = vmatprep.subr.bf16.mxu0 0
        %2324 = vmatpush1.bf16.xpose.msra.mxu0 0
        %2325 = vmatprep.subr.bf16.mxu0 0
        %2326 = vmatpush1.bf16.xpose.msra.mxu0 0
        %2327 = vmatprep.mubr.bf16.mxu0 0
        %2328 = vmatmul.mubr.bf16.gmra.mrb[0].mxu0 %v2287
        %v2329 = vpop.f32.mrb[0].mxu0
        %v2330 = vadd.f32 0.0, %v2329
        %v2331 = vpop.f32.mrb[0].mxu0
        %v2332 = vpop.f32.mrb[0].mxu0
        %v2333 = vpop.f32.mrb[0].mxu0
        %2334 = vdwg.mxu0
        %v2335 = vsel %vm1974, %v2330, -inf
        %2336 = vmax.xlane.f32.xlu0 %v2335
        %v2337 = vpop.xlane.xlu0 %2336
        %v2338 = vsub.f32 %v2330, %v2337
        %v2339 = vmul.f32 %v2338, 1.442695
        %v2340 = vpow.pop %v2339
        %v2341 = vsel %vm1974, %v2340, 0.0
        %2342 = vadd.xlane.f32.xlu0 %v2341
        %v2343 = vpop.xlane.xlu0 %2342
        %v2344 = vrcp.pop %v2343
        %v2345 = vmul.f32 %v2340, %v2344
        %v2346 = vpack.c.bf16 %v2345, %v2345
        %2347 = vrot.lane.b32.xlu0 %v1923, 72
        %v2348 = vpop.permute.xlu0 %2347
        %2349 = vrot.lane.b32.xlu0 %v1924, 72
        %v2350 = vpop.permute.xlu0 %2349
        %v2353 = vsel %vm1974, %v2346, 0
        %v2356 = vand.u32 %v2350, %v1999
        %2358 = vmatprep.subr.bf16.mxu0 0
        %2359 = vmatpush1.bf16.msra.mxu0 %v2348
        %2360 = vmatprep.subr.bf16.mxu0 0
        %2361 = vmatpush1.bf16.msra.mxu0 %v2356
        %2362 = vmatprep.subr.bf16.mxu0 0
        %2363 = vmatpush1.bf16.msra.mxu0 0
        %2364 = vmatprep.subr.bf16.mxu0 0
        %2365 = vmatpush1.bf16.msra.mxu0 0
        %2366 = vmatprep.subr.bf16.mxu0 0
        %2367 = vmatpush1.bf16.msra.mxu0 0
        %2368 = vmatprep.subr.bf16.mxu0 0
        %2369 = vmatpush1.bf16.msra.mxu0 0
        %2370 = vmatprep.subr.bf16.mxu0 0
        %2371 = vmatpush1.bf16.msra.mxu0 0
        %2372 = vmatprep.subr.bf16.mxu0 0
        %2373 = vmatpush1.bf16.msra.mxu0 0
        %2374 = vmatprep.subr.bf16.mxu0 0
        %2375 = vmatpush1.bf16.msra.mxu0 0
        %2376 = vmatprep.subr.bf16.mxu0 0
        %2377 = vmatpush1.bf16.msra.mxu0 0
        %2378 = vmatprep.subr.bf16.mxu0 0
        %2379 = vmatpush1.bf16.msra.mxu0 0
        %2380 = vmatprep.subr.bf16.mxu0 0
        %2381 = vmatpush1.bf16.msra.mxu0 0
        %2382 = vmatprep.subr.bf16.mxu0 0
        %2383 = vmatpush1.bf16.msra.mxu0 0
        %2384 = vmatprep.subr.bf16.mxu0 0
        %2385 = vmatpush1.bf16.msra.mxu0 0
        %2386 = vmatprep.subr.bf16.mxu0 0
        %2387 = vmatpush1.bf16.msra.mxu0 0
        %2388 = vmatprep.subr.bf16.mxu0 0
        %2389 = vmatpush1.bf16.msra.mxu0 0
        %2390 = vmatprep.mubr.bf16.mxu0 0
        %2391 = vmatmul.mubr.bf16.gmra.mrb[0].mxu0 %v2353
        %v2392 = vpop.f32.mrb[0].mxu0
        %v2393 = vadd.f32 0.0, %v2392
        %v2394 = vpop.f32.mrb[0].mxu0
        %v2395 = vpop.f32.mrb[0].mxu0
        %v2396 = vpop.f32.mrb[0].mxu0
        %2397 = vdwg.mxu0
        %2399 = vrot.lane.b32.xlu0 %v2157, 8
        %v2400 = vpop.permute.xlu0 %2399
        %2403 = vrot.lane.b32.xlu0 %v2275, 16
        %v2404 = vpop.permute.xlu0 %2403
        %2407 = vrot.lane.b32.xlu0 %v2393, 24
        %v2408 = vpop.permute.xlu0 %2407
        %v2410 = vsel %vm1132, %v2038, %v2400
        %v2411 = vsel %vm1180, %v2410, %v2404
        %v2412 = vsel %vm1643, %v2411, %v2408
        %v2413 = vpack.c.bf16 %v2412, %v2412
        %v2415 = vlaneseq
        %v2416 = vshrl.u32 %v2415, 7
        %v2417 = vsub.s32 0, %v2416
        %v2418 = vrot.slane %v1920, %v2417
        %v2424 = vunpack.c.l.b16 %v1916
        %v2425 = vunpack.c.l.b16 %v1917
        %v2426 = vunpack.c.l.b16 %v1918
        %v2427 = vunpack.c.l.b16 %v1919
        %v2428 = vpack.c.b16 %v2425, %v2424
        %v2429 = vpack.c.b16 %v2427, %v2426
        %v2433 = vsel %vm996, %v2413, 0
        %2435 = vmatprep.subr.bf16.mxu0 0
        %2436 = vmatpush1.bf16.msra.mxu0 %v2428
        %2437 = vmatprep.subr.bf16.mxu0 0
        %2438 = vmatpush1.bf16.msra.mxu0 %v2429
        %2439 = vmatprep.subr.bf16.mxu0 0
        %2440 = vmatpush1.bf16.msra.mxu0 0
        %2441 = vmatprep.subr.bf16.mxu0 0
        %2442 = vmatpush1.bf16.msra.mxu0 0
        %2443 = vmatprep.subr.bf16.mxu0 0
        %2444 = vmatpush1.bf16.msra.mxu0 0
        %2445 = vmatprep.subr.bf16.mxu0 0
        %2446 = vmatpush1.bf16.msra.mxu0 0
        %2447 = vmatprep.subr.bf16.mxu0 0
        %2448 = vmatpush1.bf16.msra.mxu0 0
        %2449 = vmatprep.subr.bf16.mxu0 0
        %2450 = vmatpush1.bf16.msra.mxu0 0
        %2451 = vmatprep.subr.bf16.mxu0 0
        %2452 = vmatpush1.bf16.msra.mxu0 0
        %2453 = vmatprep.subr.bf16.mxu0 0
        %2454 = vmatpush1.bf16.msra.mxu0 0
        %2455 = vmatprep.subr.bf16.mxu0 0
        %2456 = vmatpush1.bf16.msra.mxu0 0
        %2457 = vmatprep.subr.bf16.mxu0 0
        %2458 = vmatpush1.bf16.msra.mxu0 0
        %2459 = vmatprep.subr.bf16.mxu0 0
        %2460 = vmatpush1.bf16.msra.mxu0 0
        %2461 = vmatprep.subr.bf16.mxu0 0
        %2462 = vmatpush1.bf16.msra.mxu0 0
        %2463 = vmatprep.subr.bf16.mxu0 0
        %2464 = vmatpush1.bf16.msra.mxu0 0
        %2465 = vmatprep.subr.bf16.mxu0 0
        %2466 = vmatpush1.bf16.msra.mxu0 0
        %2467 = vmatprep.mubr.bf16.mxu0 0
        %2468 = vmatmul.mubr.bf16.gmra.mrb[0].mxu0 %v2433
        %v2469 = vpop.f32.mrb[0].mxu0
        %v2470 = vadd.f32 %v2418, %v2469
        %v2471 = vpop.f32.mrb[0].mxu0
        %v2472 = vpop.f32.mrb[0].mxu0
        %v2473 = vpop.f32.mrb[0].mxu0
        %2474 = vdwg.mxu0
        %v2475 = vadd.f32 %v1753, %v2470
        %v2476 = vld [vmem:[%s35] sm:$0x1]
        %v2477 = vld [vmem:[%s37] sm:$0x1]
        %v2478 = vsel %vm996, %v2475, 0.0
        %2479 = vadd.xlane.f32.xlu0 %v2478
        %v2480 = vpop.xlane.xlu0 %2479
        %v2481 = vmul.f32 %v2480, %v1003
        %v2482 = vsub.f32 %v2475, %v2481
        %v2483 = vmul.f32 %v2482, %v2482
        %v2484 = vsel %vm996, %v2483, 0.0
        %2485 = vadd.xlane.f32.xlu0 %v2484
        %v2486 = vpop.xlane.xlu0 %2485
        %v2487 = vmul.f32 %v2486, %v1003
        %v2488 = vadd.f32 %v2487, 1e-12
        %v2489 = vrsqrt.pop %v2488
        %v2490 = vmul.f32 %v2482, %v2489
        %v2492 = vlaneseq
        %v2493 = vshrl.u32 %v2492, 7
        %v2494 = vsub.s32 0, %v2493
        %v2495 = vrot.slane %v2476, %v2494
        %v2497 = vmul.f32 %v2490, %v2495
        %v2499 = vlaneseq
        %v2500 = vshrl.u32 %v2499, 7
        %v2501 = vsub.s32 0, %v2500
        %v2502 = vrot.slane %v2477, %v2501
        %v2504 = vadd.f32 %v2497, %v2502
        %v2505 = vpack.c.bf16 %v2504, %v2504
        %v2506 = vld [vmem:[%s39] sm:$0xf]
        %v2507 = vld [vmem:[%s39 + $0x4] sm:$0xf]
        %v2508 = vld [vmem:[%s39 + $0x8] sm:$0xf]
        %v2509 = vld [vmem:[%s39 + $0xc] sm:$0xf]
        %v2510 = vld [vmem:[%s41] sm:$0x1]
        %v2512 = vlaneseq
        %v2513 = vshrl.u32 %v2512, 7
        %v2514 = vsub.s32 0, %v2513
        %v2515 = vrot.slane %v2510, %v2514
        %v2521 = vunpack.c.l.b16 %v2506
        %v2522 = vunpack.c.l.b16 %v2507
        %v2523 = vunpack.c.l.b16 %v2508
        %v2524 = vunpack.c.l.b16 %v2509
        %v2525 = vpack.c.b16 %v2522, %v2521
        %v2526 = vpack.c.b16 %v2524, %v2523
        %v2530 = vsel %vm996, %v2505, 0
        %2532 = vmatprep.subr.bf16.mxu0 0
        %2533 = vmatpush1.bf16.msra.mxu0 %v2525
        %2534 = vmatprep.subr.bf16.mxu0 0
        %2535 = vmatpush1.bf16.msra.mxu0 %v2526
        %2536 = vmatprep.subr.bf16.mxu0 0
        %2537 = vmatpush1.bf16.msra.mxu0 0
        %2538 = vmatprep.subr.bf16.mxu0 0
        %2539 = vmatpush1.bf16.msra.mxu0 0
        %2540 = vmatprep.subr.bf16.mxu0 0
        %2541 = vmatpush1.bf16.msra.mxu0 0
        %2542 = vmatprep.subr.bf16.mxu0 0
        %2543 = vmatpush1.bf16.msra.mxu0 0
        %2544 = vmatprep.subr.bf16.mxu0 0
        %2545 = vmatpush1.bf16.msra.mxu0 0
        %2546 = vmatprep.subr.bf16.mxu0 0
        %2547 = vmatpush1.bf16.msra.mxu0 0
        %2548 = vmatprep.subr.bf16.mxu0 0
        %2549 = vmatpush1.bf16.msra.mxu0 0
        %2550 = vmatprep.subr.bf16.mxu0 0
        %2551 = vmatpush1.bf16.msra.mxu0 0
        %2552 = vmatprep.subr.bf16.mxu0 0
        %2553 = vmatpush1.bf16.msra.mxu0 0
        %2554 = vmatprep.subr.bf16.mxu0 0
        %2555 = vmatpush1.bf16.msra.mxu0 0
        %2556 = vmatprep.subr.bf16.mxu0 0
        %2557 = vmatpush1.bf16.msra.mxu0 0
        %2558 = vmatprep.subr.bf16.mxu0 0
        %2559 = vmatpush1.bf16.msra.mxu0 0
        %2560 = vmatprep.subr.bf16.mxu0 0
        %2561 = vmatpush1.bf16.msra.mxu0 0
        %2562 = vmatprep.subr.bf16.mxu0 0
        %2563 = vmatpush1.bf16.msra.mxu0 0
        %2564 = vmatprep.mubr.bf16.mxu0 0
        %2565 = vmatmul.mubr.bf16.gmra.mrb[0].mxu0 %v2530
        %v2566 = vpop.f32.mrb[0].mxu0
        %v2567 = vadd.f32 %v2515, %v2566
        %v2568 = vpop.f32.mrb[0].mxu0
        %v2569 = vpop.f32.mrb[0].mxu0
        %v2570 = vpop.f32.mrb[0].mxu0
        %2571 = vdwg.mxu0
        %v2572 = vmul.f32 %v2567, %v2567
        %v2573 = vmul.f32 %v2567, %v2572
        %v2574 = vmul.f32 %v2573, 0.044715
        %v2575 = vadd.f32 %v2567, %v2574
        %v2576 = vmul.f32 %v2575, 0.7978846
        %v2577 = vtanh.pop %v2576
        %v2578 = vadd.f32 %v2577, 1.0
        %v2579 = vmul.f32 %v2578, 0.5
        %v2580 = vmul.f32 %v2567, %v2579
        %v2581 = vpack.c.bf16 %v2580, %v2580
        %v2582 = vld [vmem:[%s43] sm:$0xf]
        %v2583 = vld [vmem:[%s43 + $0x4] sm:$0xf]
        %v2584 = vld [vmem:[%s43 + $0x8] sm:$0xf]
        %v2585 = vld [vmem:[%s43 + $0xc] sm:$0xf]
        %v2586 = vld [vmem:[%s43 + $0x10] sm:$0xf]
        %v2587 = vld [vmem:[%s43 + $0x14] sm:$0xf]
        %v2588 = vld [vmem:[%s43 + $0x18] sm:$0xf]
        %v2589 = vld [vmem:[%s43 + $0x1c] sm:$0xf]
        %v2590 = vld [vmem:[%s45] sm:$0x1]
        %v2592 = vlaneseq
        %v2593 = vshrl.u32 %v2592, 7
        %v2594 = vsub.s32 0, %v2593
        %v2595 = vrot.slane %v2590, %v2594
        %v2605 = vunpack.c.l.b16 %v2582
        %v2606 = vunpack.c.l.b16 %v2583
        %v2607 = vunpack.c.l.b16 %v2584
        %v2608 = vunpack.c.l.b16 %v2585
        %v2609 = vunpack.c.l.b16 %v2586
        %v2610 = vunpack.c.l.b16 %v2587
        %v2611 = vunpack.c.l.b16 %v2588
        %v2612 = vunpack.c.l.b16 %v2589
        %v2613 = vpack.c.b16 %v2606, %v2605
        %v2614 = vpack.c.b16 %v2608, %v2607
        %v2615 = vpack.c.b16 %v2610, %v2609
        %v2616 = vpack.c.b16 %v2612, %v2611
        %v2622 = vsel %vm1861, %v2581, 0
        %2624 = vmatprep.subr.bf16.mxu0 0
        %2625 = vmatpush1.bf16.msra.mxu0 %v2613
        %2626 = vmatprep.subr.bf16.mxu0 0
        %2627 = vmatpush1.bf16.msra.mxu0 %v2614
        %2628 = vmatprep.subr.bf16.mxu0 0
        %2629 = vmatpush1.bf16.msra.mxu0 %v2615
        %2630 = vmatprep.subr.bf16.mxu0 0
        %2631 = vmatpush1.bf16.msra.mxu0 %v2616
        %2632 = vmatprep.subr.bf16.mxu0 0
        %2633 = vmatpush1.bf16.msra.mxu0 0
        %2634 = vmatprep.subr.bf16.mxu0 0
        %2635 = vmatpush1.bf16.msra.mxu0 0
        %2636 = vmatprep.subr.bf16.mxu0 0
        %2637 = vmatpush1.bf16.msra.mxu0 0
        %2638 = vmatprep.subr.bf16.mxu0 0
        %2639 = vmatpush1.bf16.msra.mxu0 0
        %2640 = vmatprep.subr.bf16.mxu0 0
        %2641 = vmatpush1.bf16.msra.mxu0 0
        %2642 = vmatprep.subr.bf16.mxu0 0
        %2643 = vmatpush1.bf16.msra.mxu0 0
        %2644 = vmatprep.subr.bf16.mxu0 0
        %2645 = vmatpush1.bf16.msra.mxu0 0
        %2646 = vmatprep.subr.bf16.mxu0 0
        %2647 = vmatpush1.bf16.msra.mxu0 0
        %2648 = vmatprep.subr.bf16.mxu0 0
        %2649 = vmatpush1.bf16.msra.mxu0 0
        %2650 = vmatprep.subr.bf16.mxu0 0
        %2651 = vmatpush1.bf16.msra.mxu0 0
        %2652 = vmatprep.subr.bf16.mxu0 0
        %2653 = vmatpush1.bf16.msra.mxu0 0
        %2654 = vmatprep.subr.bf16.mxu0 0
        %2655 = vmatpush1.bf16.msra.mxu0 0
        %2656 = vmatprep.mubr.bf16.mxu0 0
        %2657 = vmatmul.mubr.bf16.gmra.mrb[0].mxu0 %v2622
        %v2658 = vpop.f32.mrb[0].mxu0
        %v2659 = vadd.f32 %v2595, %v2658
        %v2660 = vpop.f32.mrb[0].mxu0
        %v2661 = vpop.f32.mrb[0].mxu0
        %v2662 = vpop.f32.mrb[0].mxu0
        %2663 = vdwg.mxu0
        %v2664 = vadd.f32 %v2504, %v2659
        %v2665 = vld [vmem:[%s47] sm:$0x1]
        %v2666 = vld [vmem:[%s49] sm:$0x1]
        %v2667 = vsel %vm996, %v2664, 0.0
        %2668 = vadd.xlane.f32.xlu0 %v2667
        %v2669 = vpop.xlane.xlu0 %2668
        %v2670 = vmul.f32 %v2669, %v1003
        %v2671 = vsub.f32 %v2664, %v2670
        %v2672 = vmul.f32 %v2671, %v2671
        %v2673 = vsel %vm996, %v2672, 0.0
        %2674 = vadd.xlane.f32.xlu0 %v2673
        %v2675 = vpop.xlane.xlu0 %2674
        %v2676 = vmul.f32 %v2675, %v1003
        %v2677 = vadd.f32 %v2676, 1e-12
        %v2678 = vrsqrt.pop %v2677
        %v2679 = vmul.f32 %v2671, %v2678
        %v2681 = vlaneseq
        %v2682 = vshrl.u32 %v2681, 7
        %v2683 = vsub.s32 0, %v2682
        %v2684 = vrot.slane %v2665, %v2683
        %v2686 = vmul.f32 %v2679, %v2684
        %v2688 = vlaneseq
        %v2689 = vshrl.u32 %v2688, 7
        %v2690 = vsub.s32 0, %v2689
        %v2691 = vrot.slane %v2666, %v2690
        %v2693 = vadd.f32 %v2686, %v2691
        %v2694 = vpack.c.bf16 %v1754, %v1754
        %v2695 = vld [vmem:[%s51] sm:$0xf]
        %v2696 = vld [vmem:[%s51 + $0x4] sm:$0xf]
        %v2697 = vld [vmem:[%s51 + $0x8] sm:$0xf]
        %v2698 = vld [vmem:[%s51 + $0xc] sm:$0xf]
        %v2699 = vld [vmem:[%s53] sm:$0x1]
        %v2701 = vlaneseq
        %v2702 = vshrl.u32 %v2701, 7
        %v2703 = vsub.s32 0, %v2702
        %v2704 = vrot.slane %v2699, %v2703
        %v2710 = vunpack.c.l.b16 %v2695
        %v2711 = vunpack.c.l.b16 %v2696
        %v2712 = vunpack.c.l.b16 %v2697
        %v2713 = vunpack.c.l.b16 %v2698
        %v2714 = vpack.c.b16 %v2711, %v2710
        %v2715 = vpack.c.b16 %v2713, %v2712
        %v2719 = vsel %vm996, %v2694, 0
        %2721 = vmatprep.subr.bf16.mxu0 0
        %2722 = vmatpush1.bf16.msra.mxu0 %v2714
        %2723 = vmatprep.subr.bf16.mxu0 0
        %2724 = vmatpush1.bf16.msra.mxu0 %v2715
        %2725 = vmatprep.subr.bf16.mxu0 0
        %2726 = vmatpush1.bf16.msra.mxu0 0
        %2727 = vmatprep.subr.bf16.mxu0 0
        %2728 = vmatpush1.bf16.msra.mxu0 0
        %2729 = vmatprep.subr.bf16.mxu0 0
        %2730 = vmatpush1.bf16.msra.mxu0 0
        %2731 = vmatprep.subr.bf16.mxu0 0
        %2732 = vmatpush1.bf16.msra.mxu0 0
        %2733 = vmatprep.subr.bf16.mxu0 0
        %2734 = vmatpush1.bf16.msra.mxu0 0
        %2735 = vmatprep.subr.bf16.mxu0 0
        %2736 = vmatpush1.bf16.msra.mxu0 0
        %2737 = vmatprep.subr.bf16.mxu0 0
        %2738 = vmatpush1.bf16.msra.mxu0 0
        %2739 = vmatprep.subr.bf16.mxu0 0
        %2740 = vmatpush1.bf16.msra.mxu0 0
        %2741 = vmatprep.subr.bf16.mxu0 0
        %2742 = vmatpush1.bf16.msra.mxu0 0
        %2743 = vmatprep.subr.bf16.mxu0 0
        %2744 = vmatpush1.bf16.msra.mxu0 0
        %2745 = vmatprep.subr.bf16.mxu0 0
        %2746 = vmatpush1.bf16.msra.mxu0 0
        %2747 = vmatprep.subr.bf16.mxu0 0
        %2748 = vmatpush1.bf16.msra.mxu0 0
        %2749 = vmatprep.subr.bf16.mxu0 0
        %2750 = vmatpush1.bf16.msra.mxu0 0
        %2751 = vmatprep.subr.bf16.mxu0 0
        %2752 = vmatpush1.bf16.msra.mxu0 0
        %2753 = vmatprep.mubr.bf16.mxu0 0
        %2754 = vmatmul.mubr.bf16.gmra.mrb[0].mxu0 %v2719
        %v2755 = vpop.f32.mrb[0].mxu0
        %v2756 = vadd.f32 %v2704, %v2755
        %v2757 = vpop.f32.mrb[0].mxu0
        %v2758 = vpop.f32.mrb[0].mxu0
        %v2759 = vpop.f32.mrb[0].mxu0
        %2760 = vdwg.mxu0
        %v2761 = vmul.f32 %v2756, %v2756
        %v2762 = vmul.f32 %v2756, %v2761
        %v2763 = vmul.f32 %v2762, 0.044715
        %v2764 = vadd.f32 %v2756, %v2763
        %v2765 = vmul.f32 %v2764, 0.7978846
        %v2766 = vtanh.pop %v2765
        %v2767 = vadd.f32 %v2766, 1.0
        %v2768 = vmul.f32 %v2767, 0.5
        %v2769 = vmul.f32 %v2756, %v2768
        %v2770 = vpack.c.bf16 %v2769, %v2769
        %v2771 = vld [vmem:[%s55] sm:$0xf]
        %v2772 = vld [vmem:[%s55 + $0x4] sm:$0xf]
        %v2773 = vld [vmem:[%s55 + $0x8] sm:$0xf]
        %v2774 = vld [vmem:[%s55 + $0xc] sm:$0xf]
        %v2775 = vld [vmem:[%s55 + $0x10] sm:$0xf]
        %v2776 = vld [vmem:[%s55 + $0x14] sm:$0xf]
        %v2777 = vld [vmem:[%s55 + $0x18] sm:$0xf]
        %v2778 = vld [vmem:[%s55 + $0x1c] sm:$0xf]
        %v2779 = vld [vmem:[%s57] sm:$0x1]
        %v2781 = vlaneseq
        %v2782 = vshrl.u32 %v2781, 7
        %v2783 = vsub.s32 0, %v2782
        %v2784 = vrot.slane %v2779, %v2783
        %v2794 = vunpack.c.l.b16 %v2771
        %v2795 = vunpack.c.l.b16 %v2772
        %v2796 = vunpack.c.l.b16 %v2773
        %v2797 = vunpack.c.l.b16 %v2774
        %v2798 = vunpack.c.l.b16 %v2775
        %v2799 = vunpack.c.l.b16 %v2776
        %v2800 = vunpack.c.l.b16 %v2777
        %v2801 = vunpack.c.l.b16 %v2778
        %v2802 = vpack.c.b16 %v2795, %v2794
        %v2803 = vpack.c.b16 %v2797, %v2796
        %v2804 = vpack.c.b16 %v2799, %v2798
        %v2805 = vpack.c.b16 %v2801, %v2800
        %v2811 = vsel %vm1861, %v2770, 0
        %2813 = vmatprep.subr.bf16.mxu0 0
        %2814 = vmatpush1.bf16.msra.mxu0 %v2802
        %2815 = vmatprep.subr.bf16.mxu0 0
        %2816 = vmatpush1.bf16.msra.mxu0 %v2803
        %2817 = vmatprep.subr.bf16.mxu0 0
        %2818 = vmatpush1.bf16.msra.mxu0 %v2804
        %2819 = vmatprep.subr.bf16.mxu0 0
        %2820 = vmatpush1.bf16.msra.mxu0 %v2805
        %2821 = vmatprep.subr.bf16.mxu0 0
        %2822 = vmatpush1.bf16.msra.mxu0 0
        %2823 = vmatprep.subr.bf16.mxu0 0
        %2824 = vmatpush1.bf16.msra.mxu0 0
        %2825 = vmatprep.subr.bf16.mxu0 0
        %2826 = vmatpush1.bf16.msra.mxu0 0
        %2827 = vmatprep.subr.bf16.mxu0 0
        %2828 = vmatpush1.bf16.msra.mxu0 0
        %2829 = vmatprep.subr.bf16.mxu0 0
        %2830 = vmatpush1.bf16.msra.mxu0 0
        %2831 = vmatprep.subr.bf16.mxu0 0
        %2832 = vmatpush1.bf16.msra.mxu0 0
        %2833 = vmatprep.subr.bf16.mxu0 0
        %2834 = vmatpush1.bf16.msra.mxu0 0
        %2835 = vmatprep.subr.bf16.mxu0 0
        %2836 = vmatpush1.bf16.msra.mxu0 0
        %2837 = vmatprep.subr.bf16.mxu0 0
        %2838 = vmatpush1.bf16.msra.mxu0 0
        %2839 = vmatprep.subr.bf16.mxu0 0
        %2840 = vmatpush1.bf16.msra.mxu0 0
        %2841 = vmatprep.subr.bf16.mxu0 0
        %2842 = vmatpush1.bf16.msra.mxu0 0
        %2843 = vmatprep.subr.bf16.mxu0 0
        %2844 = vmatpush1.bf16.msra.mxu0 0
        %2845 = vmatprep.mubr.bf16.mxu0 0
        %2846 = vmatmul.mubr.bf16.gmra.mrb[0].mxu0 %v2811
        %v2847 = vpop.f32.mrb[0].mxu0
        %v2848 = vadd.f32 %v2784, %v2847
        %v2849 = vpop.f32.mrb[0].mxu0
        %v2850 = vpop.f32.mrb[0].mxu0
        %v2851 = vpop.f32.mrb[0].mxu0
        %2852 = vdwg.mxu0
        %v2853 = vadd.f32 %v1754, %v2848
        %v2854 = vld [vmem:[%s59] sm:$0x1]
        %v2855 = vld [vmem:[%s61] sm:$0x1]
        %v2856 = vsel %vm996, %v2853, 0.0
        %2857 = vadd.xlane.f32.xlu0 %v2856
        %v2858 = vpop.xlane.xlu0 %2857
        %v2859 = vmul.f32 %v2858, %v1003
        %v2860 = vsub.f32 %v2853, %v2859
        %v2861 = vmul.f32 %v2860, %v2860
        %v2862 = vsel %vm996, %v2861, 0.0
        %2863 = vadd.xlane.f32.xlu0 %v2862
        %v2864 = vpop.xlane.xlu0 %2863
        %v2865 = vmul.f32 %v2864, %v1003
        %v2866 = vadd.f32 %v2865, 1e-12
        %v2867 = vrsqrt.pop %v2866
        %v2868 = vmul.f32 %v2860, %v2867
        %v2870 = vlaneseq
        %v2871 = vshrl.u32 %v2870, 7
        %v2872 = vsub.s32 0, %v2871
        %v2873 = vrot.slane %v2854, %v2872
        %v2875 = vmul.f32 %v2868, %v2873
        %v2877 = vlaneseq
        %v2878 = vshrl.u32 %v2877, 7
        %v2879 = vsub.s32 0, %v2878
        %v2880 = vrot.slane %v2855, %v2879
        %v2882 = vadd.f32 %v2875, %v2880
        %v2883 = vpack.c.bf16 %v2882, %v2693
        %s2884 = scalar_lea.vmem %s11, 16
        %v2885 = vld [vmem:[%s2884] sm:$0xf]
        %v2886 = vld [vmem:[%s2884 + $0x4] sm:$0xf]
        %v2887 = vld [vmem:[%s2884 + $0x8] sm:$0xf]
        %v2888 = vld [vmem:[%s2884 + $0xc] sm:$0xf]
        %s2889 = scalar_lea.vmem %s13, 1
        %v2890 = vld [vmem:[%s2889] sm:$0x1]
        %v2892 = vlaneseq
        %v2893 = vshrl.u32 %v2892, 7
        %v2894 = vsub.s32 0, %v2893
        %v2895 = vrot.slane %v2890, %v2894
        %v2901 = vunpack.c.l.b16 %v2885
        %v2902 = vunpack.c.l.b16 %v2886
        %v2903 = vunpack.c.l.b16 %v2887
        %v2904 = vunpack.c.l.b16 %v2888
        %v2905 = vpack.c.b16 %v2902, %v2901
        %v2906 = vpack.c.b16 %v2904, %v2903
        %v2910 = vsel %vm996, %v2883, 0
        %2912 = vmatprep.subr.bf16.mxu0 0
        %2913 = vmatpush1.bf16.msra.mxu0 %v2905
        %2914 = vmatprep.subr.bf16.mxu0 0
        %2915 = vmatpush1.bf16.msra.mxu0 %v2906
        %2916 = vmatprep.subr.bf16.mxu0 0
        %2917 = vmatpush1.bf16.msra.mxu0 0
        %2918 = vmatprep.subr.bf16.mxu0 0
        %2919 = vmatpush1.bf16.msra.mxu0 0
        %2920 = vmatprep.subr.bf16.mxu0 0
        %2921 = vmatpush1.bf16.msra.mxu0 0
        %2922 = vmatprep.subr.bf16.mxu0 0
        %2923 = vmatpush1.bf16.msra.mxu0 0
        %2924 = vmatprep.subr.bf16.mxu0 0
        %2925 = vmatpush1.bf16.msra.mxu0 0
        %2926 = vmatprep.subr.bf16.mxu0 0
        %2927 = vmatpush1.bf16.msra.mxu0 0
        %2928 = vmatprep.subr.bf16.mxu0 0
        %2929 = vmatpush1.bf16.msra.mxu0 0
        %2930 = vmatprep.subr.bf16.mxu0 0
        %2931 = vmatpush1.bf16.msra.mxu0 0
        %2932 = vmatprep.subr.bf16.mxu0 0
        %2933 = vmatpush1.bf16.msra.mxu0 0
        %2934 = vmatprep.subr.bf16.mxu0 0
        %2935 = vmatpush1.bf16.msra.mxu0 0
        %2936 = vmatprep.subr.bf16.mxu0 0
        %2937 = vmatpush1.bf16.msra.mxu0 0
        %2938 = vmatprep.subr.bf16.mxu0 0
        %2939 = vmatpush1.bf16.msra.mxu0 0
        %2940 = vmatprep.subr.bf16.mxu0 0
        %2941 = vmatpush1.bf16.msra.mxu0 0
        %2942 = vmatprep.subr.bf16.mxu0 0
        %2943 = vmatpush1.bf16.msra.mxu0 0
        %2944 = vmatprep.mubr.bf16.mxu0 0
        %2945 = vmatmul.mubr.bf16.gmra.mrb[0].mxu0 %v2910
        %v2946 = vpop.f32.mrb[0].mxu0
        %v2947 = vadd.f32 %v2895, %v2946
        %v2948 = vpop.f32.mrb[0].mxu0
        %v2949 = vpop.f32.mrb[0].mxu0
        %v2950 = vadd.f32 %v2895, %v2949
        %v2951 = vpop.f32.mrb[0].mxu0
        %2952 = vdwg.mxu0
        %s2953 = scalar_lea.vmem %s15, 16
        %v2954 = vld [vmem:[%s2953] sm:$0xf]
        %v2955 = vld [vmem:[%s2953 + $0x4] sm:$0xf]
        %v2956 = vld [vmem:[%s2953 + $0x8] sm:$0xf]
        %v2957 = vld [vmem:[%s2953 + $0xc] sm:$0xf]
        %s2958 = scalar_lea.vmem %s17, 1
        %v2959 = vld [vmem:[%s2958] sm:$0x1]
        %v2960 = vmul.f32 %v2947, 0.35355338
        %v2961 = vmul.f32 %v2950, 0.35355338
        %v2962 = vpack.c.bf16 %v2961, %v2960
        %v2963 = vpack.c.bf16 %v2950, %v2947
        %2965 = vrot.lane.b32.xlu0 %v2963, 96
        %v2966 = vpop.permute.xlu0 %2965
        %v2968 = vsel %vm1132, %v2962, 0
        %v2971 = vsel %vm1132, %v2966, 0
        %2973 = vmatprep.subr.bf16.mxu0 0
        %2974 = vmatpush1.bf16.xpose.msra.mxu0 %v2971
        %2975 = vmatprep.subr.bf16.mxu0 0
        %2976 = vmatpush1.bf16.xpose.msra.mxu0 0
        %2977 = vmatprep.subr.bf16.mxu0 0
        %2978 = vmatpush1.bf16.xpose.msra.mxu0 0
        %2979 = vmatprep.subr.bf16.mxu0 0
        %2980 = vmatpush1.bf16.xpose.msra.mxu0 0
        %2981 = vmatprep.subr.bf16.mxu0 0
        %2982 = vmatpush1.bf16.xpose.msra.mxu0 0
        %2983 = vmatprep.subr.bf16.mxu0 0
        %2984 = vmatpush1.bf16.xpose.msra.mxu0 0
        %2985 = vmatprep.subr.bf16.mxu0 0
        %2986 = vmatpush1.bf16.xpose.msra.mxu0 0
        %2987 = vmatprep.subr.bf16.mxu0 0
        %2988 = vmatpush1.bf16.xpose.msra.mxu0 0
        %2989 = vmatprep.subr.bf16.mxu0 0
        %2990 = vmatpush1.bf16.xpose.msra.mxu0 0
        %2991 = vmatprep.subr.bf16.mxu0 0
        %2992 = vmatpush1.bf16.xpose.msra.mxu0 0
        %2993 = vmatprep.subr.bf16.mxu0 0
        %2994 = vmatpush1.bf16.xpose.msra.mxu0 0
        %2995 = vmatprep.subr.bf16.mxu0 0
        %2996 = vmatpush1.bf16.xpose.msra.mxu0 0
        %2997 = vmatprep.subr.bf16.mxu0 0
        %2998 = vmatpush1.bf16.xpose.msra.mxu0 0
        %2999 = vmatprep.subr.bf16.mxu0 0
        %3000 = vmatpush1.bf16.xpose.msra.mxu0 0
        %3001 = vmatprep.subr.bf16.mxu0 0
        %3002 = vmatpush1.bf16.xpose.msra.mxu0 0
        %3003 = vmatprep.subr.bf16.mxu0 0
        %3004 = vmatpush1.bf16.xpose.msra.mxu0 0
        %3005 = vmatprep.mubr.bf16.mxu0 0
        %3006 = vmatmul.mubr.bf16.gmra.mrb[0].mxu0 %v2968
        %v3007 = vpop.f32.mrb[0].mxu0
        %v3008 = vadd.f32 %v1127, %v3007
        %v3009 = vpop.f32.mrb[0].mxu0
        %v3010 = vpop.f32.mrb[0].mxu0
        %v3011 = vadd.f32 %v1127, %v3010
        %v3012 = vpop.f32.mrb[0].mxu0
        %3013 = vdwg.mxu0
        %v3014 = vsel %vm1180, %v3008, -inf
        %3015 = vmax.xlane.f32.xlu0 %v3014
        %v3016 = vpop.xlane.xlu0 %3015
        %v3017 = vsel %vm1180, %v3011, -inf
        %3018 = vmax.xlane.f32.xlu0 %v3017
        %v3019 = vpop.xlane.xlu0 %3018
        %v3020 = vsub.f32 %v3008, %v3016
        %v3021 = vsub.f32 %v3011, %v3019
        %v3022 = vmul.f32 %v3020, 1.442695
        %v3023 = vpow.pop %v3022
        %v3024 = vmul.f32 %v3021, 1.442695
        %v3025 = vpow.pop %v3024
        %v3026 = vsel %vm1180, %v3023, 0.0
        %3027 = vadd.xlane.f32.xlu0 %v3026
        %v3028 = vpop.xlane.xlu0 %3027
        %v3029 = vsel %vm1180, %v3025, 0.0
        %3030 = vadd.xlane.f32.xlu0 %v3029
        %v3031 = vpop.xlane.xlu0 %3030
        %v3032 = vrcp.pop %v3028
        %v3033 = vrcp.pop %v3031
        %v3034 = vmul.f32 %v3023, %v3032
        %v3035 = vmul.f32 %v3025, %v3033
        %v3036 = vpack.c.bf16 %v3035, %v3034
        %3037 = vrot.lane.b32.xlu0 %v2963, 64
        %v3038 = vpop.permute.xlu0 %3037
        %v3041 = vsel %vm1180, %v3036, 0
        %3043 = vmatprep.subr.bf16.mxu0 0
        %3044 = vmatpush1.bf16.msra.mxu0 %v3038
        %3045 = vmatprep.subr.bf16.mxu0 0
        %3046 = vmatpush1.bf16.msra.mxu0 0
        %3047 = vmatprep.subr.bf16.mxu0 0
        %3048 = vmatpush1.bf16.msra.mxu0 0
        %3049 = vmatprep.subr.bf16.mxu0 0
        %3050 = vmatpush1.bf16.msra.mxu0 0
        %3051 = vmatprep.subr.bf16.mxu0 0
        %3052 = vmatpush1.bf16.msra.mxu0 0
        %3053 = vmatprep.subr.bf16.mxu0 0
        %3054 = vmatpush1.bf16.msra.mxu0 0
        %3055 = vmatprep.subr.bf16.mxu0 0
        %3056 = vmatpush1.bf16.msra.mxu0 0
        %3057 = vmatprep.subr.bf16.mxu0 0
        %3058 = vmatpush1.bf16.msra.mxu0 0
        %3059 = vmatprep.subr.bf16.mxu0 0
        %3060 = vmatpush1.bf16.msra.mxu0 0
        %3061 = vmatprep.subr.bf16.mxu0 0
        %3062 = vmatpush1.bf16.msra.mxu0 0
        %3063 = vmatprep.subr.bf16.mxu0 0
        %3064 = vmatpush1.bf16.msra.mxu0 0
        %3065 = vmatprep.subr.bf16.mxu0 0
        %3066 = vmatpush1.bf16.msra.mxu0 0
        %3067 = vmatprep.subr.bf16.mxu0 0
        %3068 = vmatpush1.bf16.msra.mxu0 0
        %3069 = vmatprep.subr.bf16.mxu0 0
        %3070 = vmatpush1.bf16.msra.mxu0 0
        %3071 = vmatprep.subr.bf16.mxu0 0
        %3072 = vmatpush1.bf16.msra.mxu0 0
        %3073 = vmatprep.subr.bf16.mxu0 0
        %3074 = vmatpush1.bf16.msra.mxu0 0
        %3075 = vmatprep.mubr.bf16.mxu0 0
        %3076 = vmatmul.mubr.bf16.gmra.mrb[0].mxu0 %v3041
        %v3077 = vpop.f32.mrb[0].mxu0
        %v3078 = vadd.f32 0.0, %v3077
        %v3079 = vpop.f32.mrb[0].mxu0
        %v3080 = vpop.f32.mrb[0].mxu0
        %v3081 = vadd.f32 0.0, %v3080
        %v3082 = vpop.f32.mrb[0].mxu0
        %3083 = vdwg.mxu0
        %3085 = vrot.lane.b32.xlu0 %v2962, 120
        %v3086 = vpop.permute.xlu0 %3085
        %3087 = vrot.lane.b32.xlu0 %v2963, 88
        %v3088 = vpop.permute.xlu0 %3087
        %v3090 = vsel %vm1132, %v3086, 0
        %v3093 = vsel %vm1132, %v3088, 0
        %3095 = vmatprep.subr.bf16.mxu0 0
        %3096 = vmatpush1.bf16.xpose.msra.mxu0 %v3093
        %3097 = vmatprep.subr.bf16.mxu0 0
        %3098 = vmatpush1.bf16.xpose.msra.mxu0 0
        %3099 = vmatprep.subr.bf16.mxu0 0
        %3100 = vmatpush1.bf16.xpose.msra.mxu0 0
        %3101 = vmatprep.subr.bf16.mxu0 0
        %3102 = vmatpush1.bf16.xpose.msra.mxu0 0
        %3103 = vmatprep.subr.bf16.mxu0 0
        %3104 = vmatpush1.bf16.xpose.msra.mxu0 0
        %3105 = vmatprep.subr.bf16.mxu0 0
        %3106 = vmatpush1.bf16.xpose.msra.mxu0 0
        %3107 = vmatprep.subr.bf16.mxu0 0
        %3108 = vmatpush1.bf16.xpose.msra.mxu0 0
        %3109 = vmatprep.subr.bf16.mxu0 0
        %3110 = vmatpush1.bf16.xpose.msra.mxu0 0
        %3111 = vmatprep.subr.bf16.mxu0 0
        %3112 = vmatpush1.bf16.xpose.msra.mxu0 0
        %3113 = vmatprep.subr.bf16.mxu0 0
        %3114 = vmatpush1.bf16.xpose.msra.mxu0 0
        %3115 = vmatprep.subr.bf16.mxu0 0
        %3116 = vmatpush1.bf16.xpose.msra.mxu0 0
        %3117 = vmatprep.subr.bf16.mxu0 0
        %3118 = vmatpush1.bf16.xpose.msra.mxu0 0
        %3119 = vmatprep.subr.bf16.mxu0 0
        %3120 = vmatpush1.bf16.xpose.msra.mxu0 0
        %3121 = vmatprep.subr.bf16.mxu0 0
        %3122 = vmatpush1.bf16.xpose.msra.mxu0 0
        %3123 = vmatprep.subr.bf16.mxu0 0
        %3124 = vmatpush1.bf16.xpose.msra.mxu0 0
        %3125 = vmatprep.subr.bf16.mxu0 0
        %3126 = vmatpush1.bf16.xpose.msra.mxu0 0
        %3127 = vmatprep.mubr.bf16.mxu0 0
        %3128 = vmatmul.mubr.bf16.gmra.mrb[0].mxu0 %v3090
        %v3129 = vpop.f32.mrb[0].mxu0
        %v3130 = vadd.f32 %v1127, %v3129
        %v3131 = vpop.f32.mrb[0].mxu0
        %v3132 = vpop.f32.mrb[0].mxu0
        %v3133 = vadd.f32 %v1127, %v3132
        %v3134 = vpop.f32.mrb[0].mxu0
        %3135 = vdwg.mxu0
        %v3136 = vsel %vm1180, %v3130, -inf
        %3137 = vmax.xlane.f32.xlu0 %v3136
        %v3138 = vpop.xlane.xlu0 %3137
        %v3139 = vsel %vm1180, %v3133, -inf
        %3140 = vmax.xlane.f32.xlu0 %v3139
        %v3141 = vpop.xlane.xlu0 %3140
        %v3142 = vsub.f32 %v3130, %v3138
        %v3143 = vsub.f32 %v3133, %v3141
        %v3144 = vmul.f32 %v3142, 1.442695
        %v3145 = vpow.pop %v3144
        %v3146 = vmul.f32 %v3143, 1.442695
        %v3147 = vpow.pop %v3146
        %v3148 = vsel %vm1180, %v3145, 0.0
        %3149 = vadd.xlane.f32.xlu0 %v3148
        %v3150 = vpop.xlane.xlu0 %3149
        %v3151 = vsel %vm1180, %v3147, 0.0
        %3152 = vadd.xlane.f32.xlu0 %v3151
        %v3153 = vpop.xlane.xlu0 %3152
        %v3154 = vrcp.pop %v3150
        %v3155 = vrcp.pop %v3153
        %v3156 = vmul.f32 %v3145, %v3154
        %v3157 = vmul.f32 %v3147, %v3155
        %v3158 = vpack.c.bf16 %v3157, %v3156
        %3159 = vrot.lane.b32.xlu0 %v2963, 56
        %v3160 = vpop.permute.xlu0 %3159
        %v3163 = vsel %vm1180, %v3158, 0
        %3165 = vmatprep.subr.bf16.mxu0 0
        %3166 = vmatpush1.bf16.msra.mxu0 %v3160
        %3167 = vmatprep.subr.bf16.mxu0 0
        %3168 = vmatpush1.bf16.msra.mxu0 0
        %3169 = vmatprep.subr.bf16.mxu0 0
        %3170 = vmatpush1.bf16.msra.mxu0 0
        %3171 = vmatprep.subr.bf16.mxu0 0
        %3172 = vmatpush1.bf16.msra.mxu0 0
        %3173 = vmatprep.subr.bf16.mxu0 0
        %3174 = vmatpush1.bf16.msra.mxu0 0
        %3175 = vmatprep.subr.bf16.mxu0 0
        %3176 = vmatpush1.bf16.msra.mxu0 0
        %3177 = vmatprep.subr.bf16.mxu0 0
        %3178 = vmatpush1.bf16.msra.mxu0 0
        %3179 = vmatprep.subr.bf16.mxu0 0
        %3180 = vmatpush1.bf16.msra.mxu0 0
        %3181 = vmatprep.subr.bf16.mxu0 0
        %3182 = vmatpush1.bf16.msra.mxu0 0
        %3183 = vmatprep.subr.bf16.mxu0 0
        %3184 = vmatpush1.bf16.msra.mxu0 0
        %3185 = vmatprep.subr.bf16.mxu0 0
        %3186 = vmatpush1.bf16.msra.mxu0 0
        %3187 = vmatprep.subr.bf16.mxu0 0
        %3188 = vmatpush1.bf16.msra.mxu0 0
        %3189 = vmatprep.subr.bf16.mxu0 0
        %3190 = vmatpush1.bf16.msra.mxu0 0
        %3191 = vmatprep.subr.bf16.mxu0 0
        %3192 = vmatpush1.bf16.msra.mxu0 0
        %3193 = vmatprep.subr.bf16.mxu0 0
        %3194 = vmatpush1.bf16.msra.mxu0 0
        %3195 = vmatprep.subr.bf16.mxu0 0
        %3196 = vmatpush1.bf16.msra.mxu0 0
        %3197 = vmatprep.mubr.bf16.mxu0 0
        %3198 = vmatmul.mubr.bf16.gmra.mrb[0].mxu0 %v3163
        %v3199 = vpop.f32.mrb[0].mxu0
        %v3200 = vadd.f32 0.0, %v3199
        %v3201 = vpop.f32.mrb[0].mxu0
        %v3202 = vpop.f32.mrb[0].mxu0
        %v3203 = vadd.f32 0.0, %v3202
        %v3204 = vpop.f32.mrb[0].mxu0
        %3205 = vdwg.mxu0
        %3206 = vrot.lane.b32.xlu0 %v2962, 112
        %v3207 = vpop.permute.xlu0 %3206
        %3208 = vrot.lane.b32.xlu0 %v2963, 80
        %v3209 = vpop.permute.xlu0 %3208
        %v3211 = vsel %vm1132, %v3207, 0
        %v3214 = vsel %vm1132, %v3209, 0
        %3216 = vmatprep.subr.bf16.mxu0 0
        %3217 = vmatpush1.bf16.xpose.msra.mxu0 %v3214
        %3218 = vmatprep.subr.bf16.mxu0 0
        %3219 = vmatpush1.bf16.xpose.msra.mxu0 0
        %3220 = vmatprep.subr.bf16.mxu0 0
        %3221 = vmatpush1.bf16.xpose.msra.mxu0 0
        %3222 = vmatprep.subr.bf16.mxu0 0
        %3223 = vmatpush1.bf16.xpose.msra.mxu0 0
        %3224 = vmatprep.subr.bf16.mxu0 0
        %3225 = vmatpush1.bf16.xpose.msra.mxu0 0
        %3226 = vmatprep.subr.bf16.mxu0 0
        %3227 = vmatpush1.bf16.xpose.msra.mxu0 0
        %3228 = vmatprep.subr.bf16.mxu0 0
        %3229 = vmatpush1.bf16.xpose.msra.mxu0 0
        %3230 = vmatprep.subr.bf16.mxu0 0
        %3231 = vmatpush1.bf16.xpose.msra.mxu0 0
        %3232 = vmatprep.subr.bf16.mxu0 0
        %3233 = vmatpush1.bf16.xpose.msra.mxu0 0
        %3234 = vmatprep.subr.bf16.mxu0 0
        %3235 = vmatpush1.bf16.xpose.msra.mxu0 0
        %3236 = vmatprep.subr.bf16.mxu0 0
        %3237 = vmatpush1.bf16.xpose.msra.mxu0 0
        %3238 = vmatprep.subr.bf16.mxu0 0
        %3239 = vmatpush1.bf16.xpose.msra.mxu0 0
        %3240 = vmatprep.subr.bf16.mxu0 0
        %3241 = vmatpush1.bf16.xpose.msra.mxu0 0
        %3242 = vmatprep.subr.bf16.mxu0 0
        %3243 = vmatpush1.bf16.xpose.msra.mxu0 0
        %3244 = vmatprep.subr.bf16.mxu0 0
        %3245 = vmatpush1.bf16.xpose.msra.mxu0 0
        %3246 = vmatprep.subr.bf16.mxu0 0
        %3247 = vmatpush1.bf16.xpose.msra.mxu0 0
        %3248 = vmatprep.mubr.bf16.mxu0 0
        %3249 = vmatmul.mubr.bf16.gmra.mrb[0].mxu0 %v3211
        %v3250 = vpop.f32.mrb[0].mxu0
        %v3251 = vadd.f32 %v1127, %v3250
        %v3252 = vpop.f32.mrb[0].mxu0
        %v3253 = vpop.f32.mrb[0].mxu0
        %v3254 = vadd.f32 %v1127, %v3253
        %v3255 = vpop.f32.mrb[0].mxu0
        %3256 = vdwg.mxu0
        %v3257 = vsel %vm1180, %v3251, -inf
        %3258 = vmax.xlane.f32.xlu0 %v3257
        %v3259 = vpop.xlane.xlu0 %3258
        %v3260 = vsel %vm1180, %v3254, -inf
        %3261 = vmax.xlane.f32.xlu0 %v3260
        %v3262 = vpop.xlane.xlu0 %3261
        %v3263 = vsub.f32 %v3251, %v3259
        %v3264 = vsub.f32 %v3254, %v3262
        %v3265 = vmul.f32 %v3263, 1.442695
        %v3266 = vpow.pop %v3265
        %v3267 = vmul.f32 %v3264, 1.442695
        %v3268 = vpow.pop %v3267
        %v3269 = vsel %vm1180, %v3266, 0.0
        %3270 = vadd.xlane.f32.xlu0 %v3269
        %v3271 = vpop.xlane.xlu0 %3270
        %v3272 = vsel %vm1180, %v3268, 0.0
        %3273 = vadd.xlane.f32.xlu0 %v3272
        %v3274 = vpop.xlane.xlu0 %3273
        %v3275 = vrcp.pop %v3271
        %v3276 = vrcp.pop %v3274
        %v3277 = vmul.f32 %v3266, %v3275
        %v3278 = vmul.f32 %v3268, %v3276
        %v3279 = vpack.c.bf16 %v3278, %v3277
        %3280 = vrot.lane.b32.xlu0 %v2963, 48
        %v3281 = vpop.permute.xlu0 %3280
        %v3284 = vsel %vm1180, %v3279, 0
        %3286 = vmatprep.subr.bf16.mxu0 0
        %3287 = vmatpush1.bf16.msra.mxu0 %v3281
        %3288 = vmatprep.subr.bf16.mxu0 0
        %3289 = vmatpush1.bf16.msra.mxu0 0
        %3290 = vmatprep.subr.bf16.mxu0 0
        %3291 = vmatpush1.bf16.msra.mxu0 0
        %3292 = vmatprep.subr.bf16.mxu0 0
        %3293 = vmatpush1.bf16.msra.mxu0 0
        %3294 = vmatprep.subr.bf16.mxu0 0
        %3295 = vmatpush1.bf16.msra.mxu0 0
        %3296 = vmatprep.subr.bf16.mxu0 0
        %3297 = vmatpush1.bf16.msra.mxu0 0
        %3298 = vmatprep.subr.bf16.mxu0 0
        %3299 = vmatpush1.bf16.msra.mxu0 0
        %3300 = vmatprep.subr.bf16.mxu0 0
        %3301 = vmatpush1.bf16.msra.mxu0 0
        %3302 = vmatprep.subr.bf16.mxu0 0
        %3303 = vmatpush1.bf16.msra.mxu0 0
        %3304 = vmatprep.subr.bf16.mxu0 0
        %3305 = vmatpush1.bf16.msra.mxu0 0
        %3306 = vmatprep.subr.bf16.mxu0 0
        %3307 = vmatpush1.bf16.msra.mxu0 0
        %3308 = vmatprep.subr.bf16.mxu0 0
        %3309 = vmatpush1.bf16.msra.mxu0 0
        %3310 = vmatprep.subr.bf16.mxu0 0
        %3311 = vmatpush1.bf16.msra.mxu0 0
        %3312 = vmatprep.subr.bf16.mxu0 0
        %3313 = vmatpush1.bf16.msra.mxu0 0
        %3314 = vmatprep.subr.bf16.mxu0 0
        %3315 = vmatpush1.bf16.msra.mxu0 0
        %3316 = vmatprep.subr.bf16.mxu0 0
        %3317 = vmatpush1.bf16.msra.mxu0 0
        %3318 = vmatprep.mubr.bf16.mxu0 0
        %3319 = vmatmul.mubr.bf16.gmra.mrb[0].mxu0 %v3284
        %v3320 = vpop.f32.mrb[0].mxu0
        %v3321 = vadd.f32 0.0, %v3320
        %v3322 = vpop.f32.mrb[0].mxu0
        %v3323 = vpop.f32.mrb[0].mxu0
        %v3324 = vadd.f32 0.0, %v3323
        %v3325 = vpop.f32.mrb[0].mxu0
        %3326 = vdwg.mxu0
        %3327 = vrot.lane.b32.xlu0 %v2962, 104
        %v3328 = vpop.permute.xlu0 %3327
        %3329 = vrot.lane.b32.xlu0 %v2963, 72
        %v3330 = vpop.permute.xlu0 %3329
        %v3332 = vsel %vm1132, %v3328, 0
        %v3335 = vsel %vm1132, %v3330, 0
        %3337 = vmatprep.subr.bf16.mxu0 0
        %3338 = vmatpush1.bf16.xpose.msra.mxu0 %v3335
        %3339 = vmatprep.subr.bf16.mxu0 0
        %3340 = vmatpush1.bf16.xpose.msra.mxu0 0
        %3341 = vmatprep.subr.bf16.mxu0 0
        %3342 = vmatpush1.bf16.xpose.msra.mxu0 0
        %3343 = vmatprep.subr.bf16.mxu0 0
        %3344 = vmatpush1.bf16.xpose.msra.mxu0 0
        %3345 = vmatprep.subr.bf16.mxu0 0
        %3346 = vmatpush1.bf16.xpose.msra.mxu0 0
        %3347 = vmatprep.subr.bf16.mxu0 0
        %3348 = vmatpush1.bf16.xpose.msra.mxu0 0
        %3349 = vmatprep.subr.bf16.mxu0 0
        %3350 = vmatpush1.bf16.xpose.msra.mxu0 0
        %3351 = vmatprep.subr.bf16.mxu0 0
        %3352 = vmatpush1.bf16.xpose.msra.mxu0 0
        %3353 = vmatprep.subr.bf16.mxu0 0
        %3354 = vmatpush1.bf16.xpose.msra.mxu0 0
        %3355 = vmatprep.subr.bf16.mxu0 0
        %3356 = vmatpush1.bf16.xpose.msra.mxu0 0
        %3357 = vmatprep.subr.bf16.mxu0 0
        %3358 = vmatpush1.bf16.xpose.msra.mxu0 0
        %3359 = vmatprep.subr.bf16.mxu0 0
        %3360 = vmatpush1.bf16.xpose.msra.mxu0 0
        %3361 = vmatprep.subr.bf16.mxu0 0
        %3362 = vmatpush1.bf16.xpose.msra.mxu0 0
        %3363 = vmatprep.subr.bf16.mxu0 0
        %3364 = vmatpush1.bf16.xpose.msra.mxu0 0
        %3365 = vmatprep.subr.bf16.mxu0 0
        %3366 = vmatpush1.bf16.xpose.msra.mxu0 0
        %3367 = vmatprep.subr.bf16.mxu0 0
        %3368 = vmatpush1.bf16.xpose.msra.mxu0 0
        %3369 = vmatprep.mubr.bf16.mxu0 0
        %3370 = vmatmul.mubr.bf16.gmra.mrb[0].mxu0 %v3332
        %v3371 = vpop.f32.mrb[0].mxu0
        %v3372 = vadd.f32 %v1127, %v3371
        %v3373 = vpop.f32.mrb[0].mxu0
        %v3374 = vpop.f32.mrb[0].mxu0
        %v3375 = vadd.f32 %v1127, %v3374
        %v3376 = vpop.f32.mrb[0].mxu0
        %3377 = vdwg.mxu0
        %v3378 = vsel %vm1180, %v3372, -inf
        %3379 = vmax.xlane.f32.xlu0 %v3378
        %v3380 = vpop.xlane.xlu0 %3379
        %v3381 = vsel %vm1180, %v3375, -inf
        %3382 = vmax.xlane.f32.xlu0 %v3381
        %v3383 = vpop.xlane.xlu0 %3382
        %v3384 = vsub.f32 %v3372, %v3380
        %v3385 = vsub.f32 %v3375, %v3383
        %v3386 = vmul.f32 %v3384, 1.442695
        %v3387 = vpow.pop %v3386
        %v3388 = vmul.f32 %v3385, 1.442695
        %v3389 = vpow.pop %v3388
        %v3390 = vsel %vm1180, %v3387, 0.0
        %3391 = vadd.xlane.f32.xlu0 %v3390
        %v3392 = vpop.xlane.xlu0 %3391
        %v3393 = vsel %vm1180, %v3389, 0.0
        %3394 = vadd.xlane.f32.xlu0 %v3393
        %v3395 = vpop.xlane.xlu0 %3394
        %v3396 = vrcp.pop %v3392
        %v3397 = vrcp.pop %v3395
        %v3398 = vmul.f32 %v3387, %v3396
        %v3399 = vmul.f32 %v3389, %v3397
        %v3400 = vpack.c.bf16 %v3399, %v3398
        %3401 = vrot.lane.b32.xlu0 %v2963, 40
        %v3402 = vpop.permute.xlu0 %3401
        %v3405 = vsel %vm1180, %v3400, 0
        %3407 = vmatprep.subr.bf16.mxu0 0
        %3408 = vmatpush1.bf16.msra.mxu0 %v3402
        %3409 = vmatprep.subr.bf16.mxu0 0
        %3410 = vmatpush1.bf16.msra.mxu0 0
        %3411 = vmatprep.subr.bf16.mxu0 0
        %3412 = vmatpush1.bf16.msra.mxu0 0
        %3413 = vmatprep.subr.bf16.mxu0 0
        %3414 = vmatpush1.bf16.msra.mxu0 0
        %3415 = vmatprep.subr.bf16.mxu0 0
        %3416 = vmatpush1.bf16.msra.mxu0 0
        %3417 = vmatprep.subr.bf16.mxu0 0
        %3418 = vmatpush1.bf16.msra.mxu0 0
        %3419 = vmatprep.subr.bf16.mxu0 0
        %3420 = vmatpush1.bf16.msra.mxu0 0
        %3421 = vmatprep.subr.bf16.mxu0 0
        %3422 = vmatpush1.bf16.msra.mxu0 0
        %3423 = vmatprep.subr.bf16.mxu0 0
        %3424 = vmatpush1.bf16.msra.mxu0 0
        %3425 = vmatprep.subr.bf16.mxu0 0
        %3426 = vmatpush1.bf16.msra.mxu0 0
        %3427 = vmatprep.subr.bf16.mxu0 0
        %3428 = vmatpush1.bf16.msra.mxu0 0
        %3429 = vmatprep.subr.bf16.mxu0 0
        %3430 = vmatpush1.bf16.msra.mxu0 0
        %3431 = vmatprep.subr.bf16.mxu0 0
        %3432 = vmatpush1.bf16.msra.mxu0 0
        %3433 = vmatprep.subr.bf16.mxu0 0
        %3434 = vmatpush1.bf16.msra.mxu0 0
        %3435 = vmatprep.subr.bf16.mxu0 0
        %3436 = vmatpush1.bf16.msra.mxu0 0
        %3437 = vmatprep.subr.bf16.mxu0 0
        %3438 = vmatpush1.bf16.msra.mxu0 0
        %3439 = vmatprep.mubr.bf16.mxu0 0
        %3440 = vmatmul.mubr.bf16.gmra.mrb[0].mxu0 %v3405
        %v3441 = vpop.f32.mrb[0].mxu0
        %v3442 = vadd.f32 0.0, %v3441
        %v3443 = vpop.f32.mrb[0].mxu0
        %v3444 = vpop.f32.mrb[0].mxu0
        %v3445 = vadd.f32 0.0, %v3444
        %v3446 = vpop.f32.mrb[0].mxu0
        %3447 = vdwg.mxu0
        %3450 = vrot.lane.b32.xlu0 %v3200, 8
        %v3451 = vpop.permute.xlu0 %3450
        %3452 = vrot.lane.b32.xlu0 %v3203, 8
        %v3453 = vpop.permute.xlu0 %3452
        %3458 = vrot.lane.b32.xlu0 %v3321, 16
        %v3459 = vpop.permute.xlu0 %3458
        %3460 = vrot.lane.b32.xlu0 %v3324, 16
        %v3461 = vpop.permute.xlu0 %3460
        %3466 = vrot.lane.b32.xlu0 %v3442, 24
        %v3467 = vpop.permute.xlu0 %3466
        %3468 = vrot.lane.b32.xlu0 %v3445, 24
        %v3469 = vpop.permute.xlu0 %3468
        %v3472 = vsel %vm1132, %v3078, %v3451
        %v3473 = vsel %vm1132, %v3081, %v3453
        %v3474 = vsel %vm1180, %v3472, %v3459
        %v3475 = vsel %vm1180, %v3473, %v3461
        %v3476 = vsel %vm1643, %v3474, %v3467
        %v3477 = vsel %vm1643, %v3475, %v3469
        %v3478 = vpack.c.bf16 %v3477, %v3476
        %v3480 = vlaneseq
        %v3481 = vshrl.u32 %v3480, 7
        %v3482 = vsub.s32 0, %v3481
        %v3483 = vrot.slane %v2959, %v3482
        %v3489 = vunpack.c.l.b16 %v2954
        %v3490 = vunpack.c.l.b16 %v2955
        %v3491 = vunpack.c.l.b16 %v2956
        %v3492 = vunpack.c.l.b16 %v2957
        %v3493 = vpack.c.b16 %v3490, %v3489
        %v3494 = vpack.c.b16 %v3492, %v3491
        %v3498 = vsel %vm996, %v3478, 0
        %3500 = vmatprep.subr.bf16.mxu0 0
        %3501 = vmatpush1.bf16.msra.mxu0 %v3493
        %3502 = vmatprep.subr.bf16.mxu0 0
        %3503 = vmatpush1.bf16.msra.mxu0 %v3494
        %3504 = vmatprep.subr.bf16.mxu0 0
        %3505 = vmatpush1.bf16.msra.mxu0 0
        %3506 = vmatprep.subr.bf16.mxu0 0
        %3507 = vmatpush1.bf16.msra.mxu0 0
        %3508 = vmatprep.subr.bf16.mxu0 0
        %3509 = vmatpush1.bf16.msra.mxu0 0
        %3510 = vmatprep.subr.bf16.mxu0 0
        %3511 = vmatpush1.bf16.msra.mxu0 0
        %3512 = vmatprep.subr.bf16.mxu0 0
        %3513 = vmatpush1.bf16.msra.mxu0 0
        %3514 = vmatprep.subr.bf16.mxu0 0
        %3515 = vmatpush1.bf16.msra.mxu0 0
        %3516 = vmatprep.subr.bf16.mxu0 0
        %3517 = vmatpush1.bf16.msra.mxu0 0
        %3518 = vmatprep.subr.bf16.mxu0 0
        %3519 = vmatpush1.bf16.msra.mxu0 0
        %3520 = vmatprep.subr.bf16.mxu0 0
        %3521 = vmatpush1.bf16.msra.mxu0 0
        %3522 = vmatprep.subr.bf16.mxu0 0
        %3523 = vmatpush1.bf16.msra.mxu0 0
        %3524 = vmatprep.subr.bf16.mxu0 0
        %3525 = vmatpush1.bf16.msra.mxu0 0
        %3526 = vmatprep.subr.bf16.mxu0 0
        %3527 = vmatpush1.bf16.msra.mxu0 0
        %3528 = vmatprep.subr.bf16.mxu0 0
        %3529 = vmatpush1.bf16.msra.mxu0 0
        %3530 = vmatprep.subr.bf16.mxu0 0
        %3531 = vmatpush1.bf16.msra.mxu0 0
        %3532 = vmatprep.mubr.bf16.mxu0 0
        %3533 = vmatmul.mubr.bf16.gmra.mrb[0].mxu0 %v3498
        %v3534 = vpop.f32.mrb[0].mxu0
        %v3535 = vadd.f32 %v3483, %v3534
        %v3536 = vpop.f32.mrb[0].mxu0
        %v3537 = vpop.f32.mrb[0].mxu0
        %v3538 = vpop.f32.mrb[0].mxu0
        %3539 = vdwg.mxu0
        %v3540 = vadd.f32 %v2693, %v3535
        %s3541 = scalar_lea.vmem %s19, 1
        %v3542 = vld [vmem:[%s3541] sm:$0x1]
        %s3543 = scalar_lea.vmem %s21, 1
        %v3544 = vld [vmem:[%s3543] sm:$0x1]
        %v3545 = vsel %vm996, %v3540, 0.0
        %3546 = vadd.xlane.f32.xlu0 %v3545
        %v3547 = vpop.xlane.xlu0 %3546
        %v3548 = vmul.f32 %v3547, %v1003
        %v3549 = vsub.f32 %v3540, %v3548
        %v3550 = vmul.f32 %v3549, %v3549
        %v3551 = vsel %vm996, %v3550, 0.0
        %3552 = vadd.xlane.f32.xlu0 %v3551
        %v3553 = vpop.xlane.xlu0 %3552
        %v3554 = vmul.f32 %v3553, %v1003
        %v3555 = vadd.f32 %v3554, 1e-12
        %v3556 = vrsqrt.pop %v3555
        %v3557 = vmul.f32 %v3549, %v3556
        %v3559 = vlaneseq
        %v3560 = vshrl.u32 %v3559, 7
        %v3561 = vsub.s32 0, %v3560
        %v3562 = vrot.slane %v3542, %v3561
        %v3564 = vmul.f32 %v3557, %v3562
        %v3566 = vlaneseq
        %v3567 = vshrl.u32 %v3566, 7
        %v3568 = vsub.s32 0, %v3567
        %v3569 = vrot.slane %v3544, %v3568
        %v3571 = vadd.f32 %v3564, %v3569
        %v3572 = vpack.c.bf16 %v3571, %v3571
        %s3573 = scalar_lea.vmem %s23, 16
        %v3574 = vld [vmem:[%s3573] sm:$0xf]
        %v3575 = vld [vmem:[%s3573 + $0x4] sm:$0xf]
        %v3576 = vld [vmem:[%s3573 + $0x8] sm:$0xf]
        %v3577 = vld [vmem:[%s3573 + $0xc] sm:$0xf]
        %s3578 = scalar_lea.vmem %s25, 1
        %v3579 = vld [vmem:[%s3578] sm:$0x1]
        %v3581 = vlaneseq
        %v3582 = vshrl.u32 %v3581, 7
        %v3583 = vsub.s32 0, %v3582
        %v3584 = vrot.slane %v3579, %v3583
        %v3590 = vunpack.c.l.b16 %v3574
        %v3591 = vunpack.c.l.b16 %v3575
        %v3592 = vunpack.c.l.b16 %v3576
        %v3593 = vunpack.c.l.b16 %v3577
        %v3594 = vpack.c.b16 %v3591, %v3590
        %v3595 = vpack.c.b16 %v3593, %v3592
        %v3599 = vsel %vm996, %v3572, 0
        %3601 = vmatprep.subr.bf16.mxu0 0
        %3602 = vmatpush1.bf16.msra.mxu0 %v3594
        %3603 = vmatprep.subr.bf16.mxu0 0
        %3604 = vmatpush1.bf16.msra.mxu0 %v3595
        %3605 = vmatprep.subr.bf16.mxu0 0
        %3606 = vmatpush1.bf16.msra.mxu0 0
        %3607 = vmatprep.subr.bf16.mxu0 0
        %3608 = vmatpush1.bf16.msra.mxu0 0
        %3609 = vmatprep.subr.bf16.mxu0 0
        %3610 = vmatpush1.bf16.msra.mxu0 0
        %3611 = vmatprep.subr.bf16.mxu0 0
        %3612 = vmatpush1.bf16.msra.mxu0 0
        %3613 = vmatprep.subr.bf16.mxu0 0
        %3614 = vmatpush1.bf16.msra.mxu0 0
        %3615 = vmatprep.subr.bf16.mxu0 0
        %3616 = vmatpush1.bf16.msra.mxu0 0
        %3617 = vmatprep.subr.bf16.mxu0 0
        %3618 = vmatpush1.bf16.msra.mxu0 0
        %3619 = vmatprep.subr.bf16.mxu0 0
        %3620 = vmatpush1.bf16.msra.mxu0 0
        %3621 = vmatprep.subr.bf16.mxu0 0
        %3622 = vmatpush1.bf16.msra.mxu0 0
        %3623 = vmatprep.subr.bf16.mxu0 0
        %3624 = vmatpush1.bf16.msra.mxu0 0
        %3625 = vmatprep.subr.bf16.mxu0 0
        %3626 = vmatpush1.bf16.msra.mxu0 0
        %3627 = vmatprep.subr.bf16.mxu0 0
        %3628 = vmatpush1.bf16.msra.mxu0 0
        %3629 = vmatprep.subr.bf16.mxu0 0
        %3630 = vmatpush1.bf16.msra.mxu0 0
        %3631 = vmatprep.subr.bf16.mxu0 0
        %3632 = vmatpush1.bf16.msra.mxu0 0
        %3633 = vmatprep.mubr.bf16.mxu0 0
        %3634 = vmatmul.mubr.bf16.gmra.mrb[0].mxu0 %v3599
        %v3635 = vpop.f32.mrb[0].mxu0
        %v3636 = vadd.f32 %v3584, %v3635
        %v3637 = vpop.f32.mrb[0].mxu0
        %v3638 = vpop.f32.mrb[0].mxu0
        %v3639 = vpop.f32.mrb[0].mxu0
        %3640 = vdwg.mxu0
        %s3641 = scalar_lea.vmem %s27, 32
        %v3642 = vld [vmem:[%s3641] sm:$0xf]
        %v3643 = vld [vmem:[%s3641 + $0x4] sm:$0xf]
        %v3644 = vld [vmem:[%s3641 + $0x8] sm:$0xf]
        %v3645 = vld [vmem:[%s3641 + $0xc] sm:$0xf]
        %v3646 = vld [vmem:[%s3641 + $0x10] sm:$0xf]
        %v3647 = vld [vmem:[%s3641 + $0x14] sm:$0xf]
        %v3648 = vld [vmem:[%s3641 + $0x18] sm:$0xf]
        %v3649 = vld [vmem:[%s3641 + $0x1c] sm:$0xf]
        %s3650 = scalar_lea.vmem %s29, 1
        %v3651 = vld [vmem:[%s3650] sm:$0x1]
        %v3653 = vlaneseq
        %v3654 = vshrl.u32 %v3653, 7
        %v3655 = vsub.s32 0, %v3654
        %v3656 = vrot.slane %v3651, %v3655
        %v3666 = vunpack.c.l.b16 %v3642
        %v3667 = vunpack.c.l.b16 %v3643
        %v3668 = vunpack.c.l.b16 %v3644
        %v3669 = vunpack.c.l.b16 %v3645
        %v3670 = vunpack.c.l.b16 %v3646
        %v3671 = vunpack.c.l.b16 %v3647
        %v3672 = vunpack.c.l.b16 %v3648
        %v3673 = vunpack.c.l.b16 %v3649
        %v3674 = vpack.c.b16 %v3667, %v3666
        %v3675 = vpack.c.b16 %v3669, %v3668
        %v3676 = vpack.c.b16 %v3671, %v3670
        %v3677 = vpack.c.b16 %v3673, %v3672
        %3682 = vmatprep.subr.bf16.mxu0 0
        %3683 = vmatpush1.bf16.msra.mxu0 %v3674
        %3684 = vmatprep.subr.bf16.mxu0 0
        %3685 = vmatpush1.bf16.msra.mxu0 %v3675
        %3686 = vmatprep.subr.bf16.mxu0 0
        %3687 = vmatpush1.bf16.msra.mxu0 %v3676
        %3688 = vmatprep.subr.bf16.mxu0 0
        %3689 = vmatpush1.bf16.msra.mxu0 %v3677
        %3690 = vmatprep.subr.bf16.mxu0 0
        %3691 = vmatpush1.bf16.msra.mxu0 0
        %3692 = vmatprep.subr.bf16.mxu0 0
        %3693 = vmatpush1.bf16.msra.mxu0 0
        %3694 = vmatprep.subr.bf16.mxu0 0
        %3695 = vmatpush1.bf16.msra.mxu0 0
        %3696 = vmatprep.subr.bf16.mxu0 0
        %3697 = vmatpush1.bf16.msra.mxu0 0
        %3698 = vmatprep.subr.bf16.mxu0 0
        %3699 = vmatpush1.bf16.msra.mxu0 0
        %3700 = vmatprep.subr.bf16.mxu0 0
        %3701 = vmatpush1.bf16.msra.mxu0 0
        %3702 = vmatprep.subr.bf16.mxu0 0
        %3703 = vmatpush1.bf16.msra.mxu0 0
        %3704 = vmatprep.subr.bf16.mxu0 0
        %3705 = vmatpush1.bf16.msra.mxu0 0
        %3706 = vmatprep.subr.bf16.mxu0 0
        %3707 = vmatpush1.bf16.msra.mxu0 0
        %3708 = vmatprep.subr.bf16.mxu0 0
        %3709 = vmatpush1.bf16.msra.mxu0 0
        %3710 = vmatprep.subr.bf16.mxu0 0
        %3711 = vmatpush1.bf16.msra.mxu0 0
        %3712 = vmatprep.subr.bf16.mxu0 0
        %3713 = vmatpush1.bf16.msra.mxu0 0
        %3714 = vmatprep.mubr.bf16.mxu0 0
        %3715 = vmatmul.mubr.bf16.gmra.mrb[0].mxu0 %v1863
        %v3716 = vpop.f32.mrb[0].mxu0
        %v3717 = vadd.f32 %v3656, %v3716
        %v3718 = vpop.f32.mrb[0].mxu0
        %v3719 = vpop.f32.mrb[0].mxu0
        %v3720 = vadd.f32 %v3656, %v3719
        %v3721 = vpop.f32.mrb[0].mxu0
        %3722 = vmatprep.mubr.bf16.mxu0 0
        %3723 = vmatmul.mubr.bf16.gmra.mrb[0].mxu0 %v1866
        %v3724 = vpop.f32.mrb[0].mxu0
        %v3725 = vadd.f32 %v3656, %v3724
        %v3726 = vpop.f32.mrb[0].mxu0
        %v3727 = vpop.f32.mrb[0].mxu0
        %v3728 = vpop.f32.mrb[0].mxu0
        %3729 = vdwg.mxu0
        %s3730 = scalar_lea.vmem %s31, 16
        %v3731 = vld [vmem:[%s3730] sm:$0xf]
        %v3732 = vld [vmem:[%s3730 + $0x4] sm:$0xf]
        %v3733 = vld [vmem:[%s3730 + $0x8] sm:$0xf]
        %v3734 = vld [vmem:[%s3730 + $0xc] sm:$0xf]
        %s3735 = scalar_lea.vmem %s33, 1
        %v3736 = vld [vmem:[%s3735] sm:$0x1]
        %v3737 = vmul.f32 %v3636, 0.35355338
        %v3738 = vpack.c.bf16 %v3737, %v3737
        %v3739 = vpack.c.bf16 %v3720, %v3717
        %v3740 = vpack.c.bf16 %v3725, %v3725
        %v3742 = vsel %vm1132, %v3738, 0
        %v3745 = vsel %vm1132, %v3739, 0
        %v3748 = vsel %vm1132, %v3740, 0
        %3750 = vmatprep.subr.bf16.mxu0 0
        %3751 = vmatpush1.bf16.xpose.msra.mxu0 %v3745
        %3752 = vmatprep.subr.bf16.mxu0 0
        %3753 = vmatpush1.bf16.xpose.msra.mxu0 %v3748
        %3754 = vmatprep.subr.bf16.mxu0 0
        %3755 = vmatpush1.bf16.xpose.msra.mxu0 0
        %3756 = vmatprep.subr.bf16.mxu0 0
        %3757 = vmatpush1.bf16.xpose.msra.mxu0 0
        %3758 = vmatprep.subr.bf16.mxu0 0
        %3759 = vmatpush1.bf16.xpose.msra.mxu0 0
        %3760 = vmatprep.subr.bf16.mxu0 0
        %3761 = vmatpush1.bf16.xpose.msra.mxu0 0
        %3762 = vmatprep.subr.bf16.mxu0 0
        %3763 = vmatpush1.bf16.xpose.msra.mxu0 0
        %3764 = vmatprep.subr.bf16.mxu0 0
        %3765 = vmatpush1.bf16.xpose.msra.mxu0 0
        %3766 = vmatprep.subr.bf16.mxu0 0
        %3767 = vmatpush1.bf16.xpose.msra.mxu0 0
        %3768 = vmatprep.subr.bf16.mxu0 0
        %3769 = vmatpush1.bf16.xpose.msra.mxu0 0
        %3770 = vmatprep.subr.bf16.mxu0 0
        %3771 = vmatpush1.bf16.xpose.msra.mxu0 0
        %3772 = vmatprep.subr.bf16.mxu0 0
        %3773 = vmatpush1.bf16.xpose.msra.mxu0 0
        %3774 = vmatprep.subr.bf16.mxu0 0
        %3775 = vmatpush1.bf16.xpose.msra.mxu0 0
        %3776 = vmatprep.subr.bf16.mxu0 0
        %3777 = vmatpush1.bf16.xpose.msra.mxu0 0
        %3778 = vmatprep.subr.bf16.mxu0 0
        %3779 = vmatpush1.bf16.xpose.msra.mxu0 0
        %3780 = vmatprep.subr.bf16.mxu0 0
        %3781 = vmatpush1.bf16.xpose.msra.mxu0 0
        %3782 = vmatprep.mubr.bf16.mxu0 0
        %3783 = vmatmul.mubr.bf16.gmra.mrb[0].mxu0 %v3742
        %v3784 = vpop.f32.mrb[0].mxu0
        %v3785 = vadd.f32 0.0, %v3784
        %v3786 = vpop.f32.mrb[0].mxu0
        %v3787 = vpop.f32.mrb[0].mxu0
        %v3788 = vpop.f32.mrb[0].mxu0
        %3789 = vdwg.mxu0
        %v3790 = vsel %vm1974, %v3785, -inf
        %3791 = vmax.xlane.f32.xlu0 %v3790
        %v3792 = vpop.xlane.xlu0 %3791
        %v3793 = vsub.f32 %v3785, %v3792
        %v3794 = vmul.f32 %v3793, 1.442695
        %v3795 = vpow.pop %v3794
        %v3796 = vsel %vm1974, %v3795, 0.0
        %3797 = vadd.xlane.f32.xlu0 %v3796
        %v3798 = vpop.xlane.xlu0 %3797
        %v3799 = vrcp.pop %v3798
        %v3800 = vmul.f32 %v3795, %v3799
        %v3801 = vpack.c.bf16 %v3800, %v3800
        %3804 = vrot.lane.b32.xlu0 %v3739, 96
        %v3805 = vpop.permute.xlu0 %3804
        %3806 = vrot.lane.b32.xlu0 %v3740, 96
        %v3807 = vpop.permute.xlu0 %3806
        %v3810 = vsel %vm1974, %v3801, 0
        %v3813 = vand.u32 %v3807, %v1999
        %3815 = vmatprep.subr.bf16.mxu0 0
        %3816 = vmatpush1.bf16.msra.mxu0 %v3805
        %3817 = vmatprep.subr.bf16.mxu0 0
        %3818 = vmatpush1.bf16.msra.mxu0 %v3813
        %3819 = vmatprep.subr.bf16.mxu0 0
        %3820 = vmatpush1.bf16.msra.mxu0 0
        %3821 = vmatprep.subr.bf16.mxu0 0
        %3822 = vmatpush1.bf16.msra.mxu0 0
        %3823 = vmatprep.subr.bf16.mxu0 0
        %3824 = vmatpush1.bf16.msra.mxu0 0
        %3825 = vmatprep.subr.bf16.mxu0 0
        %3826 = vmatpush1.bf16.msra.mxu0 0
        %3827 = vmatprep.subr.bf16.mxu0 0
        %3828 = vmatpush1.bf16.msra.mxu0 0
        %3829 = vmatprep.subr.bf16.mxu0 0
        %3830 = vmatpush1.bf16.msra.mxu0 0
        %3831 = vmatprep.subr.bf16.mxu0 0
        %3832 = vmatpush1.bf16.msra.mxu0 0
        %3833 = vmatprep.subr.bf16.mxu0 0
        %3834 = vmatpush1.bf16.msra.mxu0 0
        %3835 = vmatprep.subr.bf16.mxu0 0
        %3836 = vmatpush1.bf16.msra.mxu0 0
        %3837 = vmatprep.subr.bf16.mxu0 0
        %3838 = vmatpush1.bf16.msra.mxu0 0
        %3839 = vmatprep.subr.bf16.mxu0 0
        %3840 = vmatpush1.bf16.msra.mxu0 0
        %3841 = vmatprep.subr.bf16.mxu0 0
        %3842 = vmatpush1.bf16.msra.mxu0 0
        %3843 = vmatprep.subr.bf16.mxu0 0
        %3844 = vmatpush1.bf16.msra.mxu0 0
        %3845 = vmatprep.subr.bf16.mxu0 0
        %3846 = vmatpush1.bf16.msra.mxu0 0
        %3847 = vmatprep.mubr.bf16.mxu0 0
        %3848 = vmatmul.mubr.bf16.gmra.mrb[0].mxu0 %v3810
        %v3849 = vpop.f32.mrb[0].mxu0
        %v3850 = vadd.f32 0.0, %v3849
        %v3851 = vpop.f32.mrb[0].mxu0
        %v3852 = vpop.f32.mrb[0].mxu0
        %v3853 = vpop.f32.mrb[0].mxu0
        %3854 = vdwg.mxu0
        %3856 = vrot.lane.b32.xlu0 %v3738, 120
        %v3857 = vpop.permute.xlu0 %3856
        %3858 = vrot.lane.b32.xlu0 %v3739, 120
        %v3859 = vpop.permute.xlu0 %3858
        %3860 = vrot.lane.b32.xlu0 %v3740, 120
        %v3861 = vpop.permute.xlu0 %3860
        %v3863 = vsel %vm1132, %v3857, 0
        %v3866 = vsel %vm1132, %v3859, 0
        %v3869 = vsel %vm1132, %v3861, 0
        %3871 = vmatprep.subr.bf16.mxu0 0
        %3872 = vmatpush1.bf16.xpose.msra.mxu0 %v3866
        %3873 = vmatprep.subr.bf16.mxu0 0
        %3874 = vmatpush1.bf16.xpose.msra.mxu0 %v3869
        %3875 = vmatprep.subr.bf16.mxu0 0
        %3876 = vmatpush1.bf16.xpose.msra.mxu0 0
        %3877 = vmatprep.subr.bf16.mxu0 0
        %3878 = vmatpush1.bf16.xpose.msra.mxu0 0
        %3879 = vmatprep.subr.bf16.mxu0 0
        %3880 = vmatpush1.bf16.xpose.msra.mxu0 0
        %3881 = vmatprep.subr.bf16.mxu0 0
        %3882 = vmatpush1.bf16.xpose.msra.mxu0 0
        %3883 = vmatprep.subr.bf16.mxu0 0
        %3884 = vmatpush1.bf16.xpose.msra.mxu0 0
        %3885 = vmatprep.subr.bf16.mxu0 0
        %3886 = vmatpush1.bf16.xpose.msra.mxu0 0
        %3887 = vmatprep.subr.bf16.mxu0 0
        %3888 = vmatpush1.bf16.xpose.msra.mxu0 0
        %3889 = vmatprep.subr.bf16.mxu0 0
        %3890 = vmatpush1.bf16.xpose.msra.mxu0 0
        %3891 = vmatprep.subr.bf16.mxu0 0
        %3892 = vmatpush1.bf16.xpose.msra.mxu0 0
        %3893 = vmatprep.subr.bf16.mxu0 0
        %3894 = vmatpush1.bf16.xpose.msra.mxu0 0
        %3895 = vmatprep.subr.bf16.mxu0 0
        %3896 = vmatpush1.bf16.xpose.msra.mxu0 0
        %3897 = vmatprep.subr.bf16.mxu0 0
        %3898 = vmatpush1.bf16.xpose.msra.mxu0 0
        %3899 = vmatprep.subr.bf16.mxu0 0
        %3900 = vmatpush1.bf16.xpose.msra.mxu0 0
        %3901 = vmatprep.subr.bf16.mxu0 0
        %3902 = vmatpush1.bf16.xpose.msra.mxu0 0
        %3903 = vmatprep.mubr.bf16.mxu0 0
        %3904 = vmatmul.mubr.bf16.gmra.mrb[0].mxu0 %v3863
        %v3905 = vpop.f32.mrb[0].mxu0
        %v3906 = vadd.f32 0.0, %v3905
        %v3907 = vpop.f32.mrb[0].mxu0
        %v3908 = vpop.f32.mrb[0].mxu0
        %v3909 = vpop.f32.mrb[0].mxu0
        %3910 = vdwg.mxu0
        %v3911 = vsel %vm1974, %v3906, -inf
        %3912 = vmax.xlane.f32.xlu0 %v3911
        %v3913 = vpop.xlane.xlu0 %3912
        %v3914 = vsub.f32 %v3906, %v3913
        %v3915 = vmul.f32 %v3914, 1.442695
        %v3916 = vpow.pop %v3915
        %v3917 = vsel %vm1974, %v3916, 0.0
        %3918 = vadd.xlane.f32.xlu0 %v3917
        %v3919 = vpop.xlane.xlu0 %3918
        %v3920 = vrcp.pop %v3919
        %v3921 = vmul.f32 %v3916, %v3920
        %v3922 = vpack.c.bf16 %v3921, %v3921
        %3923 = vrot.lane.b32.xlu0 %v3739, 88
        %v3924 = vpop.permute.xlu0 %3923
        %3925 = vrot.lane.b32.xlu0 %v3740, 88
        %v3926 = vpop.permute.xlu0 %3925
        %v3929 = vsel %vm1974, %v3922, 0
        %v3932 = vand.u32 %v3926, %v1999
        %3934 = vmatprep.subr.bf16.mxu0 0
        %3935 = vmatpush1.bf16.msra.mxu0 %v3924
        %3936 = vmatprep.subr.bf16.mxu0 0
        %3937 = vmatpush1.bf16.msra.mxu0 %v3932
        %3938 = vmatprep.subr.bf16.mxu0 0
        %3939 = vmatpush1.bf16.msra.mxu0 0
        %3940 = vmatprep.subr.bf16.mxu0 0
        %3941 = vmatpush1.bf16.msra.mxu0 0
        %3942 = vmatprep.subr.bf16.mxu0 0
        %3943 = vmatpush1.bf16.msra.mxu0 0
        %3944 = vmatprep.subr.bf16.mxu0 0
        %3945 = vmatpush1.bf16.msra.mxu0 0
        %3946 = vmatprep.subr.bf16.mxu0 0
        %3947 = vmatpush1.bf16.msra.mxu0 0
        %3948 = vmatprep.subr.bf16.mxu0 0
        %3949 = vmatpush1.bf16.msra.mxu0 0
        %3950 = vmatprep.subr.bf16.mxu0 0
        %3951 = vmatpush1.bf16.msra.mxu0 0
        %3952 = vmatprep.subr.bf16.mxu0 0
        %3953 = vmatpush1.bf16.msra.mxu0 0
        %3954 = vmatprep.subr.bf16.mxu0 0
        %3955 = vmatpush1.bf16.msra.mxu0 0
        %3956 = vmatprep.subr.bf16.mxu0 0
        %3957 = vmatpush1.bf16.msra.mxu0 0
        %3958 = vmatprep.subr.bf16.mxu0 0
        %3959 = vmatpush1.bf16.msra.mxu0 0
        %3960 = vmatprep.subr.bf16.mxu0 0
        %3961 = vmatpush1.bf16.msra.mxu0 0
        %3962 = vmatprep.subr.bf16.mxu0 0
        %3963 = vmatpush1.bf16.msra.mxu0 0
        %3964 = vmatprep.subr.bf16.mxu0 0
        %3965 = vmatpush1.bf16.msra.mxu0 0
        %3966 = vmatprep.mubr.bf16.mxu0 0
        %3967 = vmatmul.mubr.bf16.gmra.mrb[0].mxu0 %v3929
        %v3968 = vpop.f32.mrb[0].mxu0
        %v3969 = vadd.f32 0.0, %v3968
        %v3970 = vpop.f32.mrb[0].mxu0
        %v3971 = vpop.f32.mrb[0].mxu0
        %v3972 = vpop.f32.mrb[0].mxu0
        %3973 = vdwg.mxu0
        %3974 = vrot.lane.b32.xlu0 %v3738, 112
        %v3975 = vpop.permute.xlu0 %3974
        %3976 = vrot.lane.b32.xlu0 %v3739, 112
        %v3977 = vpop.permute.xlu0 %3976
        %3978 = vrot.lane.b32.xlu0 %v3740, 112
        %v3979 = vpop.permute.xlu0 %3978
        %v3981 = vsel %vm1132, %v3975, 0
        %v3984 = vsel %vm1132, %v3977, 0
        %v3987 = vsel %vm1132, %v3979, 0
        %3989 = vmatprep.subr.bf16.mxu0 0
        %3990 = vmatpush1.bf16.xpose.msra.mxu0 %v3984
        %3991 = vmatprep.subr.bf16.mxu0 0
        %3992 = vmatpush1.bf16.xpose.msra.mxu0 %v3987
        %3993 = vmatprep.subr.bf16.mxu0 0
        %3994 = vmatpush1.bf16.xpose.msra.mxu0 0
        %3995 = vmatprep.subr.bf16.mxu0 0
        %3996 = vmatpush1.bf16.xpose.msra.mxu0 0
        %3997 = vmatprep.subr.bf16.mxu0 0
        %3998 = vmatpush1.bf16.xpose.msra.mxu0 0
        %3999 = vmatprep.subr.bf16.mxu0 0
        %4000 = vmatpush1.bf16.xpose.msra.mxu0 0
        %4001 = vmatprep.subr.bf16.mxu0 0
        %4002 = vmatpush1.bf16.xpose.msra.mxu0 0
        %4003 = vmatprep.subr.bf16.mxu0 0
        %4004 = vmatpush1.bf16.xpose.msra.mxu0 0
        %4005 = vmatprep.subr.bf16.mxu0 0
        %4006 = vmatpush1.bf16.xpose.msra.mxu0 0
        %4007 = vmatprep.subr.bf16.mxu0 0
        %4008 = vmatpush1.bf16.xpose.msra.mxu0 0
        %4009 = vmatprep.subr.bf16.mxu0 0
        %4010 = vmatpush1.bf16.xpose.msra.mxu0 0
        %4011 = vmatprep.subr.bf16.mxu0 0
        %4012 = vmatpush1.bf16.xpose.msra.mxu0 0
        %4013 = vmatprep.subr.bf16.mxu0 0
        %4014 = vmatpush1.bf16.xpose.msra.mxu0 0
        %4015 = vmatprep.subr.bf16.mxu0 0
        %4016 = vmatpush1.bf16.xpose.msra.mxu0 0
        %4017 = vmatprep.subr.bf16.mxu0 0
        %4018 = vmatpush1.bf16.xpose.msra.mxu0 0
        %4019 = vmatprep.subr.bf16.mxu0 0
        %4020 = vmatpush1.bf16.xpose.msra.mxu0 0
        %4021 = vmatprep.mubr.bf16.mxu0 0
        %4022 = vmatmul.mubr.bf16.gmra.mrb[0].mxu0 %v3981
        %v4023 = vpop.f32.mrb[0].mxu0
        %v4024 = vadd.f32 0.0, %v4023
        %v4025 = vpop.f32.mrb[0].mxu0
        %v4026 = vpop.f32.mrb[0].mxu0
        %v4027 = vpop.f32.mrb[0].mxu0
        %4028 = vdwg.mxu0
        %v4029 = vsel %vm1974, %v4024, -inf
        %4030 = vmax.xlane.f32.xlu0 %v4029
        %v4031 = vpop.xlane.xlu0 %4030
        %v4032 = vsub.f32 %v4024, %v4031
        %v4033 = vmul.f32 %v4032, 1.442695
        %v4034 = vpow.pop %v4033
        %v4035 = vsel %vm1974, %v4034, 0.0
        %4036 = vadd.xlane.f32.xlu0 %v4035
        %v4037 = vpop.xlane.xlu0 %4036
        %v4038 = vrcp.pop %v4037
        %v4039 = vmul.f32 %v4034, %v4038
        %v4040 = vpack.c.bf16 %v4039, %v4039
        %4041 = vrot.lane.b32.xlu0 %v3739, 80
        %v4042 = vpop.permute.xlu0 %4041
        %4043 = vrot.lane.b32.xlu0 %v3740, 80
        %v4044 = vpop.permute.xlu0 %4043
        %v4047 = vsel %vm1974, %v4040, 0
        %v4050 = vand.u32 %v4044, %v1999
        %4052 = vmatprep.subr.bf16.mxu0 0
        %4053 = vmatpush1.bf16.msra.mxu0 %v4042
        %4054 = vmatprep.subr.bf16.mxu0 0
        %4055 = vmatpush1.bf16.msra.mxu0 %v4050
        %4056 = vmatprep.subr.bf16.mxu0 0
        %4057 = vmatpush1.bf16.msra.mxu0 0
        %4058 = vmatprep.subr.bf16.mxu0 0
        %4059 = vmatpush1.bf16.msra.mxu0 0
        %4060 = vmatprep.subr.bf16.mxu0 0
        %4061 = vmatpush1.bf16.msra.mxu0 0
        %4062 = vmatprep.subr.bf16.mxu0 0
        %4063 = vmatpush1.bf16.msra.mxu0 0
        %4064 = vmatprep.subr.bf16.mxu0 0
        %4065 = vmatpush1.bf16.msra.mxu0 0
        %4066 = vmatprep.subr.bf16.mxu0 0
        %4067 = vmatpush1.bf16.msra.mxu0 0
        %4068 = vmatprep.subr.bf16.mxu0 0
        %4069 = vmatpush1.bf16.msra.mxu0 0
        %4070 = vmatprep.subr.bf16.mxu0 0
        %4071 = vmatpush1.bf16.msra.mxu0 0
        %4072 = vmatprep.subr.bf16.mxu0 0
        %4073 = vmatpush1.bf16.msra.mxu0 0
        %4074 = vmatprep.subr.bf16.mxu0 0
        %4075 = vmatpush1.bf16.msra.mxu0 0
        %4076 = vmatprep.subr.bf16.mxu0 0
        %4077 = vmatpush1.bf16.msra.mxu0 0
        %4078 = vmatprep.subr.bf16.mxu0 0
        %4079 = vmatpush1.bf16.msra.mxu0 0
        %4080 = vmatprep.subr.bf16.mxu0 0
        %4081 = vmatpush1.bf16.msra.mxu0 0
        %4082 = vmatprep.subr.bf16.mxu0 0
        %4083 = vmatpush1.bf16.msra.mxu0 0
        %4084 = vmatprep.mubr.bf16.mxu0 0
        %4085 = vmatmul.mubr.bf16.gmra.mrb[0].mxu0 %v4047
        %v4086 = vpop.f32.mrb[0].mxu0
        %v4087 = vadd.f32 0.0, %v4086
        %v4088 = vpop.f32.mrb[0].mxu0
        %v4089 = vpop.f32.mrb[0].mxu0
        %v4090 = vpop.f32.mrb[0].mxu0
        %4091 = vdwg.mxu0
        %4092 = vrot.lane.b32.xlu0 %v3738, 104
        %v4093 = vpop.permute.xlu0 %4092
        %4094 = vrot.lane.b32.xlu0 %v3739, 104
        %v4095 = vpop.permute.xlu0 %4094
        %4096 = vrot.lane.b32.xlu0 %v3740, 104
        %v4097 = vpop.permute.xlu0 %4096
        %v4099 = vsel %vm1132, %v4093, 0
        %v4102 = vsel %vm1132, %v4095, 0
        %v4105 = vsel %vm1132, %v4097, 0
        %4107 = vmatprep.subr.bf16.mxu0 0
        %4108 = vmatpush1.bf16.xpose.msra.mxu0 %v4102
        %4109 = vmatprep.subr.bf16.mxu0 0
        %4110 = vmatpush1.bf16.xpose.msra.mxu0 %v4105
        %4111 = vmatprep.subr.bf16.mxu0 0
        %4112 = vmatpush1.bf16.xpose.msra.mxu0 0
        %4113 = vmatprep.subr.bf16.mxu0 0
        %4114 = vmatpush1.bf16.xpose.msra.mxu0 0
        %4115 = vmatprep.subr.bf16.mxu0 0
        %4116 = vmatpush1.bf16.xpose.msra.mxu0 0
        %4117 = vmatprep.subr.bf16.mxu0 0
        %4118 = vmatpush1.bf16.xpose.msra.mxu0 0
        %4119 = vmatprep.subr.bf16.mxu0 0
        %4120 = vmatpush1.bf16.xpose.msra.mxu0 0
        %4121 = vmatprep.subr.bf16.mxu0 0
        %4122 = vmatpush1.bf16.xpose.msra.mxu0 0
        %4123 = vmatprep.subr.bf16.mxu0 0
        %4124 = vmatpush1.bf16.xpose.msra.mxu0 0
        %4125 = vmatprep.subr.bf16.mxu0 0
        %4126 = vmatpush1.bf16.xpose.msra.mxu0 0
        %4127 = vmatprep.subr.bf16.mxu0 0
        %4128 = vmatpush1.bf16.xpose.msra.mxu0 0
        %4129 = vmatprep.subr.bf16.mxu0 0
        %4130 = vmatpush1.bf16.xpose.msra.mxu0 0
        %4131 = vmatprep.subr.bf16.mxu0 0
        %4132 = vmatpush1.bf16.xpose.msra.mxu0 0
        %4133 = vmatprep.subr.bf16.mxu0 0
        %4134 = vmatpush1.bf16.xpose.msra.mxu0 0
        %4135 = vmatprep.subr.bf16.mxu0 0
        %4136 = vmatpush1.bf16.xpose.msra.mxu0 0
        %4137 = vmatprep.subr.bf16.mxu0 0
        %4138 = vmatpush1.bf16.xpose.msra.mxu0 0
        %4139 = vmatprep.mubr.bf16.mxu0 0
        %4140 = vmatmul.mubr.bf16.gmra.mrb[0].mxu0 %v4099
        %v4141 = vpop.f32.mrb[0].mxu0
        %v4142 = vadd.f32 0.0, %v4141
        %v4143 = vpop.f32.mrb[0].mxu0
        %v4144 = vpop.f32.mrb[0].mxu0
        %v4145 = vpop.f32.mrb[0].mxu0
        %4146 = vdwg.mxu0
        %v4147 = vsel %vm1974, %v4142, -inf
        %4148 = vmax.xlane.f32.xlu0 %v4147
        %v4149 = vpop.xlane.xlu0 %4148
        %v4150 = vsub.f32 %v4142, %v4149
        %v4151 = vmul.f32 %v4150, 1.442695
        %v4152 = vpow.pop %v4151
        %v4153 = vsel %vm1974, %v4152, 0.0
        %4154 = vadd.xlane.f32.xlu0 %v4153
        %v4155 = vpop.xlane.xlu0 %4154
        %v4156 = vrcp.pop %v4155
        %v4157 = vmul.f32 %v4152, %v4156
        %v4158 = vpack.c.bf16 %v4157, %v4157
        %4159 = vrot.lane.b32.xlu0 %v3739, 72
        %v4160 = vpop.permute.xlu0 %4159
        %4161 = vrot.lane.b32.xlu0 %v3740, 72
        %v4162 = vpop.permute.xlu0 %4161
        %v4165 = vsel %vm1974, %v4158, 0
        %v4168 = vand.u32 %v4162, %v1999
        %4170 = vmatprep.subr.bf16.mxu0 0
        %4171 = vmatpush1.bf16.msra.mxu0 %v4160
        %4172 = vmatprep.subr.bf16.mxu0 0
        %4173 = vmatpush1.bf16.msra.mxu0 %v4168
        %4174 = vmatprep.subr.bf16.mxu0 0
        %4175 = vmatpush1.bf16.msra.mxu0 0
        %4176 = vmatprep.subr.bf16.mxu0 0
        %4177 = vmatpush1.bf16.msra.mxu0 0
        %4178 = vmatprep.subr.bf16.mxu0 0
        %4179 = vmatpush1.bf16.msra.mxu0 0
        %4180 = vmatprep.subr.bf16.mxu0 0
        %4181 = vmatpush1.bf16.msra.mxu0 0
        %4182 = vmatprep.subr.bf16.mxu0 0
        %4183 = vmatpush1.bf16.msra.mxu0 0
        %4184 = vmatprep.subr.bf16.mxu0 0
        %4185 = vmatpush1.bf16.msra.mxu0 0
        %4186 = vmatprep.subr.bf16.mxu0 0
        %4187 = vmatpush1.bf16.msra.mxu0 0
        %4188 = vmatprep.subr.bf16.mxu0 0
        %4189 = vmatpush1.bf16.msra.mxu0 0
        %4190 = vmatprep.subr.bf16.mxu0 0
        %4191 = vmatpush1.bf16.msra.mxu0 0
        %4192 = vmatprep.subr.bf16.mxu0 0
        %4193 = vmatpush1.bf16.msra.mxu0 0
        %4194 = vmatprep.subr.bf16.mxu0 0
        %4195 = vmatpush1.bf16.msra.mxu0 0
        %4196 = vmatprep.subr.bf16.mxu0 0
        %4197 = vmatpush1.bf16.msra.mxu0 0
        %4198 = vmatprep.subr.bf16.mxu0 0
        %4199 = vmatpush1.bf16.msra.mxu0 0
        %4200 = vmatprep.subr.bf16.mxu0 0
        %4201 = vmatpush1.bf16.msra.mxu0 0
        %4202 = vmatprep.mubr.bf16.mxu0 0
        %4203 = vmatmul.mubr.bf16.gmra.mrb[0].mxu0 %v4165
        %v4204 = vpop.f32.mrb[0].mxu0
        %v4205 = vadd.f32 0.0, %v4204
        %v4206 = vpop.f32.mrb[0].mxu0
        %v4207 = vpop.f32.mrb[0].mxu0
        %v4208 = vpop.f32.mrb[0].mxu0
        %4209 = vdwg.mxu0
        %4211 = vrot.lane.b32.xlu0 %v3969, 8
        %v4212 = vpop.permute.xlu0 %4211
        %4215 = vrot.lane.b32.xlu0 %v4087, 16
        %v4216 = vpop.permute.xlu0 %4215
        %4219 = vrot.lane.b32.xlu0 %v4205, 24
        %v4220 = vpop.permute.xlu0 %4219
        %v4222 = vsel %vm1132, %v3850, %v4212
        %v4223 = vsel %vm1180, %v4222, %v4216
        %v4224 = vsel %vm1643, %v4223, %v4220
        %v4225 = vpack.c.bf16 %v4224, %v4224
        %v4227 = vlaneseq
        %v4228 = vshrl.u32 %v4227, 7
        %v4229 = vsub.s32 0, %v4228
        %v4230 = vrot.slane %v3736, %v4229
        %v4236 = vunpack.c.l.b16 %v3731
        %v4237 = vunpack.c.l.b16 %v3732
        %v4238 = vunpack.c.l.b16 %v3733
        %v4239 = vunpack.c.l.b16 %v3734
        %v4240 = vpack.c.b16 %v4237, %v4236
        %v4241 = vpack.c.b16 %v4239, %v4238
        %v4245 = vsel %vm996, %v4225, 0
        %4247 = vmatprep.subr.bf16.mxu0 0
        %4248 = vmatpush1.bf16.msra.mxu0 %v4240
        %4249 = vmatprep.subr.bf16.mxu0 0
        %4250 = vmatpush1.bf16.msra.mxu0 %v4241
        %4251 = vmatprep.subr.bf16.mxu0 0
        %4252 = vmatpush1.bf16.msra.mxu0 0
        %4253 = vmatprep.subr.bf16.mxu0 0
        %4254 = vmatpush1.bf16.msra.mxu0 0
        %4255 = vmatprep.subr.bf16.mxu0 0
        %4256 = vmatpush1.bf16.msra.mxu0 0
        %4257 = vmatprep.subr.bf16.mxu0 0
        %4258 = vmatpush1.bf16.msra.mxu0 0
        %4259 = vmatprep.subr.bf16.mxu0 0
        %4260 = vmatpush1.bf16.msra.mxu0 0
        %4261 = vmatprep.subr.bf16.mxu0 0
        %4262 = vmatpush1.bf16.msra.mxu0 0
        %4263 = vmatprep.subr.bf16.mxu0 0
        %4264 = vmatpush1.bf16.msra.mxu0 0
        %4265 = vmatprep.subr.bf16.mxu0 0
        %4266 = vmatpush1.bf16.msra.mxu0 0
        %4267 = vmatprep.subr.bf16.mxu0 0
        %4268 = vmatpush1.bf16.msra.mxu0 0
        %4269 = vmatprep.subr.bf16.mxu0 0
        %4270 = vmatpush1.bf16.msra.mxu0 0
        %4271 = vmatprep.subr.bf16.mxu0 0
        %4272 = vmatpush1.bf16.msra.mxu0 0
        %4273 = vmatprep.subr.bf16.mxu0 0
        %4274 = vmatpush1.bf16.msra.mxu0 0
        %4275 = vmatprep.subr.bf16.mxu0 0
        %4276 = vmatpush1.bf16.msra.mxu0 0
        %4277 = vmatprep.subr.bf16.mxu0 0
        %4278 = vmatpush1.bf16.msra.mxu0 0
        %4279 = vmatprep.mubr.bf16.mxu0 0
        %4280 = vmatmul.mubr.bf16.gmra.mrb[0].mxu0 %v4245
        %v4281 = vpop.f32.mrb[0].mxu0
        %v4282 = vadd.f32 %v4230, %v4281
        %v4283 = vpop.f32.mrb[0].mxu0
        %v4284 = vpop.f32.mrb[0].mxu0
        %v4285 = vpop.f32.mrb[0].mxu0
        %4286 = vdwg.mxu0
        %v4287 = vadd.f32 %v3571, %v4282
        %s4288 = scalar_lea.vmem %s35, 1
        %v4289 = vld [vmem:[%s4288] sm:$0x1]
        %s4290 = scalar_lea.vmem %s37, 1
        %v4291 = vld [vmem:[%s4290] sm:$0x1]
        %v4292 = vsel %vm996, %v4287, 0.0
        %4293 = vadd.xlane.f32.xlu0 %v4292
        %v4294 = vpop.xlane.xlu0 %4293
        %v4295 = vmul.f32 %v4294, %v1003
        %v4296 = vsub.f32 %v4287, %v4295
        %v4297 = vmul.f32 %v4296, %v4296
        %v4298 = vsel %vm996, %v4297, 0.0
        %4299 = vadd.xlane.f32.xlu0 %v4298
        %v4300 = vpop.xlane.xlu0 %4299
        %v4301 = vmul.f32 %v4300, %v1003
        %v4302 = vadd.f32 %v4301, 1e-12
        %v4303 = vrsqrt.pop %v4302
        %v4304 = vmul.f32 %v4296, %v4303
        %v4306 = vlaneseq
        %v4307 = vshrl.u32 %v4306, 7
        %v4308 = vsub.s32 0, %v4307
        %v4309 = vrot.slane %v4289, %v4308
        %v4311 = vmul.f32 %v4304, %v4309
        %v4313 = vlaneseq
        %v4314 = vshrl.u32 %v4313, 7
        %v4315 = vsub.s32 0, %v4314
        %v4316 = vrot.slane %v4291, %v4315
        %v4318 = vadd.f32 %v4311, %v4316
        %v4319 = vpack.c.bf16 %v4318, %v4318
        %s4320 = scalar_lea.vmem %s39, 16
        %v4321 = vld [vmem:[%s4320] sm:$0xf]
        %v4322 = vld [vmem:[%s4320 + $0x4] sm:$0xf]
        %v4323 = vld [vmem:[%s4320 + $0x8] sm:$0xf]
        %v4324 = vld [vmem:[%s4320 + $0xc] sm:$0xf]
        %s4325 = scalar_lea.vmem %s41, 1
        %v4326 = vld [vmem:[%s4325] sm:$0x1]
        %v4328 = vlaneseq
        %v4329 = vshrl.u32 %v4328, 7
        %v4330 = vsub.s32 0, %v4329
        %v4331 = vrot.slane %v4326, %v4330
        %v4337 = vunpack.c.l.b16 %v4321
        %v4338 = vunpack.c.l.b16 %v4322
        %v4339 = vunpack.c.l.b16 %v4323
        %v4340 = vunpack.c.l.b16 %v4324
        %v4341 = vpack.c.b16 %v4338, %v4337
        %v4342 = vpack.c.b16 %v4340, %v4339
        %v4346 = vsel %vm996, %v4319, 0
        %4348 = vmatprep.subr.bf16.mxu0 0
        %4349 = vmatpush1.bf16.msra.mxu0 %v4341
        %4350 = vmatprep.subr.bf16.mxu0 0
        %4351 = vmatpush1.bf16.msra.mxu0 %v4342
        %4352 = vmatprep.subr.bf16.mxu0 0
        %4353 = vmatpush1.bf16.msra.mxu0 0
        %4354 = vmatprep.subr.bf16.mxu0 0
        %4355 = vmatpush1.bf16.msra.mxu0 0
        %4356 = vmatprep.subr.bf16.mxu0 0
        %4357 = vmatpush1.bf16.msra.mxu0 0
        %4358 = vmatprep.subr.bf16.mxu0 0
        %4359 = vmatpush1.bf16.msra.mxu0 0
        %4360 = vmatprep.subr.bf16.mxu0 0
        %4361 = vmatpush1.bf16.msra.mxu0 0
        %4362 = vmatprep.subr.bf16.mxu0 0
        %4363 = vmatpush1.bf16.msra.mxu0 0
        %4364 = vmatprep.subr.bf16.mxu0 0
        %4365 = vmatpush1.bf16.msra.mxu0 0
        %4366 = vmatprep.subr.bf16.mxu0 0
        %4367 = vmatpush1.bf16.msra.mxu0 0
        %4368 = vmatprep.subr.bf16.mxu0 0
        %4369 = vmatpush1.bf16.msra.mxu0 0
        %4370 = vmatprep.subr.bf16.mxu0 0
        %4371 = vmatpush1.bf16.msra.mxu0 0
        %4372 = vmatprep.subr.bf16.mxu0 0
        %4373 = vmatpush1.bf16.msra.mxu0 0
        %4374 = vmatprep.subr.bf16.mxu0 0
        %4375 = vmatpush1.bf16.msra.mxu0 0
        %4376 = vmatprep.subr.bf16.mxu0 0
        %4377 = vmatpush1.bf16.msra.mxu0 0
        %4378 = vmatprep.subr.bf16.mxu0 0
        %4379 = vmatpush1.bf16.msra.mxu0 0
        %4380 = vmatprep.mubr.bf16.mxu0 0
        %4381 = vmatmul.mubr.bf16.gmra.mrb[0].mxu0 %v4346
        %v4382 = vpop.f32.mrb[0].mxu0
        %v4383 = vadd.f32 %v4331, %v4382
        %v4384 = vpop.f32.mrb[0].mxu0
        %v4385 = vpop.f32.mrb[0].mxu0
        %v4386 = vpop.f32.mrb[0].mxu0
        %4387 = vdwg.mxu0
        %v4388 = vmul.f32 %v4383, %v4383
        %v4389 = vmul.f32 %v4383, %v4388
        %v4390 = vmul.f32 %v4389, 0.044715
        %v4391 = vadd.f32 %v4383, %v4390
        %v4392 = vmul.f32 %v4391, 0.7978846
        %v4393 = vtanh.pop %v4392
        %v4394 = vadd.f32 %v4393, 1.0
        %v4395 = vmul.f32 %v4394, 0.5
        %v4396 = vmul.f32 %v4383, %v4395
        %v4397 = vpack.c.bf16 %v4396, %v4396
        %s4398 = scalar_lea.vmem %s43, 32
        %v4399 = vld [vmem:[%s4398] sm:$0xf]
        %v4400 = vld [vmem:[%s4398 + $0x4] sm:$0xf]
        %v4401 = vld [vmem:[%s4398 + $0x8] sm:$0xf]
        %v4402 = vld [vmem:[%s4398 + $0xc] sm:$0xf]
        %v4403 = vld [vmem:[%s4398 + $0x10] sm:$0xf]
        %v4404 = vld [vmem:[%s4398 + $0x14] sm:$0xf]
        %v4405 = vld [vmem:[%s4398 + $0x18] sm:$0xf]
        %v4406 = vld [vmem:[%s4398 + $0x1c] sm:$0xf]
        %s4407 = scalar_lea.vmem %s45, 1
        %v4408 = vld [vmem:[%s4407] sm:$0x1]
        %v4410 = vlaneseq
        %v4411 = vshrl.u32 %v4410, 7
        %v4412 = vsub.s32 0, %v4411
        %v4413 = vrot.slane %v4408, %v4412
        %v4423 = vunpack.c.l.b16 %v4399
        %v4424 = vunpack.c.l.b16 %v4400
        %v4425 = vunpack.c.l.b16 %v4401
        %v4426 = vunpack.c.l.b16 %v4402
        %v4427 = vunpack.c.l.b16 %v4403
        %v4428 = vunpack.c.l.b16 %v4404
        %v4429 = vunpack.c.l.b16 %v4405
        %v4430 = vunpack.c.l.b16 %v4406
        %v4431 = vpack.c.b16 %v4424, %v4423
        %v4432 = vpack.c.b16 %v4426, %v4425
        %v4433 = vpack.c.b16 %v4428, %v4427
        %v4434 = vpack.c.b16 %v4430, %v4429
        %v4440 = vsel %vm1861, %v4397, 0
        %4442 = vmatprep.subr.bf16.mxu0 0
        %4443 = vmatpush1.bf16.msra.mxu0 %v4431
        %4444 = vmatprep.subr.bf16.mxu0 0
        %4445 = vmatpush1.bf16.msra.mxu0 %v4432
        %4446 = vmatprep.subr.bf16.mxu0 0
        %4447 = vmatpush1.bf16.msra.mxu0 %v4433
        %4448 = vmatprep.subr.bf16.mxu0 0
        %4449 = vmatpush1.bf16.msra.mxu0 %v4434
        %4450 = vmatprep.subr.bf16.mxu0 0
        %4451 = vmatpush1.bf16.msra.mxu0 0
        %4452 = vmatprep.subr.bf16.mxu0 0
        %4453 = vmatpush1.bf16.msra.mxu0 0
        %4454 = vmatprep.subr.bf16.mxu0 0
        %4455 = vmatpush1.bf16.msra.mxu0 0
        %4456 = vmatprep.subr.bf16.mxu0 0
        %4457 = vmatpush1.bf16.msra.mxu0 0
        %4458 = vmatprep.subr.bf16.mxu0 0
        %4459 = vmatpush1.bf16.msra.mxu0 0
        %4460 = vmatprep.subr.bf16.mxu0 0
        %4461 = vmatpush1.bf16.msra.mxu0 0
        %4462 = vmatprep.subr.bf16.mxu0 0
        %4463 = vmatpush1.bf16.msra.mxu0 0
        %4464 = vmatprep.subr.bf16.mxu0 0
        %4465 = vmatpush1.bf16.msra.mxu0 0
        %4466 = vmatprep.subr.bf16.mxu0 0
        %4467 = vmatpush1.bf16.msra.mxu0 0
        %4468 = vmatprep.subr.bf16.mxu0 0
        %4469 = vmatpush1.bf16.msra.mxu0 0
        %4470 = vmatprep.subr.bf16.mxu0 0
        %4471 = vmatpush1.bf16.msra.mxu0 0
        %4472 = vmatprep.subr.bf16.mxu0 0
        %4473 = vmatpush1.bf16.msra.mxu0 0
        %4474 = vmatprep.mubr.bf16.mxu0 0
        %4475 = vmatmul.mubr.bf16.gmra.mrb[0].mxu0 %v4440
        %v4476 = vpop.f32.mrb[0].mxu0
        %v4477 = vadd.f32 %v4413, %v4476
        %v4478 = vpop.f32.mrb[0].mxu0
        %v4479 = vpop.f32.mrb[0].mxu0
        %v4480 = vpop.f32.mrb[0].mxu0
        %4481 = vdwg.mxu0
        %v4482 = vadd.f32 %v4318, %v4477
        %s4483 = scalar_lea.vmem %s47, 1
        %v4484 = vld [vmem:[%s4483] sm:$0x1]
        %s4485 = scalar_lea.vmem %s49, 1
        %v4486 = vld [vmem:[%s4485] sm:$0x1]
        %v4487 = vsel %vm996, %v4482, 0.0
        %4488 = vadd.xlane.f32.xlu0 %v4487
        %v4489 = vpop.xlane.xlu0 %4488
        %v4490 = vmul.f32 %v4489, %v1003
        %v4491 = vsub.f32 %v4482, %v4490
        %v4492 = vmul.f32 %v4491, %v4491
        %v4493 = vsel %vm996, %v4492, 0.0
        %4494 = vadd.xlane.f32.xlu0 %v4493
        %v4495 = vpop.xlane.xlu0 %4494
        %v4496 = vmul.f32 %v4495, %v1003
        %v4497 = vadd.f32 %v4496, 1e-12
        %v4498 = vrsqrt.pop %v4497
        %v4499 = vmul.f32 %v4491, %v4498
        %v4501 = vlaneseq
        %v4502 = vshrl.u32 %v4501, 7
        %v4503 = vsub.s32 0, %v4502
        %v4504 = vrot.slane %v4484, %v4503
        %v4506 = vmul.f32 %v4499, %v4504
        %v4508 = vlaneseq
        %v4509 = vshrl.u32 %v4508, 7
        %v4510 = vsub.s32 0, %v4509
        %v4511 = vrot.slane %v4486, %v4510
        %v4513 = vadd.f32 %v4506, %v4511
        %4514 = vst.msk [vmem:[%s977] sm:$0xff] %vm996, %v4513
        %s4515 = sand.u32 %s751, 1
        %s4516 = scalar_lea.sflag [#allocation3], %s4515
        %s4517 = sand.u32 %s751, 1
        %s4518 = smul.addr %s4517, 8
        %s4519 = scalar_lea.vmem [#allocation2], %s4518
        // Predicated region
        $region145: #{blip_forward.3} parent=143 // pred_check
          %p4520 = pneg %p761
        $region146: #{blip_forward.3} parent=143 // pred_check_branch
          %4522 = sbr.rel (%p4520) target = $region148
        $region147: #{blip_forward.3} parent=143 // pred_region
          %s4524 = ssub.s32 128, 128
          %4525 = vsyncadd %s4516, %s4524
          %s4526 = smul.addr %s77, 128
          %s4527 = scalar_lea.hbm %s63, %s4526
          %s4529 = sshll.u32 %s4519, 4
          %s4530 = int_to_ptr.vmem [resolvable:$true] %s4529
          %4532 = dma.vmem_to_hbm [thread:$0]  %s4530, 128, %s4527, %s4516
        $region148: #{blip_forward.3} parent=143 // pred_fallthru
          _
      $region144: #{blip_forward.3} parent=5 // pred_fallthru
        _
      %p4533 = scmp.le.s32.totalorder 2, %s72
      // Predicated region
      $region149: #{blip_forward.3} parent=5 // pred_check
        %p4534 = pneg %p4533
      $region150: #{blip_forward.3} parent=5 // pred_check_branch
        %4536 = sbr.rel (%p4534) target = $region152
      $region151: #{blip_forward.3} parent=5 // pred_region
        %s4537 = ssub.s32 %s72, 2
        // Predicated region
        $region153: #{blip_forward.3} parent=151 // pred_check
          %p4538 = pneg %p767
        $region154: #{blip_forward.3} parent=151 // pred_check_branch
          %4540 = sbr.rel (%p4538) target = $region156
        $region155: #{blip_forward.3} parent=151 // pred_region
          %s4541 = sand.u32 %s752, 1
          %s4542 = scalar_lea.sflag [#allocation3], %s4541
          %s4543 = sand.u32 %s752, 1
          %s4544 = smul.addr %s4543, 8
          %s4545 = scalar_lea.vmem [#allocation2], %s4544
          %4546 = dma.done %s4542, 128
        $region156: #{blip_forward.3} parent=151 // pred_fallthru
          _
      $region152: #{blip_forward.3} parent=5 // pred_fallthru
        _
    $region6: #{blip_forward.3} parent=1 // loop_footer
      %s76 = sadd.s32 1, %s72
    $region7: #{blip_forward.3} parent=1 // loop_footer_branch
      %71 = sbr.rel target = $region3
    $region8: #{blip_forward.3} parent=1 // loop_exit
      _
    %4547 = vsyncpa [#allocation3], 1
    %s4548 = scalar_lea.sflag [#allocation3], 1
    %4549 = vsyncpa %s4548, 1

</llo_original>
